<compile_context>
chip_gen: v7x
topology: tpu7x:2x2x1
jax: 0.10.0
libtpu: 0.0.40
codegen_flags: <defaults>
</compile_context>

<pallas_src>
import functools
import math

import jax
import jax.numpy as jnp
from jax.experimental import pallas as pl
from jax.experimental.pallas import tpu as pltpu


# ----------------------------- in-kernel helpers -----------------------------

def _mm(a, w):
    """MXU matmul: activation cast to bf16, bf16 weight, fp32 accumulate."""
    return jnp.dot(a.astype(jnp.bfloat16), w, preferred_element_type=jnp.float32)


def _ln(x, g, b, eps=1e-5):
    mu = jnp.mean(x, axis=-1, keepdims=True)
    var = jnp.mean((x - mu) ** 2, axis=-1, keepdims=True)
    return (x - mu) * jax.lax.rsqrt(var + eps) * g + b


def _gelu(x):
    # tanh-approx GELU (EUP tanh).  TODO(synk): use exact erf if bit-level
    # parity with PyTorch nn.GELU() (erf default) is required.
    return 0.5 * x * (1.0 + jnp.tanh(0.7978845608028654 * (x + 0.044715 * x * x * x)))


def _mha(q, kh, vh, woh, bo, nheads):
    """Batched-head attention + output projection.

    q:   [Lq, C]      fp32 (1/sqrt(hd) already folded into its projection)
    kh:  [H, Lk, hd]  bf16
    vh:  [H, Lk, hd]  bf16
    woh: [H, hd, C]   bf16 (out_proj weight, rows grouped by head)
    bo:  [1, C]       fp32
    Returns [Lq, C] fp32  ==  concat_h(softmax(q_h k_h^T) v_h) @ Wo + bo.
    """
    Lq, C = q.shape
    hd = C // nheads
    # Head-split q with a leading-dim stack (one relayout for all heads instead
    # of the old per-head slice -> matmul -> lane-concat loop).
    qh = jnp.stack([q[:, h * hd:(h + 1) * hd] for h in range(nheads)],
                   axis=0).astype(jnp.bfloat16)                       # [H, Lq, hd]
    s = jnp.einsum("hqd,hkd->hqk", qh, kh,
                   preferred_element_type=jnp.float32)                # [H, Lq, Lk]
    s = s - jnp.max(s, axis=-1, keepdims=True)
    p = jnp.exp(s)
    p = p * pl.reciprocal(jnp.sum(p, axis=-1, keepdims=True), approx=True)
    o = jnp.einsum("hqk,hkd->hqd", p.astype(jnp.bfloat16), vh,
                   preferred_element_type=jnp.float32)                # [H, Lq, hd]
    # Output projection folded per head: concat_h(o_h) @ Wo == sum_h o_h @ Wo_h
    o = jnp.einsum("hqd,hdc->hqc", o.astype(jnp.bfloat16), woh,
                   preferred_element_type=jnp.float32)                # [H, Lq, C]
    out = bo + o[0]
    for h in range(1, nheads):
        out = out + o[h]
    return out                                                        # [Lq, C]


# ------------------- Buffered(1) (resident weights) support -------------------

def _probe_buffered_one():
    """Check whether this Pallas build accepts single-buffered invariant operands."""
    try:
        def k(x_ref, o_ref):
            o_ref[...] = x_ref[...] * 2.0

        y = pl.pallas_call(
            k,
            out_shape=jax.ShapeDtypeStruct((16, 128), jnp.float32),
            grid=(2,),
            in_specs=[pl.BlockSpec((8, 128), lambda i: (0, 0),
                                   pipeline_mode=pl.Buffered(1))],
            out_specs=pl.BlockSpec((8, 128), lambda i: (i, 0)),
        )(jnp.ones((8, 128), jnp.float32))
        jax.block_until_ready(y)
        return True
    except Exception:
        return False


_BUFFERED_ONE = _probe_buffered_one()


def _wspec(shape):
    """BlockSpec for a grid-invariant operand (weights / biases): constant
    index_map keeps it resident across grid steps; single-buffered when
    supported so ~MBs of weights are not double-buffered in VMEM."""
    idx = lambda *_: (0,) * len(shape)
    if _BUFFERED_ONE:
        return pl.BlockSpec(shape, idx, pipeline_mode=pl.Buffered(1))
    return pl.BlockSpec(shape, idx)


def _nbytes(shape, dtype):
    n = 1
    for d in shape:
        n *= int(d)
    return n * jnp.dtype(dtype).itemsize


def _vmem_limit(act_block_bytes, weight_bytes, extra_bytes=0):
    """Explicit scoped-VMEM budget: activation blocks are double-buffered by the
    pipeliner, weights use 1 or 2 buffers, plus in-kernel intermediates."""
    wbuf = 1 if _BUFFERED_ONE else 2
    est = 2 * act_block_bytes + wbuf * weight_bytes + extra_bytes
    est = int(1.5 * est) + (2 << 20)
    # Clamp to a window legal on every chip (v7x physical VMEM is 64 MiB).
    return max(32 << 20, min(est, 64 << 20))


def _q_tile(L, max_tile=256):
    """Largest multiple-of-8 query tile (<= max_tile) dividing L; whole L if small."""
    if L <= max_tile:
        return L
    best = L
    for t in range(8, max_tile + 1, 8):
        if L % t == 0:
            best = t
    return best


# --------------------------------- kernels ------------------------------------

def _embed_kernel(xp_ref, pos_ref, *refs):
    """Phase 1: patch embed (im2col matmul) + LayerNorm0 + self-attn K/V
    projections for one (batch, query-tile) block."""
    patch_w, patch_b, ln0g, ln0b, wk, bk, wv, bv = refs[:8]
    tok_ref, k_ref, v_ref = refs[8:]

    tok = _ln(_mm(xp_ref[0], patch_w[...]) + patch_b[...], ln0g[...], ln0b[...])
    pos = pos_ref[...]
    tok_ref[0] = tok                                                   # fp32
    # self-attn: k = (tok + pos) Wk + bk, v = tok Wv + bv  (different LHS ->
    # no fusion possible); stored bf16 for the attention matmuls.
    k_ref[0] = (_mm(tok + pos, wk[...]) + bk[...]).astype(jnp.bfloat16)
    v_ref[0] = (_mm(tok, wv[...]) + bv[...]).astype(jnp.bfloat16)


def _memkv_kernel(kv_ref, *refs, has_proj):
    """Phase 2: cross-attention memory K/V projections (+ optional CrossBlock.proj)."""
    it = iter(refs)
    if has_proj:
        proj_w, proj_b = next(it), next(it)
    wk, bk, wv, bv = next(it), next(it), next(it), next(it)
    k_ref, v_ref = next(it), next(it)

    kvm = kv_ref[0]                                                    # [Lkv, Ckv]
    if has_proj:
        kvm = _mm(kvm, proj_w[...]) + proj_b[...]
    # K and V share the LHS but stay as separate matmuls: fusing them needs a
    # lane split at offset C, which is only tile-aligned when C % 128 == 0.
    k_ref[0] = (_mm(kvm, wk[...]) + bk[...]).astype(jnp.bfloat16)
    v_ref[0] = (_mm(kvm, wv[...]) + bv[...]).astype(jnp.bfloat16)


def _block_kernel(tok_ref, pos_ref, ksf_ref, vsf_ref, kcr_ref, vcr_ref,
                  *refs, nheads):
    """Phase 3: self-attn + cross-attn + GELU FFN + the three post-LayerNorms
    for one (batch, query-tile) block.  Whole-sequence K/V stay VMEM-resident.
    TODO(synk): add an inner online-softmax loop over key tiles when
    H*tq*L*4 bytes exceeds the VMEM budget (very long L / v7x)."""
    o_ref = refs[-1]
    (sa_wq, sa_bq, sa_woh, sa_bo, ln1g, ln1b,
     ca_wq, ca_bq, ca_woh, ca_bo, ln2g, ln2b,
     w1, b1, w2, b2, ln3g, ln3b) = refs[:-1]

    tok = tok_ref[0]                                                   # [tq, C] fp32
    pos = pos_ref[...]

    # self-attention (q = k = tok + pos, v = tok), post-norm residual
    q = _mm(tok + pos, sa_wq[...]) + sa_bq[...]
    o = _mha(q, ksf_ref[0], vsf_ref[0], sa_woh[...], sa_bo[...], nheads)
    tok = _ln(tok + o, ln1g[...], ln1b[...])

    # cross-attention (q = tok + pos, k = v = memory; pos_kv is None)
    q = _mm(tok + pos, ca_wq[...]) + ca_bq[...]
    o = _mha(q, kcr_ref[0], vcr_ref[0], ca_woh[...], ca_bo[...], nheads)
    tok = _ln(tok + o, ln2g[...], ln2b[...])

    # FFN (gelu); elementwise math stays fp32 (v5e has no bf16 VPU/EUP path)
    h = _gelu(_mm(tok, w1[...]) + b1[...])
    h = _mm(h, w2[...]) + b2[...]
    tok = _ln(tok + h, ln3g[...], ln3b[...])

    o_ref[0] = tok


# ------------------------------ per-level wrapper ------------------------------

def level_forward(xp, kv, p, nheads):
    """xp: im2col'd patches [B, L, 3*r*r] (bf16); kv: memory [B, Lkv, kv_dim]
    (bf16).  Returns tokens [B, L, C] fp32."""
    B, L, Kp = xp.shape
    _, Lkv, Ckv = kv.shape
    C = p["ln0_g"].shape[1]
    H = nheads
    hd = C // H
    has_proj = "proj_w" in p
    tq = _q_tile(L)
    nlt = L // tq
    par2 = ("parallel", "parallel")

    # -------- phase 1: embed + LN0 + self-attn K/V, tiled over L --------------
    emb_w = [p[n] for n in ("patch_w", "patch_b", "ln0_g", "ln0_b",
                            "sa_wk", "sa_bk", "sa_wv", "sa_bv")]
    act = (_nbytes((tq, Kp), jnp.bfloat16) + _nbytes((tq, C), jnp.float32)
           + _nbytes((tq, C), jnp.float32) + 2 * _nbytes((tq, C), jnp.bfloat16))
    wb = sum(_nbytes(w.shape, w.dtype) for w in emb_w)
    tok0, kself, vself = pl.pallas_call(
        _embed_kernel,
        out_shape=(jax.ShapeDtypeStruct((B, L, C), jnp.float32),
                   jax.ShapeDtypeStruct((B, L, C), jnp.bfloat16),
                   jax.ShapeDtypeStruct((B, L, C), jnp.bfloat16)),
        grid=(B, nlt),
        in_specs=[pl.BlockSpec((1, tq, Kp), lambda b, t: (b, t, 0)),
                  pl.BlockSpec((tq, C), lambda b, t: (t, 0))]
                 + [_wspec(w.shape) for w in emb_w],
        out_specs=(pl.BlockSpec((1, tq, C), lambda b, t: (b, t, 0)),
                   pl.BlockSpec((1, tq, C), lambda b, t: (b, t, 0)),
                   pl.BlockSpec((1, tq, C), lambda b, t: (b, t, 0))),
        compiler_params=pltpu.CompilerParams(
            dimension_semantics=par2,
            vmem_limit_bytes=_vmem_limit(act, wb)),
    )(xp, p["pos"], *emb_w)

    # -------- phase 2: cross-attention memory K/V (+ proj) --------------------
    mem_w = ([p["proj_w"], p["proj_b"]] if has_proj else []) + \
            [p["ca_wk"], p["ca_bk"], p["ca_wv"], p["ca_bv"]]
    act = _nbytes((Lkv, Ckv), jnp.bfloat16) + 2 * _nbytes((Lkv, C), jnp.bfloat16)
    wb = sum(_nbytes(w.shape, w.dtype) for w in mem_w)
    kcross, vcross = pl.pallas_call(
        functools.partial(_memkv_kernel, has_proj=has_proj),
        out_shape=(jax.ShapeDtypeStruct((B, Lkv, C), jnp.bfloat16),
                   jax.ShapeDtypeStruct((B, Lkv, C), jnp.bfloat16)),
        grid=(B,),
        in_specs=[pl.BlockSpec((1, Lkv, Ckv), lambda b: (b, 0, 0))]
                 + [_wspec(w.shape) for w in mem_w],
        out_specs=(pl.BlockSpec((1, Lkv, C), lambda b: (b, 0, 0)),
                   pl.BlockSpec((1, Lkv, C), lambda b: (b, 0, 0))),
        compiler_params=pltpu.CompilerParams(
            dimension_semantics=("parallel",),
            vmem_limit_bytes=_vmem_limit(act, wb)),
    )(kv, *mem_w)

    # Head split of K/V and out_proj weights: wrapper-side layout plumbing only.
    ksf = kself.reshape(B, L, H, hd).transpose(0, 2, 1, 3)       # [B, H, L, hd]
    vsf = vself.reshape(B, L, H, hd).transpose(0, 2, 1, 3)
    kcr = kcross.reshape(B, Lkv, H, hd).transpose(0, 2, 1, 3)    # [B, H, Lkv, hd]
    vcr = vcross.reshape(B, Lkv, H, hd).transpose(0, 2, 1, 3)
    sa_woh = p["sa_wo"].reshape(H, hd, C)
    ca_woh = p["ca_wo"].reshape(H, hd, C)

    # -------- phase 3: attention + FFN per query tile -------------------------
    blk_w = [p["sa_wq"], p["sa_bq"], sa_woh, p["sa_bo"], p["ln1_g"], p["ln1_b"],
             p["ca_wq"], p["ca_bq"], ca_woh, p["ca_bo"], p["ln2_g"], p["ln2_b"],
             p["w1"], p["b1"], p["w2"], p["b2"], p["ln3_g"], p["ln3_b"]]
    act = (3 * _nbytes((tq, C), jnp.float32)                      # tok, pos, out
           + 2 * _nbytes((H, L, hd), jnp.bfloat16)                # self K/V
           + 2 * _nbytes((H, Lkv, hd), jnp.bfloat16))             # cross K/V
    extra = (_nbytes((H, tq, max(L, Lkv)), jnp.float32)           # score block
             + _nbytes((H, tq, C), jnp.float32)                   # per-head o-proj
             + _nbytes((tq, 4 * C), jnp.float32))                 # FFN intermediate
    wb = sum(_nbytes(w.shape, w.dtype) for w in blk_w)
    out = pl.pallas_call(
        functools.partial(_block_kernel, nheads=H),
        out_shape=jax.ShapeDtypeStruct((B, L, C), jnp.float32),
        grid=(B, nlt),
        in_specs=[pl.BlockSpec((1, tq, C), lambda b, t: (b, t, 0)),
                  pl.BlockSpec((tq, C), lambda b, t: (t, 0)),
                  pl.BlockSpec((1, H, L, hd), lambda b, t: (b, 0, 0, 0)),
                  pl.BlockSpec((1, H, L, hd), lambda b, t: (b, 0, 0, 0)),
                  pl.BlockSpec((1, H, Lkv, hd), lambda b, t: (b, 0, 0, 0)),
                  pl.BlockSpec((1, H, Lkv, hd), lambda b, t: (b, 0, 0, 0))]
                 + [_wspec(w.shape) for w in blk_w],
        out_specs=pl.BlockSpec((1, tq, C), lambda b, t: (b, t, 0)),
        compiler_params=pltpu.CompilerParams(
            dimension_semantics=par2,
            vmem_limit_bytes=_vmem_limit(act, wb, extra)),
    )(tok0, p["pos"], ksf, vsf, kcr, vcr, *blk_w)
    return out


# --------------------------------- forward -----------------------------------

def vit_pyramid_forward(params, imgs, fs, reductions, hidden_dims, nheads):
    B, Cin, Him, Wim = imgs.shape
    outs = []
    for i, r in enumerate(reductions):
        C = hidden_dims[i]
        nH, nW = Him // r, Wim // r
        # im2col for the strided Conv2d patch embed (wrapper-side layout only),
        # cast to bf16 at the HBM boundary (matmuls run in bf16 anyway).
        xp = imgs.reshape(B, Cin, nH, r, nW, r).transpose(0, 2, 4, 1, 3, 5)
        xp = xp.reshape(B, nH * nW, Cin * r * r).astype(jnp.bfloat16)
        f = fs[i]
        kv = f.reshape(B, hidden_dims[-1], f.shape[2] * f.shape[3])
        kv = kv.transpose(0, 2, 1).astype(jnp.bfloat16)
        out = level_forward(xp, kv, params[i], nheads)                 # [B, L, C]
        outs.append(out.transpose(0, 2, 1).reshape(B, C, nH, nW))      # NCHW
    outs.append(fs[-1])
    return outs


# ---------------------------- parameter construction --------------------------

def sine_pos_embed(H, W, C, temperature=10000.0):
    """2D sine positional embedding (DETR-style, normalized), returns [H*W, C]."""
    npf = C // 2
    scale = 2.0 * math.pi
    eps = 1e-6
    y_embed = jnp.broadcast_to(jnp.arange(1, H + 1, dtype=jnp.float32)[:, None], (H, W))
    x_embed = jnp.broadcast_to(jnp.arange(1, W + 1, dtype=jnp.float32)[None, :], (H, W))
    y_embed = y_embed / (H + eps) * scale
    x_embed = x_embed / (W + eps) * scale
    i = jnp.arange(npf, dtype=jnp.float32)
    dim_t = temperature ** (2.0 * jnp.floor(i / 2.0) / npf)
    pos_x = x_embed[:, :, None] / dim_t
    pos_y = y_embed[:, :, None] / dim_t
    pos_x = jnp.stack([jnp.sin(pos_x[:, :, 0::2]), jnp.cos(pos_x[:, :, 1::2])],
                      axis=3).reshape(H, W, npf)
    pos_y = jnp.stack([jnp.sin(pos_y[:, :, 0::2]), jnp.cos(pos_y[:, :, 1::2])],
                      axis=3).reshape(H, W, npf)
    return jnp.concatenate([pos_y, pos_x], axis=2).reshape(H * W, C)


def _dense(key, shape, std=0.02):
    return std * jax.random.normal(key, shape, dtype=jnp.float32)


def init_level_params(key, C, kv_dim, r, nheads, grid_side):
    hd = C // nheads
    scale = 1.0 / math.sqrt(hd)
    Kp = 3 * r * r
    ks = jax.random.split(key, 13)
    ones = jnp.ones((1, C), jnp.float32)
    zeros = jnp.zeros((1, C), jnp.float32)

    # Weights are stored input-major [in, out]; matmul weights in bf16.
    # NOTE: porting real PyTorch weights requires [out, in] -> [in, out]
    # transposes, conv weight [C, 3, r, r] -> [3*r*r, C], and scaling the real
    # q bias by 1/sqrt(hd) as well (zero here, so a no-op).
    s_wq, s_wk, s_wv, s_wo = (_dense(ks[i], (C, C)) for i in range(4))
    c_wq, c_wk, c_wv, c_wo = (_dense(ks[i], (C, C)) for i in range(4, 8))

    p = {
        "patch_w": _dense(ks[8], (Kp, C)).astype(jnp.bfloat16),
        "patch_b": _dense(ks[9], (C,)).reshape(1, C),
        "ln0_g": ones, "ln0_b": zeros,
        # self-attn (1/sqrt(hd) folded into q projection)
        "sa_wq": (s_wq * scale).astype(jnp.bfloat16), "sa_bq": zeros,
        "sa_wk": s_wk.astype(jnp.bfloat16), "sa_bk": zeros,
        "sa_wv": s_wv.astype(jnp.bfloat16), "sa_bv": zeros,
        "sa_wo": s_wo.astype(jnp.bfloat16), "sa_bo": zeros,
        "ln1_g": ones, "ln1_b": zeros,
        # cross-attn
        "ca_wq": (c_wq * scale).astype(jnp.bfloat16), "ca_bq": zeros,
        "ca_wk": c_wk.astype(jnp.bfloat16), "ca_bk": zeros,
        "ca_wv": c_wv.astype(jnp.bfloat16), "ca_bv": zeros,
        "ca_wo": c_wo.astype(jnp.bfloat16), "ca_bo": zeros,
        "ln2_g": ones, "ln2_b": zeros,
        # FFN
        "w1": _dense(ks[10], (C, 4 * C)).astype(jnp.bfloat16),
        "b1": jnp.zeros((1, 4 * C), jnp.float32),
        "w2": _dense(ks[11], (4 * C, C)).astype(jnp.bfloat16),
        "b2": zeros,
        "ln3_g": ones, "ln3_b": zeros,
        "pos": sine_pos_embed(grid_side, grid_side, C),
    }
    if C != kv_dim:  # CrossBlock.proj
        p["proj_w"] = _dense(ks[12], (kv_dim, C)).astype(jnp.bfloat16)
        p["proj_b"] = zeros
    return p


def init_vit_pyramid(key, reductions, hidden_dims, num_cross, nheads, image_size):
    kv_dim = hidden_dims[-1]
    keys = jax.random.split(key, num_cross)
    return [
        init_level_params(keys[i], hidden_dims[i], kv_dim, reductions[i],
                          nheads, image_size // reductions[i])
        for i in range(num_cross)
    ]


# ----------------------------------- main -------------------------------------

if __name__ == "__main__":
    reductions = (4, 8)
    hidden_dims = (32, 64)
    num_cross = 2
    nheads = 4
    image_size = 16

    key = jax.random.PRNGKey(0)
    k_param, k_img, k_f0, k_f1 = jax.random.split(key, 4)

    params = init_vit_pyramid(k_param, reductions, hidden_dims, num_cross,
                              nheads, image_size)

    imgs = jax.random.normal(k_img, (2, 3, image_size, image_size), jnp.float32)
    fs = [
        jax.random.normal(k_f0, (2, hidden_dims[-1], 4, 4), jnp.float32),
        jax.random.normal(k_f1, (2, hidden_dims[-1], 2, 2), jnp.float32),
    ]

    @jax.jit
    def fwd(params_, imgs_, fs_):
        return vit_pyramid_forward(params_, imgs_, fs_, reductions, hidden_dims, nheads)

    outs = fwd(params, imgs, fs)
    for o in outs:
        jax.block_until_ready(o)

    assert outs[0].shape == (2, 32, 4, 4)
    assert outs[1].shape == (2, 64, 2, 2)
    assert outs[2].shape == (2, 64, 2, 2)
    assert all(bool(jnp.all(jnp.isfinite(o))) for o in outs)
    print("KERNEL_OK")
</pallas_src>

<mosaic_0001>
module attributes {stable_mosaic.version = 11 : i64} {
  func.func @k(%arg0: i32, %arg1: memref<8x128xf32, #tpu.memory_space<vmem>>, %arg2: memref<8x128xf32, #tpu.memory_space<vmem>>) attributes {dimension_semantics = [#tpu.dimension_semantics<arbitrary>], iteration_bounds = array<i64: 2>, scalar_prefetch = 0 : i64, scratch_operands = 0 : i64, tpu.core_type = #tpu.core_type<tc>, window_params = [{pipeline_mode = #tpu.pipeline_mode<synchronous>, transform_indices = @transform_0, window_bounds = array<i64: 8, 128>}, {transform_indices = @transform_1, window_bounds = array<i64: 8, 128>}]} {
    %c0 = arith.constant 0 : index
    %c0_0 = arith.constant 0 : index
    %0 = vector.load %arg1[%c0, %c0_0] : memref<8x128xf32, #tpu.memory_space<vmem>>, vector<8x128xf32>
    %cst = arith.constant 2.000000e+00 : f32
    %1 = vector.broadcast %cst : f32 to vector<8x128xf32>
    %2 = arith.mulf %0, %1 : vector<8x128xf32>
    %c0_1 = arith.constant 0 : index
    %c0_2 = arith.constant 0 : index
    %3 = vector.load %arg2[%c0_1, %c0_2] : memref<8x128xf32, #tpu.memory_space<vmem>>, vector<8x128xf32>
    tpu.vector_store %arg2[%c0_1, %c0_2], %2 {strides = array<i32>} : memref<8x128xf32, #tpu.memory_space<vmem>>, vector<8x128xf32>,
    return
  }
  func.func @transform_0(%arg0: i32) -> (i32, i32) {
    %c0_i32 = arith.constant 0 : i32
    %c0_i32_0 = arith.constant 0 : i32
    %c0_i32_1 = arith.constant 0 : i32
    return %c0_i32, %c0_i32_0 : i32, i32
  }
  func.func @transform_1(%arg0: i32) -> (i32, i32) {
    %c0_i32 = arith.constant 0 : i32
    %c0_i32_0 = arith.constant 0 : i32
    return %arg0, %c0_i32 : i32, i32
  }
}

module attributes {stable_mosaic.version = 11 : i64} {
  func.func @_embed_kernel(%arg0: i32, %arg1: i32, %arg2: memref<1x4x192xbf16, #tpu.memory_space<vmem>>, %arg3: memref<4x64xf32, #tpu.memory_space<vmem>>, %arg4: memref<192x64xbf16, #tpu.memory_space<vmem>>, %arg5: memref<1x64xf32, #tpu.memory_space<vmem>>, %arg6: memref<1x64xf32, #tpu.memory_space<vmem>>, %arg7: memref<1x64xf32, #tpu.memory_space<vmem>>, %arg8: memref<64x64xbf16, #tpu.memory_space<vmem>>, %arg9: memref<1x64xf32, #tpu.memory_space<vmem>>, %arg10: memref<64x64xbf16, #tpu.memory_space<vmem>>, %arg11: memref<1x64xf32, #tpu.memory_space<vmem>>, %arg12: memref<1x4x64xf32, #tpu.memory_space<vmem>>, %arg13: memref<1x4x64xbf16, #tpu.memory_space<vmem>>, %arg14: memref<1x4x64xbf16, #tpu.memory_space<vmem>>) attributes {dimension_semantics = [#tpu.dimension_semantics<parallel>, #tpu.dimension_semantics<parallel>], iteration_bounds = array<i64: 2, 1>, scalar_prefetch = 0 : i64, scratch_operands = 0 : i64, tpu.core_type = #tpu.core_type<tc>, window_params = [{transform_indices = @transform_0, window_bounds = array<i64: 1, 4, 192>}, {transform_indices = @transform_1, window_bounds = array<i64: 4, 64>}, {pipeline_mode = #tpu.pipeline_mode<synchronous>, transform_indices = @transform_2, window_bounds = array<i64: 192, 64>}, {pipeline_mode = #tpu.pipeline_mode<synchronous>, transform_indices = @transform_3, window_bounds = array<i64: 1, 64>}, {pipeline_mode = #tpu.pipeline_mode<synchronous>, transform_indices = @transform_4, window_bounds = array<i64: 1, 64>}, {pipeline_mode = #tpu.pipeline_mode<synchronous>, transform_indices = @transform_5, window_bounds = array<i64: 1, 64>}, {pipeline_mode = #tpu.pipeline_mode<synchronous>, transform_indices = @transform_6, window_bounds = array<i64: 64, 64>}, {pipeline_mode = #tpu.pipeline_mode<synchronous>, transform_indices = @transform_7, window_bounds = array<i64: 1, 64>}, {pipeline_mode = #tpu.pipeline_mode<synchronous>, transform_indices = @transform_8, window_bounds = array<i64: 64, 64>}, {pipeline_mode = #tpu.pipeline_mode<synchronous>, transform_indices = @transform_9, window_bounds = array<i64: 1, 64>}, {transform_indices = @transform_10, window_bounds = array<i64: 1, 4, 64>}, {transform_indices = @transform_11, window_bounds = array<i64: 1, 4, 64>}, {transform_indices = @transform_12, window_bounds = array<i64: 1, 4, 64>}]} {
    %c0 = arith.constant 0 : index
    %c0_0 = arith.constant 0 : index
    %c0_1 = arith.constant 0 : index
    %0 = vector.load %arg2[%c0, %c0_0, %c0_1] : memref<1x4x192xbf16, #tpu.memory_space<vmem>>, vector<1x4x192xbf16>
    %1 = vector.shape_cast %0 : vector<1x4x192xbf16> to vector<4x192xbf16>
    %c0_2 = arith.constant 0 : index
    %c0_3 = arith.constant 0 : index
    %2 = vector.load %arg4[%c0_2, %c0_3] : memref<192x64xbf16, #tpu.memory_space<vmem>>, vector<192x64xbf16>
    %cst = arith.constant dense<0.000000e+00> : vector<4x64xf32>
    %3 = tpu.matmul %1, %2, %cst {dimension_numbers = #tpu.dot_dimension_numbers<[1], [0], [0], [1], [0, 0, 1, 1], [], []>} : vector<4x192xbf16>, vector<192x64xbf16>, vector<4x64xf32> -> vector<4x64xf32>
    %c0_4 = arith.constant 0 : index
    %c0_5 = arith.constant 0 : index
    %4 = vector.load %arg5[%c0_4, %c0_5] : memref<1x64xf32, #tpu.memory_space<vmem>>, vector<1x64xf32>
    %5 = vector.broadcast %4 : vector<1x64xf32> to vector<4x64xf32>
    %6 = arith.addf %3, %5 : vector<4x64xf32>
    %c0_6 = arith.constant 0 : index
    %c0_7 = arith.constant 0 : index
    %7 = vector.load %arg6[%c0_6, %c0_7] : memref<1x64xf32, #tpu.memory_space<vmem>>, vector<1x64xf32>
    %c0_8 = arith.constant 0 : index
    %c0_9 = arith.constant 0 : index
    %8 = vector.load %arg7[%c0_8, %c0_9] : memref<1x64xf32, #tpu.memory_space<vmem>>, vector<1x64xf32>
    %cst_10 = arith.constant dense<0.000000e+00> : vector<4xf32>
    %9 = vector.multi_reduction <add>, %6, %cst_10 [1] : vector<4x64xf32> to vector<4xf32>
    %10 = vector.shape_cast %9 : vector<4xf32> to vector<4x1xf32>
    %cst_11 = arith.constant 6.400000e+01 : f32
    %11 = vector.broadcast %cst_11 : f32 to vector<4x1xf32>
    %12 = arith.divf %10, %11 : vector<4x1xf32>
    %13 = vector.broadcast %12 : vector<4x1xf32> to vector<4x64xf32>
    %14 = arith.subf %6, %13 : vector<4x64xf32>
    %15 = arith.mulf %14, %14 : vector<4x64xf32>
    %cst_12 = arith.constant dense<0.000000e+00> : vector<4xf32>
    %16 = vector.multi_reduction <add>, %15, %cst_12 [1] : vector<4x64xf32> to vector<4xf32>
    %17 = vector.shape_cast %16 : vector<4xf32> to vector<4x1xf32>
    %cst_13 = arith.constant 6.400000e+01 : f32
    %18 = vector.broadcast %cst_13 : f32 to vector<4x1xf32>
    %19 = arith.divf %17, %18 : vector<4x1xf32>
    %20 = vector.broadcast %12 : vector<4x1xf32> to vector<4x64xf32>
    %21 = arith.subf %6, %20 : vector<4x64xf32>
    %cst_14 = arith.constant 9.99999974E-6 : f32
    %22 = vector.broadcast %cst_14 : f32 to vector<4x1xf32>
    %23 = arith.addf %19, %22 : vector<4x1xf32>
    %24 = math.rsqrt %23 : vector<4x1xf32>
    %25 = vector.broadcast %24 : vector<4x1xf32> to vector<4x64xf32>
    %26 = arith.mulf %21, %25 : vector<4x64xf32>
    %27 = vector.broadcast %7 : vector<1x64xf32> to vector<4x64xf32>
    %28 = arith.mulf %26, %27 : vector<4x64xf32>
    %29 = vector.broadcast %8 : vector<1x64xf32> to vector<4x64xf32>
    %30 = arith.addf %28, %29 : vector<4x64xf32>
    %c0_15 = arith.constant 0 : index
    %c0_16 = arith.constant 0 : index
    %31 = vector.load %arg3[%c0_15, %c0_16] : memref<4x64xf32, #tpu.memory_space<vmem>>, vector<4x64xf32>
    %c0_17 = arith.constant 0 : index
    %c0_18 = arith.constant 0 : index
    %c0_19 = arith.constant 0 : index
    %32 = vector.load %arg12[%c0_17, %c0_18, %c0_19] : memref<1x4x64xf32, #tpu.memory_space<vmem>>, vector<1x4x64xf32>
    %33 = vector.shape_cast %32 : vector<1x4x64xf32> to vector<4x64xf32>
    %34 = vector.shape_cast %30 : vector<4x64xf32> to vector<1x4x64xf32>
    tpu.vector_store %arg12[%c0_17, %c0_18, %c0_19], %34 {strides = array<i32>} : memref<1x4x64xf32, #tpu.memory_space<vmem>>, vector<1x4x64xf32>,
    %35 = arith.addf %30, %31 : vector<4x64xf32>
    %c0_20 = arith.constant 0 : index
    %c0_21 = arith.constant 0 : index
    %36 = vector.load %arg8[%c0_20, %c0_21] : memref<64x64xbf16, #tpu.memory_space<vmem>>, vector<64x64xbf16>
    %37 = arith.truncf %35 : vector<4x64xf32> to vector<4x64xbf16>
    %cst_22 = arith.constant dense<0.000000e+00> : vector<4x64xf32>
    %38 = tpu.matmul %37, %36, %cst_22 {dimension_numbers = #tpu.dot_dimension_numbers<[1], [0], [0], [1], [0, 0, 1, 1], [], []>} : vector<4x64xbf16>, vector<64x64xbf16>, vector<4x64xf32> -> vector<4x64xf32>
    %c0_23 = arith.constant 0 : index
    %c0_24 = arith.constant 0 : index
    %39 = vector.load %arg9[%c0_23, %c0_24] : memref<1x64xf32, #tpu.memory_space<vmem>>, vector<1x64xf32>
    %40 = vector.broadcast %39 : vector<1x64xf32> to vector<4x64xf32>
    %41 = arith.addf %38, %40 : vector<4x64xf32>
    %42 = arith.truncf %41 : vector<4x64xf32> to vector<4x64xbf16>
    %c0_25 = arith.constant 0 : index
    %c0_26 = arith.constant 0 : index
    %c0_27 = arith.constant 0 : index
    %43 = vector.load %arg13[%c0_25, %c0_26, %c0_27] : memref<1x4x64xbf16, #tpu.memory_space<vmem>>, vector<1x4x64xbf16>
    %44 = vector.shape_cast %43 : vector<1x4x64xbf16> to vector<4x64xbf16>
    %45 = vector.shape_cast %42 : vector<4x64xbf16> to vector<1x4x64xbf16>
    tpu.vector_store %arg13[%c0_25, %c0_26, %c0_27], %45 {strides = array<i32>} : memref<1x4x64xbf16, #tpu.memory_space<vmem>>, vector<1x4x64xbf16>,
    %c0_28 = arith.constant 0 : index
    %c0_29 = arith.constant 0 : index
    %46 = vector.load %arg10[%c0_28, %c0_29] : memref<64x64xbf16, #tpu.memory_space<vmem>>, vector<64x64xbf16>
    %47 = arith.truncf %30 : vector<4x64xf32> to vector<4x64xbf16>
    %cst_30 = arith.constant dense<0.000000e+00> : vector<4x64xf32>
    %48 = tpu.matmul %47, %46, %cst_30 {dimension_numbers = #tpu.dot_dimension_numbers<[1], [0], [0], [1], [0, 0, 1, 1], [], []>} : vector<4x64xbf16>, vector<64x64xbf16>, vector<4x64xf32> -> vector<4x64xf32>
    %c0_31 = arith.constant 0 : index
    %c0_32 = arith.constant 0 : index
    %49 = vector.load %arg11[%c0_31, %c0_32] : memref<1x64xf32, #tpu.memory_space<vmem>>, vector<1x64xf32>
    %50 = vector.broadcast %49 : vector<1x64xf32> to vector<4x64xf32>
    %51 = arith.addf %48, %50 : vector<4x64xf32>
    %52 = arith.truncf %51 : vector<4x64xf32> to vector<4x64xbf16>
    %c0_33 = arith.constant 0 : index
    %c0_34 = arith.constant 0 : index
    %c0_35 = arith.constant 0 : index
    %53 = vector.load %arg14[%c0_33, %c0_34, %c0_35] : memref<1x4x64xbf16, #tpu.memory_space<vmem>>, vector<1x4x64xbf16>
    %54 = vector.shape_cast %53 : vector<1x4x64xbf16> to vector<4x64xbf16>
    %55 = vector.shape_cast %52 : vector<4x64xbf16> to vector<1x4x64xbf16>
    tpu.vector_store %arg14[%c0_33, %c0_34, %c0_35], %55 {strides = array<i32>} : memref<1x4x64xbf16, #tpu.memory_space<vmem>>, vector<1x4x64xbf16>,
    return
  }
  func.func @transform_0(%arg0: i32, %arg1: i32) -> (i32, i32, i32) {
    %c0_i32 = arith.constant 0 : i32
    %c0_i32_0 = arith.constant 0 : i32
    return %arg0, %arg1, %c0_i32 : i32, i32, i32
  }
  func.func @transform_1(%arg0: i32, %arg1: i32) -> (i32, i32) {
    %c0_i32 = arith.constant 0 : i32
    %c0_i32_0 = arith.constant 0 : i32
    return %arg1, %c0_i32 : i32, i32
  }
  func.func @transform_2(%arg0: i32, %arg1: i32) -> (i32, i32) {
    %c0_i32 = arith.constant 0 : i32
    %c0_i32_0 = arith.constant 0 : i32
    %c0_i32_1 = arith.constant 0 : i32
    return %c0_i32, %c0_i32_0 : i32, i32
  }
  func.func @transform_3(%arg0: i32, %arg1: i32) -> (i32, i32) {
    %c0_i32 = arith.constant 0 : i32
    %c0_i32_0 = arith.constant 0 : i32
    %c0_i32_1 = arith.constant 0 : i32
    return %c0_i32, %c0_i32_0 : i32, i32
  }
  func.func @transform_4(%arg0: i32, %arg1: i32) -> (i32, i32) {
    %c0_i32 = arith.constant 0 : i32
    %c0_i32_0 = arith.constant 0 : i32
    %c0_i32_1 = arith.constant 0 : i32
    return %c0_i32, %c0_i32_0 : i32, i32
  }
  func.func @transform_5(%arg0: i32, %arg1: i32) -> (i32, i32) {
    %c0_i32 = arith.constant 0 : i32
    %c0_i32_0 = arith.constant 0 : i32
    %c0_i32_1 = arith.constant 0 : i32
    return %c0_i32, %c0_i32_0 : i32, i32
  }
  func.func @transform_6(%arg0: i32, %arg1: i32) -> (i32, i32) {
    %c0_i32 = arith.constant 0 : i32
    %c0_i32_0 = arith.constant 0 : i32
    %c0_i32_1 = arith.constant 0 : i32
    return %c0_i32, %c0_i32_0 : i32, i32
  }
  func.func @transform_7(%arg0: i32, %arg1: i32) -> (i32, i32) {
    %c0_i32 = arith.constant 0 : i32
    %c0_i32_0 = arith.constant 0 : i32
    %c0_i32_1 = arith.constant 0 : i32
    return %c0_i32, %c0_i32_0 : i32, i32
  }
  func.func @transform_8(%arg0: i32, %arg1: i32) -> (i32, i32) {
    %c0_i32 = arith.constant 0 : i32
    %c0_i32_0 = arith.constant 0 : i32
    %c0_i32_1 = arith.constant 0 : i32
    return %c0_i32, %c0_i32_0 : i32, i32
  }
  func.func @transform_9(%arg0: i32, %arg1: i32) -> (i32, i32) {
    %c0_i32 = arith.constant 0 : i32
    %c0_i32_0 = arith.constant 0 : i32
    %c0_i32_1 = arith.constant 0 : i32
    return %c0_i32, %c0_i32_0 : i32, i32
  }
  func.func @transform_10(%arg0: i32, %arg1: i32) -> (i32, i32, i32) {
    %c0_i32 = arith.constant 0 : i32
    %c0_i32_0 = arith.constant 0 : i32
    return %arg0, %arg1, %c0_i32 : i32, i32, i32
  }
  func.func @transform_11(%arg0: i32, %arg1: i32) -> (i32, i32, i32) {
    %c0_i32 = arith.constant 0 : i32
    %c0_i32_0 = arith.constant 0 : i32
    return %arg0, %arg1, %c0_i32 : i32, i32, i32
  }
  func.func @transform_12(%arg0: i32, %arg1: i32) -> (i32, i32, i32) {
    %c0_i32 = arith.constant 0 : i32
    %c0_i32_0 = arith.constant 0 : i32
    return %arg0, %arg1, %c0_i32 : i32, i32, i32
  }
}

module attributes {stable_mosaic.version = 11 : i64} {
  func.func @_memkv_kernel(%arg0: i32, %arg1: memref<1x4x64xbf16, #tpu.memory_space<vmem>>, %arg2: memref<64x64xbf16, #tpu.memory_space<vmem>>, %arg3: memref<1x64xf32, #tpu.memory_space<vmem>>, %arg4: memref<64x64xbf16, #tpu.memory_space<vmem>>, %arg5: memref<1x64xf32, #tpu.memory_space<vmem>>, %arg6: memref<1x4x64xbf16, #tpu.memory_space<vmem>>, %arg7: memref<1x4x64xbf16, #tpu.memory_space<vmem>>) attributes {dimension_semantics = [#tpu.dimension_semantics<parallel>], iteration_bounds = array<i64: 2>, scalar_prefetch = 0 : i64, scratch_operands = 0 : i64, tpu.core_type = #tpu.core_type<tc>, window_params = [{transform_indices = @transform_0, window_bounds = array<i64: 1, 4, 64>}, {pipeline_mode = #tpu.pipeline_mode<synchronous>, transform_indices = @transform_1, window_bounds = array<i64: 64, 64>}, {pipeline_mode = #tpu.pipeline_mode<synchronous>, transform_indices = @transform_2, window_bounds = array<i64: 1, 64>}, {pipeline_mode = #tpu.pipeline_mode<synchronous>, transform_indices = @transform_3, window_bounds = array<i64: 64, 64>}, {pipeline_mode = #tpu.pipeline_mode<synchronous>, transform_indices = @transform_4, window_bounds = array<i64: 1, 64>}, {transform_indices = @transform_5, window_bounds = array<i64: 1, 4, 64>}, {transform_indices = @transform_6, window_bounds = array<i64: 1, 4, 64>}]} {
    %c0 = arith.constant 0 : index
    %c0_0 = arith.constant 0 : index
    %c0_1 = arith.constant 0 : index
    %0 = vector.load %arg1[%c0, %c0_0, %c0_1] : memref<1x4x64xbf16, #tpu.memory_space<vmem>>, vector<1x4x64xbf16>
    %1 = vector.shape_cast %0 : vector<1x4x64xbf16> to vector<4x64xbf16>
    %c0_2 = arith.constant 0 : index
    %c0_3 = arith.constant 0 : index
    %2 = vector.load %arg2[%c0_2, %c0_3] : memref<64x64xbf16, #tpu.memory_space<vmem>>, vector<64x64xbf16>
    %cst = arith.constant dense<0.000000e+00> : vector<4x64xf32>
    %3 = tpu.matmul %1, %2, %cst {dimension_numbers = #tpu.dot_dimension_numbers<[1], [0], [0], [1], [0, 0, 1, 1], [], []>} : vector<4x64xbf16>, vector<64x64xbf16>, vector<4x64xf32> -> vector<4x64xf32>
    %c0_4 = arith.constant 0 : index
    %c0_5 = arith.constant 0 : index
    %4 = vector.load %arg3[%c0_4, %c0_5] : memref<1x64xf32, #tpu.memory_space<vmem>>, vector<1x64xf32>
    %5 = vector.broadcast %4 : vector<1x64xf32> to vector<4x64xf32>
    %6 = arith.addf %3, %5 : vector<4x64xf32>
    %7 = arith.truncf %6 : vector<4x64xf32> to vector<4x64xbf16>
    %c0_6 = arith.constant 0 : index
    %c0_7 = arith.constant 0 : index
    %c0_8 = arith.constant 0 : index
    %8 = vector.load %arg6[%c0_6, %c0_7, %c0_8] : memref<1x4x64xbf16, #tpu.memory_space<vmem>>, vector<1x4x64xbf16>
    %9 = vector.shape_cast %8 : vector<1x4x64xbf16> to vector<4x64xbf16>
    %10 = vector.shape_cast %7 : vector<4x64xbf16> to vector<1x4x64xbf16>
    tpu.vector_store %arg6[%c0_6, %c0_7, %c0_8], %10 {strides = array<i32>} : memref<1x4x64xbf16, #tpu.memory_space<vmem>>, vector<1x4x64xbf16>,
    %c0_9 = arith.constant 0 : index
    %c0_10 = arith.constant 0 : index
    %11 = vector.load %arg4[%c0_9, %c0_10] : memref<64x64xbf16, #tpu.memory_space<vmem>>, vector<64x64xbf16>
    %cst_11 = arith.constant dense<0.000000e+00> : vector<4x64xf32>
    %12 = tpu.matmul %1, %11, %cst_11 {dimension_numbers = #tpu.dot_dimension_numbers<[1], [0], [0], [1], [0, 0, 1, 1], [], []>} : vector<4x64xbf16>, vector<64x64xbf16>, vector<4x64xf32> -> vector<4x64xf32>
    %c0_12 = arith.constant 0 : index
    %c0_13 = arith.constant 0 : index
    %13 = vector.load %arg5[%c0_12, %c0_13] : memref<1x64xf32, #tpu.memory_space<vmem>>, vector<1x64xf32>
    %14 = vector.broadcast %13 : vector<1x64xf32> to vector<4x64xf32>
    %15 = arith.addf %12, %14 : vector<4x64xf32>
    %16 = arith.truncf %15 : vector<4x64xf32> to vector<4x64xbf16>
    %c0_14 = arith.constant 0 : index
    %c0_15 = arith.constant 0 : index
    %c0_16 = arith.constant 0 : index
    %17 = vector.load %arg7[%c0_14, %c0_15, %c0_16] : memref<1x4x64xbf16, #tpu.memory_space<vmem>>, vector<1x4x64xbf16>
    %18 = vector.shape_cast %17 : vector<1x4x64xbf16> to vector<4x64xbf16>
    %19 = vector.shape_cast %16 : vector<4x64xbf16> to vector<1x4x64xbf16>
    tpu.vector_store %arg7[%c0_14, %c0_15, %c0_16], %19 {strides = array<i32>} : memref<1x4x64xbf16, #tpu.memory_space<vmem>>, vector<1x4x64xbf16>,
    return
  }
  func.func @transform_0(%arg0: i32) -> (i32, i32, i32) {
    %c0_i32 = arith.constant 0 : i32
    %c0_i32_0 = arith.constant 0 : i32
    %c0_i32_1 = arith.constant 0 : i32
    return %arg0, %c0_i32, %c0_i32_0 : i32, i32, i32
  }
  func.func @transform_1(%arg0: i32) -> (i32, i32) {
    %c0_i32 = arith.constant 0 : i32
    %c0_i32_0 = arith.constant 0 : i32
    %c0_i32_1 = arith.constant 0 : i32
    return %c0_i32, %c0_i32_0 : i32, i32
  }
  func.func @transform_2(%arg0: i32) -> (i32, i32) {
    %c0_i32 = arith.constant 0 : i32
    %c0_i32_0 = arith.constant 0 : i32
    %c0_i32_1 = arith.constant 0 : i32
    return %c0_i32, %c0_i32_0 : i32, i32
  }
  func.func @transform_3(%arg0: i32) -> (i32, i32) {
    %c0_i32 = arith.constant 0 : i32
    %c0_i32_0 = arith.constant 0 : i32
    %c0_i32_1 = arith.constant 0 : i32
    return %c0_i32, %c0_i32_0 : i32, i32
  }
  func.func @transform_4(%arg0: i32) -> (i32, i32) {
    %c0_i32 = arith.constant 0 : i32
    %c0_i32_0 = arith.constant 0 : i32
    %c0_i32_1 = arith.constant 0 : i32
    return %c0_i32, %c0_i32_0 : i32, i32
  }
  func.func @transform_5(%arg0: i32) -> (i32, i32, i32) {
    %c0_i32 = arith.constant 0 : i32
    %c0_i32_0 = arith.constant 0 : i32
    %c0_i32_1 = arith.constant 0 : i32
    return %arg0, %c0_i32, %c0_i32_0 : i32, i32, i32
  }
  func.func @transform_6(%arg0: i32) -> (i32, i32, i32) {
    %c0_i32 = arith.constant 0 : i32
    %c0_i32_0 = arith.constant 0 : i32
    %c0_i32_1 = arith.constant 0 : i32
    return %arg0, %c0_i32, %c0_i32_0 : i32, i32, i32
  }
}

module attributes {stable_mosaic.version = 11 : i64} {
  func.func @_block_kernel(%arg0: i32, %arg1: i32, %arg2: memref<1x4x64xf32, #tpu.memory_space<vmem>>, %arg3: memref<4x64xf32, #tpu.memory_space<vmem>>, %arg4: memref<1x4x4x16xbf16, #tpu.memory_space<vmem>>, %arg5: memref<1x4x4x16xbf16, #tpu.memory_space<vmem>>, %arg6: memref<1x4x4x16xbf16, #tpu.memory_space<vmem>>, %arg7: memref<1x4x4x16xbf16, #tpu.memory_space<vmem>>, %arg8: memref<64x64xbf16, #tpu.memory_space<vmem>>, %arg9: memref<1x64xf32, #tpu.memory_space<vmem>>, %arg10: memref<4x16x64xbf16, #tpu.memory_space<vmem>>, %arg11: memref<1x64xf32, #tpu.memory_space<vmem>>, %arg12: memref<1x64xf32, #tpu.memory_space<vmem>>, %arg13: memref<1x64xf32, #tpu.memory_space<vmem>>, %arg14: memref<64x64xbf16, #tpu.memory_space<vmem>>, %arg15: memref<1x64xf32, #tpu.memory_space<vmem>>, %arg16: memref<4x16x64xbf16, #tpu.memory_space<vmem>>, %arg17: memref<1x64xf32, #tpu.memory_space<vmem>>, %arg18: memref<1x64xf32, #tpu.memory_space<vmem>>, %arg19: memref<1x64xf32, #tpu.memory_space<vmem>>, %arg20: memref<64x256xbf16, #tpu.memory_space<vmem>>, %arg21: memref<1x256xf32, #tpu.memory_space<vmem>>, %arg22: memref<256x64xbf16, #tpu.memory_space<vmem>>, %arg23: memref<1x64xf32, #tpu.memory_space<vmem>>, %arg24: memref<1x64xf32, #tpu.memory_space<vmem>>, %arg25: memref<1x64xf32, #tpu.memory_space<vmem>>, %arg26: memref<1x4x64xf32, #tpu.memory_space<vmem>>) attributes {dimension_semantics = [#tpu.dimension_semantics<parallel>, #tpu.dimension_semantics<parallel>], iteration_bounds = array<i64: 2, 1>, scalar_prefetch = 0 : i64, scratch_operands = 0 : i64, tpu.core_type = #tpu.core_type<tc>, window_params = [{transform_indices = @transform_0, window_bounds = array<i64: 1, 4, 64>}, {transform_indices = @transform_1, window_bounds = array<i64: 4, 64>}, {transform_indices = @transform_2, window_bounds = array<i64: 1, 4, 4, 16>}, {transform_indices = @transform_3, window_bounds = array<i64: 1, 4, 4, 16>}, {transform_indices = @transform_4, window_bounds = array<i64: 1, 4, 4, 16>}, {transform_indices = @transform_5, window_bounds = array<i64: 1, 4, 4, 16>}, {pipeline_mode = #tpu.pipeline_mode<synchronous>, transform_indices = @transform_6, window_bounds = array<i64: 64, 64>}, {pipeline_mode = #tpu.pipeline_mode<synchronous>, transform_indices = @transform_7, window_bounds = array<i64: 1, 64>}, {pipeline_mode = #tpu.pipeline_mode<synchronous>, transform_indices = @transform_8, window_bounds = array<i64: 4, 16, 64>}, {pipeline_mode = #tpu.pipeline_mode<synchronous>, transform_indices = @transform_9, window_bounds = array<i64: 1, 64>}, {pipeline_mode = #tpu.pipeline_mode<synchronous>, transform_indices = @transform_10, window_bounds = array<i64: 1, 64>}, {pipeline_mode = #tpu.pipeline_mode<synchronous>, transform_indices = @transform_11, window_bounds = array<i64: 1, 64>}, {pipeline_mode = #tpu.pipeline_mode<synchronous>, transform_indices = @transform_12, window_bounds = array<i64: 64, 64>}, {pipeline_mode = #tpu.pipeline_mode<synchronous>, transform_indices = @transform_13, window_bounds = array<i64: 1, 64>}, {pipeline_mode = #tpu.pipeline_mode<synchronous>, transform_indices = @transform_14, window_bounds = array<i64: 4, 16, 64>}, {pipeline_mode = #tpu.pipeline_mode<synchronous>, transform_indices = @transform_15, window_bounds = array<i64: 1, 64>}, {pipeline_mode = #tpu.pipeline_mode<synchronous>, transform_indices = @transform_16, window_bounds = array<i64: 1, 64>}, {pipeline_mode = #tpu.pipeline_mode<synchronous>, transform_indices = @transform_17, window_bounds = array<i64: 1, 64>}, {pipeline_mode = #tpu.pipeline_mode<synchronous>, transform_indices = @transform_18, window_bounds = array<i64: 64, 256>}, {pipeline_mode = #tpu.pipeline_mode<synchronous>, transform_indices = @transform_19, window_bounds = array<i64: 1, 256>}, {pipeline_mode = #tpu.pipeline_mode<synchronous>, transform_indices = @transform_20, window_bounds = array<i64: 256, 64>}, {pipeline_mode = #tpu.pipeline_mode<synchronous>, transform_indices = @transform_21, window_bounds = array<i64: 1, 64>}, {pipeline_mode = #tpu.pipeline_mode<synchronous>, transform_indices = @transform_22, window_bounds = array<i64: 1, 64>}, {pipeline_mode = #tpu.pipeline_mode<synchronous>, transform_indices = @transform_23, window_bounds = array<i64: 1, 64>}, {transform_indices = @transform_24, window_bounds = array<i64: 1, 4, 64>}]} {
    %c0 = arith.constant 0 : index
    %c0_0 = arith.constant 0 : index
    %c0_1 = arith.constant 0 : index
    %0 = vector.load %arg2[%c0, %c0_0, %c0_1] : memref<1x4x64xf32, #tpu.memory_space<vmem>>, vector<1x4x64xf32>
    %1 = vector.shape_cast %0 : vector<1x4x64xf32> to vector<4x64xf32>
    %c0_2 = arith.constant 0 : index
    %c0_3 = arith.constant 0 : index
    %2 = vector.load %arg3[%c0_2, %c0_3] : memref<4x64xf32, #tpu.memory_space<vmem>>, vector<4x64xf32>
    %3 = arith.addf %1, %2 : vector<4x64xf32>
    %c0_4 = arith.constant 0 : index
    %c0_5 = arith.constant 0 : index
    %4 = vector.load %arg8[%c0_4, %c0_5] : memref<64x64xbf16, #tpu.memory_space<vmem>>, vector<64x64xbf16>
    %5 = arith.truncf %3 : vector<4x64xf32> to vector<4x64xbf16>
    %cst = arith.constant dense<0.000000e+00> : vector<4x64xf32>
    %6 = tpu.matmul %5, %4, %cst {dimension_numbers = #tpu.dot_dimension_numbers<[1], [0], [0], [1], [0, 0, 1, 1], [], []>} : vector<4x64xbf16>, vector<64x64xbf16>, vector<4x64xf32> -> vector<4x64xf32>
    %c0_6 = arith.constant 0 : index
    %c0_7 = arith.constant 0 : index
    %7 = vector.load %arg9[%c0_6, %c0_7] : memref<1x64xf32, #tpu.memory_space<vmem>>, vector<1x64xf32>
    %8 = vector.broadcast %7 : vector<1x64xf32> to vector<4x64xf32>
    %9 = arith.addf %6, %8 : vector<4x64xf32>
    %c0_8 = arith.constant 0 : index
    %c0_9 = arith.constant 0 : index
    %c0_10 = arith.constant 0 : index
    %c0_11 = arith.constant 0 : index
    %10 = vector.load %arg4[%c0_8, %c0_9, %c0_10, %c0_11] : memref<1x4x4x16xbf16, #tpu.memory_space<vmem>>, vector<1x4x4x16xbf16>
    %11 = vector.shape_cast %10 : vector<1x4x4x16xbf16> to vector<4x4x16xbf16>
    %c0_12 = arith.constant 0 : index
    %c0_13 = arith.constant 0 : index
    %c0_14 = arith.constant 0 : index
    %c0_15 = arith.constant 0 : index
    %12 = vector.load %arg5[%c0_12, %c0_13, %c0_14, %c0_15] : memref<1x4x4x16xbf16, #tpu.memory_space<vmem>>, vector<1x4x4x16xbf16>
    %13 = vector.shape_cast %12 : vector<1x4x4x16xbf16> to vector<4x4x16xbf16>
    %c0_16 = arith.constant 0 : index
    %c0_17 = arith.constant 0 : index
    %c0_18 = arith.constant 0 : index
    %14 = vector.load %arg10[%c0_16, %c0_17, %c0_18] : memref<4x16x64xbf16, #tpu.memory_space<vmem>>, vector<4x16x64xbf16>
    %c0_19 = arith.constant 0 : index
    %c0_20 = arith.constant 0 : index
    %15 = vector.load %arg11[%c0_19, %c0_20] : memref<1x64xf32, #tpu.memory_space<vmem>>, vector<1x64xf32>
    %16 = vector.extract_strided_slice %9 {offsets = [0, 0], sizes = [4, 16], strides = [1, 1]} : vector<4x64xf32> to vector<4x16xf32>
    %17 = vector.extract_strided_slice %9 {offsets = [0, 16], sizes = [4, 16], strides = [1, 1]} : vector<4x64xf32> to vector<4x16xf32>
    %18 = vector.extract_strided_slice %9 {offsets = [0, 32], sizes = [4, 16], strides = [1, 1]} : vector<4x64xf32> to vector<4x16xf32>
    %19 = vector.extract_strided_slice %9 {offsets = [0, 48], sizes = [4, 16], strides = [1, 1]} : vector<4x64xf32> to vector<4x16xf32>
    %20 = vector.shape_cast %16 : vector<4x16xf32> to vector<1x4x16xf32>
    %21 = vector.shape_cast %17 : vector<4x16xf32> to vector<1x4x16xf32>
    %22 = vector.shape_cast %18 : vector<4x16xf32> to vector<1x4x16xf32>
    %23 = vector.shape_cast %19 : vector<4x16xf32> to vector<1x4x16xf32>
    %24 = tpu.concatenate %20, %21, %22, %23 in 0 : vector<1x4x16xf32>, vector<1x4x16xf32>, vector<1x4x16xf32>, vector<1x4x16xf32> -> vector<4x4x16xf32>
    %25 = arith.truncf %24 : vector<4x4x16xf32> to vector<4x4x16xbf16>
    "tpu.trace_start"() <{level = 10 : i32, message = "hqd,hkd->hqk"}> : () -> ()
    %cst_21 = arith.constant dense<0.000000e+00> : vector<4x4x4xf32>
    %26 = tpu.matmul %25, %11, %cst_21 {dimension_numbers = #tpu.dot_dimension_numbers<[2], [2], [1], [1], [0, 0, 0, 1, 1, 1], [0], [0]>} : vector<4x4x16xbf16>, vector<4x4x16xbf16>, vector<4x4x4xf32> -> vector<4x4x4xf32>
    "tpu.trace_stop"() : () -> ()
    %cst_22 = arith.constant dense<0xFF800000> : vector<4x4xf32>
    %27 = vector.multi_reduction <maximumf>, %26, %cst_22 [2] : vector<4x4x4xf32> to vector<4x4xf32>
    %28 = vector.shape_cast %27 : vector<4x4xf32> to vector<4x4x1xf32>
    %29 = vector.broadcast %28 : vector<4x4x1xf32> to vector<4x4x4xf32>
    %30 = arith.subf %26, %29 : vector<4x4x4xf32>
    %31 = math.exp %30 : vector<4x4x4xf32>
    %cst_23 = arith.constant dense<0.000000e+00> : vector<4x4xf32>
    %32 = vector.multi_reduction <add>, %31, %cst_23 [2] : vector<4x4x4xf32> to vector<4x4xf32>
    %33 = vector.shape_cast %32 : vector<4x4xf32> to vector<4x4x1xf32>
    %34 = tpu.reciprocal %33 {approx = true} : vector<4x4x1xf32> -> vector<4x4x1xf32>
    %35 = vector.broadcast %34 : vector<4x4x1xf32> to vector<4x4x4xf32>
    %36 = arith.mulf %31, %35 : vector<4x4x4xf32>
    %37 = arith.truncf %36 : vector<4x4x4xf32> to vector<4x4x4xbf16>
    "tpu.trace_start"() <{level = 10 : i32, message = "hqk,hkd->hqd"}> : () -> ()
    %cst_24 = arith.constant dense<0.000000e+00> : vector<4x4x16xf32>
    %38 = tpu.matmul %37, %13, %cst_24 {dimension_numbers = #tpu.dot_dimension_numbers<[2], [1], [1], [2], [0, 0, 0, 1, 1, 2], [0], [0]>} : vector<4x4x4xbf16>, vector<4x4x16xbf16>, vector<4x4x16xf32> -> vector<4x4x16xf32>
    "tpu.trace_stop"() : () -> ()
    %39 = arith.truncf %38 : vector<4x4x16xf32> to vector<4x4x16xbf16>
    "tpu.trace_start"() <{level = 10 : i32, message = "hqd,hdc->hqc"}> : () -> ()
    %cst_25 = arith.constant dense<0.000000e+00> : vector<4x4x64xf32>
    %40 = tpu.matmul %39, %14, %cst_25 {dimension_numbers = #tpu.dot_dimension_numbers<[2], [1], [1], [2], [0, 0, 0, 1, 1, 2], [0], [0]>} : vector<4x4x16xbf16>, vector<4x16x64xbf16>, vector<4x4x64xf32> -> vector<4x4x64xf32>
    "tpu.trace_stop"() : () -> ()
    %41 = vector.extract_strided_slice %40 {offsets = [0, 0, 0], sizes = [1, 4, 64], strides = [1, 1, 1]} : vector<4x4x64xf32> to vector<1x4x64xf32>
    %42 = vector.shape_cast %41 : vector<1x4x64xf32> to vector<4x64xf32>
    %43 = vector.broadcast %15 : vector<1x64xf32> to vector<4x64xf32>
    %44 = arith.addf %43, %42 : vector<4x64xf32>
    %45 = vector.extract_strided_slice %40 {offsets = [1, 0, 0], sizes = [1, 4, 64], strides = [1, 1, 1]} : vector<4x4x64xf32> to vector<1x4x64xf32>
    %46 = vector.shape_cast %45 : vector<1x4x64xf32> to vector<4x64xf32>
    %47 = arith.addf %44, %46 : vector<4x64xf32>
    %48 = vector.extract_strided_slice %40 {offsets = [2, 0, 0], sizes = [1, 4, 64], strides = [1, 1, 1]} : vector<4x4x64xf32> to vector<1x4x64xf32>
    %49 = vector.shape_cast %48 : vector<1x4x64xf32> to vector<4x64xf32>
    %50 = arith.addf %47, %49 : vector<4x64xf32>
    %51 = vector.extract_strided_slice %40 {offsets = [3, 0, 0], sizes = [1, 4, 64], strides = [1, 1, 1]} : vector<4x4x64xf32> to vector<1x4x64xf32>
    %52 = vector.shape_cast %51 : vector<1x4x64xf32> to vector<4x64xf32>
    %53 = arith.addf %50, %52 : vector<4x64xf32>
    %54 = arith.addf %1, %53 : vector<4x64xf32>
    %c0_26 = arith.constant 0 : index
    %c0_27 = arith.constant 0 : index
    %55 = vector.load %arg12[%c0_26, %c0_27] : memref<1x64xf32, #tpu.memory_space<vmem>>, vector<1x64xf32>
    %c0_28 = arith.constant 0 : index
    %c0_29 = arith.constant 0 : index
    %56 = vector.load %arg13[%c0_28, %c0_29] : memref<1x64xf32, #tpu.memory_space<vmem>>, vector<1x64xf32>
    %cst_30 = arith.constant dense<0.000000e+00> : vector<4xf32>
    %57 = vector.multi_reduction <add>, %54, %cst_30 [1] : vector<4x64xf32> to vector<4xf32>
    %58 = vector.shape_cast %57 : vector<4xf32> to vector<4x1xf32>
    %cst_31 = arith.constant 6.400000e+01 : f32
    %59 = vector.broadcast %cst_31 : f32 to vector<4x1xf32>
    %60 = arith.divf %58, %59 : vector<4x1xf32>
    %61 = vector.broadcast %60 : vector<4x1xf32> to vector<4x64xf32>
    %62 = arith.subf %54, %61 : vector<4x64xf32>
    %63 = arith.mulf %62, %62 : vector<4x64xf32>
    %cst_32 = arith.constant dense<0.000000e+00> : vector<4xf32>
    %64 = vector.multi_reduction <add>, %63, %cst_32 [1] : vector<4x64xf32> to vector<4xf32>
    %65 = vector.shape_cast %64 : vector<4xf32> to vector<4x1xf32>
    %cst_33 = arith.constant 6.400000e+01 : f32
    %66 = vector.broadcast %cst_33 : f32 to vector<4x1xf32>
    %67 = arith.divf %65, %66 : vector<4x1xf32>
    %68 = vector.broadcast %60 : vector<4x1xf32> to vector<4x64xf32>
    %69 = arith.subf %54, %68 : vector<4x64xf32>
    %cst_34 = arith.constant 9.99999974E-6 : f32
    %70 = vector.broadcast %cst_34 : f32 to vector<4x1xf32>
    %71 = arith.addf %67, %70 : vector<4x1xf32>
    %72 = math.rsqrt %71 : vector<4x1xf32>
    %73 = vector.broadcast %72 : vector<4x1xf32> to vector<4x64xf32>
    %74 = arith.mulf %69, %73 : vector<4x64xf32>
    %75 = vector.broadcast %55 : vector<1x64xf32> to vector<4x64xf32>
    %76 = arith.mulf %74, %75 : vector<4x64xf32>
    %77 = vector.broadcast %56 : vector<1x64xf32> to vector<4x64xf32>
    %78 = arith.addf %76, %77 : vector<4x64xf32>
    %79 = arith.addf %78, %2 : vector<4x64xf32>
    %c0_35 = arith.constant 0 : index
    %c0_36 = arith.constant 0 : index
    %80 = vector.load %arg14[%c0_35, %c0_36] : memref<64x64xbf16, #tpu.memory_space<vmem>>, vector<64x64xbf16>
    %81 = arith.truncf %79 : vector<4x64xf32> to vector<4x64xbf16>
    %cst_37 = arith.constant dense<0.000000e+00> : vector<4x64xf32>
    %82 = tpu.matmul %81, %80, %cst_37 {dimension_numbers = #tpu.dot_dimension_numbers<[1], [0], [0], [1], [0, 0, 1, 1], [], []>} : vector<4x64xbf16>, vector<64x64xbf16>, vector<4x64xf32> -> vector<4x64xf32>
    %c0_38 = arith.constant 0 : index
    %c0_39 = arith.constant 0 : index
    %83 = vector.load %arg15[%c0_38, %c0_39] : memref<1x64xf32, #tpu.memory_space<vmem>>, vector<1x64xf32>
    %84 = vector.broadcast %83 : vector<1x64xf32> to vector<4x64xf32>
    %85 = arith.addf %82, %84 : vector<4x64xf32>
    %c0_40 = arith.constant 0 : index
    %c0_41 = arith.constant 0 : index
    %c0_42 = arith.constant 0 : index
    %c0_43 = arith.constant 0 : index
    %86 = vector.load %arg6[%c0_40, %c0_41, %c0_42, %c0_43] : memref<1x4x4x16xbf16, #tpu.memory_space<vmem>>, vector<1x4x4x16xbf16>
    %87 = vector.shape_cast %86 : vector<1x4x4x16xbf16> to vector<4x4x16xbf16>
    %c0_44 = arith.constant 0 : index
    %c0_45 = arith.constant 0 : index
    %c0_46 = arith.constant 0 : index
    %c0_47 = arith.constant 0 : index
    %88 = vector.load %arg7[%c0_44, %c0_45, %c0_46, %c0_47] : memref<1x4x4x16xbf16, #tpu.memory_space<vmem>>, vector<1x4x4x16xbf16>
    %89 = vector.shape_cast %88 : vector<1x4x4x16xbf16> to vector<4x4x16xbf16>
    %c0_48 = arith.constant 0 : index
    %c0_49 = arith.constant 0 : index
    %c0_50 = arith.constant 0 : index
    %90 = vector.load %arg16[%c0_48, %c0_49, %c0_50] : memref<4x16x64xbf16, #tpu.memory_space<vmem>>, vector<4x16x64xbf16>
    %c0_51 = arith.constant 0 : index
    %c0_52 = arith.constant 0 : index
    %91 = vector.load %arg17[%c0_51, %c0_52] : memref<1x64xf32, #tpu.memory_space<vmem>>, vector<1x64xf32>
    %92 = vector.extract_strided_slice %85 {offsets = [0, 0], sizes = [4, 16], strides = [1, 1]} : vector<4x64xf32> to vector<4x16xf32>
    %93 = vector.extract_strided_slice %85 {offsets = [0, 16], sizes = [4, 16], strides = [1, 1]} : vector<4x64xf32> to vector<4x16xf32>
    %94 = vector.extract_strided_slice %85 {offsets = [0, 32], sizes = [4, 16], strides = [1, 1]} : vector<4x64xf32> to vector<4x16xf32>
    %95 = vector.extract_strided_slice %85 {offsets = [0, 48], sizes = [4, 16], strides = [1, 1]} : vector<4x64xf32> to vector<4x16xf32>
    %96 = vector.shape_cast %92 : vector<4x16xf32> to vector<1x4x16xf32>
    %97 = vector.shape_cast %93 : vector<4x16xf32> to vector<1x4x16xf32>
    %98 = vector.shape_cast %94 : vector<4x16xf32> to vector<1x4x16xf32>
    %99 = vector.shape_cast %95 : vector<4x16xf32> to vector<1x4x16xf32>
    %100 = tpu.concatenate %96, %97, %98, %99 in 0 : vector<1x4x16xf32>, vector<1x4x16xf32>, vector<1x4x16xf32>, vector<1x4x16xf32> -> vector<4x4x16xf32>
    %101 = arith.truncf %100 : vector<4x4x16xf32> to vector<4x4x16xbf16>
    "tpu.trace_start"() <{level = 10 : i32, message = "hqd,hkd->hqk"}> : () -> ()
    %cst_53 = arith.constant dense<0.000000e+00> : vector<4x4x4xf32>
    %102 = tpu.matmul %101, %87, %cst_53 {dimension_numbers = #tpu.dot_dimension_numbers<[2], [2], [1], [1], [0, 0, 0, 1, 1, 1], [0], [0]>} : vector<4x4x16xbf16>, vector<4x4x16xbf16>, vector<4x4x4xf32> -> vector<4x4x4xf32>
    "tpu.trace_stop"() : () -> ()
    %cst_54 = arith.constant dense<0xFF800000> : vector<4x4xf32>
    %103 = vector.multi_reduction <maximumf>, %102, %cst_54 [2] : vector<4x4x4xf32> to vector<4x4xf32>
    %104 = vector.shape_cast %103 : vector<4x4xf32> to vector<4x4x1xf32>
    %105 = vector.broadcast %104 : vector<4x4x1xf32> to vector<4x4x4xf32>
    %106 = arith.subf %102, %105 : vector<4x4x4xf32>
    %107 = math.exp %106 : vector<4x4x4xf32>
    %cst_55 = arith.constant dense<0.000000e+00> : vector<4x4xf32>
    %108 = vector.multi_reduction <add>, %107, %cst_55 [2] : vector<4x4x4xf32> to vector<4x4xf32>
    %109 = vector.shape_cast %108 : vector<4x4xf32> to vector<4x4x1xf32>
    %110 = tpu.reciprocal %109 {approx = true} : vector<4x4x1xf32> -> vector<4x4x1xf32>
    %111 = vector.broadcast %110 : vector<4x4x1xf32> to vector<4x4x4xf32>
    %112 = arith.mulf %107, %111 : vector<4x4x4xf32>
    %113 = arith.truncf %112 : vector<4x4x4xf32> to vector<4x4x4xbf16>
    "tpu.trace_start"() <{level = 10 : i32, message = "hqk,hkd->hqd"}> : () -> ()
    %cst_56 = arith.constant dense<0.000000e+00> : vector<4x4x16xf32>
    %114 = tpu.matmul %113, %89, %cst_56 {dimension_numbers = #tpu.dot_dimension_numbers<[2], [1], [1], [2], [0, 0, 0, 1, 1, 2], [0], [0]>} : vector<4x4x4xbf16>, vector<4x4x16xbf16>, vector<4x4x16xf32> -> vector<4x4x16xf32>
    "tpu.trace_stop"() : () -> ()
    %115 = arith.truncf %114 : vector<4x4x16xf32> to vector<4x4x16xbf16>
    "tpu.trace_start"() <{level = 10 : i32, message = "hqd,hdc->hqc"}> : () -> ()
    %cst_57 = arith.constant dense<0.000000e+00> : vector<4x4x64xf32>
    %116 = tpu.matmul %115, %90, %cst_57 {dimension_numbers = #tpu.dot_dimension_numbers<[2], [1], [1], [2], [0, 0, 0, 1, 1, 2], [0], [0]>} : vector<4x4x16xbf16>, vector<4x16x64xbf16>, vector<4x4x64xf32> -> vector<4x4x64xf32>
    "tpu.trace_stop"() : () -> ()
    %117 = vector.extract_strided_slice %116 {offsets = [0, 0, 0], sizes = [1, 4, 64], strides = [1, 1, 1]} : vector<4x4x64xf32> to vector<1x4x64xf32>
    %118 = vector.shape_cast %117 : vector<1x4x64xf32> to vector<4x64xf32>
    %119 = vector.broadcast %91 : vector<1x64xf32> to vector<4x64xf32>
    %120 = arith.addf %119, %118 : vector<4x64xf32>
    %121 = vector.extract_strided_slice %116 {offsets = [1, 0, 0], sizes = [1, 4, 64], strides = [1, 1, 1]} : vector<4x4x64xf32> to vector<1x4x64xf32>
    %122 = vector.shape_cast %121 : vector<1x4x64xf32> to vector<4x64xf32>
    %123 = arith.addf %120, %122 : vector<4x64xf32>
    %124 = vector.extract_strided_slice %116 {offsets = [2, 0, 0], sizes = [1, 4, 64], strides = [1, 1, 1]} : vector<4x4x64xf32> to vector<1x4x64xf32>
    %125 = vector.shape_cast %124 : vector<1x4x64xf32> to vector<4x64xf32>
    %126 = arith.addf %123, %125 : vector<4x64xf32>
    %127 = vector.extract_strided_slice %116 {offsets = [3, 0, 0], sizes = [1, 4, 64], strides = [1, 1, 1]} : vector<4x4x64xf32> to vector<1x4x64xf32>
    %128 = vector.shape_cast %127 : vector<1x4x64xf32> to vector<4x64xf32>
    %129 = arith.addf %126, %128 : vector<4x64xf32>
    %130 = arith.addf %78, %129 : vector<4x64xf32>
    %c0_58 = arith.constant 0 : index
    %c0_59 = arith.constant 0 : index
    %131 = vector.load %arg18[%c0_58, %c0_59] : memref<1x64xf32, #tpu.memory_space<vmem>>, vector<1x64xf32>
    %c0_60 = arith.constant 0 : index
    %c0_61 = arith.constant 0 : index
    %132 = vector.load %arg19[%c0_60, %c0_61] : memref<1x64xf32, #tpu.memory_space<vmem>>, vector<1x64xf32>
    %cst_62 = arith.constant dense<0.000000e+00> : vector<4xf32>
    %133 = vector.multi_reduction <add>, %130, %cst_62 [1] : vector<4x64xf32> to vector<4xf32>
    %134 = vector.shape_cast %133 : vector<4xf32> to vector<4x1xf32>
    %cst_63 = arith.constant 6.400000e+01 : f32
    %135 = vector.broadcast %cst_63 : f32 to vector<4x1xf32>
    %136 = arith.divf %134, %135 : vector<4x1xf32>
    %137 = vector.broadcast %136 : vector<4x1xf32> to vector<4x64xf32>
    %138 = arith.subf %130, %137 : vector<4x64xf32>
    %139 = arith.mulf %138, %138 : vector<4x64xf32>
    %cst_64 = arith.constant dense<0.000000e+00> : vector<4xf32>
    %140 = vector.multi_reduction <add>, %139, %cst_64 [1] : vector<4x64xf32> to vector<4xf32>
    %141 = vector.shape_cast %140 : vector<4xf32> to vector<4x1xf32>
    %cst_65 = arith.constant 6.400000e+01 : f32
    %142 = vector.broadcast %cst_65 : f32 to vector<4x1xf32>
    %143 = arith.divf %141, %142 : vector<4x1xf32>
    %144 = vector.broadcast %136 : vector<4x1xf32> to vector<4x64xf32>
    %145 = arith.subf %130, %144 : vector<4x64xf32>
    %cst_66 = arith.constant 9.99999974E-6 : f32
    %146 = vector.broadcast %cst_66 : f32 to vector<4x1xf32>
    %147 = arith.addf %143, %146 : vector<4x1xf32>
    %148 = math.rsqrt %147 : vector<4x1xf32>
    %149 = vector.broadcast %148 : vector<4x1xf32> to vector<4x64xf32>
    %150 = arith.mulf %145, %149 : vector<4x64xf32>
    %151 = vector.broadcast %131 : vector<1x64xf32> to vector<4x64xf32>
    %152 = arith.mulf %150, %151 : vector<4x64xf32>
    %153 = vector.broadcast %132 : vector<1x64xf32> to vector<4x64xf32>
    %154 = arith.addf %152, %153 : vector<4x64xf32>
    %c0_67 = arith.constant 0 : index
    %c0_68 = arith.constant 0 : index
    %155 = vector.load %arg20[%c0_67, %c0_68] : memref<64x256xbf16, #tpu.memory_space<vmem>>, vector<64x256xbf16>
    %156 = arith.truncf %154 : vector<4x64xf32> to vector<4x64xbf16>
    %cst_69 = arith.constant dense<0.000000e+00> : vector<4x256xf32>
    %157 = tpu.matmul %156, %155, %cst_69 {dimension_numbers = #tpu.dot_dimension_numbers<[1], [0], [0], [1], [0, 0, 1, 1], [], []>} : vector<4x64xbf16>, vector<64x256xbf16>, vector<4x256xf32> -> vector<4x256xf32>
    %c0_70 = arith.constant 0 : index
    %c0_71 = arith.constant 0 : index
    %158 = vector.load %arg21[%c0_70, %c0_71] : memref<1x256xf32, #tpu.memory_space<vmem>>, vector<1x256xf32>
    %159 = vector.broadcast %158 : vector<1x256xf32> to vector<4x256xf32>
    %160 = arith.addf %157, %159 : vector<4x256xf32>
    %cst_72 = arith.constant 5.000000e-01 : f32
    %161 = vector.broadcast %cst_72 : f32 to vector<4x256xf32>
    %162 = arith.mulf %161, %160 : vector<4x256xf32>
    %cst_73 = arith.constant 4.471500e-02 : f32
    %163 = vector.broadcast %cst_73 : f32 to vector<4x256xf32>
    %164 = arith.mulf %163, %160 : vector<4x256xf32>
    %165 = arith.mulf %164, %160 : vector<4x256xf32>
    %166 = arith.mulf %165, %160 : vector<4x256xf32>
    %167 = arith.addf %160, %166 : vector<4x256xf32>
    %cst_74 = arith.constant 0.797884583 : f32
    %168 = vector.broadcast %cst_74 : f32 to vector<4x256xf32>
    %169 = arith.mulf %168, %167 : vector<4x256xf32>
    %170 = math.tanh %169 : vector<4x256xf32>
    %cst_75 = arith.constant 1.000000e+00 : f32
    %171 = vector.broadcast %cst_75 : f32 to vector<4x256xf32>
    %172 = arith.addf %171, %170 : vector<4x256xf32>
    %173 = arith.mulf %162, %172 : vector<4x256xf32>
    %c0_76 = arith.constant 0 : index
    %c0_77 = arith.constant 0 : index
    %174 = vector.load %arg22[%c0_76, %c0_77] : memref<256x64xbf16, #tpu.memory_space<vmem>>, vector<256x64xbf16>
    %175 = arith.truncf %173 : vector<4x256xf32> to vector<4x256xbf16>
    %cst_78 = arith.constant dense<0.000000e+00> : vector<4x64xf32>
    %176 = tpu.matmul %175, %174, %cst_78 {dimension_numbers = #tpu.dot_dimension_numbers<[1], [0], [0], [1], [0, 0, 1, 1], [], []>} : vector<4x256xbf16>, vector<256x64xbf16>, vector<4x64xf32> -> vector<4x64xf32>
    %c0_79 = arith.constant 0 : index
    %c0_80 = arith.constant 0 : index
    %177 = vector.load %arg23[%c0_79, %c0_80] : memref<1x64xf32, #tpu.memory_space<vmem>>, vector<1x64xf32>
    %178 = vector.broadcast %177 : vector<1x64xf32> to vector<4x64xf32>
    %179 = arith.addf %176, %178 : vector<4x64xf32>
    %180 = arith.addf %154, %179 : vector<4x64xf32>
    %c0_81 = arith.constant 0 : index
    %c0_82 = arith.constant 0 : index
    %181 = vector.load %arg24[%c0_81, %c0_82] : memref<1x64xf32, #tpu.memory_space<vmem>>, vector<1x64xf32>
    %c0_83 = arith.constant 0 : index
    %c0_84 = arith.constant 0 : index
    %182 = vector.load %arg25[%c0_83, %c0_84] : memref<1x64xf32, #tpu.memory_space<vmem>>, vector<1x64xf32>
    %cst_85 = arith.constant dense<0.000000e+00> : vector<4xf32>
    %183 = vector.multi_reduction <add>, %180, %cst_85 [1] : vector<4x64xf32> to vector<4xf32>
    %184 = vector.shape_cast %183 : vector<4xf32> to vector<4x1xf32>
    %cst_86 = arith.constant 6.400000e+01 : f32
    %185 = vector.broadcast %cst_86 : f32 to vector<4x1xf32>
    %186 = arith.divf %184, %185 : vector<4x1xf32>
    %187 = vector.broadcast %186 : vector<4x1xf32> to vector<4x64xf32>
    %188 = arith.subf %180, %187 : vector<4x64xf32>
    %189 = arith.mulf %188, %188 : vector<4x64xf32>
    %cst_87 = arith.constant dense<0.000000e+00> : vector<4xf32>
    %190 = vector.multi_reduction <add>, %189, %cst_87 [1] : vector<4x64xf32> to vector<4xf32>
    %191 = vector.shape_cast %190 : vector<4xf32> to vector<4x1xf32>
    %cst_88 = arith.constant 6.400000e+01 : f32
    %192 = vector.broadcast %cst_88 : f32 to vector<4x1xf32>
    %193 = arith.divf %191, %192 : vector<4x1xf32>
    %194 = vector.broadcast %186 : vector<4x1xf32> to vector<4x64xf32>
    %195 = arith.subf %180, %194 : vector<4x64xf32>
    %cst_89 = arith.constant 9.99999974E-6 : f32
    %196 = vector.broadcast %cst_89 : f32 to vector<4x1xf32>
    %197 = arith.addf %193, %196 : vector<4x1xf32>
    %198 = math.rsqrt %197 : vector<4x1xf32>
    %199 = vector.broadcast %198 : vector<4x1xf32> to vector<4x64xf32>
    %200 = arith.mulf %195, %199 : vector<4x64xf32>
    %201 = vector.broadcast %181 : vector<1x64xf32> to vector<4x64xf32>
    %202 = arith.mulf %200, %201 : vector<4x64xf32>
    %203 = vector.broadcast %182 : vector<1x64xf32> to vector<4x64xf32>
    %204 = arith.addf %202, %203 : vector<4x64xf32>
    %c0_90 = arith.constant 0 : index
    %c0_91 = arith.constant 0 : index
    %c0_92 = arith.constant 0 : index
    %205 = vector.load %arg26[%c0_90, %c0_91, %c0_92] : memref<1x4x64xf32, #tpu.memory_space<vmem>>, vector<1x4x64xf32>
    %206 = vector.shape_cast %205 : vector<1x4x64xf32> to vector<4x64xf32>
    %207 = vector.shape_cast %204 : vector<4x64xf32> to vector<1x4x64xf32>
    tpu.vector_store %arg26[%c0_90, %c0_91, %c0_92], %207 {strides = array<i32>} : memref<1x4x64xf32, #tpu.memory_space<vmem>>, vector<1x4x64xf32>,
    return
  }
  func.func @transform_0(%arg0: i32, %arg1: i32) -> (i32, i32, i32) {
    %c0_i32 = arith.constant 0 : i32
    %c0_i32_0 = arith.constant 0 : i32
    return %arg0, %arg1, %c0_i32 : i32, i32, i32
  }
  func.func @transform_1(%arg0: i32, %arg1: i32) -> (i32, i32) {
    %c0_i32 = arith.constant 0 : i32
    %c0_i32_0 = arith.constant 0 : i32
    return %arg1, %c0_i32 : i32, i32
  }
  func.func @transform_2(%arg0: i32, %arg1: i32) -> (i32, i32, i32, i32) {
    %c0_i32 = arith.constant 0 : i32
    %c0_i32_0 = arith.constant 0 : i32
    %c0_i32_1 = arith.constant 0 : i32
    %c0_i32_2 = arith.constant 0 : i32
    return %arg0, %c0_i32, %c0_i32_0, %c0_i32_1 : i32, i32, i32, i32
  }
  func.func @transform_3(%arg0: i32, %arg1: i32) -> (i32, i32, i32, i32) {
    %c0_i32 = arith.constant 0 : i32
    %c0_i32_0 = arith.constant 0 : i32
    %c0_i32_1 = arith.constant 0 : i32
    %c0_i32_2 = arith.constant 0 : i32
    return %arg0, %c0_i32, %c0_i32_0, %c0_i32_1 : i32, i32, i32, i32
  }
  func.func @transform_4(%arg0: i32, %arg1: i32) -> (i32, i32, i32, i32) {
    %c0_i32 = arith.constant 0 : i32
    %c0_i32_0 = arith.constant 0 : i32
    %c0_i32_1 = arith.constant 0 : i32
    %c0_i32_2 = arith.constant 0 : i32
    return %arg0, %c0_i32, %c0_i32_0, %c0_i32_1 : i32, i32, i32, i32
  }
  func.func @transform_5(%arg0: i32, %arg1: i32) -> (i32, i32, i32, i32) {
    %c0_i32 = arith.constant 0 : i32
    %c0_i32_0 = arith.constant 0 : i32
    %c0_i32_1 = arith.constant 0 : i32
    %c0_i32_2 = arith.constant 0 : i32
    return %arg0, %c0_i32, %c0_i32_0, %c0_i32_1 : i32, i32, i32, i32
  }
  func.func @transform_6(%arg0: i32, %arg1: i32) -> (i32, i32) {
    %c0_i32 = arith.constant 0 : i32
    %c0_i32_0 = arith.constant 0 : i32
    %c0_i32_1 = arith.constant 0 : i32
    return %c0_i32, %c0_i32_0 : i32, i32
  }
  func.func @transform_7(%arg0: i32, %arg1: i32) -> (i32, i32) {
    %c0_i32 = arith.constant 0 : i32
    %c0_i32_0 = arith.constant 0 : i32
    %c0_i32_1 = arith.constant 0 : i32
    return %c0_i32, %c0_i32_0 : i32, i32
  }
  func.func @transform_8(%arg0: i32, %arg1: i32) -> (i32, i32, i32) {
    %c0_i32 = arith.constant 0 : i32
    %c0_i32_0 = arith.constant 0 : i32
    %c0_i32_1 = arith.constant 0 : i32
    %c0_i32_2 = arith.constant 0 : i32
    return %c0_i32, %c0_i32_0, %c0_i32_1 : i32, i32, i32
  }
  func.func @transform_9(%arg0: i32, %arg1: i32) -> (i32, i32) {
    %c0_i32 = arith.constant 0 : i32
    %c0_i32_0 = arith.constant 0 : i32
    %c0_i32_1 = arith.constant 0 : i32
    return %c0_i32, %c0_i32_0 : i32, i32
  }
  func.func @transform_10(%arg0: i32, %arg1: i32) -> (i32, i32) {
    %c0_i32 = arith.constant 0 : i32
    %c0_i32_0 = arith.constant 0 : i32
    %c0_i32_1 = arith.constant 0 : i32
    return %c0_i32, %c0_i32_0 : i32, i32
  }
  func.func @transform_11(%arg0: i32, %arg1: i32) -> (i32, i32) {
    %c0_i32 = arith.constant 0 : i32
    %c0_i32_0 = arith.constant 0 : i32
    %c0_i32_1 = arith.constant 0 : i32
    return %c0_i32, %c0_i32_0 : i32, i32
  }
  func.func @transform_12(%arg0: i32, %arg1: i32) -> (i32, i32) {
    %c0_i32 = arith.constant 0 : i32
    %c0_i32_0 = arith.constant 0 : i32
    %c0_i32_1 = arith.constant 0 : i32
    return %c0_i32, %c0_i32_0 : i32, i32
  }
  func.func @transform_13(%arg0: i32, %arg1: i32) -> (i32, i32) {
    %c0_i32 = arith.constant 0 : i32
    %c0_i32_0 = arith.constant 0 : i32
    %c0_i32_1 = arith.constant 0 : i32
    return %c0_i32, %c0_i32_0 : i32, i32
  }
  func.func @transform_14(%arg0: i32, %arg1: i32) -> (i32, i32, i32) {
    %c0_i32 = arith.constant 0 : i32
    %c0_i32_0 = arith.constant 0 : i32
    %c0_i32_1 = arith.constant 0 : i32
    %c0_i32_2 = arith.constant 0 : i32
    return %c0_i32, %c0_i32_0, %c0_i32_1 : i32, i32, i32
  }
  func.func @transform_15(%arg0: i32, %arg1: i32) -> (i32, i32) {
    %c0_i32 = arith.constant 0 : i32
    %c0_i32_0 = arith.constant 0 : i32
    %c0_i32_1 = arith.constant 0 : i32
    return %c0_i32, %c0_i32_0 : i32, i32
  }
  func.func @transform_16(%arg0: i32, %arg1: i32) -> (i32, i32) {
    %c0_i32 = arith.constant 0 : i32
    %c0_i32_0 = arith.constant 0 : i32
    %c0_i32_1 = arith.constant 0 : i32
    return %c0_i32, %c0_i32_0 : i32, i32
  }
  func.func @transform_17(%arg0: i32, %arg1: i32) -> (i32, i32) {
    %c0_i32 = arith.constant 0 : i32
    %c0_i32_0 = arith.constant 0 : i32
    %c0_i32_1 = arith.constant 0 : i32
    return %c0_i32, %c0_i32_0 : i32, i32
  }
  func.func @transform_18(%arg0: i32, %arg1: i32) -> (i32, i32) {
    %c0_i32 = arith.constant 0 : i32
    %c0_i32_0 = arith.constant 0 : i32
    %c0_i32_1 = arith.constant 0 : i32
    return %c0_i32, %c0_i32_0 : i32, i32
  }
  func.func @transform_19(%arg0: i32, %arg1: i32) -> (i32, i32) {
    %c0_i32 = arith.constant 0 : i32
    %c0_i32_0 = arith.constant 0 : i32
    %c0_i32_1 = arith.constant 0 : i32
    return %c0_i32, %c0_i32_0 : i32, i32
  }
  func.func @transform_20(%arg0: i32, %arg1: i32) -> (i32, i32) {
    %c0_i32 = arith.constant 0 : i32
    %c0_i32_0 = arith.constant 0 : i32
    %c0_i32_1 = arith.constant 0 : i32
    return %c0_i32, %c0_i32_0 : i32, i32
  }
  func.func @transform_21(%arg0: i32, %arg1: i32) -> (i32, i32) {
    %c0_i32 = arith.constant 0 : i32
    %c0_i32_0 = arith.constant 0 : i32
    %c0_i32_1 = arith.constant 0 : i32
    return %c0_i32, %c0_i32_0 : i32, i32
  }
  func.func @transform_22(%arg0: i32, %arg1: i32) -> (i32, i32) {
    %c0_i32 = arith.constant 0 : i32
    %c0_i32_0 = arith.constant 0 : i32
    %c0_i32_1 = arith.constant 0 : i32
    return %c0_i32, %c0_i32_0 : i32, i32
  }
  func.func @transform_23(%arg0: i32, %arg1: i32) -> (i32, i32) {
    %c0_i32 = arith.constant 0 : i32
    %c0_i32_0 = arith.constant 0 : i32
    %c0_i32_1 = arith.constant 0 : i32
    return %c0_i32, %c0_i32_0 : i32, i32
  }
  func.func @transform_24(%arg0: i32, %arg1: i32) -> (i32, i32, i32) {
    %c0_i32 = arith.constant 0 : i32
    %c0_i32_0 = arith.constant 0 : i32
    return %arg0, %arg1, %c0_i32 : i32, i32, i32
  }
}

module attributes {stable_mosaic.version = 11 : i64} {
  func.func @_embed_kernel(%arg0: i32, %arg1: i32, %arg2: memref<1x16x48xbf16, #tpu.memory_space<vmem>>, %arg3: memref<16x32xf32, #tpu.memory_space<vmem>>, %arg4: memref<48x32xbf16, #tpu.memory_space<vmem>>, %arg5: memref<1x32xf32, #tpu.memory_space<vmem>>, %arg6: memref<1x32xf32, #tpu.memory_space<vmem>>, %arg7: memref<1x32xf32, #tpu.memory_space<vmem>>, %arg8: memref<32x32xbf16, #tpu.memory_space<vmem>>, %arg9: memref<1x32xf32, #tpu.memory_space<vmem>>, %arg10: memref<32x32xbf16, #tpu.memory_space<vmem>>, %arg11: memref<1x32xf32, #tpu.memory_space<vmem>>, %arg12: memref<1x16x32xf32, #tpu.memory_space<vmem>>, %arg13: memref<1x16x32xbf16, #tpu.memory_space<vmem>>, %arg14: memref<1x16x32xbf16, #tpu.memory_space<vmem>>) attributes {dimension_semantics = [#tpu.dimension_semantics<parallel>, #tpu.dimension_semantics<parallel>], iteration_bounds = array<i64: 2, 1>, scalar_prefetch = 0 : i64, scratch_operands = 0 : i64, tpu.core_type = #tpu.core_type<tc>, window_params = [{transform_indices = @transform_0, window_bounds = array<i64: 1, 16, 48>}, {transform_indices = @transform_1, window_bounds = array<i64: 16, 32>}, {pipeline_mode = #tpu.pipeline_mode<synchronous>, transform_indices = @transform_2, window_bounds = array<i64: 48, 32>}, {pipeline_mode = #tpu.pipeline_mode<synchronous>, transform_indices = @transform_3, window_bounds = array<i64: 1, 32>}, {pipeline_mode = #tpu.pipeline_mode<synchronous>, transform_indices = @transform_4, window_bounds = array<i64: 1, 32>}, {pipeline_mode = #tpu.pipeline_mode<synchronous>, transform_indices = @transform_5, window_bounds = array<i64: 1, 32>}, {pipeline_mode = #tpu.pipeline_mode<synchronous>, transform_indices = @transform_6, window_bounds = array<i64: 32, 32>}, {pipeline_mode = #tpu.pipeline_mode<synchronous>, transform_indices = @transform_7, window_bounds = array<i64: 1, 32>}, {pipeline_mode = #tpu.pipeline_mode<synchronous>, transform_indices = @transform_8, window_bounds = array<i64: 32, 32>}, {pipeline_mode = #tpu.pipeline_mode<synchronous>, transform_indices = @transform_9, window_bounds = array<i64: 1, 32>}, {transform_indices = @transform_10, window_bounds = array<i64: 1, 16, 32>}, {transform_indices = @transform_11, window_bounds = array<i64: 1, 16, 32>}, {transform_indices = @transform_12, window_bounds = array<i64: 1, 16, 32>}]} {
    %c0 = arith.constant 0 : index
    %c0_0 = arith.constant 0 : index
    %c0_1 = arith.constant 0 : index
    %0 = vector.load %arg2[%c0, %c0_0, %c0_1] : memref<1x16x48xbf16, #tpu.memory_space<vmem>>, vector<1x16x48xbf16>
    %1 = vector.shape_cast %0 : vector<1x16x48xbf16> to vector<16x48xbf16>
    %c0_2 = arith.constant 0 : index
    %c0_3 = arith.constant 0 : index
    %2 = vector.load %arg4[%c0_2, %c0_3] : memref<48x32xbf16, #tpu.memory_space<vmem>>, vector<48x32xbf16>
    %cst = arith.constant dense<0.000000e+00> : vector<16x32xf32>
    %3 = tpu.matmul %1, %2, %cst {dimension_numbers = #tpu.dot_dimension_numbers<[1], [0], [0], [1], [0, 0, 1, 1], [], []>} : vector<16x48xbf16>, vector<48x32xbf16>, vector<16x32xf32> -> vector<16x32xf32>
    %c0_4 = arith.constant 0 : index
    %c0_5 = arith.constant 0 : index
    %4 = vector.load %arg5[%c0_4, %c0_5] : memref<1x32xf32, #tpu.memory_space<vmem>>, vector<1x32xf32>
    %5 = vector.broadcast %4 : vector<1x32xf32> to vector<16x32xf32>
    %6 = arith.addf %3, %5 : vector<16x32xf32>
    %c0_6 = arith.constant 0 : index
    %c0_7 = arith.constant 0 : index
    %7 = vector.load %arg6[%c0_6, %c0_7] : memref<1x32xf32, #tpu.memory_space<vmem>>, vector<1x32xf32>
    %c0_8 = arith.constant 0 : index
    %c0_9 = arith.constant 0 : index
    %8 = vector.load %arg7[%c0_8, %c0_9] : memref<1x32xf32, #tpu.memory_space<vmem>>, vector<1x32xf32>
    %cst_10 = arith.constant dense<0.000000e+00> : vector<16xf32>
    %9 = vector.multi_reduction <add>, %6, %cst_10 [1] : vector<16x32xf32> to vector<16xf32>
    %10 = vector.shape_cast %9 : vector<16xf32> to vector<16x1xf32>
    %cst_11 = arith.constant 3.200000e+01 : f32
    %11 = vector.broadcast %cst_11 : f32 to vector<16x1xf32>
    %12 = arith.divf %10, %11 : vector<16x1xf32>
    %13 = vector.broadcast %12 : vector<16x1xf32> to vector<16x32xf32>
    %14 = arith.subf %6, %13 : vector<16x32xf32>
    %15 = arith.mulf %14, %14 : vector<16x32xf32>
    %cst_12 = arith.constant dense<0.000000e+00> : vector<16xf32>
    %16 = vector.multi_reduction <add>, %15, %cst_12 [1] : vector<16x32xf32> to vector<16xf32>
    %17 = vector.shape_cast %16 : vector<16xf32> to vector<16x1xf32>
    %cst_13 = arith.constant 3.200000e+01 : f32
    %18 = vector.broadcast %cst_13 : f32 to vector<16x1xf32>
    %19 = arith.divf %17, %18 : vector<16x1xf32>
    %20 = vector.broadcast %12 : vector<16x1xf32> to vector<16x32xf32>
    %21 = arith.subf %6, %20 : vector<16x32xf32>
    %cst_14 = arith.constant 9.99999974E-6 : f32
    %22 = vector.broadcast %cst_14 : f32 to vector<16x1xf32>
    %23 = arith.addf %19, %22 : vector<16x1xf32>
    %24 = math.rsqrt %23 : vector<16x1xf32>
    %25 = vector.broadcast %24 : vector<16x1xf32> to vector<16x32xf32>
    %26 = arith.mulf %21, %25 : vector<16x32xf32>
    %27 = vector.broadcast %7 : vector<1x32xf32> to vector<16x32xf32>
    %28 = arith.mulf %26, %27 : vector<16x32xf32>
    %29 = vector.broadcast %8 : vector<1x32xf32> to vector<16x32xf32>
    %30 = arith.addf %28, %29 : vector<16x32xf32>
    %c0_15 = arith.constant 0 : index
    %c0_16 = arith.constant 0 : index
    %31 = vector.load %arg3[%c0_15, %c0_16] : memref<16x32xf32, #tpu.memory_space<vmem>>, vector<16x32xf32>
    %c0_17 = arith.constant 0 : index
    %c0_18 = arith.constant 0 : index
    %c0_19 = arith.constant 0 : index
    %32 = vector.load %arg12[%c0_17, %c0_18, %c0_19] : memref<1x16x32xf32, #tpu.memory_space<vmem>>, vector<1x16x32xf32>
    %33 = vector.shape_cast %32 : vector<1x16x32xf32> to vector<16x32xf32>
    %34 = vector.shape_cast %30 : vector<16x32xf32> to vector<1x16x32xf32>
    tpu.vector_store %arg12[%c0_17, %c0_18, %c0_19], %34 {strides = array<i32>} : memref<1x16x32xf32, #tpu.memory_space<vmem>>, vector<1x16x32xf32>,
    %35 = arith.addf %30, %31 : vector<16x32xf32>
    %c0_20 = arith.constant 0 : index
    %c0_21 = arith.constant 0 : index
    %36 = vector.load %arg8[%c0_20, %c0_21] : memref<32x32xbf16, #tpu.memory_space<vmem>>, vector<32x32xbf16>
    %37 = arith.truncf %35 : vector<16x32xf32> to vector<16x32xbf16>
    %cst_22 = arith.constant dense<0.000000e+00> : vector<16x32xf32>
    %38 = tpu.matmul %37, %36, %cst_22 {dimension_numbers = #tpu.dot_dimension_numbers<[1], [0], [0], [1], [0, 0, 1, 1], [], []>} : vector<16x32xbf16>, vector<32x32xbf16>, vector<16x32xf32> -> vector<16x32xf32>
    %c0_23 = arith.constant 0 : index
    %c0_24 = arith.constant 0 : index
    %39 = vector.load %arg9[%c0_23, %c0_24] : memref<1x32xf32, #tpu.memory_space<vmem>>, vector<1x32xf32>
    %40 = vector.broadcast %39 : vector<1x32xf32> to vector<16x32xf32>
    %41 = arith.addf %38, %40 : vector<16x32xf32>
    %42 = arith.truncf %41 : vector<16x32xf32> to vector<16x32xbf16>
    %c0_25 = arith.constant 0 : index
    %c0_26 = arith.constant 0 : index
    %c0_27 = arith.constant 0 : index
    %43 = vector.load %arg13[%c0_25, %c0_26, %c0_27] : memref<1x16x32xbf16, #tpu.memory_space<vmem>>, vector<1x16x32xbf16>
    %44 = vector.shape_cast %43 : vector<1x16x32xbf16> to vector<16x32xbf16>
    %45 = vector.shape_cast %42 : vector<16x32xbf16> to vector<1x16x32xbf16>
    tpu.vector_store %arg13[%c0_25, %c0_26, %c0_27], %45 {strides = array<i32>} : memref<1x16x32xbf16, #tpu.memory_space<vmem>>, vector<1x16x32xbf16>,
    %c0_28 = arith.constant 0 : index
    %c0_29 = arith.constant 0 : index
    %46 = vector.load %arg10[%c0_28, %c0_29] : memref<32x32xbf16, #tpu.memory_space<vmem>>, vector<32x32xbf16>
    %47 = arith.truncf %30 : vector<16x32xf32> to vector<16x32xbf16>
    %cst_30 = arith.constant dense<0.000000e+00> : vector<16x32xf32>
    %48 = tpu.matmul %47, %46, %cst_30 {dimension_numbers = #tpu.dot_dimension_numbers<[1], [0], [0], [1], [0, 0, 1, 1], [], []>} : vector<16x32xbf16>, vector<32x32xbf16>, vector<16x32xf32> -> vector<16x32xf32>
    %c0_31 = arith.constant 0 : index
    %c0_32 = arith.constant 0 : index
    %49 = vector.load %arg11[%c0_31, %c0_32] : memref<1x32xf32, #tpu.memory_space<vmem>>, vector<1x32xf32>
    %50 = vector.broadcast %49 : vector<1x32xf32> to vector<16x32xf32>
    %51 = arith.addf %48, %50 : vector<16x32xf32>
    %52 = arith.truncf %51 : vector<16x32xf32> to vector<16x32xbf16>
    %c0_33 = arith.constant 0 : index
    %c0_34 = arith.constant 0 : index
    %c0_35 = arith.constant 0 : index
    %53 = vector.load %arg14[%c0_33, %c0_34, %c0_35] : memref<1x16x32xbf16, #tpu.memory_space<vmem>>, vector<1x16x32xbf16>
    %54 = vector.shape_cast %53 : vector<1x16x32xbf16> to vector<16x32xbf16>
    %55 = vector.shape_cast %52 : vector<16x32xbf16> to vector<1x16x32xbf16>
    tpu.vector_store %arg14[%c0_33, %c0_34, %c0_35], %55 {strides = array<i32>} : memref<1x16x32xbf16, #tpu.memory_space<vmem>>, vector<1x16x32xbf16>,
    return
  }
  func.func @transform_0(%arg0: i32, %arg1: i32) -> (i32, i32, i32) {
    %c0_i32 = arith.constant 0 : i32
    %c0_i32_0 = arith.constant 0 : i32
    return %arg0, %arg1, %c0_i32 : i32, i32, i32
  }
  func.func @transform_1(%arg0: i32, %arg1: i32) -> (i32, i32) {
    %c0_i32 = arith.constant 0 : i32
    %c0_i32_0 = arith.constant 0 : i32
    return %arg1, %c0_i32 : i32, i32
  }
  func.func @transform_2(%arg0: i32, %arg1: i32) -> (i32, i32) {
    %c0_i32 = arith.constant 0 : i32
    %c0_i32_0 = arith.constant 0 : i32
    %c0_i32_1 = arith.constant 0 : i32
    return %c0_i32, %c0_i32_0 : i32, i32
  }
  func.func @transform_3(%arg0: i32, %arg1: i32) -> (i32, i32) {
    %c0_i32 = arith.constant 0 : i32
    %c0_i32_0 = arith.constant 0 : i32
    %c0_i32_1 = arith.constant 0 : i32
    return %c0_i32, %c0_i32_0 : i32, i32
  }
  func.func @transform_4(%arg0: i32, %arg1: i32) -> (i32, i32) {
    %c0_i32 = arith.constant 0 : i32
    %c0_i32_0 = arith.constant 0 : i32
    %c0_i32_1 = arith.constant 0 : i32
    return %c0_i32, %c0_i32_0 : i32, i32
  }
  func.func @transform_5(%arg0: i32, %arg1: i32) -> (i32, i32) {
    %c0_i32 = arith.constant 0 : i32
    %c0_i32_0 = arith.constant 0 : i32
    %c0_i32_1 = arith.constant 0 : i32
    return %c0_i32, %c0_i32_0 : i32, i32
  }
  func.func @transform_6(%arg0: i32, %arg1: i32) -> (i32, i32) {
    %c0_i32 = arith.constant 0 : i32
    %c0_i32_0 = arith.constant 0 : i32
    %c0_i32_1 = arith.constant 0 : i32
    return %c0_i32, %c0_i32_0 : i32, i32
  }
  func.func @transform_7(%arg0: i32, %arg1: i32) -> (i32, i32) {
    %c0_i32 = arith.constant 0 : i32
    %c0_i32_0 = arith.constant 0 : i32
    %c0_i32_1 = arith.constant 0 : i32
    return %c0_i32, %c0_i32_0 : i32, i32
  }
  func.func @transform_8(%arg0: i32, %arg1: i32) -> (i32, i32) {
    %c0_i32 = arith.constant 0 : i32
    %c0_i32_0 = arith.constant 0 : i32
    %c0_i32_1 = arith.constant 0 : i32
    return %c0_i32, %c0_i32_0 : i32, i32
  }
  func.func @transform_9(%arg0: i32, %arg1: i32) -> (i32, i32) {
    %c0_i32 = arith.constant 0 : i32
    %c0_i32_0 = arith.constant 0 : i32
    %c0_i32_1 = arith.constant 0 : i32
    return %c0_i32, %c0_i32_0 : i32, i32
  }
  func.func @transform_10(%arg0: i32, %arg1: i32) -> (i32, i32, i32) {
    %c0_i32 = arith.constant 0 : i32
    %c0_i32_0 = arith.constant 0 : i32
    return %arg0, %arg1, %c0_i32 : i32, i32, i32
  }
  func.func @transform_11(%arg0: i32, %arg1: i32) -> (i32, i32, i32) {
    %c0_i32 = arith.constant 0 : i32
    %c0_i32_0 = arith.constant 0 : i32
    return %arg0, %arg1, %c0_i32 : i32, i32, i32
  }
  func.func @transform_12(%arg0: i32, %arg1: i32) -> (i32, i32, i32) {
    %c0_i32 = arith.constant 0 : i32
    %c0_i32_0 = arith.constant 0 : i32
    return %arg0, %arg1, %c0_i32 : i32, i32, i32
  }
}

module attributes {stable_mosaic.version = 11 : i64} {
  func.func @_memkv_kernel(%arg0: i32, %arg1: memref<1x16x64xbf16, #tpu.memory_space<vmem>>, %arg2: memref<64x32xbf16, #tpu.memory_space<vmem>>, %arg3: memref<1x32xf32, #tpu.memory_space<vmem>>, %arg4: memref<32x32xbf16, #tpu.memory_space<vmem>>, %arg5: memref<1x32xf32, #tpu.memory_space<vmem>>, %arg6: memref<32x32xbf16, #tpu.memory_space<vmem>>, %arg7: memref<1x32xf32, #tpu.memory_space<vmem>>, %arg8: memref<1x16x32xbf16, #tpu.memory_space<vmem>>, %arg9: memref<1x16x32xbf16, #tpu.memory_space<vmem>>) attributes {dimension_semantics = [#tpu.dimension_semantics<parallel>], iteration_bounds = array<i64: 2>, scalar_prefetch = 0 : i64, scratch_operands = 0 : i64, tpu.core_type = #tpu.core_type<tc>, window_params = [{transform_indices = @transform_0, window_bounds = array<i64: 1, 16, 64>}, {pipeline_mode = #tpu.pipeline_mode<synchronous>, transform_indices = @transform_1, window_bounds = array<i64: 64, 32>}, {pipeline_mode = #tpu.pipeline_mode<synchronous>, transform_indices = @transform_2, window_bounds = array<i64: 1, 32>}, {pipeline_mode = #tpu.pipeline_mode<synchronous>, transform_indices = @transform_3, window_bounds = array<i64: 32, 32>}, {pipeline_mode = #tpu.pipeline_mode<synchronous>, transform_indices = @transform_4, window_bounds = array<i64: 1, 32>}, {pipeline_mode = #tpu.pipeline_mode<synchronous>, transform_indices = @transform_5, window_bounds = array<i64: 32, 32>}, {pipeline_mode = #tpu.pipeline_mode<synchronous>, transform_indices = @transform_6, window_bounds = array<i64: 1, 32>}, {transform_indices = @transform_7, window_bounds = array<i64: 1, 16, 32>}, {transform_indices = @transform_8, window_bounds = array<i64: 1, 16, 32>}]} {
    %c0 = arith.constant 0 : index
    %c0_0 = arith.constant 0 : index
    %c0_1 = arith.constant 0 : index
    %0 = vector.load %arg1[%c0, %c0_0, %c0_1] : memref<1x16x64xbf16, #tpu.memory_space<vmem>>, vector<1x16x64xbf16>
    %1 = vector.shape_cast %0 : vector<1x16x64xbf16> to vector<16x64xbf16>
    %c0_2 = arith.constant 0 : index
    %c0_3 = arith.constant 0 : index
    %2 = vector.load %arg2[%c0_2, %c0_3] : memref<64x32xbf16, #tpu.memory_space<vmem>>, vector<64x32xbf16>
    %cst = arith.constant dense<0.000000e+00> : vector<16x32xf32>
    %3 = tpu.matmul %1, %2, %cst {dimension_numbers = #tpu.dot_dimension_numbers<[1], [0], [0], [1], [0, 0, 1, 1], [], []>} : vector<16x64xbf16>, vector<64x32xbf16>, vector<16x32xf32> -> vector<16x32xf32>
    %c0_4 = arith.constant 0 : index
    %c0_5 = arith.constant 0 : index
    %4 = vector.load %arg3[%c0_4, %c0_5] : memref<1x32xf32, #tpu.memory_space<vmem>>, vector<1x32xf32>
    %5 = vector.broadcast %4 : vector<1x32xf32> to vector<16x32xf32>
    %6 = arith.addf %3, %5 : vector<16x32xf32>
    %c0_6 = arith.constant 0 : index
    %c0_7 = arith.constant 0 : index
    %7 = vector.load %arg4[%c0_6, %c0_7] : memref<32x32xbf16, #tpu.memory_space<vmem>>, vector<32x32xbf16>
    %8 = arith.truncf %6 : vector<16x32xf32> to vector<16x32xbf16>
    %cst_8 = arith.constant dense<0.000000e+00> : vector<16x32xf32>
    %9 = tpu.matmul %8, %7, %cst_8 {dimension_numbers = #tpu.dot_dimension_numbers<[1], [0], [0], [1], [0, 0, 1, 1], [], []>} : vector<16x32xbf16>, vector<32x32xbf16>, vector<16x32xf32> -> vector<16x32xf32>
    %c0_9 = arith.constant 0 : index
    %c0_10 = arith.constant 0 : index
    %10 = vector.load %arg5[%c0_9, %c0_10] : memref<1x32xf32, #tpu.memory_space<vmem>>, vector<1x32xf32>
    %11 = vector.broadcast %10 : vector<1x32xf32> to vector<16x32xf32>
    %12 = arith.addf %9, %11 : vector<16x32xf32>
    %13 = arith.truncf %12 : vector<16x32xf32> to vector<16x32xbf16>
    %c0_11 = arith.constant 0 : index
    %c0_12 = arith.constant 0 : index
    %c0_13 = arith.constant 0 : index
    %14 = vector.load %arg8[%c0_11, %c0_12, %c0_13] : memref<1x16x32xbf16, #tpu.memory_space<vmem>>, vector<1x16x32xbf16>
    %15 = vector.shape_cast %14 : vector<1x16x32xbf16> to vector<16x32xbf16>
    %16 = vector.shape_cast %13 : vector<16x32xbf16> to vector<1x16x32xbf16>
    tpu.vector_store %arg8[%c0_11, %c0_12, %c0_13], %16 {strides = array<i32>} : memref<1x16x32xbf16, #tpu.memory_space<vmem>>, vector<1x16x32xbf16>,
    %c0_14 = arith.constant 0 : index
    %c0_15 = arith.constant 0 : index
    %17 = vector.load %arg6[%c0_14, %c0_15] : memref<32x32xbf16, #tpu.memory_space<vmem>>, vector<32x32xbf16>
    %18 = arith.truncf %6 : vector<16x32xf32> to vector<16x32xbf16>
    %cst_16 = arith.constant dense<0.000000e+00> : vector<16x32xf32>
    %19 = tpu.matmul %18, %17, %cst_16 {dimension_numbers = #tpu.dot_dimension_numbers<[1], [0], [0], [1], [0, 0, 1, 1], [], []>} : vector<16x32xbf16>, vector<32x32xbf16>, vector<16x32xf32> -> vector<16x32xf32>
    %c0_17 = arith.constant 0 : index
    %c0_18 = arith.constant 0 : index
    %20 = vector.load %arg7[%c0_17, %c0_18] : memref<1x32xf32, #tpu.memory_space<vmem>>, vector<1x32xf32>
    %21 = vector.broadcast %20 : vector<1x32xf32> to vector<16x32xf32>
    %22 = arith.addf %19, %21 : vector<16x32xf32>
    %23 = arith.truncf %22 : vector<16x32xf32> to vector<16x32xbf16>
    %c0_19 = arith.constant 0 : index
    %c0_20 = arith.constant 0 : index
    %c0_21 = arith.constant 0 : index
    %24 = vector.load %arg9[%c0_19, %c0_20, %c0_21] : memref<1x16x32xbf16, #tpu.memory_space<vmem>>, vector<1x16x32xbf16>
    %25 = vector.shape_cast %24 : vector<1x16x32xbf16> to vector<16x32xbf16>
    %26 = vector.shape_cast %23 : vector<16x32xbf16> to vector<1x16x32xbf16>
    tpu.vector_store %arg9[%c0_19, %c0_20, %c0_21], %26 {strides = array<i32>} : memref<1x16x32xbf16, #tpu.memory_space<vmem>>, vector<1x16x32xbf16>,
    return
  }
  func.func @transform_0(%arg0: i32) -> (i32, i32, i32) {
    %c0_i32 = arith.constant 0 : i32
    %c0_i32_0 = arith.constant 0 : i32
    %c0_i32_1 = arith.constant 0 : i32
    return %arg0, %c0_i32, %c0_i32_0 : i32, i32, i32
  }
  func.func @transform_1(%arg0: i32) -> (i32, i32) {
    %c0_i32 = arith.constant 0 : i32
    %c0_i32_0 = arith.constant 0 : i32
    %c0_i32_1 = arith.constant 0 : i32
    return %c0_i32, %c0_i32_0 : i32, i32
  }
  func.func @transform_2(%arg0: i32) -> (i32, i32) {
    %c0_i32 = arith.constant 0 : i32
    %c0_i32_0 = arith.constant 0 : i32
    %c0_i32_1 = arith.constant 0 : i32
    return %c0_i32, %c0_i32_0 : i32, i32
  }
  func.func @transform_3(%arg0: i32) -> (i32, i32) {
    %c0_i32 = arith.constant 0 : i32
    %c0_i32_0 = arith.constant 0 : i32
    %c0_i32_1 = arith.constant 0 : i32
    return %c0_i32, %c0_i32_0 : i32, i32
  }
  func.func @transform_4(%arg0: i32) -> (i32, i32) {
    %c0_i32 = arith.constant 0 : i32
    %c0_i32_0 = arith.constant 0 : i32
    %c0_i32_1 = arith.constant 0 : i32
    return %c0_i32, %c0_i32_0 : i32, i32
  }
  func.func @transform_5(%arg0: i32) -> (i32, i32) {
    %c0_i32 = arith.constant 0 : i32
    %c0_i32_0 = arith.constant 0 : i32
    %c0_i32_1 = arith.constant 0 : i32
    return %c0_i32, %c0_i32_0 : i32, i32
  }
  func.func @transform_6(%arg0: i32) -> (i32, i32) {
    %c0_i32 = arith.constant 0 : i32
    %c0_i32_0 = arith.constant 0 : i32
    %c0_i32_1 = arith.constant 0 : i32
    return %c0_i32, %c0_i32_0 : i32, i32
  }
  func.func @transform_7(%arg0: i32) -> (i32, i32, i32) {
    %c0_i32 = arith.constant 0 : i32
    %c0_i32_0 = arith.constant 0 : i32
    %c0_i32_1 = arith.constant 0 : i32
    return %arg0, %c0_i32, %c0_i32_0 : i32, i32, i32
  }
  func.func @transform_8(%arg0: i32) -> (i32, i32, i32) {
    %c0_i32 = arith.constant 0 : i32
    %c0_i32_0 = arith.constant 0 : i32
    %c0_i32_1 = arith.constant 0 : i32
    return %arg0, %c0_i32, %c0_i32_0 : i32, i32, i32
  }
}

module attributes {stable_mosaic.version = 11 : i64} {
  func.func @_block_kernel(%arg0: i32, %arg1: i32, %arg2: memref<1x16x32xf32, #tpu.memory_space<vmem>>, %arg3: memref<16x32xf32, #tpu.memory_space<vmem>>, %arg4: memref<1x4x16x8xbf16, #tpu.memory_space<vmem>>, %arg5: memref<1x4x16x8xbf16, #tpu.memory_space<vmem>>, %arg6: memref<1x4x16x8xbf16, #tpu.memory_space<vmem>>, %arg7: memref<1x4x16x8xbf16, #tpu.memory_space<vmem>>, %arg8: memref<32x32xbf16, #tpu.memory_space<vmem>>, %arg9: memref<1x32xf32, #tpu.memory_space<vmem>>, %arg10: memref<4x8x32xbf16, #tpu.memory_space<vmem>>, %arg11: memref<1x32xf32, #tpu.memory_space<vmem>>, %arg12: memref<1x32xf32, #tpu.memory_space<vmem>>, %arg13: memref<1x32xf32, #tpu.memory_space<vmem>>, %arg14: memref<32x32xbf16, #tpu.memory_space<vmem>>, %arg15: memref<1x32xf32, #tpu.memory_space<vmem>>, %arg16: memref<4x8x32xbf16, #tpu.memory_space<vmem>>, %arg17: memref<1x32xf32, #tpu.memory_space<vmem>>, %arg18: memref<1x32xf32, #tpu.memory_space<vmem>>, %arg19: memref<1x32xf32, #tpu.memory_space<vmem>>, %arg20: memref<32x128xbf16, #tpu.memory_space<vmem>>, %arg21: memref<1x128xf32, #tpu.memory_space<vmem>>, %arg22: memref<128x32xbf16, #tpu.memory_space<vmem>>, %arg23: memref<1x32xf32, #tpu.memory_space<vmem>>, %arg24: memref<1x32xf32, #tpu.memory_space<vmem>>, %arg25: memref<1x32xf32, #tpu.memory_space<vmem>>, %arg26: memref<1x16x32xf32, #tpu.memory_space<vmem>>) attributes {dimension_semantics = [#tpu.dimension_semantics<parallel>, #tpu.dimension_semantics<parallel>], iteration_bounds = array<i64: 2, 1>, scalar_prefetch = 0 : i64, scratch_operands = 0 : i64, tpu.core_type = #tpu.core_type<tc>, window_params = [{transform_indices = @transform_0, window_bounds = array<i64: 1, 16, 32>}, {transform_indices = @transform_1, window_bounds = array<i64: 16, 32>}, {transform_indices = @transform_2, window_bounds = array<i64: 1, 4, 16, 8>}, {transform_indices = @transform_3, window_bounds = array<i64: 1, 4, 16, 8>}, {transform_indices = @transform_4, window_bounds = array<i64: 1, 4, 16, 8>}, {transform_indices = @transform_5, window_bounds = array<i64: 1, 4, 16, 8>}, {pipeline_mode = #tpu.pipeline_mode<synchronous>, transform_indices = @transform_6, window_bounds = array<i64: 32, 32>}, {pipeline_mode = #tpu.pipeline_mode<synchronous>, transform_indices = @transform_7, window_bounds = array<i64: 1, 32>}, {pipeline_mode = #tpu.pipeline_mode<synchronous>, transform_indices = @transform_8, window_bounds = array<i64: 4, 8, 32>}, {pipeline_mode = #tpu.pipeline_mode<synchronous>, transform_indices = @transform_9, window_bounds = array<i64: 1, 32>}, {pipeline_mode = #tpu.pipeline_mode<synchronous>, transform_indices = @transform_10, window_bounds = array<i64: 1, 32>}, {pipeline_mode = #tpu.pipeline_mode<synchronous>, transform_indices = @transform_11, window_bounds = array<i64: 1, 32>}, {pipeline_mode = #tpu.pipeline_mode<synchronous>, transform_indices = @transform_12, window_bounds = array<i64: 32, 32>}, {pipeline_mode = #tpu.pipeline_mode<synchronous>, transform_indices = @transform_13, window_bounds = array<i64: 1, 32>}, {pipeline_mode = #tpu.pipeline_mode<synchronous>, transform_indices = @transform_14, window_bounds = array<i64: 4, 8, 32>}, {pipeline_mode = #tpu.pipeline_mode<synchronous>, transform_indices = @transform_15, window_bounds = array<i64: 1, 32>}, {pipeline_mode = #tpu.pipeline_mode<synchronous>, transform_indices = @transform_16, window_bounds = array<i64: 1, 32>}, {pipeline_mode = #tpu.pipeline_mode<synchronous>, transform_indices = @transform_17, window_bounds = array<i64: 1, 32>}, {pipeline_mode = #tpu.pipeline_mode<synchronous>, transform_indices = @transform_18, window_bounds = array<i64: 32, 128>}, {pipeline_mode = #tpu.pipeline_mode<synchronous>, transform_indices = @transform_19, window_bounds = array<i64: 1, 128>}, {pipeline_mode = #tpu.pipeline_mode<synchronous>, transform_indices = @transform_20, window_bounds = array<i64: 128, 32>}, {pipeline_mode = #tpu.pipeline_mode<synchronous>, transform_indices = @transform_21, window_bounds = array<i64: 1, 32>}, {pipeline_mode = #tpu.pipeline_mode<synchronous>, transform_indices = @transform_22, window_bounds = array<i64: 1, 32>}, {pipeline_mode = #tpu.pipeline_mode<synchronous>, transform_indices = @transform_23, window_bounds = array<i64: 1, 32>}, {transform_indices = @transform_24, window_bounds = array<i64: 1, 16, 32>}]} {
    %c0 = arith.constant 0 : index
    %c0_0 = arith.constant 0 : index
    %c0_1 = arith.constant 0 : index
    %0 = vector.load %arg2[%c0, %c0_0, %c0_1] : memref<1x16x32xf32, #tpu.memory_space<vmem>>, vector<1x16x32xf32>
    %1 = vector.shape_cast %0 : vector<1x16x32xf32> to vector<16x32xf32>
    %c0_2 = arith.constant 0 : index
    %c0_3 = arith.constant 0 : index
    %2 = vector.load %arg3[%c0_2, %c0_3] : memref<16x32xf32, #tpu.memory_space<vmem>>, vector<16x32xf32>
    %3 = arith.addf %1, %2 : vector<16x32xf32>
    %c0_4 = arith.constant 0 : index
    %c0_5 = arith.constant 0 : index
    %4 = vector.load %arg8[%c0_4, %c0_5] : memref<32x32xbf16, #tpu.memory_space<vmem>>, vector<32x32xbf16>
    %5 = arith.truncf %3 : vector<16x32xf32> to vector<16x32xbf16>
    %cst = arith.constant dense<0.000000e+00> : vector<16x32xf32>
    %6 = tpu.matmul %5, %4, %cst {dimension_numbers = #tpu.dot_dimension_numbers<[1], [0], [0], [1], [0, 0, 1, 1], [], []>} : vector<16x32xbf16>, vector<32x32xbf16>, vector<16x32xf32> -> vector<16x32xf32>
    %c0_6 = arith.constant 0 : index
    %c0_7 = arith.constant 0 : index
    %7 = vector.load %arg9[%c0_6, %c0_7] : memref<1x32xf32, #tpu.memory_space<vmem>>, vector<1x32xf32>
    %8 = vector.broadcast %7 : vector<1x32xf32> to vector<16x32xf32>
    %9 = arith.addf %6, %8 : vector<16x32xf32>
    %c0_8 = arith.constant 0 : index
    %c0_9 = arith.constant 0 : index
    %c0_10 = arith.constant 0 : index
    %c0_11 = arith.constant 0 : index
    %10 = vector.load %arg4[%c0_8, %c0_9, %c0_10, %c0_11] : memref<1x4x16x8xbf16, #tpu.memory_space<vmem>>, vector<1x4x16x8xbf16>
    %11 = vector.shape_cast %10 : vector<1x4x16x8xbf16> to vector<4x16x8xbf16>
    %c0_12 = arith.constant 0 : index
    %c0_13 = arith.constant 0 : index
    %c0_14 = arith.constant 0 : index
    %c0_15 = arith.constant 0 : index
    %12 = vector.load %arg5[%c0_12, %c0_13, %c0_14, %c0_15] : memref<1x4x16x8xbf16, #tpu.memory_space<vmem>>, vector<1x4x16x8xbf16>
    %13 = vector.shape_cast %12 : vector<1x4x16x8xbf16> to vector<4x16x8xbf16>
    %c0_16 = arith.constant 0 : index
    %c0_17 = arith.constant 0 : index
    %c0_18 = arith.constant 0 : index
    %14 = vector.load %arg10[%c0_16, %c0_17, %c0_18] : memref<4x8x32xbf16, #tpu.memory_space<vmem>>, vector<4x8x32xbf16>
    %c0_19 = arith.constant 0 : index
    %c0_20 = arith.constant 0 : index
    %15 = vector.load %arg11[%c0_19, %c0_20] : memref<1x32xf32, #tpu.memory_space<vmem>>, vector<1x32xf32>
    %16 = vector.extract_strided_slice %9 {offsets = [0, 0], sizes = [16, 8], strides = [1, 1]} : vector<16x32xf32> to vector<16x8xf32>
    %17 = vector.extract_strided_slice %9 {offsets = [0, 8], sizes = [16, 8], strides = [1, 1]} : vector<16x32xf32> to vector<16x8xf32>
    %18 = vector.extract_strided_slice %9 {offsets = [0, 16], sizes = [16, 8], strides = [1, 1]} : vector<16x32xf32> to vector<16x8xf32>
    %19 = vector.extract_strided_slice %9 {offsets = [0, 24], sizes = [16, 8], strides = [1, 1]} : vector<16x32xf32> to vector<16x8xf32>
    %20 = vector.shape_cast %16 : vector<16x8xf32> to vector<1x16x8xf32>
    %21 = vector.shape_cast %17 : vector<16x8xf32> to vector<1x16x8xf32>
    %22 = vector.shape_cast %18 : vector<16x8xf32> to vector<1x16x8xf32>
    %23 = vector.shape_cast %19 : vector<16x8xf32> to vector<1x16x8xf32>
    %24 = tpu.concatenate %20, %21, %22, %23 in 0 : vector<1x16x8xf32>, vector<1x16x8xf32>, vector<1x16x8xf32>, vector<1x16x8xf32> -> vector<4x16x8xf32>
    %25 = arith.truncf %24 : vector<4x16x8xf32> to vector<4x16x8xbf16>
    "tpu.trace_start"() <{level = 10 : i32, message = "hqd,hkd->hqk"}> : () -> ()
    %cst_21 = arith.constant dense<0.000000e+00> : vector<4x16x16xf32>
    %26 = tpu.matmul %25, %11, %cst_21 {dimension_numbers = #tpu.dot_dimension_numbers<[2], [2], [1], [1], [0, 0, 0, 1, 1, 1], [0], [0]>} : vector<4x16x8xbf16>, vector<4x16x8xbf16>, vector<4x16x16xf32> -> vector<4x16x16xf32>
    "tpu.trace_stop"() : () -> ()
    %cst_22 = arith.constant dense<0xFF800000> : vector<4x16xf32>
    %27 = vector.multi_reduction <maximumf>, %26, %cst_22 [2] : vector<4x16x16xf32> to vector<4x16xf32>
    %28 = vector.shape_cast %27 : vector<4x16xf32> to vector<4x16x1xf32>
    %29 = vector.broadcast %28 : vector<4x16x1xf32> to vector<4x16x16xf32>
    %30 = arith.subf %26, %29 : vector<4x16x16xf32>
    %31 = math.exp %30 : vector<4x16x16xf32>
    %cst_23 = arith.constant dense<0.000000e+00> : vector<4x16xf32>
    %32 = vector.multi_reduction <add>, %31, %cst_23 [2] : vector<4x16x16xf32> to vector<4x16xf32>
    %33 = vector.shape_cast %32 : vector<4x16xf32> to vector<4x16x1xf32>
    %34 = tpu.reciprocal %33 {approx = true} : vector<4x16x1xf32> -> vector<4x16x1xf32>
    %35 = vector.broadcast %34 : vector<4x16x1xf32> to vector<4x16x16xf32>
    %36 = arith.mulf %31, %35 : vector<4x16x16xf32>
    %37 = arith.truncf %36 : vector<4x16x16xf32> to vector<4x16x16xbf16>
    "tpu.trace_start"() <{level = 10 : i32, message = "hqk,hkd->hqd"}> : () -> ()
    %cst_24 = arith.constant dense<0.000000e+00> : vector<4x16x8xf32>
    %38 = tpu.matmul %37, %13, %cst_24 {dimension_numbers = #tpu.dot_dimension_numbers<[2], [1], [1], [2], [0, 0, 0, 1, 1, 2], [0], [0]>} : vector<4x16x16xbf16>, vector<4x16x8xbf16>, vector<4x16x8xf32> -> vector<4x16x8xf32>
    "tpu.trace_stop"() : () -> ()
    %39 = arith.truncf %38 : vector<4x16x8xf32> to vector<4x16x8xbf16>
    "tpu.trace_start"() <{level = 10 : i32, message = "hqd,hdc->hqc"}> : () -> ()
    %cst_25 = arith.constant dense<0.000000e+00> : vector<4x16x32xf32>
    %40 = tpu.matmul %39, %14, %cst_25 {dimension_numbers = #tpu.dot_dimension_numbers<[2], [1], [1], [2], [0, 0, 0, 1, 1, 2], [0], [0]>} : vector<4x16x8xbf16>, vector<4x8x32xbf16>, vector<4x16x32xf32> -> vector<4x16x32xf32>
    "tpu.trace_stop"() : () -> ()
    %41 = vector.extract_strided_slice %40 {offsets = [0, 0, 0], sizes = [1, 16, 32], strides = [1, 1, 1]} : vector<4x16x32xf32> to vector<1x16x32xf32>
    %42 = vector.shape_cast %41 : vector<1x16x32xf32> to vector<16x32xf32>
    %43 = vector.broadcast %15 : vector<1x32xf32> to vector<16x32xf32>
    %44 = arith.addf %43, %42 : vector<16x32xf32>
    %45 = vector.extract_strided_slice %40 {offsets = [1, 0, 0], sizes = [1, 16, 32], strides = [1, 1, 1]} : vector<4x16x32xf32> to vector<1x16x32xf32>
    %46 = vector.shape_cast %45 : vector<1x16x32xf32> to vector<16x32xf32>
    %47 = arith.addf %44, %46 : vector<16x32xf32>
    %48 = vector.extract_strided_slice %40 {offsets = [2, 0, 0], sizes = [1, 16, 32], strides = [1, 1, 1]} : vector<4x16x32xf32> to vector<1x16x32xf32>
    %49 = vector.shape_cast %48 : vector<1x16x32xf32> to vector<16x32xf32>
    %50 = arith.addf %47, %49 : vector<16x32xf32>
    %51 = vector.extract_strided_slice %40 {offsets = [3, 0, 0], sizes = [1, 16, 32], strides = [1, 1, 1]} : vector<4x16x32xf32> to vector<1x16x32xf32>
    %52 = vector.shape_cast %51 : vector<1x16x32xf32> to vector<16x32xf32>
    %53 = arith.addf %50, %52 : vector<16x32xf32>
    %54 = arith.addf %1, %53 : vector<16x32xf32>
    %c0_26 = arith.constant 0 : index
    %c0_27 = arith.constant 0 : index
    %55 = vector.load %arg12[%c0_26, %c0_27] : memref<1x32xf32, #tpu.memory_space<vmem>>, vector<1x32xf32>
    %c0_28 = arith.constant 0 : index
    %c0_29 = arith.constant 0 : index
    %56 = vector.load %arg13[%c0_28, %c0_29] : memref<1x32xf32, #tpu.memory_space<vmem>>, vector<1x32xf32>
    %cst_30 = arith.constant dense<0.000000e+00> : vector<16xf32>
    %57 = vector.multi_reduction <add>, %54, %cst_30 [1] : vector<16x32xf32> to vector<16xf32>
    %58 = vector.shape_cast %57 : vector<16xf32> to vector<16x1xf32>
    %cst_31 = arith.constant 3.200000e+01 : f32
    %59 = vector.broadcast %cst_31 : f32 to vector<16x1xf32>
    %60 = arith.divf %58, %59 : vector<16x1xf32>
    %61 = vector.broadcast %60 : vector<16x1xf32> to vector<16x32xf32>
    %62 = arith.subf %54, %61 : vector<16x32xf32>
    %63 = arith.mulf %62, %62 : vector<16x32xf32>
    %cst_32 = arith.constant dense<0.000000e+00> : vector<16xf32>
    %64 = vector.multi_reduction <add>, %63, %cst_32 [1] : vector<16x32xf32> to vector<16xf32>
    %65 = vector.shape_cast %64 : vector<16xf32> to vector<16x1xf32>
    %cst_33 = arith.constant 3.200000e+01 : f32
    %66 = vector.broadcast %cst_33 : f32 to vector<16x1xf32>
    %67 = arith.divf %65, %66 : vector<16x1xf32>
    %68 = vector.broadcast %60 : vector<16x1xf32> to vector<16x32xf32>
    %69 = arith.subf %54, %68 : vector<16x32xf32>
    %cst_34 = arith.constant 9.99999974E-6 : f32
    %70 = vector.broadcast %cst_34 : f32 to vector<16x1xf32>
    %71 = arith.addf %67, %70 : vector<16x1xf32>
    %72 = math.rsqrt %71 : vector<16x1xf32>
    %73 = vector.broadcast %72 : vector<16x1xf32> to vector<16x32xf32>
    %74 = arith.mulf %69, %73 : vector<16x32xf32>
    %75 = vector.broadcast %55 : vector<1x32xf32> to vector<16x32xf32>
    %76 = arith.mulf %74, %75 : vector<16x32xf32>
    %77 = vector.broadcast %56 : vector<1x32xf32> to vector<16x32xf32>
    %78 = arith.addf %76, %77 : vector<16x32xf32>
    %79 = arith.addf %78, %2 : vector<16x32xf32>
    %c0_35 = arith.constant 0 : index
    %c0_36 = arith.constant 0 : index
    %80 = vector.load %arg14[%c0_35, %c0_36] : memref<32x32xbf16, #tpu.memory_space<vmem>>, vector<32x32xbf16>
    %81 = arith.truncf %79 : vector<16x32xf32> to vector<16x32xbf16>
    %cst_37 = arith.constant dense<0.000000e+00> : vector<16x32xf32>
    %82 = tpu.matmul %81, %80, %cst_37 {dimension_numbers = #tpu.dot_dimension_numbers<[1], [0], [0], [1], [0, 0, 1, 1], [], []>} : vector<16x32xbf16>, vector<32x32xbf16>, vector<16x32xf32> -> vector<16x32xf32>
    %c0_38 = arith.constant 0 : index
    %c0_39 = arith.constant 0 : index
    %83 = vector.load %arg15[%c0_38, %c0_39] : memref<1x32xf32, #tpu.memory_space<vmem>>, vector<1x32xf32>
    %84 = vector.broadcast %83 : vector<1x32xf32> to vector<16x32xf32>
    %85 = arith.addf %82, %84 : vector<16x32xf32>
    %c0_40 = arith.constant 0 : index
    %c0_41 = arith.constant 0 : index
    %c0_42 = arith.constant 0 : index
    %c0_43 = arith.constant 0 : index
    %86 = vector.load %arg6[%c0_40, %c0_41, %c0_42, %c0_43] : memref<1x4x16x8xbf16, #tpu.memory_space<vmem>>, vector<1x4x16x8xbf16>
    %87 = vector.shape_cast %86 : vector<1x4x16x8xbf16> to vector<4x16x8xbf16>
    %c0_44 = arith.constant 0 : index
    %c0_45 = arith.constant 0 : index
    %c0_46 = arith.constant 0 : index
    %c0_47 = arith.constant 0 : index
    %88 = vector.load %arg7[%c0_44, %c0_45, %c0_46, %c0_47] : memref<1x4x16x8xbf16, #tpu.memory_space<vmem>>, vector<1x4x16x8xbf16>
    %89 = vector.shape_cast %88 : vector<1x4x16x8xbf16> to vector<4x16x8xbf16>
    %c0_48 = arith.constant 0 : index
    %c0_49 = arith.constant 0 : index
    %c0_50 = arith.constant 0 : index
    %90 = vector.load %arg16[%c0_48, %c0_49, %c0_50] : memref<4x8x32xbf16, #tpu.memory_space<vmem>>, vector<4x8x32xbf16>
    %c0_51 = arith.constant 0 : index
    %c0_52 = arith.constant 0 : index
    %91 = vector.load %arg17[%c0_51, %c0_52] : memref<1x32xf32, #tpu.memory_space<vmem>>, vector<1x32xf32>
    %92 = vector.extract_strided_slice %85 {offsets = [0, 0], sizes = [16, 8], strides = [1, 1]} : vector<16x32xf32> to vector<16x8xf32>
    %93 = vector.extract_strided_slice %85 {offsets = [0, 8], sizes = [16, 8], strides = [1, 1]} : vector<16x32xf32> to vector<16x8xf32>
    %94 = vector.extract_strided_slice %85 {offsets = [0, 16], sizes = [16, 8], strides = [1, 1]} : vector<16x32xf32> to vector<16x8xf32>
    %95 = vector.extract_strided_slice %85 {offsets = [0, 24], sizes = [16, 8], strides = [1, 1]} : vector<16x32xf32> to vector<16x8xf32>
    %96 = vector.shape_cast %92 : vector<16x8xf32> to vector<1x16x8xf32>
    %97 = vector.shape_cast %93 : vector<16x8xf32> to vector<1x16x8xf32>
    %98 = vector.shape_cast %94 : vector<16x8xf32> to vector<1x16x8xf32>
    %99 = vector.shape_cast %95 : vector<16x8xf32> to vector<1x16x8xf32>
    %100 = tpu.concatenate %96, %97, %98, %99 in 0 : vector<1x16x8xf32>, vector<1x16x8xf32>, vector<1x16x8xf32>, vector<1x16x8xf32> -> vector<4x16x8xf32>
    %101 = arith.truncf %100 : vector<4x16x8xf32> to vector<4x16x8xbf16>
    "tpu.trace_start"() <{level = 10 : i32, message = "hqd,hkd->hqk"}> : () -> ()
    %cst_53 = arith.constant dense<0.000000e+00> : vector<4x16x16xf32>
    %102 = tpu.matmul %101, %87, %cst_53 {dimension_numbers = #tpu.dot_dimension_numbers<[2], [2], [1], [1], [0, 0, 0, 1, 1, 1], [0], [0]>} : vector<4x16x8xbf16>, vector<4x16x8xbf16>, vector<4x16x16xf32> -> vector<4x16x16xf32>
    "tpu.trace_stop"() : () -> ()
    %cst_54 = arith.constant dense<0xFF800000> : vector<4x16xf32>
    %103 = vector.multi_reduction <maximumf>, %102, %cst_54 [2] : vector<4x16x16xf32> to vector<4x16xf32>
    %104 = vector.shape_cast %103 : vector<4x16xf32> to vector<4x16x1xf32>
    %105 = vector.broadcast %104 : vector<4x16x1xf32> to vector<4x16x16xf32>
    %106 = arith.subf %102, %105 : vector<4x16x16xf32>
    %107 = math.exp %106 : vector<4x16x16xf32>
    %cst_55 = arith.constant dense<0.000000e+00> : vector<4x16xf32>
    %108 = vector.multi_reduction <add>, %107, %cst_55 [2] : vector<4x16x16xf32> to vector<4x16xf32>
    %109 = vector.shape_cast %108 : vector<4x16xf32> to vector<4x16x1xf32>
    %110 = tpu.reciprocal %109 {approx = true} : vector<4x16x1xf32> -> vector<4x16x1xf32>
    %111 = vector.broadcast %110 : vector<4x16x1xf32> to vector<4x16x16xf32>
    %112 = arith.mulf %107, %111 : vector<4x16x16xf32>
    %113 = arith.truncf %112 : vector<4x16x16xf32> to vector<4x16x16xbf16>
    "tpu.trace_start"() <{level = 10 : i32, message = "hqk,hkd->hqd"}> : () -> ()
    %cst_56 = arith.constant dense<0.000000e+00> : vector<4x16x8xf32>
    %114 = tpu.matmul %113, %89, %cst_56 {dimension_numbers = #tpu.dot_dimension_numbers<[2], [1], [1], [2], [0, 0, 0, 1, 1, 2], [0], [0]>} : vector<4x16x16xbf16>, vector<4x16x8xbf16>, vector<4x16x8xf32> -> vector<4x16x8xf32>
    "tpu.trace_stop"() : () -> ()
    %115 = arith.truncf %114 : vector<4x16x8xf32> to vector<4x16x8xbf16>
    "tpu.trace_start"() <{level = 10 : i32, message = "hqd,hdc->hqc"}> : () -> ()
    %cst_57 = arith.constant dense<0.000000e+00> : vector<4x16x32xf32>
    %116 = tpu.matmul %115, %90, %cst_57 {dimension_numbers = #tpu.dot_dimension_numbers<[2], [1], [1], [2], [0, 0, 0, 1, 1, 2], [0], [0]>} : vector<4x16x8xbf16>, vector<4x8x32xbf16>, vector<4x16x32xf32> -> vector<4x16x32xf32>
    "tpu.trace_stop"() : () -> ()
    %117 = vector.extract_strided_slice %116 {offsets = [0, 0, 0], sizes = [1, 16, 32], strides = [1, 1, 1]} : vector<4x16x32xf32> to vector<1x16x32xf32>
    %118 = vector.shape_cast %117 : vector<1x16x32xf32> to vector<16x32xf32>
    %119 = vector.broadcast %91 : vector<1x32xf32> to vector<16x32xf32>
    %120 = arith.addf %119, %118 : vector<16x32xf32>
    %121 = vector.extract_strided_slice %116 {offsets = [1, 0, 0], sizes = [1, 16, 32], strides = [1, 1, 1]} : vector<4x16x32xf32> to vector<1x16x32xf32>
    %122 = vector.shape_cast %121 : vector<1x16x32xf32> to vector<16x32xf32>
    %123 = arith.addf %120, %122 : vector<16x32xf32>
    %124 = vector.extract_strided_slice %116 {offsets = [2, 0, 0], sizes = [1, 16, 32], strides = [1, 1, 1]} : vector<4x16x32xf32> to vector<1x16x32xf32>
    %125 = vector.shape_cast %124 : vector<1x16x32xf32> to vector<16x32xf32>
    %126 = arith.addf %123, %125 : vector<16x32xf32>
    %127 = vector.extract_strided_slice %116 {offsets = [3, 0, 0], sizes = [1, 16, 32], strides = [1, 1, 1]} : vector<4x16x32xf32> to vector<1x16x32xf32>
    %128 = vector.shape_cast %127 : vector<1x16x32xf32> to vector<16x32xf32>
    %129 = arith.addf %126, %128 : vector<16x32xf32>
    %130 = arith.addf %78, %129 : vector<16x32xf32>
    %c0_58 = arith.constant 0 : index
    %c0_59 = arith.constant 0 : index
    %131 = vector.load %arg18[%c0_58, %c0_59] : memref<1x32xf32, #tpu.memory_space<vmem>>, vector<1x32xf32>
    %c0_60 = arith.constant 0 : index
    %c0_61 = arith.constant 0 : index
    %132 = vector.load %arg19[%c0_60, %c0_61] : memref<1x32xf32, #tpu.memory_space<vmem>>, vector<1x32xf32>
    %cst_62 = arith.constant dense<0.000000e+00> : vector<16xf32>
    %133 = vector.multi_reduction <add>, %130, %cst_62 [1] : vector<16x32xf32> to vector<16xf32>
    %134 = vector.shape_cast %133 : vector<16xf32> to vector<16x1xf32>
    %cst_63 = arith.constant 3.200000e+01 : f32
    %135 = vector.broadcast %cst_63 : f32 to vector<16x1xf32>
    %136 = arith.divf %134, %135 : vector<16x1xf32>
    %137 = vector.broadcast %136 : vector<16x1xf32> to vector<16x32xf32>
    %138 = arith.subf %130, %137 : vector<16x32xf32>
    %139 = arith.mulf %138, %138 : vector<16x32xf32>
    %cst_64 = arith.constant dense<0.000000e+00> : vector<16xf32>
    %140 = vector.multi_reduction <add>, %139, %cst_64 [1] : vector<16x32xf32> to vector<16xf32>
    %141 = vector.shape_cast %140 : vector<16xf32> to vector<16x1xf32>
    %cst_65 = arith.constant 3.200000e+01 : f32
    %142 = vector.broadcast %cst_65 : f32 to vector<16x1xf32>
    %143 = arith.divf %141, %142 : vector<16x1xf32>
    %144 = vector.broadcast %136 : vector<16x1xf32> to vector<16x32xf32>
    %145 = arith.subf %130, %144 : vector<16x32xf32>
    %cst_66 = arith.constant 9.99999974E-6 : f32
    %146 = vector.broadcast %cst_66 : f32 to vector<16x1xf32>
    %147 = arith.addf %143, %146 : vector<16x1xf32>
    %148 = math.rsqrt %147 : vector<16x1xf32>
    %149 = vector.broadcast %148 : vector<16x1xf32> to vector<16x32xf32>
    %150 = arith.mulf %145, %149 : vector<16x32xf32>
    %151 = vector.broadcast %131 : vector<1x32xf32> to vector<16x32xf32>
    %152 = arith.mulf %150, %151 : vector<16x32xf32>
    %153 = vector.broadcast %132 : vector<1x32xf32> to vector<16x32xf32>
    %154 = arith.addf %152, %153 : vector<16x32xf32>
    %c0_67 = arith.constant 0 : index
    %c0_68 = arith.constant 0 : index
    %155 = vector.load %arg20[%c0_67, %c0_68] : memref<32x128xbf16, #tpu.memory_space<vmem>>, vector<32x128xbf16>
    %156 = arith.truncf %154 : vector<16x32xf32> to vector<16x32xbf16>
    %cst_69 = arith.constant dense<0.000000e+00> : vector<16x128xf32>
    %157 = tpu.matmul %156, %155, %cst_69 {dimension_numbers = #tpu.dot_dimension_numbers<[1], [0], [0], [1], [0, 0, 1, 1], [], []>} : vector<16x32xbf16>, vector<32x128xbf16>, vector<16x128xf32> -> vector<16x128xf32>
    %c0_70 = arith.constant 0 : index
    %c0_71 = arith.constant 0 : index
    %158 = vector.load %arg21[%c0_70, %c0_71] : memref<1x128xf32, #tpu.memory_space<vmem>>, vector<1x128xf32>
    %159 = vector.broadcast %158 : vector<1x128xf32> to vector<16x128xf32>
    %160 = arith.addf %157, %159 : vector<16x128xf32>
    %cst_72 = arith.constant 5.000000e-01 : f32
    %161 = vector.broadcast %cst_72 : f32 to vector<16x128xf32>
    %162 = arith.mulf %161, %160 : vector<16x128xf32>
    %cst_73 = arith.constant 4.471500e-02 : f32
    %163 = vector.broadcast %cst_73 : f32 to vector<16x128xf32>
    %164 = arith.mulf %163, %160 : vector<16x128xf32>
    %165 = arith.mulf %164, %160 : vector<16x128xf32>
    %166 = arith.mulf %165, %160 : vector<16x128xf32>
    %167 = arith.addf %160, %166 : vector<16x128xf32>
    %cst_74 = arith.constant 0.797884583 : f32
    %168 = vector.broadcast %cst_74 : f32 to vector<16x128xf32>
    %169 = arith.mulf %168, %167 : vector<16x128xf32>
    %170 = math.tanh %169 : vector<16x128xf32>
    %cst_75 = arith.constant 1.000000e+00 : f32
    %171 = vector.broadcast %cst_75 : f32 to vector<16x128xf32>
    %172 = arith.addf %171, %170 : vector<16x128xf32>
    %173 = arith.mulf %162, %172 : vector<16x128xf32>
    %c0_76 = arith.constant 0 : index
    %c0_77 = arith.constant 0 : index
    %174 = vector.load %arg22[%c0_76, %c0_77] : memref<128x32xbf16, #tpu.memory_space<vmem>>, vector<128x32xbf16>
    %175 = arith.truncf %173 : vector<16x128xf32> to vector<16x128xbf16>
    %cst_78 = arith.constant dense<0.000000e+00> : vector<16x32xf32>
    %176 = tpu.matmul %175, %174, %cst_78 {dimension_numbers = #tpu.dot_dimension_numbers<[1], [0], [0], [1], [0, 0, 1, 1], [], []>} : vector<16x128xbf16>, vector<128x32xbf16>, vector<16x32xf32> -> vector<16x32xf32>
    %c0_79 = arith.constant 0 : index
    %c0_80 = arith.constant 0 : index
    %177 = vector.load %arg23[%c0_79, %c0_80] : memref<1x32xf32, #tpu.memory_space<vmem>>, vector<1x32xf32>
    %178 = vector.broadcast %177 : vector<1x32xf32> to vector<16x32xf32>
    %179 = arith.addf %176, %178 : vector<16x32xf32>
    %180 = arith.addf %154, %179 : vector<16x32xf32>
    %c0_81 = arith.constant 0 : index
    %c0_82 = arith.constant 0 : index
    %181 = vector.load %arg24[%c0_81, %c0_82] : memref<1x32xf32, #tpu.memory_space<vmem>>, vector<1x32xf32>
    %c0_83 = arith.constant 0 : index
    %c0_84 = arith.constant 0 : index
    %182 = vector.load %arg25[%c0_83, %c0_84] : memref<1x32xf32, #tpu.memory_space<vmem>>, vector<1x32xf32>
    %cst_85 = arith.constant dense<0.000000e+00> : vector<16xf32>
    %183 = vector.multi_reduction <add>, %180, %cst_85 [1] : vector<16x32xf32> to vector<16xf32>
    %184 = vector.shape_cast %183 : vector<16xf32> to vector<16x1xf32>
    %cst_86 = arith.constant 3.200000e+01 : f32
    %185 = vector.broadcast %cst_86 : f32 to vector<16x1xf32>
    %186 = arith.divf %184, %185 : vector<16x1xf32>
    %187 = vector.broadcast %186 : vector<16x1xf32> to vector<16x32xf32>
    %188 = arith.subf %180, %187 : vector<16x32xf32>
    %189 = arith.mulf %188, %188 : vector<16x32xf32>
    %cst_87 = arith.constant dense<0.000000e+00> : vector<16xf32>
    %190 = vector.multi_reduction <add>, %189, %cst_87 [1] : vector<16x32xf32> to vector<16xf32>
    %191 = vector.shape_cast %190 : vector<16xf32> to vector<16x1xf32>
    %cst_88 = arith.constant 3.200000e+01 : f32
    %192 = vector.broadcast %cst_88 : f32 to vector<16x1xf32>
    %193 = arith.divf %191, %192 : vector<16x1xf32>
    %194 = vector.broadcast %186 : vector<16x1xf32> to vector<16x32xf32>
    %195 = arith.subf %180, %194 : vector<16x32xf32>
    %cst_89 = arith.constant 9.99999974E-6 : f32
    %196 = vector.broadcast %cst_89 : f32 to vector<16x1xf32>
    %197 = arith.addf %193, %196 : vector<16x1xf32>
    %198 = math.rsqrt %197 : vector<16x1xf32>
    %199 = vector.broadcast %198 : vector<16x1xf32> to vector<16x32xf32>
    %200 = arith.mulf %195, %199 : vector<16x32xf32>
    %201 = vector.broadcast %181 : vector<1x32xf32> to vector<16x32xf32>
    %202 = arith.mulf %200, %201 : vector<16x32xf32>
    %203 = vector.broadcast %182 : vector<1x32xf32> to vector<16x32xf32>
    %204 = arith.addf %202, %203 : vector<16x32xf32>
    %c0_90 = arith.constant 0 : index
    %c0_91 = arith.constant 0 : index
    %c0_92 = arith.constant 0 : index
    %205 = vector.load %arg26[%c0_90, %c0_91, %c0_92] : memref<1x16x32xf32, #tpu.memory_space<vmem>>, vector<1x16x32xf32>
    %206 = vector.shape_cast %205 : vector<1x16x32xf32> to vector<16x32xf32>
    %207 = vector.shape_cast %204 : vector<16x32xf32> to vector<1x16x32xf32>
    tpu.vector_store %arg26[%c0_90, %c0_91, %c0_92], %207 {strides = array<i32>} : memref<1x16x32xf32, #tpu.memory_space<vmem>>, vector<1x16x32xf32>,
    return
  }
  func.func @transform_0(%arg0: i32, %arg1: i32) -> (i32, i32, i32) {
    %c0_i32 = arith.constant 0 : i32
    %c0_i32_0 = arith.constant 0 : i32
    return %arg0, %arg1, %c0_i32 : i32, i32, i32
  }
  func.func @transform_1(%arg0: i32, %arg1: i32) -> (i32, i32) {
    %c0_i32 = arith.constant 0 : i32
    %c0_i32_0 = arith.constant 0 : i32
    return %arg1, %c0_i32 : i32, i32
  }
  func.func @transform_2(%arg0: i32, %arg1: i32) -> (i32, i32, i32, i32) {
    %c0_i32 = arith.constant 0 : i32
    %c0_i32_0 = arith.constant 0 : i32
    %c0_i32_1 = arith.constant 0 : i32
    %c0_i32_2 = arith.constant 0 : i32
    return %arg0, %c0_i32, %c0_i32_0, %c0_i32_1 : i32, i32, i32, i32
  }
  func.func @transform_3(%arg0: i32, %arg1: i32) -> (i32, i32, i32, i32) {
    %c0_i32 = arith.constant 0 : i32
    %c0_i32_0 = arith.constant 0 : i32
    %c0_i32_1 = arith.constant 0 : i32
    %c0_i32_2 = arith.constant 0 : i32
    return %arg0, %c0_i32, %c0_i32_0, %c0_i32_1 : i32, i32, i32, i32
  }
  func.func @transform_4(%arg0: i32, %arg1: i32) -> (i32, i32, i32, i32) {
    %c0_i32 = arith.constant 0 : i32
    %c0_i32_0 = arith.constant 0 : i32
    %c0_i32_1 = arith.constant 0 : i32
    %c0_i32_2 = arith.constant 0 : i32
    return %arg0, %c0_i32, %c0_i32_0, %c0_i32_1 : i32, i32, i32, i32
  }
  func.func @transform_5(%arg0: i32, %arg1: i32) -> (i32, i32, i32, i32) {
    %c0_i32 = arith.constant 0 : i32
    %c0_i32_0 = arith.constant 0 : i32
    %c0_i32_1 = arith.constant 0 : i32
    %c0_i32_2 = arith.constant 0 : i32
    return %arg0, %c0_i32, %c0_i32_0, %c0_i32_1 : i32, i32, i32, i32
  }
  func.func @transform_6(%arg0: i32, %arg1: i32) -> (i32, i32) {
    %c0_i32 = arith.constant 0 : i32
    %c0_i32_0 = arith.constant 0 : i32
    %c0_i32_1 = arith.constant 0 : i32
    return %c0_i32, %c0_i32_0 : i32, i32
  }
  func.func @transform_7(%arg0: i32, %arg1: i32) -> (i32, i32) {
    %c0_i32 = arith.constant 0 : i32
    %c0_i32_0 = arith.constant 0 : i32
    %c0_i32_1 = arith.constant 0 : i32
    return %c0_i32, %c0_i32_0 : i32, i32
  }
  func.func @transform_8(%arg0: i32, %arg1: i32) -> (i32, i32, i32) {
    %c0_i32 = arith.constant 0 : i32
    %c0_i32_0 = arith.constant 0 : i32
    %c0_i32_1 = arith.constant 0 : i32
    %c0_i32_2 = arith.constant 0 : i32
    return %c0_i32, %c0_i32_0, %c0_i32_1 : i32, i32, i32
  }
  func.func @transform_9(%arg0: i32, %arg1: i32) -> (i32, i32) {
    %c0_i32 = arith.constant 0 : i32
    %c0_i32_0 = arith.constant 0 : i32
    %c0_i32_1 = arith.constant 0 : i32
    return %c0_i32, %c0_i32_0 : i32, i32
  }
  func.func @transform_10(%arg0: i32, %arg1: i32) -> (i32, i32) {
    %c0_i32 = arith.constant 0 : i32
    %c0_i32_0 = arith.constant 0 : i32
    %c0_i32_1 = arith.constant 0 : i32
    return %c0_i32, %c0_i32_0 : i32, i32
  }
  func.func @transform_11(%arg0: i32, %arg1: i32) -> (i32, i32) {
    %c0_i32 = arith.constant 0 : i32
    %c0_i32_0 = arith.constant 0 : i32
    %c0_i32_1 = arith.constant 0 : i32
    return %c0_i32, %c0_i32_0 : i32, i32
  }
  func.func @transform_12(%arg0: i32, %arg1: i32) -> (i32, i32) {
    %c0_i32 = arith.constant 0 : i32
    %c0_i32_0 = arith.constant 0 : i32
    %c0_i32_1 = arith.constant 0 : i32
    return %c0_i32, %c0_i32_0 : i32, i32
  }
  func.func @transform_13(%arg0: i32, %arg1: i32) -> (i32, i32) {
    %c0_i32 = arith.constant 0 : i32
    %c0_i32_0 = arith.constant 0 : i32
    %c0_i32_1 = arith.constant 0 : i32
    return %c0_i32, %c0_i32_0 : i32, i32
  }
  func.func @transform_14(%arg0: i32, %arg1: i32) -> (i32, i32, i32) {
    %c0_i32 = arith.constant 0 : i32
    %c0_i32_0 = arith.constant 0 : i32
    %c0_i32_1 = arith.constant 0 : i32
    %c0_i32_2 = arith.constant 0 : i32
    return %c0_i32, %c0_i32_0, %c0_i32_1 : i32, i32, i32
  }
  func.func @transform_15(%arg0: i32, %arg1: i32) -> (i32, i32) {
    %c0_i32 = arith.constant 0 : i32
    %c0_i32_0 = arith.constant 0 : i32
    %c0_i32_1 = arith.constant 0 : i32
    return %c0_i32, %c0_i32_0 : i32, i32
  }
  func.func @transform_16(%arg0: i32, %arg1: i32) -> (i32, i32) {
    %c0_i32 = arith.constant 0 : i32
    %c0_i32_0 = arith.constant 0 : i32
    %c0_i32_1 = arith.constant 0 : i32
    return %c0_i32, %c0_i32_0 : i32, i32
  }
  func.func @transform_17(%arg0: i32, %arg1: i32) -> (i32, i32) {
    %c0_i32 = arith.constant 0 : i32
    %c0_i32_0 = arith.constant 0 : i32
    %c0_i32_1 = arith.constant 0 : i32
    return %c0_i32, %c0_i32_0 : i32, i32
  }
  func.func @transform_18(%arg0: i32, %arg1: i32) -> (i32, i32) {
    %c0_i32 = arith.constant 0 : i32
    %c0_i32_0 = arith.constant 0 : i32
    %c0_i32_1 = arith.constant 0 : i32
    return %c0_i32, %c0_i32_0 : i32, i32
  }
  func.func @transform_19(%arg0: i32, %arg1: i32) -> (i32, i32) {
    %c0_i32 = arith.constant 0 : i32
    %c0_i32_0 = arith.constant 0 : i32
    %c0_i32_1 = arith.constant 0 : i32
    return %c0_i32, %c0_i32_0 : i32, i32
  }
  func.func @transform_20(%arg0: i32, %arg1: i32) -> (i32, i32) {
    %c0_i32 = arith.constant 0 : i32
    %c0_i32_0 = arith.constant 0 : i32
    %c0_i32_1 = arith.constant 0 : i32
    return %c0_i32, %c0_i32_0 : i32, i32
  }
  func.func @transform_21(%arg0: i32, %arg1: i32) -> (i32, i32) {
    %c0_i32 = arith.constant 0 : i32
    %c0_i32_0 = arith.constant 0 : i32
    %c0_i32_1 = arith.constant 0 : i32
    return %c0_i32, %c0_i32_0 : i32, i32
  }
  func.func @transform_22(%arg0: i32, %arg1: i32) -> (i32, i32) {
    %c0_i32 = arith.constant 0 : i32
    %c0_i32_0 = arith.constant 0 : i32
    %c0_i32_1 = arith.constant 0 : i32
    return %c0_i32, %c0_i32_0 : i32, i32
  }
  func.func @transform_23(%arg0: i32, %arg1: i32) -> (i32, i32) {
    %c0_i32 = arith.constant 0 : i32
    %c0_i32_0 = arith.constant 0 : i32
    %c0_i32_1 = arith.constant 0 : i32
    return %c0_i32, %c0_i32_0 : i32, i32
  }
  func.func @transform_24(%arg0: i32, %arg1: i32) -> (i32, i32, i32) {
    %c0_i32 = arith.constant 0 : i32
    %c0_i32_0 = arith.constant 0 : i32
    return %arg0, %arg1, %c0_i32 : i32, i32, i32
  }
}

</mosaic_0001>

<llo_original>
// kernel: tpu_custom_call.1
$region0: #{tpu_custom_call.1}
  #allocation0 [shape = 'u32[]', space=smem, size = 0x4, offset = 0x4, fixed_abs, tag = 'smem constant byte address 0x4 - core index']
  #allocation1 [shape = 'u32[144,128]{1,0:T(1,128)}', space=vmem, size = 0x12000, scoped, tag = 'internal scratch']
  %s0 = inlined_call_operand.hbm [shape: f32[8,128], index: 0, kind: input, shape index: {}]
  %s1 = inlined_call_operand.hbm [shape: f32[16,128], index: 1, kind: output, shape index: {}]
  %s2 = sld [smem:[#allocation0]]
  $region41: #{tpu_custom_call.1} parent=0
    _
  %s4 = ssub.s32 1, %s2
  %s5 = scalar_select 0, %s4, %s2
  $region1: #{tpu_custom_call.1} parent=0
    #allocation2 [shape = 'u8[4096]{0}', space=vmem, size = 0x1000, scoped, tag = 'input window, operand 0, single buffered']
    #allocation3 [shape = 's32[2]{0}', space=sflag, size = 0x8, scoped, tag = 'scoped memory for tpu_custom_call.1']
    #allocation4 [shape = 's32[2]{0}', space=sflag, size = 0x8, scoped, tag = 'scoped memory for tpu_custom_call.1']
    #allocation5 [shape = 'u8[8192]{0}', space=vmem, size = 0x2000, scoped, tag = 'output window, operand 0']
    %6 = vsyncpa [#allocation3], 0
    %7 = vsyncpa [#allocation4], 0
    %s8 = scalar_lea.sflag [#allocation4], 1
    %9 = vsyncpa %s8, 0
    loop: start=0, step=1, limit=4
    $region2: #{tpu_custom_call.1} parent=1 // loop_pre_header
      _
    $region3: #{tpu_custom_call.1} parent=1 // loop_header
      %s11 = sphi 0, %s15
      %p12 = scmp.ge.s32.totalorder %s11, 4
      %s19 = sphi 0, %s19
      %s21 = sphi 0, %s19
      %s22 = sphi 0, %s21
      %s36 = sphi 0, %s22
      %s42 = sphi 0, %s44
      %s45 = sphi 0, %s42
      %s46 = sphi 0, %s45
      %s62 = sphi 0, %s46
    $region4: #{tpu_custom_call.1} parent=1 // loop_header_branch
      %14 = sbr.rel (%p12) target = $region8
    $region5: #{tpu_custom_call.1} parent=1 // loop_body
      %s16 = ssub.s32 %s11, 1
      %s17 = ssub.s32 %s11, 2
      %s18 = sadd.s32 %s11, 1
      %s20 = sadd.s32 %s19, 1
      %p23 = scmp.eq.s32.totalorder %s11, 1
      %p24 = scmp.ne.s32.totalorder %s19, %s21
      %p25 = scmp.eq.s32.totalorder %s11, 0
      %p26 = por %p24, %p25
      %p27 = scmp.ne.s32.totalorder %s19, %s21
      %p28 = scmp.eq.s32.totalorder %s16, 1
      %p29 = por %p27, %p28
      %p30 = scmp.ne.s32.totalorder %s21, %s22
      %p31 = scmp.eq.s32.totalorder %s16, 0
      %p32 = por %p30, %p31
      %p33 = scmp.ne.s32.totalorder %s21, %s22
      %p34 = scmp.eq.s32.totalorder %s17, 1
      %p35 = por %p33, %p34
      %p37 = scmp.ne.s32.totalorder %s22, %s36
      %p38 = scmp.eq.s32.totalorder %s17, 0
      %p39 = por %p37, %p38
      %s40 = ssub.s32 %s11, %s18
      %p41 = scmp.eq.s32.totalorder %s40, 0
      %s43 = sadd.s32 %s42, 1
      %s44 = scalar_select %p41, %s42, %s43
      %p47 = pneg %p41
      %p48 = scmp.eq.s32.totalorder %s11, 1
      %p49 = por %p47, %p48
      %p50 = scmp.ne.s32.totalorder %s42, %s45
      %p51 = scmp.eq.s32.totalorder %s11, 0
      %p52 = por %p50, %p51
      %p53 = scmp.ne.s32.totalorder %s42, %s45
      %p54 = scmp.eq.s32.totalorder %s16, 1
      %p55 = por %p53, %p54
      %p56 = scmp.ne.s32.totalorder %s45, %s46
      %p57 = scmp.eq.s32.totalorder %s16, 0
      %p58 = por %p56, %p57
      %p59 = scmp.ne.s32.totalorder %s45, %s46
      %p60 = scmp.eq.s32.totalorder %s17, 1
      %p61 = por %p59, %p60
      %p63 = scmp.ne.s32.totalorder %s46, %s62
      %p64 = scmp.eq.s32.totalorder %s17, 0
      %p65 = por %p63, %p64
      %p66 = scmp.le.s32.totalorder 1, %s11
      %p67 = scmp.lt.s32.totalorder %s11, 3
      %p68 = pnand %p66, %p67
      %p69 = pneg %p68
      // Predicated region
      $region9: #{tpu_custom_call.1} parent=5 // pred_check
        _
      $region10: #{tpu_custom_call.1} parent=5 // pred_check_branch
        %71 = sbr.rel (%p68) target = $region12
      $region11: #{tpu_custom_call.1} parent=5 // pred_region
        %s72 = ssub.s32 %s11, 1
        // Predicated region
        $region13: #{tpu_custom_call.1} parent=11 // pred_check
          %p73 = pneg %p32
        $region14: #{tpu_custom_call.1} parent=11 // pred_check_branch
          %75 = sbr.rel (%p73) target = $region16
        $region15: #{tpu_custom_call.1} parent=11 // pred_region
          %s77 = ssub.s32 128, 128
          %78 = vsyncadd [#allocation3], %s77
          %s80 = sshll.u32 [#allocation2], 4
          %s81 = int_to_ptr.vmem [resolvable:$true] %s80
          %83 = dma.hbm_to_vmem [thread:$0]  %s0, 128, %s81, [#allocation3]
        $region16: #{tpu_custom_call.1} parent=11 // pred_fallthru
          _
      $region12: #{tpu_custom_call.1} parent=5 // pred_fallthru
        _
      %p84 = scmp.lt.s32.totalorder %s11, 2
      // Predicated region
      $region17: #{tpu_custom_call.1} parent=5 // pred_check
        %p85 = pneg %p84
      $region18: #{tpu_custom_call.1} parent=5 // pred_check_branch
        %87 = sbr.rel (%p85) target = $region20
      $region19: #{tpu_custom_call.1} parent=5 // pred_region
        _
      $region20: #{tpu_custom_call.1} parent=5 // pred_fallthru
        _
      %p88 = scmp.le.s32.totalorder 1, %s11
      %p89 = scmp.lt.s32.totalorder %s11, 3
      %p90 = pnand %p88, %p89
      %p91 = pneg %p90
      // Predicated region
      $region21: #{tpu_custom_call.1} parent=5 // pred_check
        _
      $region22: #{tpu_custom_call.1} parent=5 // pred_check_branch
        %93 = sbr.rel (%p90) target = $region24
      $region23: #{tpu_custom_call.1} parent=5 // pred_region
        %s94 = ssub.s32 %s11, 1
        // Predicated region
        $region25: #{tpu_custom_call.1} parent=23 // pred_check
          %p95 = pneg %p32
        $region26: #{tpu_custom_call.1} parent=23 // pred_check_branch
          %97 = sbr.rel (%p95) target = $region28
        $region27: #{tpu_custom_call.1} parent=23 // pred_region
          %98 = dma.done [#allocation3], 128
        $region28: #{tpu_custom_call.1} parent=23 // pred_fallthru
          _
        %p99 = pneg %p32
        %p100 = pneg %p29
        %p101 = pneg %p58
        %p102 = pneg %p55
        %s103 = sand.u32 %s45, 1
        %s104 = scalar_lea.sflag [#allocation4], %s103
        %s105 = sand.u32 %s45, 1
        %s106 = smul.addr %s105, 8
        %s107 = scalar_lea.vmem [#allocation5], %s106
        %v108 = vld [vmem:[#allocation2] sm:$0xff]
        %v109 = vmul.f32 %v108, 2.0
        %110 = vst [vmem:[%s107] sm:$0xff] %v109
        %s111 = sand.u32 %s45, 1
        %s112 = scalar_lea.sflag [#allocation4], %s111
        %s113 = sand.u32 %s45, 1
        %s114 = smul.addr %s113, 8
        %s115 = scalar_lea.vmem [#allocation5], %s114
        // Predicated region
        $region29: #{tpu_custom_call.1} parent=23 // pred_check
          %p116 = pneg %p55
        $region30: #{tpu_custom_call.1} parent=23 // pred_check_branch
          %118 = sbr.rel (%p116) target = $region32
        $region31: #{tpu_custom_call.1} parent=23 // pred_region
          %s120 = ssub.s32 128, 128
          %121 = vsyncadd %s112, %s120
          %s122 = smul.addr %s16, 128
          %s123 = scalar_lea.hbm %s1, %s122
          %s125 = sshll.u32 %s115, 4
          %s126 = int_to_ptr.vmem [resolvable:$true] %s125
          %128 = dma.vmem_to_hbm [thread:$0]  %s126, 128, %s123, %s112
        $region32: #{tpu_custom_call.1} parent=23 // pred_fallthru
          _
      $region24: #{tpu_custom_call.1} parent=5 // pred_fallthru
        _
      %p129 = scmp.le.s32.totalorder 2, %s11
      // Predicated region
      $region33: #{tpu_custom_call.1} parent=5 // pred_check
        %p130 = pneg %p129
      $region34: #{tpu_custom_call.1} parent=5 // pred_check_branch
        %132 = sbr.rel (%p130) target = $region36
      $region35: #{tpu_custom_call.1} parent=5 // pred_region
        %s133 = ssub.s32 %s11, 2
        // Predicated region
        $region37: #{tpu_custom_call.1} parent=35 // pred_check
          %p134 = pneg %p61
        $region38: #{tpu_custom_call.1} parent=35 // pred_check_branch
          %136 = sbr.rel (%p134) target = $region40
        $region39: #{tpu_custom_call.1} parent=35 // pred_region
          %s137 = sand.u32 %s46, 1
          %s138 = scalar_lea.sflag [#allocation4], %s137
          %s139 = sand.u32 %s46, 1
          %s140 = smul.addr %s139, 8
          %s141 = scalar_lea.vmem [#allocation5], %s140
          %142 = dma.done %s138, 128
        $region40: #{tpu_custom_call.1} parent=35 // pred_fallthru
          _
      $region36: #{tpu_custom_call.1} parent=5 // pred_fallthru
        _
    $region6: #{tpu_custom_call.1} parent=1 // loop_footer
      %s15 = sadd.s32 1, %s11
    $region7: #{tpu_custom_call.1} parent=1 // loop_footer_branch
      %10 = sbr.rel target = $region3
    $region8: #{tpu_custom_call.1} parent=1 // loop_exit
      _
    %143 = vsyncpa [#allocation3], 1
    %s144 = scalar_lea.sflag [#allocation3], 1
    %145 = vsyncpa %s144, 1
    %146 = vsyncpa [#allocation4], 1
    %s147 = scalar_lea.sflag [#allocation4], 1
    %148 = vsyncpa %s147, 1

// kernel: fwd.10
$region0: #{fwd.10}
  #allocation0 [shape = 'u32[]', space=smem, size = 0x4, offset = 0x4, fixed_abs, tag = 'smem constant byte address 0x4 - core index']
  #allocation1 [shape = 'u32[144,128]{1,0:T(1,128)}', space=vmem, size = 0x12000, scoped, tag = 'internal scratch']
  %s0 = inlined_call_operand.vmem [shape: bf16[2,4,64], index: 0, kind: input, shape index: {}]
  %s1 = inlined_call_operand.vmem [shape: bf16[64,64], index: 1, kind: input, shape index: {}]
  %s2 = inlined_call_operand.vmem [shape: f32[1,64], index: 2, kind: input, shape index: {}]
  %s3 = inlined_call_operand.vmem [shape: bf16[64,64], index: 3, kind: input, shape index: {}]
  %s4 = inlined_call_operand.vmem [shape: f32[1,64], index: 4, kind: input, shape index: {}]
  %s5 = inlined_call_operand.vmem [shape: bf16[2,4,64], index: 5, kind: output, shape index: {0}]
  %s6 = inlined_call_operand.vmem [shape: bf16[2,4,64], index: 6, kind: output, shape index: {1}]
  %7 = xla_tuple %s5, %s6
  %s8 = sld [smem:[#allocation0]]
  $region61: #{fwd.10} parent=0
    _
  %s10 = ssub.s32 1, %s8
  %s11 = scalar_select 0, %s10, %s8
  loop: start=0, step=1, limit=4
  $region2: #{fwd.10} parent=0 // loop_pre_header
    _
  $region3: #{fwd.10} parent=0 // loop_header
    %s13 = sphi 0, %s17
    %p14 = scmp.ge.s32.totalorder %s13, 4
    %s23 = sphi 0, %s25
    %s26 = sphi 0, %s23
    %s27 = sphi 0, %s26
    %s43 = sphi 0, %s27
    %s47 = sphi 0, %s47
    %s49 = sphi 0, %s47
    %s50 = sphi 0, %s49
    %s64 = sphi 0, %s50
    %s68 = sphi 0, %s68
    %s70 = sphi 0, %s68
    %s71 = sphi 0, %s70
    %s85 = sphi 0, %s71
    %s89 = sphi 0, %s89
    %s91 = sphi 0, %s89
    %s92 = sphi 0, %s91
    %s106 = sphi 0, %s92
    %s110 = sphi 0, %s110
    %s112 = sphi 0, %s110
    %s113 = sphi 0, %s112
    %s127 = sphi 0, %s113
    %s133 = sphi 0, %s135
    %s136 = sphi 0, %s133
    %s137 = sphi 0, %s136
    %s153 = sphi 0, %s137
    %s159 = sphi 0, %s161
    %s162 = sphi 0, %s159
    %s163 = sphi 0, %s162
    %s179 = sphi 0, %s163
  $region4: #{fwd.10} parent=0 // loop_header_branch
    %16 = sbr.rel (%p14) target = $region8
  $region5: #{fwd.10} parent=0 // loop_body
    %s18 = ssub.s32 %s13, 1
    %s19 = ssub.s32 %s13, 2
    %s20 = sadd.s32 %s13, 1
    %s21 = ssub.s32 %s13, %s20
    %p22 = scmp.eq.s32.totalorder %s21, 0
    %s24 = sadd.s32 %s23, 1
    %s25 = scalar_select %p22, %s23, %s24
    %p28 = pneg %p22
    %p29 = scmp.eq.s32.totalorder %s13, 1
    %p30 = por %p28, %p29
    %p31 = scmp.ne.s32.totalorder %s23, %s26
    %p32 = scmp.eq.s32.totalorder %s13, 0
    %p33 = por %p31, %p32
    %p34 = scmp.ne.s32.totalorder %s23, %s26
    %p35 = scmp.eq.s32.totalorder %s18, 1
    %p36 = por %p34, %p35
    %p37 = scmp.ne.s32.totalorder %s26, %s27
    %p38 = scmp.eq.s32.totalorder %s18, 0
    %p39 = por %p37, %p38
    %p40 = scmp.ne.s32.totalorder %s26, %s27
    %p41 = scmp.eq.s32.totalorder %s19, 1
    %p42 = por %p40, %p41
    %p44 = scmp.ne.s32.totalorder %s27, %s43
    %p45 = scmp.eq.s32.totalorder %s19, 0
    %p46 = por %p44, %p45
    %s48 = sadd.s32 %s47, 1
    %p51 = scmp.eq.s32.totalorder %s13, 1
    %p52 = scmp.ne.s32.totalorder %s47, %s49
    %p53 = scmp.eq.s32.totalorder %s13, 0
    %p54 = por %p52, %p53
    %p55 = scmp.ne.s32.totalorder %s47, %s49
    %p56 = scmp.eq.s32.totalorder %s18, 1
    %p57 = por %p55, %p56
    %p58 = scmp.ne.s32.totalorder %s49, %s50
    %p59 = scmp.eq.s32.totalorder %s18, 0
    %p60 = por %p58, %p59
    %p61 = scmp.ne.s32.totalorder %s49, %s50
    %p62 = scmp.eq.s32.totalorder %s19, 1
    %p63 = por %p61, %p62
    %p65 = scmp.ne.s32.totalorder %s50, %s64
    %p66 = scmp.eq.s32.totalorder %s19, 0
    %p67 = por %p65, %p66
    %s69 = sadd.s32 %s68, 1
    %p72 = scmp.eq.s32.totalorder %s13, 1
    %p73 = scmp.ne.s32.totalorder %s68, %s70
    %p74 = scmp.eq.s32.totalorder %s13, 0
    %p75 = por %p73, %p74
    %p76 = scmp.ne.s32.totalorder %s68, %s70
    %p77 = scmp.eq.s32.totalorder %s18, 1
    %p78 = por %p76, %p77
    %p79 = scmp.ne.s32.totalorder %s70, %s71
    %p80 = scmp.eq.s32.totalorder %s18, 0
    %p81 = por %p79, %p80
    %p82 = scmp.ne.s32.totalorder %s70, %s71
    %p83 = scmp.eq.s32.totalorder %s19, 1
    %p84 = por %p82, %p83
    %p86 = scmp.ne.s32.totalorder %s71, %s85
    %p87 = scmp.eq.s32.totalorder %s19, 0
    %p88 = por %p86, %p87
    %s90 = sadd.s32 %s89, 1
    %p93 = scmp.eq.s32.totalorder %s13, 1
    %p94 = scmp.ne.s32.totalorder %s89, %s91
    %p95 = scmp.eq.s32.totalorder %s13, 0
    %p96 = por %p94, %p95
    %p97 = scmp.ne.s32.totalorder %s89, %s91
    %p98 = scmp.eq.s32.totalorder %s18, 1
    %p99 = por %p97, %p98
    %p100 = scmp.ne.s32.totalorder %s91, %s92
    %p101 = scmp.eq.s32.totalorder %s18, 0
    %p102 = por %p100, %p101
    %p103 = scmp.ne.s32.totalorder %s91, %s92
    %p104 = scmp.eq.s32.totalorder %s19, 1
    %p105 = por %p103, %p104
    %p107 = scmp.ne.s32.totalorder %s92, %s106
    %p108 = scmp.eq.s32.totalorder %s19, 0
    %p109 = por %p107, %p108
    %s111 = sadd.s32 %s110, 1
    %p114 = scmp.eq.s32.totalorder %s13, 1
    %p115 = scmp.ne.s32.totalorder %s110, %s112
    %p116 = scmp.eq.s32.totalorder %s13, 0
    %p117 = por %p115, %p116
    %p118 = scmp.ne.s32.totalorder %s110, %s112
    %p119 = scmp.eq.s32.totalorder %s18, 1
    %p120 = por %p118, %p119
    %p121 = scmp.ne.s32.totalorder %s112, %s113
    %p122 = scmp.eq.s32.totalorder %s18, 0
    %p123 = por %p121, %p122
    %p124 = scmp.ne.s32.totalorder %s112, %s113
    %p125 = scmp.eq.s32.totalorder %s19, 1
    %p126 = por %p124, %p125
    %p128 = scmp.ne.s32.totalorder %s113, %s127
    %p129 = scmp.eq.s32.totalorder %s19, 0
    %p130 = por %p128, %p129
    %s131 = ssub.s32 %s13, %s20
    %p132 = scmp.eq.s32.totalorder %s131, 0
    %s134 = sadd.s32 %s133, 1
    %s135 = scalar_select %p132, %s133, %s134
    %p138 = pneg %p132
    %p139 = scmp.eq.s32.totalorder %s13, 1
    %p140 = por %p138, %p139
    %p141 = scmp.ne.s32.totalorder %s133, %s136
    %p142 = scmp.eq.s32.totalorder %s13, 0
    %p143 = por %p141, %p142
    %p144 = scmp.ne.s32.totalorder %s133, %s136
    %p145 = scmp.eq.s32.totalorder %s18, 1
    %p146 = por %p144, %p145
    %p147 = scmp.ne.s32.totalorder %s136, %s137
    %p148 = scmp.eq.s32.totalorder %s18, 0
    %p149 = por %p147, %p148
    %p150 = scmp.ne.s32.totalorder %s136, %s137
    %p151 = scmp.eq.s32.totalorder %s19, 1
    %p152 = por %p150, %p151
    %p154 = scmp.ne.s32.totalorder %s137, %s153
    %p155 = scmp.eq.s32.totalorder %s19, 0
    %p156 = por %p154, %p155
    %s157 = ssub.s32 %s13, %s20
    %p158 = scmp.eq.s32.totalorder %s157, 0
    %s160 = sadd.s32 %s159, 1
    %s161 = scalar_select %p158, %s159, %s160
    %p164 = pneg %p158
    %p165 = scmp.eq.s32.totalorder %s13, 1
    %p166 = por %p164, %p165
    %p167 = scmp.ne.s32.totalorder %s159, %s162
    %p168 = scmp.eq.s32.totalorder %s13, 0
    %p169 = por %p167, %p168
    %p170 = scmp.ne.s32.totalorder %s159, %s162
    %p171 = scmp.eq.s32.totalorder %s18, 1
    %p172 = por %p170, %p171
    %p173 = scmp.ne.s32.totalorder %s162, %s163
    %p174 = scmp.eq.s32.totalorder %s18, 0
    %p175 = por %p173, %p174
    %p176 = scmp.ne.s32.totalorder %s162, %s163
    %p177 = scmp.eq.s32.totalorder %s19, 1
    %p178 = por %p176, %p177
    %p180 = scmp.ne.s32.totalorder %s163, %s179
    %p181 = scmp.eq.s32.totalorder %s19, 0
    %p182 = por %p180, %p181
    %p183 = scmp.le.s32.totalorder 1, %s13
    %p184 = scmp.lt.s32.totalorder %s13, 3
    %p185 = pnand %p183, %p184
    %p186 = pneg %p185
    // Predicated region
    $region9: #{fwd.10} parent=5 // pred_check
      _
    $region10: #{fwd.10} parent=5 // pred_check_branch
      %188 = sbr.rel (%p185) target = $region12
    $region11: #{fwd.10} parent=5 // pred_region
      %s189 = ssub.s32 %s13, 1
      // Predicated region
      $region13: #{fwd.10} parent=11 // pred_check
        %p190 = pneg %p60
      $region14: #{fwd.10} parent=11 // pred_check_branch
        %192 = sbr.rel (%p190) target = $region16
      $region15: #{fwd.10} parent=11 // pred_region
        _
      $region16: #{fwd.10} parent=11 // pred_fallthru
        _
      // Predicated region
      $region17: #{fwd.10} parent=11 // pred_check
        %p193 = pneg %p81
      $region18: #{fwd.10} parent=11 // pred_check_branch
        %195 = sbr.rel (%p193) target = $region20
      $region19: #{fwd.10} parent=11 // pred_region
        _
      $region20: #{fwd.10} parent=11 // pred_fallthru
        _
      // Predicated region
      $region21: #{fwd.10} parent=11 // pred_check
        %p196 = pneg %p102
      $region22: #{fwd.10} parent=11 // pred_check_branch
        %198 = sbr.rel (%p196) target = $region24
      $region23: #{fwd.10} parent=11 // pred_region
        _
      $region24: #{fwd.10} parent=11 // pred_fallthru
        _
      // Predicated region
      $region25: #{fwd.10} parent=11 // pred_check
        %p199 = pneg %p123
      $region26: #{fwd.10} parent=11 // pred_check_branch
        %201 = sbr.rel (%p199) target = $region28
      $region27: #{fwd.10} parent=11 // pred_region
        _
      $region28: #{fwd.10} parent=11 // pred_fallthru
        _
    $region12: #{fwd.10} parent=5 // pred_fallthru
      _
    %p202 = scmp.lt.s32.totalorder %s13, 2
    // Predicated region
    $region29: #{fwd.10} parent=5 // pred_check
      %p203 = pneg %p202
    $region30: #{fwd.10} parent=5 // pred_check_branch
      %205 = sbr.rel (%p203) target = $region32
    $region31: #{fwd.10} parent=5 // pred_region
      // Predicated region
      $region33: #{fwd.10} parent=31 // pred_check
        %p206 = pneg %p33
      $region34: #{fwd.10} parent=31 // pred_check_branch
        %208 = sbr.rel (%p206) target = $region36
      $region35: #{fwd.10} parent=31 // pred_region
        %p209 = scmp.lt.s32.totalorder %s13, 1
        %s210 = scalar_select %p209, %s13, 1
        %s211 = smul.addr %s210, 2
        %s212 = scalar_lea.vmem %s0, %s211
      $region36: #{fwd.10} parent=31 // pred_fallthru
        _
    $region32: #{fwd.10} parent=5 // pred_fallthru
      _
    %p213 = scmp.le.s32.totalorder 1, %s13
    %p214 = scmp.lt.s32.totalorder %s13, 3
    %p215 = pnand %p213, %p214
    %p216 = pneg %p215
    // Predicated region
    $region37: #{fwd.10} parent=5 // pred_check
      _
    $region38: #{fwd.10} parent=5 // pred_check_branch
      %218 = sbr.rel (%p215) target = $region40
    $region39: #{fwd.10} parent=5 // pred_region
      %s219 = ssub.s32 %s13, 1
      %p220 = scmp.lt.s32.totalorder %s18, 1
      %s221 = scalar_select %p220, %s18, 1
      %s222 = smul.addr %s221, 2
      %s223 = scalar_lea.vmem %s0, %s222
      %p224 = pneg %p39
      %p225 = pneg %p36
      %p226 = pneg %p60
      %p227 = pneg %p57
      %p228 = pneg %p81
      %p229 = pneg %p78
      %p230 = pneg %p102
      %p231 = pneg %p99
      %p232 = pneg %p123
      %p233 = pneg %p120
      %p234 = pneg %p149
      %p235 = pneg %p146
      %p236 = scmp.lt.s32.totalorder %s18, 1
      %s237 = scalar_select %p236, %s18, 1
      %s238 = smul.addr %s237, 2
      %s239 = scalar_lea.vmem %s5, %s238
      %p240 = pneg %p175
      %p241 = pneg %p172
      %p242 = scmp.lt.s32.totalorder %s18, 1
      %s243 = scalar_select %p242, %s18, 1
      %s244 = smul.addr %s243, 2
      %s245 = scalar_lea.vmem %s6, %s244
      %p246 = scmp.lt.s32.totalorder %s18, 1
      %s247 = scalar_select %p246, %s18, 1
      %s248 = smul.addr %s247, 2
      %s249 = scalar_lea.vmem %s0, %s248
      %p250 = scmp.lt.s32.totalorder %s18, 1
      %s251 = scalar_select %p250, %s18, 1
      %s252 = smul.addr %s251, 2
      %s253 = scalar_lea.vmem %s5, %s252
      %p254 = scmp.lt.s32.totalorder %s18, 1
      %s255 = scalar_select %p254, %s18, 1
      %s256 = smul.addr %s255, 2
      %s257 = scalar_lea.vmem %s6, %s256
      %v259 = vld [vmem:[%s249] sm:$0x3]
      %v260 = vld [vmem:[%s1] sm:$0xf]
      %v261 = vld [vmem:[%s1 + $0x4] sm:$0xf]
      %v262 = vld [vmem:[%s1 + $0x8] sm:$0xf]
      %v263 = vld [vmem:[%s1 + $0xc] sm:$0xf]
      %v264 = vld [vmem:[%s1 + $0x10] sm:$0xf]
      %v265 = vld [vmem:[%s1 + $0x14] sm:$0xf]
      %v266 = vld [vmem:[%s1 + $0x18] sm:$0xf]
      %v267 = vld [vmem:[%s1 + $0x1c] sm:$0xf]
      %v268 = vld [vmem:[%s2] sm:$0x1]
      %v270 = vlaneseq
      %v271 = vshrl.u32 %v270, 7
      %v272 = vsub.s32 0, %v271
      %v273 = vrot.slane %v268, %v272
      %v283 = vunpack.c.l.b16 %v260
      %v284 = vunpack.c.l.b16 %v261
      %v285 = vunpack.c.l.b16 %v262
      %v286 = vunpack.c.l.b16 %v263
      %v287 = vunpack.c.l.b16 %v264
      %v288 = vunpack.c.l.b16 %v265
      %v289 = vunpack.c.l.b16 %v266
      %v290 = vunpack.c.l.b16 %v267
      %v291 = vpack.c.b16 %v284, %v283
      %v292 = vpack.c.b16 %v286, %v285
      %v293 = vpack.c.b16 %v288, %v287
      %v294 = vpack.c.b16 %v290, %v289
      %vm299 = vcmask 523264
      %v301 = vsel %vm299, %v259, 0
      %303 = vmatprep.subr.bf16.mxu0 0
      %304 = vmatpush1.bf16.msra.mxu0 %v291
      %305 = vmatprep.subr.bf16.mxu0 0
      %306 = vmatpush1.bf16.msra.mxu0 %v292
      %307 = vmatprep.subr.bf16.mxu0 0
      %308 = vmatpush1.bf16.msra.mxu0 %v293
      %309 = vmatprep.subr.bf16.mxu0 0
      %310 = vmatpush1.bf16.msra.mxu0 %v294
      %311 = vmatprep.subr.bf16.mxu0 0
      %312 = vmatpush1.bf16.msra.mxu0 0
      %313 = vmatprep.subr.bf16.mxu0 0
      %314 = vmatpush1.bf16.msra.mxu0 0
      %315 = vmatprep.subr.bf16.mxu0 0
      %316 = vmatpush1.bf16.msra.mxu0 0
      %317 = vmatprep.subr.bf16.mxu0 0
      %318 = vmatpush1.bf16.msra.mxu0 0
      %319 = vmatprep.subr.bf16.mxu0 0
      %320 = vmatpush1.bf16.msra.mxu0 0
      %321 = vmatprep.subr.bf16.mxu0 0
      %322 = vmatpush1.bf16.msra.mxu0 0
      %323 = vmatprep.subr.bf16.mxu0 0
      %324 = vmatpush1.bf16.msra.mxu0 0
      %325 = vmatprep.subr.bf16.mxu0 0
      %326 = vmatpush1.bf16.msra.mxu0 0
      %327 = vmatprep.subr.bf16.mxu0 0
      %328 = vmatpush1.bf16.msra.mxu0 0
      %329 = vmatprep.subr.bf16.mxu0 0
      %330 = vmatpush1.bf16.msra.mxu0 0
      %331 = vmatprep.subr.bf16.mxu0 0
      %332 = vmatpush1.bf16.msra.mxu0 0
      %333 = vmatprep.subr.bf16.mxu0 0
      %334 = vmatpush1.bf16.msra.mxu0 0
      %335 = vmatprep.mubr.bf16.mxu0 0
      %336 = vmatmul.mubr.bf16.gmra.mrb[0].mxu0 %v301
      %v337 = vpop.f32.mrb[0].mxu0
      %v338 = vadd.f32 %v273, %v337
      %v339 = vpop.f32.mrb[0].mxu0
      %v340 = vpop.f32.mrb[0].mxu0
      %v341 = vpop.f32.mrb[0].mxu0
      %342 = vdwg.mxu0
      %v343 = vpack.c.bf16 %v338, %v338
      %vm344 = vcmask 517120
      %345 = vst.msk [vmem:[%s253] sm:$0x3] %vm344, %v343
      %v346 = vld [vmem:[%s3] sm:$0xf]
      %v347 = vld [vmem:[%s3 + $0x4] sm:$0xf]
      %v348 = vld [vmem:[%s3 + $0x8] sm:$0xf]
      %v349 = vld [vmem:[%s3 + $0xc] sm:$0xf]
      %v350 = vld [vmem:[%s3 + $0x10] sm:$0xf]
      %v351 = vld [vmem:[%s3 + $0x14] sm:$0xf]
      %v352 = vld [vmem:[%s3 + $0x18] sm:$0xf]
      %v353 = vld [vmem:[%s3 + $0x1c] sm:$0xf]
      %v354 = vld [vmem:[%s4] sm:$0x1]
      %v356 = vlaneseq
      %v357 = vshrl.u32 %v356, 7
      %v358 = vsub.s32 0, %v357
      %v359 = vrot.slane %v354, %v358
      %v369 = vunpack.c.l.b16 %v346
      %v370 = vunpack.c.l.b16 %v347
      %v371 = vunpack.c.l.b16 %v348
      %v372 = vunpack.c.l.b16 %v349
      %v373 = vunpack.c.l.b16 %v350
      %v374 = vunpack.c.l.b16 %v351
      %v375 = vunpack.c.l.b16 %v352
      %v376 = vunpack.c.l.b16 %v353
      %v377 = vpack.c.b16 %v370, %v369
      %v378 = vpack.c.b16 %v372, %v371
      %v379 = vpack.c.b16 %v374, %v373
      %v380 = vpack.c.b16 %v376, %v375
      %385 = vmatprep.subr.bf16.mxu0 0
      %386 = vmatpush1.bf16.msra.mxu0 %v377
      %387 = vmatprep.subr.bf16.mxu0 0
      %388 = vmatpush1.bf16.msra.mxu0 %v378
      %389 = vmatprep.subr.bf16.mxu0 0
      %390 = vmatpush1.bf16.msra.mxu0 %v379
      %391 = vmatprep.subr.bf16.mxu0 0
      %392 = vmatpush1.bf16.msra.mxu0 %v380
      %393 = vmatprep.subr.bf16.mxu0 0
      %394 = vmatpush1.bf16.msra.mxu0 0
      %395 = vmatprep.subr.bf16.mxu0 0
      %396 = vmatpush1.bf16.msra.mxu0 0
      %397 = vmatprep.subr.bf16.mxu0 0
      %398 = vmatpush1.bf16.msra.mxu0 0
      %399 = vmatprep.subr.bf16.mxu0 0
      %400 = vmatpush1.bf16.msra.mxu0 0
      %401 = vmatprep.subr.bf16.mxu0 0
      %402 = vmatpush1.bf16.msra.mxu0 0
      %403 = vmatprep.subr.bf16.mxu0 0
      %404 = vmatpush1.bf16.msra.mxu0 0
      %405 = vmatprep.subr.bf16.mxu0 0
      %406 = vmatpush1.bf16.msra.mxu0 0
      %407 = vmatprep.subr.bf16.mxu0 0
      %408 = vmatpush1.bf16.msra.mxu0 0
      %409 = vmatprep.subr.bf16.mxu0 0
      %410 = vmatpush1.bf16.msra.mxu0 0
      %411 = vmatprep.subr.bf16.mxu0 0
      %412 = vmatpush1.bf16.msra.mxu0 0
      %413 = vmatprep.subr.bf16.mxu0 0
      %414 = vmatpush1.bf16.msra.mxu0 0
      %415 = vmatprep.subr.bf16.mxu0 0
      %416 = vmatpush1.bf16.msra.mxu0 0
      %417 = vmatprep.mubr.bf16.mxu0 0
      %418 = vmatmul.mubr.bf16.gmra.mrb[0].mxu0 %v301
      %v419 = vpop.f32.mrb[0].mxu0
      %v420 = vadd.f32 %v359, %v419
      %v421 = vpop.f32.mrb[0].mxu0
      %v422 = vpop.f32.mrb[0].mxu0
      %v423 = vpop.f32.mrb[0].mxu0
      %424 = vdwg.mxu0
      %v425 = vpack.c.bf16 %v420, %v420
      %426 = vst.msk [vmem:[%s257] sm:$0x3] %vm344, %v425
      %p427 = scmp.lt.s32.totalorder %s18, 1
      %s428 = scalar_select %p427, %s18, 1
      %s429 = smul.addr %s428, 2
      %s430 = scalar_lea.vmem %s5, %s429
      %p431 = scmp.lt.s32.totalorder %s18, 1
      %s432 = scalar_select %p431, %s18, 1
      %s433 = smul.addr %s432, 2
      %s434 = scalar_lea.vmem %s6, %s433
      // Predicated region
      $region41: #{fwd.10} parent=39 // pred_check
        %p435 = pneg %p146
      $region42: #{fwd.10} parent=39 // pred_check_branch
        %437 = sbr.rel (%p435) target = $region44
      $region43: #{fwd.10} parent=39 // pred_region
        _
      $region44: #{fwd.10} parent=39 // pred_fallthru
        _
      // Predicated region
      $region45: #{fwd.10} parent=39 // pred_check
        %p438 = pneg %p172
      $region46: #{fwd.10} parent=39 // pred_check_branch
        %440 = sbr.rel (%p438) target = $region48
      $region47: #{fwd.10} parent=39 // pred_region
        _
      $region48: #{fwd.10} parent=39 // pred_fallthru
        _
    $region40: #{fwd.10} parent=5 // pred_fallthru
      _
    %p441 = scmp.le.s32.totalorder 2, %s13
    // Predicated region
    $region49: #{fwd.10} parent=5 // pred_check
      %p442 = pneg %p441
    $region50: #{fwd.10} parent=5 // pred_check_branch
      %444 = sbr.rel (%p442) target = $region52
    $region51: #{fwd.10} parent=5 // pred_region
      %s445 = ssub.s32 %s13, 2
      // Predicated region
      $region53: #{fwd.10} parent=51 // pred_check
        %p446 = pneg %p152
      $region54: #{fwd.10} parent=51 // pred_check_branch
        %448 = sbr.rel (%p446) target = $region56
      $region55: #{fwd.10} parent=51 // pred_region
        %p449 = scmp.lt.s32.totalorder %s19, 1
        %s450 = scalar_select %p449, %s19, 1
        %s451 = smul.addr %s450, 2
        %s452 = scalar_lea.vmem %s5, %s451
      $region56: #{fwd.10} parent=51 // pred_fallthru
        _
      // Predicated region
      $region57: #{fwd.10} parent=51 // pred_check
        %p453 = pneg %p178
      $region58: #{fwd.10} parent=51 // pred_check_branch
        %455 = sbr.rel (%p453) target = $region60
      $region59: #{fwd.10} parent=51 // pred_region
        %p456 = scmp.lt.s32.totalorder %s19, 1
        %s457 = scalar_select %p456, %s19, 1
        %s458 = smul.addr %s457, 2
        %s459 = scalar_lea.vmem %s6, %s458
      $region60: #{fwd.10} parent=51 // pred_fallthru
        _
    $region52: #{fwd.10} parent=5 // pred_fallthru
      _
  $region6: #{fwd.10} parent=0 // loop_footer
    %s17 = sadd.s32 1, %s13
  $region7: #{fwd.10} parent=0 // loop_footer_branch
    %12 = sbr.rel target = $region3
  $region8: #{fwd.10} parent=0 // loop_exit
    _

// kernel: fwd.9
$region0: #{fwd.9}
  #allocation0 [shape = 'u32[]', space=smem, size = 0x4, offset = 0x4, fixed_abs, tag = 'smem constant byte address 0x4 - core index']
  #allocation1 [shape = 'u32[144,128]{1,0:T(1,128)}', space=vmem, size = 0x12000, scoped, tag = 'internal scratch']
  %s0 = inlined_call_operand.vmem [shape: bf16[2,4,192], index: 0, kind: input, shape index: {}]
  %s1 = inlined_call_operand.vmem [shape: f32[4,64], index: 1, kind: input, shape index: {}]
  %s2 = inlined_call_operand.vmem [shape: bf16[192,64], index: 2, kind: input, shape index: {}]
  %s3 = inlined_call_operand.vmem [shape: f32[1,64], index: 3, kind: input, shape index: {}]
  %s4 = inlined_call_operand.vmem [shape: f32[1,64], index: 4, kind: input, shape index: {}]
  %s5 = inlined_call_operand.vmem [shape: f32[1,64], index: 5, kind: input, shape index: {}]
  %s6 = inlined_call_operand.vmem [shape: bf16[64,64], index: 6, kind: input, shape index: {}]
  %s7 = inlined_call_operand.vmem [shape: f32[1,64], index: 7, kind: input, shape index: {}]
  %s8 = inlined_call_operand.vmem [shape: bf16[64,64], index: 8, kind: input, shape index: {}]
  %s9 = inlined_call_operand.vmem [shape: f32[1,64], index: 9, kind: input, shape index: {}]
  %s10 = inlined_call_operand.vmem [shape: f32[2,4,64], index: 10, kind: output, shape index: {0}]
  %s11 = inlined_call_operand.vmem [shape: bf16[2,4,64], index: 11, kind: output, shape index: {1}]
  %s12 = inlined_call_operand.vmem [shape: bf16[2,4,64], index: 12, kind: output, shape index: {2}]
  %13 = xla_tuple %s10, %s11, %s12
  %s14 = sld [smem:[#allocation0]]
  $region89: #{fwd.9} parent=0
    _
  %s16 = ssub.s32 1, %s14
  %s17 = scalar_select 0, %s16, %s14
  loop: start=0, step=1, limit=4
  $region2: #{fwd.9} parent=0 // loop_pre_header
    _
  $region3: #{fwd.9} parent=0 // loop_header
    %s19 = sphi 0, %s23
    %p20 = scmp.ge.s32.totalorder %s19, 4
    %s26 = sphi 0, %s38
    %s27 = sphi 0, %s34
    %s28 = sphi 0, %s26
    %s29 = sphi 0, %s27
    %s30 = sphi 0, %s28
    %s31 = sphi 0, %s29
    %s43 = sphi 0, %s45
    %s46 = sphi 0, %s43
    %s47 = sphi 0, %s46
    %s63 = sphi 0, %s47
    %s69 = sphi 0, %s71
    %s72 = sphi 0, %s69
    %s73 = sphi 0, %s72
    %s89 = sphi 0, %s73
    %s93 = sphi 0, %s93
    %s95 = sphi 0, %s93
    %s96 = sphi 0, %s95
    %s110 = sphi 0, %s96
    %s114 = sphi 0, %s114
    %s116 = sphi 0, %s114
    %s117 = sphi 0, %s116
    %s131 = sphi 0, %s117
    %s135 = sphi 0, %s135
    %s137 = sphi 0, %s135
    %s138 = sphi 0, %s137
    %s152 = sphi 0, %s138
    %s156 = sphi 0, %s156
    %s158 = sphi 0, %s156
    %s159 = sphi 0, %s158
    %s173 = sphi 0, %s159
    %s177 = sphi 0, %s177
    %s179 = sphi 0, %s177
    %s180 = sphi 0, %s179
    %s194 = sphi 0, %s180
    %s198 = sphi 0, %s198
    %s200 = sphi 0, %s198
    %s201 = sphi 0, %s200
    %s215 = sphi 0, %s201
    %s219 = sphi 0, %s219
    %s221 = sphi 0, %s219
    %s222 = sphi 0, %s221
    %s236 = sphi 0, %s222
    %s240 = sphi 0, %s240
    %s242 = sphi 0, %s240
    %s243 = sphi 0, %s242
    %s257 = sphi 0, %s243
    %s265 = sphi 0, %s267
    %s268 = sphi 0, %s265
    %s269 = sphi 0, %s268
    %s285 = sphi 0, %s269
    %s293 = sphi 0, %s295
    %s296 = sphi 0, %s293
    %s297 = sphi 0, %s296
    %s313 = sphi 0, %s297
    %s321 = sphi 0, %s323
    %s324 = sphi 0, %s321
    %s325 = sphi 0, %s324
    %s341 = sphi 0, %s325
  $region4: #{fwd.9} parent=0 // loop_header_branch
    %22 = sbr.rel (%p20) target = $region8
  $region5: #{fwd.9} parent=0 // loop_body
    %s24 = ssub.s32 %s19, 1
    %s25 = ssub.s32 %s19, 2
    %s32 = sadd.s32 1, %s27
    %p33 = scmp.ge.s32.totalorder %s32, 1
    %s34 = scalar_select %p33, 0, %s32
    %s35 = sadd.s32 1, %s26
    %s36 = scalar_select %p33, %s35, %s26
    %p37 = scmp.ge.s32.totalorder %s36, 2
    %s38 = scalar_select %p37, 0, %s36
    %s39 = ssub.s32 %s26, %s38
    %s40 = ssub.s32 %s27, %s34
    %s41 = sor.u32 %s39, %s40
    %p42 = scmp.eq.s32.totalorder %s41, 0
    %s44 = sadd.s32 %s43, 1
    %s45 = scalar_select %p42, %s43, %s44
    %p48 = pneg %p42
    %p49 = scmp.eq.s32.totalorder %s19, 1
    %p50 = por %p48, %p49
    %p51 = scmp.ne.s32.totalorder %s43, %s46
    %p52 = scmp.eq.s32.totalorder %s19, 0
    %p53 = por %p51, %p52
    %p54 = scmp.ne.s32.totalorder %s43, %s46
    %p55 = scmp.eq.s32.totalorder %s24, 1
    %p56 = por %p54, %p55
    %p57 = scmp.ne.s32.totalorder %s46, %s47
    %p58 = scmp.eq.s32.totalorder %s24, 0
    %p59 = por %p57, %p58
    %p60 = scmp.ne.s32.totalorder %s46, %s47
    %p61 = scmp.eq.s32.totalorder %s25, 1
    %p62 = por %p60, %p61
    %p64 = scmp.ne.s32.totalorder %s47, %s63
    %p65 = scmp.eq.s32.totalorder %s25, 0
    %p66 = por %p64, %p65
    %s67 = ssub.s32 %s27, %s34
    %p68 = scmp.eq.s32.totalorder %s67, 0
    %s70 = sadd.s32 %s69, 1
    %s71 = scalar_select %p68, %s69, %s70
    %p74 = pneg %p68
    %p75 = scmp.eq.s32.totalorder %s19, 1
    %p76 = por %p74, %p75
    %p77 = scmp.ne.s32.totalorder %s69, %s72
    %p78 = scmp.eq.s32.totalorder %s19, 0
    %p79 = por %p77, %p78
    %p80 = scmp.ne.s32.totalorder %s69, %s72
    %p81 = scmp.eq.s32.totalorder %s24, 1
    %p82 = por %p80, %p81
    %p83 = scmp.ne.s32.totalorder %s72, %s73
    %p84 = scmp.eq.s32.totalorder %s24, 0
    %p85 = por %p83, %p84
    %p86 = scmp.ne.s32.totalorder %s72, %s73
    %p87 = scmp.eq.s32.totalorder %s25, 1
    %p88 = por %p86, %p87
    %p90 = scmp.ne.s32.totalorder %s73, %s89
    %p91 = scmp.eq.s32.totalorder %s25, 0
    %p92 = por %p90, %p91
    %s94 = sadd.s32 %s93, 1
    %p97 = scmp.eq.s32.totalorder %s19, 1
    %p98 = scmp.ne.s32.totalorder %s93, %s95
    %p99 = scmp.eq.s32.totalorder %s19, 0
    %p100 = por %p98, %p99
    %p101 = scmp.ne.s32.totalorder %s93, %s95
    %p102 = scmp.eq.s32.totalorder %s24, 1
    %p103 = por %p101, %p102
    %p104 = scmp.ne.s32.totalorder %s95, %s96
    %p105 = scmp.eq.s32.totalorder %s24, 0
    %p106 = por %p104, %p105
    %p107 = scmp.ne.s32.totalorder %s95, %s96
    %p108 = scmp.eq.s32.totalorder %s25, 1
    %p109 = por %p107, %p108
    %p111 = scmp.ne.s32.totalorder %s96, %s110
    %p112 = scmp.eq.s32.totalorder %s25, 0
    %p113 = por %p111, %p112
    %s115 = sadd.s32 %s114, 1
    %p118 = scmp.eq.s32.totalorder %s19, 1
    %p119 = scmp.ne.s32.totalorder %s114, %s116
    %p120 = scmp.eq.s32.totalorder %s19, 0
    %p121 = por %p119, %p120
    %p122 = scmp.ne.s32.totalorder %s114, %s116
    %p123 = scmp.eq.s32.totalorder %s24, 1
    %p124 = por %p122, %p123
    %p125 = scmp.ne.s32.totalorder %s116, %s117
    %p126 = scmp.eq.s32.totalorder %s24, 0
    %p127 = por %p125, %p126
    %p128 = scmp.ne.s32.totalorder %s116, %s117
    %p129 = scmp.eq.s32.totalorder %s25, 1
    %p130 = por %p128, %p129
    %p132 = scmp.ne.s32.totalorder %s117, %s131
    %p133 = scmp.eq.s32.totalorder %s25, 0
    %p134 = por %p132, %p133
    %s136 = sadd.s32 %s135, 1
    %p139 = scmp.eq.s32.totalorder %s19, 1
    %p140 = scmp.ne.s32.totalorder %s135, %s137
    %p141 = scmp.eq.s32.totalorder %s19, 0
    %p142 = por %p140, %p141
    %p143 = scmp.ne.s32.totalorder %s135, %s137
    %p144 = scmp.eq.s32.totalorder %s24, 1
    %p145 = por %p143, %p144
    %p146 = scmp.ne.s32.totalorder %s137, %s138
    %p147 = scmp.eq.s32.totalorder %s24, 0
    %p148 = por %p146, %p147
    %p149 = scmp.ne.s32.totalorder %s137, %s138
    %p150 = scmp.eq.s32.totalorder %s25, 1
    %p151 = por %p149, %p150
    %p153 = scmp.ne.s32.totalorder %s138, %s152
    %p154 = scmp.eq.s32.totalorder %s25, 0
    %p155 = por %p153, %p154
    %s157 = sadd.s32 %s156, 1
    %p160 = scmp.eq.s32.totalorder %s19, 1
    %p161 = scmp.ne.s32.totalorder %s156, %s158
    %p162 = scmp.eq.s32.totalorder %s19, 0
    %p163 = por %p161, %p162
    %p164 = scmp.ne.s32.totalorder %s156, %s158
    %p165 = scmp.eq.s32.totalorder %s24, 1
    %p166 = por %p164, %p165
    %p167 = scmp.ne.s32.totalorder %s158, %s159
    %p168 = scmp.eq.s32.totalorder %s24, 0
    %p169 = por %p167, %p168
    %p170 = scmp.ne.s32.totalorder %s158, %s159
    %p171 = scmp.eq.s32.totalorder %s25, 1
    %p172 = por %p170, %p171
    %p174 = scmp.ne.s32.totalorder %s159, %s173
    %p175 = scmp.eq.s32.totalorder %s25, 0
    %p176 = por %p174, %p175
    %s178 = sadd.s32 %s177, 1
    %p181 = scmp.eq.s32.totalorder %s19, 1
    %p182 = scmp.ne.s32.totalorder %s177, %s179
    %p183 = scmp.eq.s32.totalorder %s19, 0
    %p184 = por %p182, %p183
    %p185 = scmp.ne.s32.totalorder %s177, %s179
    %p186 = scmp.eq.s32.totalorder %s24, 1
    %p187 = por %p185, %p186
    %p188 = scmp.ne.s32.totalorder %s179, %s180
    %p189 = scmp.eq.s32.totalorder %s24, 0
    %p190 = por %p188, %p189
    %p191 = scmp.ne.s32.totalorder %s179, %s180
    %p192 = scmp.eq.s32.totalorder %s25, 1
    %p193 = por %p191, %p192
    %p195 = scmp.ne.s32.totalorder %s180, %s194
    %p196 = scmp.eq.s32.totalorder %s25, 0
    %p197 = por %p195, %p196
    %s199 = sadd.s32 %s198, 1
    %p202 = scmp.eq.s32.totalorder %s19, 1
    %p203 = scmp.ne.s32.totalorder %s198, %s200
    %p204 = scmp.eq.s32.totalorder %s19, 0
    %p205 = por %p203, %p204
    %p206 = scmp.ne.s32.totalorder %s198, %s200
    %p207 = scmp.eq.s32.totalorder %s24, 1
    %p208 = por %p206, %p207
    %p209 = scmp.ne.s32.totalorder %s200, %s201
    %p210 = scmp.eq.s32.totalorder %s24, 0
    %p211 = por %p209, %p210
    %p212 = scmp.ne.s32.totalorder %s200, %s201
    %p213 = scmp.eq.s32.totalorder %s25, 1
    %p214 = por %p212, %p213
    %p216 = scmp.ne.s32.totalorder %s201, %s215
    %p217 = scmp.eq.s32.totalorder %s25, 0
    %p218 = por %p216, %p217
    %s220 = sadd.s32 %s219, 1
    %p223 = scmp.eq.s32.totalorder %s19, 1
    %p224 = scmp.ne.s32.totalorder %s219, %s221
    %p225 = scmp.eq.s32.totalorder %s19, 0
    %p226 = por %p224, %p225
    %p227 = scmp.ne.s32.totalorder %s219, %s221
    %p228 = scmp.eq.s32.totalorder %s24, 1
    %p229 = por %p227, %p228
    %p230 = scmp.ne.s32.totalorder %s221, %s222
    %p231 = scmp.eq.s32.totalorder %s24, 0
    %p232 = por %p230, %p231
    %p233 = scmp.ne.s32.totalorder %s221, %s222
    %p234 = scmp.eq.s32.totalorder %s25, 1
    %p235 = por %p233, %p234
    %p237 = scmp.ne.s32.totalorder %s222, %s236
    %p238 = scmp.eq.s32.totalorder %s25, 0
    %p239 = por %p237, %p238
    %s241 = sadd.s32 %s240, 1
    %p244 = scmp.eq.s32.totalorder %s19, 1
    %p245 = scmp.ne.s32.totalorder %s240, %s242
    %p246 = scmp.eq.s32.totalorder %s19, 0
    %p247 = por %p245, %p246
    %p248 = scmp.ne.s32.totalorder %s240, %s242
    %p249 = scmp.eq.s32.totalorder %s24, 1
    %p250 = por %p248, %p249
    %p251 = scmp.ne.s32.totalorder %s242, %s243
    %p252 = scmp.eq.s32.totalorder %s24, 0
    %p253 = por %p251, %p252
    %p254 = scmp.ne.s32.totalorder %s242, %s243
    %p255 = scmp.eq.s32.totalorder %s25, 1
    %p256 = por %p254, %p255
    %p258 = scmp.ne.s32.totalorder %s243, %s257
    %p259 = scmp.eq.s32.totalorder %s25, 0
    %p260 = por %p258, %p259
    %s261 = ssub.s32 %s26, %s38
    %s262 = ssub.s32 %s27, %s34
    %s263 = sor.u32 %s261, %s262
    %p264 = scmp.eq.s32.totalorder %s263, 0
    %s266 = sadd.s32 %s265, 1
    %s267 = scalar_select %p264, %s265, %s266
    %p270 = pneg %p264
    %p271 = scmp.eq.s32.totalorder %s19, 1
    %p272 = por %p270, %p271
    %p273 = scmp.ne.s32.totalorder %s265, %s268
    %p274 = scmp.eq.s32.totalorder %s19, 0
    %p275 = por %p273, %p274
    %p276 = scmp.ne.s32.totalorder %s265, %s268
    %p277 = scmp.eq.s32.totalorder %s24, 1
    %p278 = por %p276, %p277
    %p279 = scmp.ne.s32.totalorder %s268, %s269
    %p280 = scmp.eq.s32.totalorder %s24, 0
    %p281 = por %p279, %p280
    %p282 = scmp.ne.s32.totalorder %s268, %s269
    %p283 = scmp.eq.s32.totalorder %s25, 1
    %p284 = por %p282, %p283
    %p286 = scmp.ne.s32.totalorder %s269, %s285
    %p287 = scmp.eq.s32.totalorder %s25, 0
    %p288 = por %p286, %p287
    %s289 = ssub.s32 %s26, %s38
    %s290 = ssub.s32 %s27, %s34
    %s291 = sor.u32 %s289, %s290
    %p292 = scmp.eq.s32.totalorder %s291, 0
    %s294 = sadd.s32 %s293, 1
    %s295 = scalar_select %p292, %s293, %s294
    %p298 = pneg %p292
    %p299 = scmp.eq.s32.totalorder %s19, 1
    %p300 = por %p298, %p299
    %p301 = scmp.ne.s32.totalorder %s293, %s296
    %p302 = scmp.eq.s32.totalorder %s19, 0
    %p303 = por %p301, %p302
    %p304 = scmp.ne.s32.totalorder %s293, %s296
    %p305 = scmp.eq.s32.totalorder %s24, 1
    %p306 = por %p304, %p305
    %p307 = scmp.ne.s32.totalorder %s296, %s297
    %p308 = scmp.eq.s32.totalorder %s24, 0
    %p309 = por %p307, %p308
    %p310 = scmp.ne.s32.totalorder %s296, %s297
    %p311 = scmp.eq.s32.totalorder %s25, 1
    %p312 = por %p310, %p311
    %p314 = scmp.ne.s32.totalorder %s297, %s313
    %p315 = scmp.eq.s32.totalorder %s25, 0
    %p316 = por %p314, %p315
    %s317 = ssub.s32 %s26, %s38
    %s318 = ssub.s32 %s27, %s34
    %s319 = sor.u32 %s317, %s318
    %p320 = scmp.eq.s32.totalorder %s319, 0
    %s322 = sadd.s32 %s321, 1
    %s323 = scalar_select %p320, %s321, %s322
    %p326 = pneg %p320
    %p327 = scmp.eq.s32.totalorder %s19, 1
    %p328 = por %p326, %p327
    %p329 = scmp.ne.s32.totalorder %s321, %s324
    %p330 = scmp.eq.s32.totalorder %s19, 0
    %p331 = por %p329, %p330
    %p332 = scmp.ne.s32.totalorder %s321, %s324
    %p333 = scmp.eq.s32.totalorder %s24, 1
    %p334 = por %p332, %p333
    %p335 = scmp.ne.s32.totalorder %s324, %s325
    %p336 = scmp.eq.s32.totalorder %s24, 0
    %p337 = por %p335, %p336
    %p338 = scmp.ne.s32.totalorder %s324, %s325
    %p339 = scmp.eq.s32.totalorder %s25, 1
    %p340 = por %p338, %p339
    %p342 = scmp.ne.s32.totalorder %s325, %s341
    %p343 = scmp.eq.s32.totalorder %s25, 0
    %p344 = por %p342, %p343
    %p345 = scmp.le.s32.totalorder 1, %s19
    %p346 = scmp.lt.s32.totalorder %s19, 3
    %p347 = pnand %p345, %p346
    %p348 = pneg %p347
    // Predicated region
    $region9: #{fwd.9} parent=5 // pred_check
      _
    $region10: #{fwd.9} parent=5 // pred_check_branch
      %350 = sbr.rel (%p347) target = $region12
    $region11: #{fwd.9} parent=5 // pred_region
      %s351 = ssub.s32 %s19, 1
      // Predicated region
      $region13: #{fwd.9} parent=11 // pred_check
        %p352 = pneg %p85
      $region14: #{fwd.9} parent=11 // pred_check_branch
        %354 = sbr.rel (%p352) target = $region16
      $region15: #{fwd.9} parent=11 // pred_region
        %p355 = scmp.lt.s32.totalorder %s29, 0
        %s356 = scalar_select %p355, %s29, 0
        %s357 = smul.addr %s356, 4
        %s358 = scalar_lea.vmem %s1, %s357
      $region16: #{fwd.9} parent=11 // pred_fallthru
        _
      // Predicated region
      $region17: #{fwd.9} parent=11 // pred_check
        %p359 = pneg %p106
      $region18: #{fwd.9} parent=11 // pred_check_branch
        %361 = sbr.rel (%p359) target = $region20
      $region19: #{fwd.9} parent=11 // pred_region
        _
      $region20: #{fwd.9} parent=11 // pred_fallthru
        _
      // Predicated region
      $region21: #{fwd.9} parent=11 // pred_check
        %p362 = pneg %p127
      $region22: #{fwd.9} parent=11 // pred_check_branch
        %364 = sbr.rel (%p362) target = $region24
      $region23: #{fwd.9} parent=11 // pred_region
        _
      $region24: #{fwd.9} parent=11 // pred_fallthru
        _
      // Predicated region
      $region25: #{fwd.9} parent=11 // pred_check
        %p365 = pneg %p148
      $region26: #{fwd.9} parent=11 // pred_check_branch
        %367 = sbr.rel (%p365) target = $region28
      $region27: #{fwd.9} parent=11 // pred_region
        _
      $region28: #{fwd.9} parent=11 // pred_fallthru
        _
      // Predicated region
      $region29: #{fwd.9} parent=11 // pred_check
        %p368 = pneg %p169
      $region30: #{fwd.9} parent=11 // pred_check_branch
        %370 = sbr.rel (%p368) target = $region32
      $region31: #{fwd.9} parent=11 // pred_region
        _
      $region32: #{fwd.9} parent=11 // pred_fallthru
        _
      // Predicated region
      $region33: #{fwd.9} parent=11 // pred_check
        %p371 = pneg %p190
      $region34: #{fwd.9} parent=11 // pred_check_branch
        %373 = sbr.rel (%p371) target = $region36
      $region35: #{fwd.9} parent=11 // pred_region
        _
      $region36: #{fwd.9} parent=11 // pred_fallthru
        _
      // Predicated region
      $region37: #{fwd.9} parent=11 // pred_check
        %p374 = pneg %p211
      $region38: #{fwd.9} parent=11 // pred_check_branch
        %376 = sbr.rel (%p374) target = $region40
      $region39: #{fwd.9} parent=11 // pred_region
        _
      $region40: #{fwd.9} parent=11 // pred_fallthru
        _
      // Predicated region
      $region41: #{fwd.9} parent=11 // pred_check
        %p377 = pneg %p232
      $region42: #{fwd.9} parent=11 // pred_check_branch
        %379 = sbr.rel (%p377) target = $region44
      $region43: #{fwd.9} parent=11 // pred_region
        _
      $region44: #{fwd.9} parent=11 // pred_fallthru
        _
      // Predicated region
      $region45: #{fwd.9} parent=11 // pred_check
        %p380 = pneg %p253
      $region46: #{fwd.9} parent=11 // pred_check_branch
        %382 = sbr.rel (%p380) target = $region48
      $region47: #{fwd.9} parent=11 // pred_region
        _
      $region48: #{fwd.9} parent=11 // pred_fallthru
        _
    $region12: #{fwd.9} parent=5 // pred_fallthru
      _
    %p383 = scmp.lt.s32.totalorder %s19, 2
    // Predicated region
    $region49: #{fwd.9} parent=5 // pred_check
      %p384 = pneg %p383
    $region50: #{fwd.9} parent=5 // pred_check_branch
      %386 = sbr.rel (%p384) target = $region52
    $region51: #{fwd.9} parent=5 // pred_region
      // Predicated region
      $region53: #{fwd.9} parent=51 // pred_check
        %p387 = pneg %p53
      $region54: #{fwd.9} parent=51 // pred_check_branch
        %389 = sbr.rel (%p387) target = $region56
      $region55: #{fwd.9} parent=51 // pred_region
        %p390 = scmp.lt.s32.totalorder %s26, 1
        %s391 = scalar_select %p390, %s26, 1
        %p392 = scmp.lt.s32.totalorder %s27, 0
        %s393 = scalar_select %p392, %s27, 0
        %s394 = smul.addr %s393, 2
        %s395 = smul.addr %s391, 2
        %s396 = sadd.s32 %s394, %s395
        %s397 = smul.addr %s396, 2
        %s398 = scalar_lea.vmem %s0, %s397
      $region56: #{fwd.9} parent=51 // pred_fallthru
        _
    $region52: #{fwd.9} parent=5 // pred_fallthru
      _
    %p399 = scmp.le.s32.totalorder 1, %s19
    %p400 = scmp.lt.s32.totalorder %s19, 3
    %p401 = pnand %p399, %p400
    %p402 = pneg %p401
    // Predicated region
    $region57: #{fwd.9} parent=5 // pred_check
      _
    $region58: #{fwd.9} parent=5 // pred_check_branch
      %404 = sbr.rel (%p401) target = $region60
    $region59: #{fwd.9} parent=5 // pred_region
      %s405 = ssub.s32 %s19, 1
      %p406 = scmp.lt.s32.totalorder %s28, 1
      %s407 = scalar_select %p406, %s28, 1
      %p408 = scmp.lt.s32.totalorder %s29, 0
      %s409 = scalar_select %p408, %s29, 0
      %s410 = smul.addr %s409, 2
      %s411 = smul.addr %s407, 2
      %s412 = sadd.s32 %s410, %s411
      %s413 = smul.addr %s412, 2
      %s414 = scalar_lea.vmem %s0, %s413
      %p415 = pneg %p59
      %p416 = pneg %p56
      %p417 = scmp.lt.s32.totalorder %s29, 0
      %s418 = scalar_select %p417, %s29, 0
      %s419 = smul.addr %s418, 4
      %s420 = scalar_lea.vmem %s1, %s419
      %p421 = pneg %p85
      %p422 = pneg %p82
      %p423 = pneg %p106
      %p424 = pneg %p103
      %p425 = pneg %p127
      %p426 = pneg %p124
      %p427 = pneg %p148
      %p428 = pneg %p145
      %p429 = pneg %p169
      %p430 = pneg %p166
      %p431 = pneg %p190
      %p432 = pneg %p187
      %p433 = pneg %p211
      %p434 = pneg %p208
      %p435 = pneg %p232
      %p436 = pneg %p229
      %p437 = pneg %p253
      %p438 = pneg %p250
      %p439 = pneg %p281
      %p440 = pneg %p278
      %p441 = scmp.lt.s32.totalorder %s28, 1
      %s442 = scalar_select %p441, %s28, 1
      %p443 = scmp.lt.s32.totalorder %s29, 0
      %s444 = scalar_select %p443, %s29, 0
      %s445 = sadd.s32 %s444, %s442
      %s446 = smul.addr %s445, 4
      %s447 = scalar_lea.vmem %s10, %s446
      %p448 = pneg %p309
      %p449 = pneg %p306
      %p450 = scmp.lt.s32.totalorder %s28, 1
      %s451 = scalar_select %p450, %s28, 1
      %p452 = scmp.lt.s32.totalorder %s29, 0
      %s453 = scalar_select %p452, %s29, 0
      %s454 = sadd.s32 %s453, %s451
      %s455 = smul.addr %s454, 2
      %s456 = scalar_lea.vmem %s11, %s455
      %p457 = pneg %p337
      %p458 = pneg %p334
      %p459 = scmp.lt.s32.totalorder %s28, 1
      %s460 = scalar_select %p459, %s28, 1
      %p461 = scmp.lt.s32.totalorder %s29, 0
      %s462 = scalar_select %p461, %s29, 0
      %s463 = sadd.s32 %s462, %s460
      %s464 = smul.addr %s463, 2
      %s465 = scalar_lea.vmem %s12, %s464
      %p466 = scmp.lt.s32.totalorder %s28, 1
      %s467 = scalar_select %p466, %s28, 1
      %p468 = scmp.lt.s32.totalorder %s29, 0
      %s469 = scalar_select %p468, %s29, 0
      %s470 = smul.addr %s469, 2
      %s471 = smul.addr %s467, 2
      %s472 = sadd.s32 %s470, %s471
      %s473 = smul.addr %s472, 2
      %s474 = scalar_lea.vmem %s0, %s473
      %p475 = scmp.lt.s32.totalorder %s29, 0
      %s476 = scalar_select %p475, %s29, 0
      %s477 = smul.addr %s476, 4
      %s478 = scalar_lea.vmem %s1, %s477
      %p479 = scmp.lt.s32.totalorder %s28, 1
      %s480 = scalar_select %p479, %s28, 1
      %p481 = scmp.lt.s32.totalorder %s29, 0
      %s482 = scalar_select %p481, %s29, 0
      %s483 = sadd.s32 %s482, %s480
      %s484 = smul.addr %s483, 4
      %s485 = scalar_lea.vmem %s10, %s484
      %p486 = scmp.lt.s32.totalorder %s28, 1
      %s487 = scalar_select %p486, %s28, 1
      %p488 = scmp.lt.s32.totalorder %s29, 0
      %s489 = scalar_select %p488, %s29, 0
      %s490 = sadd.s32 %s489, %s487
      %s491 = smul.addr %s490, 2
      %s492 = scalar_lea.vmem %s11, %s491
      %p493 = scmp.lt.s32.totalorder %s28, 1
      %s494 = scalar_select %p493, %s28, 1
      %p495 = scmp.lt.s32.totalorder %s29, 0
      %s496 = scalar_select %p495, %s29, 0
      %s497 = sadd.s32 %s496, %s494
      %s498 = smul.addr %s497, 2
      %s499 = scalar_lea.vmem %s12, %s498
      %v501 = vld [vmem:[%s474] sm:$0xf]
      %v502 = vld [vmem:[%s2] sm:$0xf]
      %v503 = vld [vmem:[%s2 + $0x4] sm:$0xf]
      %v504 = vld [vmem:[%s2 + $0x8] sm:$0xf]
      %v505 = vld [vmem:[%s2 + $0xc] sm:$0xf]
      %v506 = vld [vmem:[%s2 + $0x10] sm:$0xf]
      %v507 = vld [vmem:[%s2 + $0x14] sm:$0xf]
      %v508 = vld [vmem:[%s2 + $0x18] sm:$0xf]
      %v509 = vld [vmem:[%s2 + $0x1c] sm:$0xf]
      %v510 = vld [vmem:[%s2 + $0x20] sm:$0xf]
      %v511 = vld [vmem:[%s2 + $0x24] sm:$0xf]
      %v512 = vld [vmem:[%s2 + $0x28] sm:$0xf]
      %v513 = vld [vmem:[%s2 + $0x2c] sm:$0xf]
      %v514 = vld [vmem:[%s2 + $0x30] sm:$0xf]
      %v515 = vld [vmem:[%s2 + $0x34] sm:$0xf]
      %v516 = vld [vmem:[%s2 + $0x38] sm:$0xf]
      %v517 = vld [vmem:[%s2 + $0x3c] sm:$0xf]
      %v518 = vld [vmem:[%s2 + $0x40] sm:$0xf]
      %v519 = vld [vmem:[%s2 + $0x44] sm:$0xf]
      %v520 = vld [vmem:[%s2 + $0x48] sm:$0xf]
      %v521 = vld [vmem:[%s2 + $0x4c] sm:$0xf]
      %v522 = vld [vmem:[%s2 + $0x50] sm:$0xf]
      %v523 = vld [vmem:[%s2 + $0x54] sm:$0xf]
      %v524 = vld [vmem:[%s2 + $0x58] sm:$0xf]
      %v525 = vld [vmem:[%s2 + $0x5c] sm:$0xf]
      %v526 = vld [vmem:[%s3] sm:$0x1]
      %v528 = vlaneseq
      %v529 = vshrl.u32 %v528, 7
      %v530 = vsub.s32 0, %v529
      %v531 = vrot.slane %v526, %v530
      %v535 = vunpack.c.l.s4 1983009808
      %v536 = vunpack.c.0.s8 %v535
      %v537 = vlaneseq
      %v538 = vshrl.u32 %v537, 7
      %v539 = vsub.s32 %v536, %v538
      %v540 = vrot.slane %v501, %v539
      %v541 = vcombine.high %v540, %v540
      %v567 = vunpack.c.l.b16 %v502
      %v568 = vunpack.c.l.b16 %v503
      %v569 = vunpack.c.l.b16 %v504
      %v570 = vunpack.c.l.b16 %v505
      %v571 = vunpack.c.l.b16 %v506
      %v572 = vunpack.c.l.b16 %v507
      %v573 = vunpack.c.l.b16 %v508
      %v574 = vunpack.c.l.b16 %v509
      %v575 = vunpack.c.l.b16 %v510
      %v576 = vunpack.c.l.b16 %v511
      %v577 = vunpack.c.l.b16 %v512
      %v578 = vunpack.c.l.b16 %v513
      %v579 = vunpack.c.l.b16 %v514
      %v580 = vunpack.c.l.b16 %v515
      %v581 = vunpack.c.l.b16 %v516
      %v582 = vunpack.c.l.b16 %v517
      %v583 = vunpack.c.l.b16 %v518
      %v584 = vunpack.c.l.b16 %v519
      %v585 = vunpack.c.l.b16 %v520
      %v586 = vunpack.c.l.b16 %v521
      %v587 = vunpack.c.l.b16 %v522
      %v588 = vunpack.c.l.b16 %v523
      %v589 = vunpack.c.l.b16 %v524
      %v590 = vunpack.c.l.b16 %v525
      %v591 = vpack.c.b16 %v568, %v567
      %v592 = vpack.c.b16 %v570, %v569
      %v593 = vpack.c.b16 %v572, %v571
      %v594 = vpack.c.b16 %v574, %v573
      %v595 = vpack.c.b16 %v576, %v575
      %v596 = vpack.c.b16 %v578, %v577
      %v597 = vpack.c.b16 %v580, %v579
      %v598 = vpack.c.b16 %v582, %v581
      %v599 = vpack.c.b16 %v584, %v583
      %v600 = vpack.c.b16 %v586, %v585
      %v601 = vpack.c.b16 %v588, %v587
      %v602 = vpack.c.b16 %v590, %v589
      %vm615 = vcmask 523264
      %v617 = vsel %vm615, %v541, 0
      %619 = vmatprep.subr.bf16.mxu0 0
      %620 = vmatpush1.bf16.msra.mxu0 %v591
      %621 = vmatprep.subr.bf16.mxu0 0
      %622 = vmatpush1.bf16.msra.mxu0 %v592
      %623 = vmatprep.subr.bf16.mxu0 0
      %624 = vmatpush1.bf16.msra.mxu0 %v593
      %625 = vmatprep.subr.bf16.mxu0 0
      %626 = vmatpush1.bf16.msra.mxu0 %v594
      %627 = vmatprep.subr.bf16.mxu0 0
      %628 = vmatpush1.bf16.msra.mxu0 %v595
      %629 = vmatprep.subr.bf16.mxu0 0
      %630 = vmatpush1.bf16.msra.mxu0 %v596
      %631 = vmatprep.subr.bf16.mxu0 0
      %632 = vmatpush1.bf16.msra.mxu0 %v597
      %633 = vmatprep.subr.bf16.mxu0 0
      %634 = vmatpush1.bf16.msra.mxu0 %v598
      %635 = vmatprep.subr.bf16.mxu0 0
      %636 = vmatpush1.bf16.msra.mxu0 %v599
      %637 = vmatprep.subr.bf16.mxu0 0
      %638 = vmatpush1.bf16.msra.mxu0 %v600
      %639 = vmatprep.subr.bf16.mxu0 0
      %640 = vmatpush1.bf16.msra.mxu0 %v601
      %641 = vmatprep.subr.bf16.mxu0 0
      %642 = vmatpush1.bf16.msra.mxu0 %v602
      %643 = vmatprep.subr.bf16.mxu0 0
      %644 = vmatpush1.bf16.msra.mxu0 0
      %645 = vmatprep.subr.bf16.mxu0 0
      %646 = vmatpush1.bf16.msra.mxu0 0
      %647 = vmatprep.subr.bf16.mxu0 0
      %648 = vmatpush1.bf16.msra.mxu0 0
      %649 = vmatprep.subr.bf16.mxu0 0
      %650 = vmatpush1.bf16.msra.mxu0 0
      %651 = vmatprep.mubr.bf16.mxu0 %v617
      %652 = vmatmul.mubr.bf16.gmra.mrb[0].mxu0 %v540
      %v653 = vpop.f32.mrb[0].mxu0
      %v654 = vadd.f32 %v531, %v653
      %v655 = vpop.f32.mrb[0].mxu0
      %v656 = vpop.f32.mrb[0].mxu0
      %v657 = vpop.f32.mrb[0].mxu0
      %658 = vdwg.mxu0
      %v659 = vld [vmem:[%s4] sm:$0x1]
      %v660 = vld [vmem:[%s5] sm:$0x1]
      %vm661 = vcmask 519168
      %v662 = vsel %vm661, %v654, 0.0
      %663 = vadd.xlane.f32.xlu0 %v662
      %v664 = vpop.xlane.xlu0 %663
      %v665 = vrcp.pop 64.0
      %v666 = vmul.f32 %v664, %v665
      %v667 = vsub.f32 %v654, %v666
      %v668 = vmul.f32 %v667, %v667
      %v669 = vsel %vm661, %v668, 0.0
      %670 = vadd.xlane.f32.xlu0 %v669
      %v671 = vpop.xlane.xlu0 %670
      %v672 = vmul.f32 %v671, %v665
      %v673 = vadd.f32 %v672, 1e-05
      %v674 = vrsqrt.pop %v673
      %v675 = vmul.f32 %v667, %v674
      %v677 = vlaneseq
      %v678 = vshrl.u32 %v677, 7
      %v679 = vsub.s32 0, %v678
      %v680 = vrot.slane %v659, %v679
      %v682 = vmul.f32 %v675, %v680
      %v684 = vlaneseq
      %v685 = vshrl.u32 %v684, 7
      %v686 = vsub.s32 0, %v685
      %v687 = vrot.slane %v660, %v686
      %v689 = vadd.f32 %v682, %v687
      %v690 = vld [vmem:[%s478] sm:$0xf]
      %691 = vst.msk [vmem:[%s485] sm:$0xf] %vm661, %v689
      %v692 = vadd.f32 %v689, %v690
      %v693 = vld [vmem:[%s6] sm:$0xf]
      %v694 = vld [vmem:[%s6 + $0x4] sm:$0xf]
      %v695 = vld [vmem:[%s6 + $0x8] sm:$0xf]
      %v696 = vld [vmem:[%s6 + $0xc] sm:$0xf]
      %v697 = vld [vmem:[%s6 + $0x10] sm:$0xf]
      %v698 = vld [vmem:[%s6 + $0x14] sm:$0xf]
      %v699 = vld [vmem:[%s6 + $0x18] sm:$0xf]
      %v700 = vld [vmem:[%s6 + $0x1c] sm:$0xf]
      %v701 = vpack.c.bf16 %v692, %v692
      %v702 = vld [vmem:[%s7] sm:$0x1]
      %v704 = vlaneseq
      %v705 = vshrl.u32 %v704, 7
      %v706 = vsub.s32 0, %v705
      %v707 = vrot.slane %v702, %v706
      %v717 = vunpack.c.l.b16 %v693
      %v718 = vunpack.c.l.b16 %v694
      %v719 = vunpack.c.l.b16 %v695
      %v720 = vunpack.c.l.b16 %v696
      %v721 = vunpack.c.l.b16 %v697
      %v722 = vunpack.c.l.b16 %v698
      %v723 = vunpack.c.l.b16 %v699
      %v724 = vunpack.c.l.b16 %v700
      %v725 = vpack.c.b16 %v718, %v717
      %v726 = vpack.c.b16 %v720, %v719
      %v727 = vpack.c.b16 %v722, %v721
      %v728 = vpack.c.b16 %v724, %v723
      %v734 = vsel %vm615, %v701, 0
      %736 = vmatprep.subr.bf16.mxu0 0
      %737 = vmatpush1.bf16.msra.mxu0 %v725
      %738 = vmatprep.subr.bf16.mxu0 0
      %739 = vmatpush1.bf16.msra.mxu0 %v726
      %740 = vmatprep.subr.bf16.mxu0 0
      %741 = vmatpush1.bf16.msra.mxu0 %v727
      %742 = vmatprep.subr.bf16.mxu0 0
      %743 = vmatpush1.bf16.msra.mxu0 %v728
      %744 = vmatprep.subr.bf16.mxu0 0
      %745 = vmatpush1.bf16.msra.mxu0 0
      %746 = vmatprep.subr.bf16.mxu0 0
      %747 = vmatpush1.bf16.msra.mxu0 0
      %748 = vmatprep.subr.bf16.mxu0 0
      %749 = vmatpush1.bf16.msra.mxu0 0
      %750 = vmatprep.subr.bf16.mxu0 0
      %751 = vmatpush1.bf16.msra.mxu0 0
      %752 = vmatprep.subr.bf16.mxu0 0
      %753 = vmatpush1.bf16.msra.mxu0 0
      %754 = vmatprep.subr.bf16.mxu0 0
      %755 = vmatpush1.bf16.msra.mxu0 0
      %756 = vmatprep.subr.bf16.mxu0 0
      %757 = vmatpush1.bf16.msra.mxu0 0
      %758 = vmatprep.subr.bf16.mxu0 0
      %759 = vmatpush1.bf16.msra.mxu0 0
      %760 = vmatprep.subr.bf16.mxu0 0
      %761 = vmatpush1.bf16.msra.mxu0 0
      %762 = vmatprep.subr.bf16.mxu0 0
      %763 = vmatpush1.bf16.msra.mxu0 0
      %764 = vmatprep.subr.bf16.mxu0 0
      %765 = vmatpush1.bf16.msra.mxu0 0
      %766 = vmatprep.subr.bf16.mxu0 0
      %767 = vmatpush1.bf16.msra.mxu0 0
      %768 = vmatprep.mubr.bf16.mxu0 0
      %769 = vmatmul.mubr.bf16.gmra.mrb[0].mxu0 %v734
      %v770 = vpop.f32.mrb[0].mxu0
      %v771 = vadd.f32 %v707, %v770
      %v772 = vpop.f32.mrb[0].mxu0
      %v773 = vpop.f32.mrb[0].mxu0
      %v774 = vpop.f32.mrb[0].mxu0
      %775 = vdwg.mxu0
      %v776 = vpack.c.bf16 %v771, %v771
      %vm777 = vcmask 517120
      %778 = vst.msk [vmem:[%s492] sm:$0x3] %vm777, %v776
      %v779 = vld [vmem:[%s8] sm:$0xf]
      %v780 = vld [vmem:[%s8 + $0x4] sm:$0xf]
      %v781 = vld [vmem:[%s8 + $0x8] sm:$0xf]
      %v782 = vld [vmem:[%s8 + $0xc] sm:$0xf]
      %v783 = vld [vmem:[%s8 + $0x10] sm:$0xf]
      %v784 = vld [vmem:[%s8 + $0x14] sm:$0xf]
      %v785 = vld [vmem:[%s8 + $0x18] sm:$0xf]
      %v786 = vld [vmem:[%s8 + $0x1c] sm:$0xf]
      %v787 = vpack.c.bf16 %v689, %v689
      %v788 = vld [vmem:[%s9] sm:$0x1]
      %v790 = vlaneseq
      %v791 = vshrl.u32 %v790, 7
      %v792 = vsub.s32 0, %v791
      %v793 = vrot.slane %v788, %v792
      %v803 = vunpack.c.l.b16 %v779
      %v804 = vunpack.c.l.b16 %v780
      %v805 = vunpack.c.l.b16 %v781
      %v806 = vunpack.c.l.b16 %v782
      %v807 = vunpack.c.l.b16 %v783
      %v808 = vunpack.c.l.b16 %v784
      %v809 = vunpack.c.l.b16 %v785
      %v810 = vunpack.c.l.b16 %v786
      %v811 = vpack.c.b16 %v804, %v803
      %v812 = vpack.c.b16 %v806, %v805
      %v813 = vpack.c.b16 %v808, %v807
      %v814 = vpack.c.b16 %v810, %v809
      %v820 = vsel %vm615, %v787, 0
      %822 = vmatprep.subr.bf16.mxu0 0
      %823 = vmatpush1.bf16.msra.mxu0 %v811
      %824 = vmatprep.subr.bf16.mxu0 0
      %825 = vmatpush1.bf16.msra.mxu0 %v812
      %826 = vmatprep.subr.bf16.mxu0 0
      %827 = vmatpush1.bf16.msra.mxu0 %v813
      %828 = vmatprep.subr.bf16.mxu0 0
      %829 = vmatpush1.bf16.msra.mxu0 %v814
      %830 = vmatprep.subr.bf16.mxu0 0
      %831 = vmatpush1.bf16.msra.mxu0 0
      %832 = vmatprep.subr.bf16.mxu0 0
      %833 = vmatpush1.bf16.msra.mxu0 0
      %834 = vmatprep.subr.bf16.mxu0 0
      %835 = vmatpush1.bf16.msra.mxu0 0
      %836 = vmatprep.subr.bf16.mxu0 0
      %837 = vmatpush1.bf16.msra.mxu0 0
      %838 = vmatprep.subr.bf16.mxu0 0
      %839 = vmatpush1.bf16.msra.mxu0 0
      %840 = vmatprep.subr.bf16.mxu0 0
      %841 = vmatpush1.bf16.msra.mxu0 0
      %842 = vmatprep.subr.bf16.mxu0 0
      %843 = vmatpush1.bf16.msra.mxu0 0
      %844 = vmatprep.subr.bf16.mxu0 0
      %845 = vmatpush1.bf16.msra.mxu0 0
      %846 = vmatprep.subr.bf16.mxu0 0
      %847 = vmatpush1.bf16.msra.mxu0 0
      %848 = vmatprep.subr.bf16.mxu0 0
      %849 = vmatpush1.bf16.msra.mxu0 0
      %850 = vmatprep.subr.bf16.mxu0 0
      %851 = vmatpush1.bf16.msra.mxu0 0
      %852 = vmatprep.subr.bf16.mxu0 0
      %853 = vmatpush1.bf16.msra.mxu0 0
      %854 = vmatprep.mubr.bf16.mxu0 0
      %855 = vmatmul.mubr.bf16.gmra.mrb[0].mxu0 %v820
      %v856 = vpop.f32.mrb[0].mxu0
      %v857 = vadd.f32 %v793, %v856
      %v858 = vpop.f32.mrb[0].mxu0
      %v859 = vpop.f32.mrb[0].mxu0
      %v860 = vpop.f32.mrb[0].mxu0
      %861 = vdwg.mxu0
      %v862 = vpack.c.bf16 %v857, %v857
      %863 = vst.msk [vmem:[%s499] sm:$0x3] %vm777, %v862
      %p864 = scmp.lt.s32.totalorder %s28, 1
      %s865 = scalar_select %p864, %s28, 1
      %p866 = scmp.lt.s32.totalorder %s29, 0
      %s867 = scalar_select %p866, %s29, 0
      %s868 = sadd.s32 %s867, %s865
      %s869 = smul.addr %s868, 4
      %s870 = scalar_lea.vmem %s10, %s869
      %p871 = scmp.lt.s32.totalorder %s28, 1
      %s872 = scalar_select %p871, %s28, 1
      %p873 = scmp.lt.s32.totalorder %s29, 0
      %s874 = scalar_select %p873, %s29, 0
      %s875 = sadd.s32 %s874, %s872
      %s876 = smul.addr %s875, 2
      %s877 = scalar_lea.vmem %s11, %s876
      %p878 = scmp.lt.s32.totalorder %s28, 1
      %s879 = scalar_select %p878, %s28, 1
      %p880 = scmp.lt.s32.totalorder %s29, 0
      %s881 = scalar_select %p880, %s29, 0
      %s882 = sadd.s32 %s881, %s879
      %s883 = smul.addr %s882, 2
      %s884 = scalar_lea.vmem %s12, %s883
      // Predicated region
      $region61: #{fwd.9} parent=59 // pred_check
        %p885 = pneg %p278
      $region62: #{fwd.9} parent=59 // pred_check_branch
        %887 = sbr.rel (%p885) target = $region64
      $region63: #{fwd.9} parent=59 // pred_region
        _
      $region64: #{fwd.9} parent=59 // pred_fallthru
        _
      // Predicated region
      $region65: #{fwd.9} parent=59 // pred_check
        %p888 = pneg %p306
      $region66: #{fwd.9} parent=59 // pred_check_branch
        %890 = sbr.rel (%p888) target = $region68
      $region67: #{fwd.9} parent=59 // pred_region
        _
      $region68: #{fwd.9} parent=59 // pred_fallthru
        _
      // Predicated region
      $region69: #{fwd.9} parent=59 // pred_check
        %p891 = pneg %p334
      $region70: #{fwd.9} parent=59 // pred_check_branch
        %893 = sbr.rel (%p891) target = $region72
      $region71: #{fwd.9} parent=59 // pred_region
        _
      $region72: #{fwd.9} parent=59 // pred_fallthru
        _
    $region60: #{fwd.9} parent=5 // pred_fallthru
      _
    %p894 = scmp.le.s32.totalorder 2, %s19
    // Predicated region
    $region73: #{fwd.9} parent=5 // pred_check
      %p895 = pneg %p894
    $region74: #{fwd.9} parent=5 // pred_check_branch
      %897 = sbr.rel (%p895) target = $region76
    $region75: #{fwd.9} parent=5 // pred_region
      %s898 = ssub.s32 %s19, 2
      // Predicated region
      $region77: #{fwd.9} parent=75 // pred_check
        %p899 = pneg %p284
      $region78: #{fwd.9} parent=75 // pred_check_branch
        %901 = sbr.rel (%p899) target = $region80
      $region79: #{fwd.9} parent=75 // pred_region
        %p902 = scmp.lt.s32.totalorder %s30, 1
        %s903 = scalar_select %p902, %s30, 1
        %p904 = scmp.lt.s32.totalorder %s31, 0
        %s905 = scalar_select %p904, %s31, 0
        %s906 = sadd.s32 %s905, %s903
        %s907 = smul.addr %s906, 4
        %s908 = scalar_lea.vmem %s10, %s907
      $region80: #{fwd.9} parent=75 // pred_fallthru
        _
      // Predicated region
      $region81: #{fwd.9} parent=75 // pred_check
        %p909 = pneg %p312
      $region82: #{fwd.9} parent=75 // pred_check_branch
        %911 = sbr.rel (%p909) target = $region84
      $region83: #{fwd.9} parent=75 // pred_region
        %p912 = scmp.lt.s32.totalorder %s30, 1
        %s913 = scalar_select %p912, %s30, 1
        %p914 = scmp.lt.s32.totalorder %s31, 0
        %s915 = scalar_select %p914, %s31, 0
        %s916 = sadd.s32 %s915, %s913
        %s917 = smul.addr %s916, 2
        %s918 = scalar_lea.vmem %s11, %s917
      $region84: #{fwd.9} parent=75 // pred_fallthru
        _
      // Predicated region
      $region85: #{fwd.9} parent=75 // pred_check
        %p919 = pneg %p340
      $region86: #{fwd.9} parent=75 // pred_check_branch
        %921 = sbr.rel (%p919) target = $region88
      $region87: #{fwd.9} parent=75 // pred_region
        %p922 = scmp.lt.s32.totalorder %s30, 1
        %s923 = scalar_select %p922, %s30, 1
        %p924 = scmp.lt.s32.totalorder %s31, 0
        %s925 = scalar_select %p924, %s31, 0
        %s926 = sadd.s32 %s925, %s923
        %s927 = smul.addr %s926, 2
        %s928 = scalar_lea.vmem %s12, %s927
      $region88: #{fwd.9} parent=75 // pred_fallthru
        _
    $region76: #{fwd.9} parent=5 // pred_fallthru
      _
  $region6: #{fwd.9} parent=0 // loop_footer
    %s23 = sadd.s32 1, %s19
  $region7: #{fwd.9} parent=0 // loop_footer_branch
    %18 = sbr.rel target = $region3
  $region8: #{fwd.9} parent=0 // loop_exit
    _

// kernel: fwd.6
$region0: #{fwd.6}
  #allocation0 [shape = 'u32[]', space=smem, size = 0x4, offset = 0x4, fixed_abs, tag = 'smem constant byte address 0x4 - core index']
  #allocation1 [shape = 'u32[144,128]{1,0:T(1,128)}', space=vmem, size = 0x12000, scoped, tag = 'internal scratch']
  %s0 = inlined_call_operand.vmem [shape: bf16[2,16,48], index: 0, kind: input, shape index: {}]
  %s1 = inlined_call_operand.vmem [shape: f32[16,32], index: 1, kind: input, shape index: {}]
  %s2 = inlined_call_operand.vmem [shape: bf16[48,32], index: 2, kind: input, shape index: {}]
  %s3 = inlined_call_operand.vmem [shape: f32[1,32], index: 3, kind: input, shape index: {}]
  %s4 = inlined_call_operand.vmem [shape: f32[1,32], index: 4, kind: input, shape index: {}]
  %s5 = inlined_call_operand.vmem [shape: f32[1,32], index: 5, kind: input, shape index: {}]
  %s6 = inlined_call_operand.vmem [shape: bf16[32,32], index: 6, kind: input, shape index: {}]
  %s7 = inlined_call_operand.vmem [shape: f32[1,32], index: 7, kind: input, shape index: {}]
  %s8 = inlined_call_operand.vmem [shape: bf16[32,32], index: 8, kind: input, shape index: {}]
  %s9 = inlined_call_operand.vmem [shape: f32[1,32], index: 9, kind: input, shape index: {}]
  %s10 = inlined_call_operand.vmem [shape: f32[2,16,32], index: 10, kind: output, shape index: {0}]
  %s11 = inlined_call_operand.vmem [shape: bf16[2,16,32], index: 11, kind: output, shape index: {1}]
  %s12 = inlined_call_operand.vmem [shape: bf16[2,16,32], index: 12, kind: output, shape index: {2}]
  %13 = xla_tuple %s10, %s11, %s12
  %s14 = sld [smem:[#allocation0]]
  $region89: #{fwd.6} parent=0
    _
  %s16 = ssub.s32 1, %s14
  %s17 = scalar_select 0, %s16, %s14
  loop: start=0, step=1, limit=4
  $region2: #{fwd.6} parent=0 // loop_pre_header
    _
  $region3: #{fwd.6} parent=0 // loop_header
    %s19 = sphi 0, %s23
    %p20 = scmp.ge.s32.totalorder %s19, 4
    %s26 = sphi 0, %s38
    %s27 = sphi 0, %s34
    %s28 = sphi 0, %s26
    %s29 = sphi 0, %s27
    %s30 = sphi 0, %s28
    %s31 = sphi 0, %s29
    %s43 = sphi 0, %s45
    %s46 = sphi 0, %s43
    %s47 = sphi 0, %s46
    %s63 = sphi 0, %s47
    %s69 = sphi 0, %s71
    %s72 = sphi 0, %s69
    %s73 = sphi 0, %s72
    %s89 = sphi 0, %s73
    %s93 = sphi 0, %s93
    %s95 = sphi 0, %s93
    %s96 = sphi 0, %s95
    %s110 = sphi 0, %s96
    %s114 = sphi 0, %s114
    %s116 = sphi 0, %s114
    %s117 = sphi 0, %s116
    %s131 = sphi 0, %s117
    %s135 = sphi 0, %s135
    %s137 = sphi 0, %s135
    %s138 = sphi 0, %s137
    %s152 = sphi 0, %s138
    %s156 = sphi 0, %s156
    %s158 = sphi 0, %s156
    %s159 = sphi 0, %s158
    %s173 = sphi 0, %s159
    %s177 = sphi 0, %s177
    %s179 = sphi 0, %s177
    %s180 = sphi 0, %s179
    %s194 = sphi 0, %s180
    %s198 = sphi 0, %s198
    %s200 = sphi 0, %s198
    %s201 = sphi 0, %s200
    %s215 = sphi 0, %s201
    %s219 = sphi 0, %s219
    %s221 = sphi 0, %s219
    %s222 = sphi 0, %s221
    %s236 = sphi 0, %s222
    %s240 = sphi 0, %s240
    %s242 = sphi 0, %s240
    %s243 = sphi 0, %s242
    %s257 = sphi 0, %s243
    %s265 = sphi 0, %s267
    %s268 = sphi 0, %s265
    %s269 = sphi 0, %s268
    %s285 = sphi 0, %s269
    %s293 = sphi 0, %s295
    %s296 = sphi 0, %s293
    %s297 = sphi 0, %s296
    %s313 = sphi 0, %s297
    %s321 = sphi 0, %s323
    %s324 = sphi 0, %s321
    %s325 = sphi 0, %s324
    %s341 = sphi 0, %s325
  $region4: #{fwd.6} parent=0 // loop_header_branch
    %22 = sbr.rel (%p20) target = $region8
  $region5: #{fwd.6} parent=0 // loop_body
    %s24 = ssub.s32 %s19, 1
    %s25 = ssub.s32 %s19, 2
    %s32 = sadd.s32 1, %s27
    %p33 = scmp.ge.s32.totalorder %s32, 1
    %s34 = scalar_select %p33, 0, %s32
    %s35 = sadd.s32 1, %s26
    %s36 = scalar_select %p33, %s35, %s26
    %p37 = scmp.ge.s32.totalorder %s36, 2
    %s38 = scalar_select %p37, 0, %s36
    %s39 = ssub.s32 %s26, %s38
    %s40 = ssub.s32 %s27, %s34
    %s41 = sor.u32 %s39, %s40
    %p42 = scmp.eq.s32.totalorder %s41, 0
    %s44 = sadd.s32 %s43, 1
    %s45 = scalar_select %p42, %s43, %s44
    %p48 = pneg %p42
    %p49 = scmp.eq.s32.totalorder %s19, 1
    %p50 = por %p48, %p49
    %p51 = scmp.ne.s32.totalorder %s43, %s46
    %p52 = scmp.eq.s32.totalorder %s19, 0
    %p53 = por %p51, %p52
    %p54 = scmp.ne.s32.totalorder %s43, %s46
    %p55 = scmp.eq.s32.totalorder %s24, 1
    %p56 = por %p54, %p55
    %p57 = scmp.ne.s32.totalorder %s46, %s47
    %p58 = scmp.eq.s32.totalorder %s24, 0
    %p59 = por %p57, %p58
    %p60 = scmp.ne.s32.totalorder %s46, %s47
    %p61 = scmp.eq.s32.totalorder %s25, 1
    %p62 = por %p60, %p61
    %p64 = scmp.ne.s32.totalorder %s47, %s63
    %p65 = scmp.eq.s32.totalorder %s25, 0
    %p66 = por %p64, %p65
    %s67 = ssub.s32 %s27, %s34
    %p68 = scmp.eq.s32.totalorder %s67, 0
    %s70 = sadd.s32 %s69, 1
    %s71 = scalar_select %p68, %s69, %s70
    %p74 = pneg %p68
    %p75 = scmp.eq.s32.totalorder %s19, 1
    %p76 = por %p74, %p75
    %p77 = scmp.ne.s32.totalorder %s69, %s72
    %p78 = scmp.eq.s32.totalorder %s19, 0
    %p79 = por %p77, %p78
    %p80 = scmp.ne.s32.totalorder %s69, %s72
    %p81 = scmp.eq.s32.totalorder %s24, 1
    %p82 = por %p80, %p81
    %p83 = scmp.ne.s32.totalorder %s72, %s73
    %p84 = scmp.eq.s32.totalorder %s24, 0
    %p85 = por %p83, %p84
    %p86 = scmp.ne.s32.totalorder %s72, %s73
    %p87 = scmp.eq.s32.totalorder %s25, 1
    %p88 = por %p86, %p87
    %p90 = scmp.ne.s32.totalorder %s73, %s89
    %p91 = scmp.eq.s32.totalorder %s25, 0
    %p92 = por %p90, %p91
    %s94 = sadd.s32 %s93, 1
    %p97 = scmp.eq.s32.totalorder %s19, 1
    %p98 = scmp.ne.s32.totalorder %s93, %s95
    %p99 = scmp.eq.s32.totalorder %s19, 0
    %p100 = por %p98, %p99
    %p101 = scmp.ne.s32.totalorder %s93, %s95
    %p102 = scmp.eq.s32.totalorder %s24, 1
    %p103 = por %p101, %p102
    %p104 = scmp.ne.s32.totalorder %s95, %s96
    %p105 = scmp.eq.s32.totalorder %s24, 0
    %p106 = por %p104, %p105
    %p107 = scmp.ne.s32.totalorder %s95, %s96
    %p108 = scmp.eq.s32.totalorder %s25, 1
    %p109 = por %p107, %p108
    %p111 = scmp.ne.s32.totalorder %s96, %s110
    %p112 = scmp.eq.s32.totalorder %s25, 0
    %p113 = por %p111, %p112
    %s115 = sadd.s32 %s114, 1
    %p118 = scmp.eq.s32.totalorder %s19, 1
    %p119 = scmp.ne.s32.totalorder %s114, %s116
    %p120 = scmp.eq.s32.totalorder %s19, 0
    %p121 = por %p119, %p120
    %p122 = scmp.ne.s32.totalorder %s114, %s116
    %p123 = scmp.eq.s32.totalorder %s24, 1
    %p124 = por %p122, %p123
    %p125 = scmp.ne.s32.totalorder %s116, %s117
    %p126 = scmp.eq.s32.totalorder %s24, 0
    %p127 = por %p125, %p126
    %p128 = scmp.ne.s32.totalorder %s116, %s117
    %p129 = scmp.eq.s32.totalorder %s25, 1
    %p130 = por %p128, %p129
    %p132 = scmp.ne.s32.totalorder %s117, %s131
    %p133 = scmp.eq.s32.totalorder %s25, 0
    %p134 = por %p132, %p133
    %s136 = sadd.s32 %s135, 1
    %p139 = scmp.eq.s32.totalorder %s19, 1
    %p140 = scmp.ne.s32.totalorder %s135, %s137
    %p141 = scmp.eq.s32.totalorder %s19, 0
    %p142 = por %p140, %p141
    %p143 = scmp.ne.s32.totalorder %s135, %s137
    %p144 = scmp.eq.s32.totalorder %s24, 1
    %p145 = por %p143, %p144
    %p146 = scmp.ne.s32.totalorder %s137, %s138
    %p147 = scmp.eq.s32.totalorder %s24, 0
    %p148 = por %p146, %p147
    %p149 = scmp.ne.s32.totalorder %s137, %s138
    %p150 = scmp.eq.s32.totalorder %s25, 1
    %p151 = por %p149, %p150
    %p153 = scmp.ne.s32.totalorder %s138, %s152
    %p154 = scmp.eq.s32.totalorder %s25, 0
    %p155 = por %p153, %p154
    %s157 = sadd.s32 %s156, 1
    %p160 = scmp.eq.s32.totalorder %s19, 1
    %p161 = scmp.ne.s32.totalorder %s156, %s158
    %p162 = scmp.eq.s32.totalorder %s19, 0
    %p163 = por %p161, %p162
    %p164 = scmp.ne.s32.totalorder %s156, %s158
    %p165 = scmp.eq.s32.totalorder %s24, 1
    %p166 = por %p164, %p165
    %p167 = scmp.ne.s32.totalorder %s158, %s159
    %p168 = scmp.eq.s32.totalorder %s24, 0
    %p169 = por %p167, %p168
    %p170 = scmp.ne.s32.totalorder %s158, %s159
    %p171 = scmp.eq.s32.totalorder %s25, 1
    %p172 = por %p170, %p171
    %p174 = scmp.ne.s32.totalorder %s159, %s173
    %p175 = scmp.eq.s32.totalorder %s25, 0
    %p176 = por %p174, %p175
    %s178 = sadd.s32 %s177, 1
    %p181 = scmp.eq.s32.totalorder %s19, 1
    %p182 = scmp.ne.s32.totalorder %s177, %s179
    %p183 = scmp.eq.s32.totalorder %s19, 0
    %p184 = por %p182, %p183
    %p185 = scmp.ne.s32.totalorder %s177, %s179
    %p186 = scmp.eq.s32.totalorder %s24, 1
    %p187 = por %p185, %p186
    %p188 = scmp.ne.s32.totalorder %s179, %s180
    %p189 = scmp.eq.s32.totalorder %s24, 0
    %p190 = por %p188, %p189
    %p191 = scmp.ne.s32.totalorder %s179, %s180
    %p192 = scmp.eq.s32.totalorder %s25, 1
    %p193 = por %p191, %p192
    %p195 = scmp.ne.s32.totalorder %s180, %s194
    %p196 = scmp.eq.s32.totalorder %s25, 0
    %p197 = por %p195, %p196
    %s199 = sadd.s32 %s198, 1
    %p202 = scmp.eq.s32.totalorder %s19, 1
    %p203 = scmp.ne.s32.totalorder %s198, %s200
    %p204 = scmp.eq.s32.totalorder %s19, 0
    %p205 = por %p203, %p204
    %p206 = scmp.ne.s32.totalorder %s198, %s200
    %p207 = scmp.eq.s32.totalorder %s24, 1
    %p208 = por %p206, %p207
    %p209 = scmp.ne.s32.totalorder %s200, %s201
    %p210 = scmp.eq.s32.totalorder %s24, 0
    %p211 = por %p209, %p210
    %p212 = scmp.ne.s32.totalorder %s200, %s201
    %p213 = scmp.eq.s32.totalorder %s25, 1
    %p214 = por %p212, %p213
    %p216 = scmp.ne.s32.totalorder %s201, %s215
    %p217 = scmp.eq.s32.totalorder %s25, 0
    %p218 = por %p216, %p217
    %s220 = sadd.s32 %s219, 1
    %p223 = scmp.eq.s32.totalorder %s19, 1
    %p224 = scmp.ne.s32.totalorder %s219, %s221
    %p225 = scmp.eq.s32.totalorder %s19, 0
    %p226 = por %p224, %p225
    %p227 = scmp.ne.s32.totalorder %s219, %s221
    %p228 = scmp.eq.s32.totalorder %s24, 1
    %p229 = por %p227, %p228
    %p230 = scmp.ne.s32.totalorder %s221, %s222
    %p231 = scmp.eq.s32.totalorder %s24, 0
    %p232 = por %p230, %p231
    %p233 = scmp.ne.s32.totalorder %s221, %s222
    %p234 = scmp.eq.s32.totalorder %s25, 1
    %p235 = por %p233, %p234
    %p237 = scmp.ne.s32.totalorder %s222, %s236
    %p238 = scmp.eq.s32.totalorder %s25, 0
    %p239 = por %p237, %p238
    %s241 = sadd.s32 %s240, 1
    %p244 = scmp.eq.s32.totalorder %s19, 1
    %p245 = scmp.ne.s32.totalorder %s240, %s242
    %p246 = scmp.eq.s32.totalorder %s19, 0
    %p247 = por %p245, %p246
    %p248 = scmp.ne.s32.totalorder %s240, %s242
    %p249 = scmp.eq.s32.totalorder %s24, 1
    %p250 = por %p248, %p249
    %p251 = scmp.ne.s32.totalorder %s242, %s243
    %p252 = scmp.eq.s32.totalorder %s24, 0
    %p253 = por %p251, %p252
    %p254 = scmp.ne.s32.totalorder %s242, %s243
    %p255 = scmp.eq.s32.totalorder %s25, 1
    %p256 = por %p254, %p255
    %p258 = scmp.ne.s32.totalorder %s243, %s257
    %p259 = scmp.eq.s32.totalorder %s25, 0
    %p260 = por %p258, %p259
    %s261 = ssub.s32 %s26, %s38
    %s262 = ssub.s32 %s27, %s34
    %s263 = sor.u32 %s261, %s262
    %p264 = scmp.eq.s32.totalorder %s263, 0
    %s266 = sadd.s32 %s265, 1
    %s267 = scalar_select %p264, %s265, %s266
    %p270 = pneg %p264
    %p271 = scmp.eq.s32.totalorder %s19, 1
    %p272 = por %p270, %p271
    %p273 = scmp.ne.s32.totalorder %s265, %s268
    %p274 = scmp.eq.s32.totalorder %s19, 0
    %p275 = por %p273, %p274
    %p276 = scmp.ne.s32.totalorder %s265, %s268
    %p277 = scmp.eq.s32.totalorder %s24, 1
    %p278 = por %p276, %p277
    %p279 = scmp.ne.s32.totalorder %s268, %s269
    %p280 = scmp.eq.s32.totalorder %s24, 0
    %p281 = por %p279, %p280
    %p282 = scmp.ne.s32.totalorder %s268, %s269
    %p283 = scmp.eq.s32.totalorder %s25, 1
    %p284 = por %p282, %p283
    %p286 = scmp.ne.s32.totalorder %s269, %s285
    %p287 = scmp.eq.s32.totalorder %s25, 0
    %p288 = por %p286, %p287
    %s289 = ssub.s32 %s26, %s38
    %s290 = ssub.s32 %s27, %s34
    %s291 = sor.u32 %s289, %s290
    %p292 = scmp.eq.s32.totalorder %s291, 0
    %s294 = sadd.s32 %s293, 1
    %s295 = scalar_select %p292, %s293, %s294
    %p298 = pneg %p292
    %p299 = scmp.eq.s32.totalorder %s19, 1
    %p300 = por %p298, %p299
    %p301 = scmp.ne.s32.totalorder %s293, %s296
    %p302 = scmp.eq.s32.totalorder %s19, 0
    %p303 = por %p301, %p302
    %p304 = scmp.ne.s32.totalorder %s293, %s296
    %p305 = scmp.eq.s32.totalorder %s24, 1
    %p306 = por %p304, %p305
    %p307 = scmp.ne.s32.totalorder %s296, %s297
    %p308 = scmp.eq.s32.totalorder %s24, 0
    %p309 = por %p307, %p308
    %p310 = scmp.ne.s32.totalorder %s296, %s297
    %p311 = scmp.eq.s32.totalorder %s25, 1
    %p312 = por %p310, %p311
    %p314 = scmp.ne.s32.totalorder %s297, %s313
    %p315 = scmp.eq.s32.totalorder %s25, 0
    %p316 = por %p314, %p315
    %s317 = ssub.s32 %s26, %s38
    %s318 = ssub.s32 %s27, %s34
    %s319 = sor.u32 %s317, %s318
    %p320 = scmp.eq.s32.totalorder %s319, 0
    %s322 = sadd.s32 %s321, 1
    %s323 = scalar_select %p320, %s321, %s322
    %p326 = pneg %p320
    %p327 = scmp.eq.s32.totalorder %s19, 1
    %p328 = por %p326, %p327
    %p329 = scmp.ne.s32.totalorder %s321, %s324
    %p330 = scmp.eq.s32.totalorder %s19, 0
    %p331 = por %p329, %p330
    %p332 = scmp.ne.s32.totalorder %s321, %s324
    %p333 = scmp.eq.s32.totalorder %s24, 1
    %p334 = por %p332, %p333
    %p335 = scmp.ne.s32.totalorder %s324, %s325
    %p336 = scmp.eq.s32.totalorder %s24, 0
    %p337 = por %p335, %p336
    %p338 = scmp.ne.s32.totalorder %s324, %s325
    %p339 = scmp.eq.s32.totalorder %s25, 1
    %p340 = por %p338, %p339
    %p342 = scmp.ne.s32.totalorder %s325, %s341
    %p343 = scmp.eq.s32.totalorder %s25, 0
    %p344 = por %p342, %p343
    %p345 = scmp.le.s32.totalorder 1, %s19
    %p346 = scmp.lt.s32.totalorder %s19, 3
    %p347 = pnand %p345, %p346
    %p348 = pneg %p347
    // Predicated region
    $region9: #{fwd.6} parent=5 // pred_check
      _
    $region10: #{fwd.6} parent=5 // pred_check_branch
      %350 = sbr.rel (%p347) target = $region12
    $region11: #{fwd.6} parent=5 // pred_region
      %s351 = ssub.s32 %s19, 1
      // Predicated region
      $region13: #{fwd.6} parent=11 // pred_check
        %p352 = pneg %p85
      $region14: #{fwd.6} parent=11 // pred_check_branch
        %354 = sbr.rel (%p352) target = $region16
      $region15: #{fwd.6} parent=11 // pred_region
        %s355 = smul.u32 2, %s29
        %p356 = scmp.lt.s32.totalorder %s355, 1
        %s357 = scalar_select %p356, %s355, 1
        %s358 = smul.addr %s357, 8
        %s359 = scalar_lea.vmem %s1, %s358
        %s360 = smul.u32 2, %s29
      $region16: #{fwd.6} parent=11 // pred_fallthru
        _
      // Predicated region
      $region17: #{fwd.6} parent=11 // pred_check
        %p361 = pneg %p106
      $region18: #{fwd.6} parent=11 // pred_check_branch
        %363 = sbr.rel (%p361) target = $region20
      $region19: #{fwd.6} parent=11 // pred_region
        _
      $region20: #{fwd.6} parent=11 // pred_fallthru
        _
      // Predicated region
      $region21: #{fwd.6} parent=11 // pred_check
        %p364 = pneg %p127
      $region22: #{fwd.6} parent=11 // pred_check_branch
        %366 = sbr.rel (%p364) target = $region24
      $region23: #{fwd.6} parent=11 // pred_region
        _
      $region24: #{fwd.6} parent=11 // pred_fallthru
        _
      // Predicated region
      $region25: #{fwd.6} parent=11 // pred_check
        %p367 = pneg %p148
      $region26: #{fwd.6} parent=11 // pred_check_branch
        %369 = sbr.rel (%p367) target = $region28
      $region27: #{fwd.6} parent=11 // pred_region
        _
      $region28: #{fwd.6} parent=11 // pred_fallthru
        _
      // Predicated region
      $region29: #{fwd.6} parent=11 // pred_check
        %p370 = pneg %p169
      $region30: #{fwd.6} parent=11 // pred_check_branch
        %372 = sbr.rel (%p370) target = $region32
      $region31: #{fwd.6} parent=11 // pred_region
        _
      $region32: #{fwd.6} parent=11 // pred_fallthru
        _
      // Predicated region
      $region33: #{fwd.6} parent=11 // pred_check
        %p373 = pneg %p190
      $region34: #{fwd.6} parent=11 // pred_check_branch
        %375 = sbr.rel (%p373) target = $region36
      $region35: #{fwd.6} parent=11 // pred_region
        _
      $region36: #{fwd.6} parent=11 // pred_fallthru
        _
      // Predicated region
      $region37: #{fwd.6} parent=11 // pred_check
        %p376 = pneg %p211
      $region38: #{fwd.6} parent=11 // pred_check_branch
        %378 = sbr.rel (%p376) target = $region40
      $region39: #{fwd.6} parent=11 // pred_region
        _
      $region40: #{fwd.6} parent=11 // pred_fallthru
        _
      // Predicated region
      $region41: #{fwd.6} parent=11 // pred_check
        %p379 = pneg %p232
      $region42: #{fwd.6} parent=11 // pred_check_branch
        %381 = sbr.rel (%p379) target = $region44
      $region43: #{fwd.6} parent=11 // pred_region
        _
      $region44: #{fwd.6} parent=11 // pred_fallthru
        _
      // Predicated region
      $region45: #{fwd.6} parent=11 // pred_check
        %p382 = pneg %p253
      $region46: #{fwd.6} parent=11 // pred_check_branch
        %384 = sbr.rel (%p382) target = $region48
      $region47: #{fwd.6} parent=11 // pred_region
        _
      $region48: #{fwd.6} parent=11 // pred_fallthru
        _
    $region12: #{fwd.6} parent=5 // pred_fallthru
      _
    %p385 = scmp.lt.s32.totalorder %s19, 2
    // Predicated region
    $region49: #{fwd.6} parent=5 // pred_check
      %p386 = pneg %p385
    $region50: #{fwd.6} parent=5 // pred_check_branch
      %388 = sbr.rel (%p386) target = $region52
    $region51: #{fwd.6} parent=5 // pred_region
      // Predicated region
      $region53: #{fwd.6} parent=51 // pred_check
        %p389 = pneg %p53
      $region54: #{fwd.6} parent=51 // pred_check_branch
        %391 = sbr.rel (%p389) target = $region56
      $region55: #{fwd.6} parent=51 // pred_region
        %s392 = smul.u32 2, %s27
        %p393 = scmp.lt.s32.totalorder %s26, 1
        %s394 = scalar_select %p393, %s26, 1
        %p395 = scmp.lt.s32.totalorder %s392, 1
        %s396 = scalar_select %p395, %s392, 1
        %s397 = smul.addr %s394, 2
        %s398 = sadd.s32 %s396, %s397
        %s399 = smul.addr %s398, 4
        %s400 = scalar_lea.vmem %s0, %s399
        %s401 = smul.u32 2, %s27
      $region56: #{fwd.6} parent=51 // pred_fallthru
        _
    $region52: #{fwd.6} parent=5 // pred_fallthru
      _
    %p402 = scmp.le.s32.totalorder 1, %s19
    %p403 = scmp.lt.s32.totalorder %s19, 3
    %p404 = pnand %p402, %p403
    %p405 = pneg %p404
    // Predicated region
    $region57: #{fwd.6} parent=5 // pred_check
      _
    $region58: #{fwd.6} parent=5 // pred_check_branch
      %407 = sbr.rel (%p404) target = $region60
    $region59: #{fwd.6} parent=5 // pred_region
      %s408 = ssub.s32 %s19, 1
      %s409 = smul.u32 2, %s29
      %p410 = scmp.lt.s32.totalorder %s28, 1
      %s411 = scalar_select %p410, %s28, 1
      %p412 = scmp.lt.s32.totalorder %s409, 1
      %s413 = scalar_select %p412, %s409, 1
      %s414 = smul.addr %s411, 2
      %s415 = sadd.s32 %s413, %s414
      %s416 = smul.addr %s415, 4
      %s417 = scalar_lea.vmem %s0, %s416
      %p418 = pneg %p59
      %p419 = pneg %p56
      %s420 = smul.u32 2, %s29
      %p421 = scmp.lt.s32.totalorder %s420, 1
      %s422 = scalar_select %p421, %s420, 1
      %s423 = smul.addr %s422, 8
      %s424 = scalar_lea.vmem %s1, %s423
      %p425 = pneg %p85
      %p426 = pneg %p82
      %p427 = pneg %p106
      %p428 = pneg %p103
      %p429 = pneg %p127
      %p430 = pneg %p124
      %p431 = pneg %p148
      %p432 = pneg %p145
      %p433 = pneg %p169
      %p434 = pneg %p166
      %p435 = pneg %p190
      %p436 = pneg %p187
      %p437 = pneg %p211
      %p438 = pneg %p208
      %p439 = pneg %p232
      %p440 = pneg %p229
      %p441 = pneg %p253
      %p442 = pneg %p250
      %p443 = pneg %p281
      %p444 = pneg %p278
      %s445 = smul.u32 2, %s29
      %p446 = scmp.lt.s32.totalorder %s28, 1
      %s447 = scalar_select %p446, %s28, 1
      %p448 = scmp.lt.s32.totalorder %s445, 1
      %s449 = scalar_select %p448, %s445, 1
      %s450 = smul.addr %s447, 2
      %s451 = sadd.s32 %s449, %s450
      %s452 = smul.addr %s451, 8
      %s453 = scalar_lea.vmem %s10, %s452
      %p454 = pneg %p309
      %p455 = pneg %p306
      %s456 = smul.u32 2, %s29
      %p457 = scmp.lt.s32.totalorder %s28, 1
      %s458 = scalar_select %p457, %s28, 1
      %p459 = scmp.lt.s32.totalorder %s456, 1
      %s460 = scalar_select %p459, %s456, 1
      %s461 = smul.addr %s458, 2
      %s462 = sadd.s32 %s460, %s461
      %s463 = smul.addr %s462, 4
      %s464 = scalar_lea.vmem %s11, %s463
      %p465 = pneg %p337
      %p466 = pneg %p334
      %s467 = smul.u32 2, %s29
      %p468 = scmp.lt.s32.totalorder %s28, 1
      %s469 = scalar_select %p468, %s28, 1
      %p470 = scmp.lt.s32.totalorder %s467, 1
      %s471 = scalar_select %p470, %s467, 1
      %s472 = smul.addr %s469, 2
      %s473 = sadd.s32 %s471, %s472
      %s474 = smul.addr %s473, 4
      %s475 = scalar_lea.vmem %s12, %s474
      %s476 = smul.u32 2, %s29
      %p477 = scmp.lt.s32.totalorder %s28, 1
      %s478 = scalar_select %p477, %s28, 1
      %p479 = scmp.lt.s32.totalorder %s476, 1
      %s480 = scalar_select %p479, %s476, 1
      %s481 = smul.addr %s478, 2
      %s482 = sadd.s32 %s480, %s481
      %s483 = smul.addr %s482, 4
      %s484 = scalar_lea.vmem %s0, %s483
      %s485 = smul.u32 2, %s29
      %s486 = smul.u32 2, %s29
      %p487 = scmp.lt.s32.totalorder %s486, 1
      %s488 = scalar_select %p487, %s486, 1
      %s489 = smul.addr %s488, 8
      %s490 = scalar_lea.vmem %s1, %s489
      %s491 = smul.u32 2, %s29
      %s492 = smul.u32 2, %s29
      %p493 = scmp.lt.s32.totalorder %s28, 1
      %s494 = scalar_select %p493, %s28, 1
      %p495 = scmp.lt.s32.totalorder %s492, 1
      %s496 = scalar_select %p495, %s492, 1
      %s497 = smul.addr %s494, 2
      %s498 = sadd.s32 %s496, %s497
      %s499 = smul.addr %s498, 8
      %s500 = scalar_lea.vmem %s10, %s499
      %s501 = smul.u32 2, %s29
      %s502 = smul.u32 2, %s29
      %p503 = scmp.lt.s32.totalorder %s28, 1
      %s504 = scalar_select %p503, %s28, 1
      %p505 = scmp.lt.s32.totalorder %s502, 1
      %s506 = scalar_select %p505, %s502, 1
      %s507 = smul.addr %s504, 2
      %s508 = sadd.s32 %s506, %s507
      %s509 = smul.addr %s508, 4
      %s510 = scalar_lea.vmem %s11, %s509
      %s511 = smul.u32 2, %s29
      %s512 = smul.u32 2, %s29
      %p513 = scmp.lt.s32.totalorder %s28, 1
      %s514 = scalar_select %p513, %s28, 1
      %p515 = scmp.lt.s32.totalorder %s512, 1
      %s516 = scalar_select %p515, %s512, 1
      %s517 = smul.addr %s514, 2
      %s518 = sadd.s32 %s516, %s517
      %s519 = smul.addr %s518, 4
      %s520 = scalar_lea.vmem %s12, %s519
      %s521 = smul.u32 2, %s29
      %v523 = vld [vmem:[%s484] sm:$0xf]
      %v524 = vld [vmem:[%s484 + $0x4] sm:$0xf]
      %v525 = vld [vmem:[%s2] sm:$0xf]
      %v526 = vld [vmem:[%s2 + $0x4] sm:$0xf]
      %v527 = vld [vmem:[%s2 + $0x8] sm:$0xf]
      %v528 = vld [vmem:[%s2 + $0xc] sm:$0xf]
      %v529 = vld [vmem:[%s2 + $0x10] sm:$0xf]
      %v530 = vld [vmem:[%s2 + $0x14] sm:$0xf]
      %v531 = vld [vmem:[%s3] sm:$0x1]
      %v533 = vlaneseq
      %v534 = vshrl.u32 %v533, 7
      %v535 = vsub.s32 0, %v534
      %v536 = vrot.slane %v531, %v535
      %v540 = vunpack.c.l.b16 %v523
      %v541 = vunpack.c.l.b16 %v524
      %v542 = vpack.c.b16 %v541, %v540
      %v549 = vunpack.c.l.b16 %v525
      %v550 = vunpack.c.l.b16 %v526
      %v551 = vunpack.c.l.b16 %v527
      %v552 = vunpack.c.l.b16 %v528
      %v553 = vunpack.c.l.b16 %v529
      %v554 = vunpack.c.l.b16 %v530
      %v555 = vpack.c.b16 %v550, %v549
      %v556 = vpack.c.b16 %v552, %v551
      %v557 = vpack.c.b16 %v554, %v553
      %vm561 = vcmask 392192
      %v563 = vsel %vm561, %v542, 0
      %565 = vmatprep.subr.bf16.mxu0 0
      %566 = vmatpush1.bf16.msra.mxu0 %v555
      %567 = vmatprep.subr.bf16.mxu0 0
      %568 = vmatpush1.bf16.msra.mxu0 %v556
      %569 = vmatprep.subr.bf16.mxu0 0
      %570 = vmatpush1.bf16.msra.mxu0 %v557
      %571 = vmatprep.subr.bf16.mxu0 0
      %572 = vmatpush1.bf16.msra.mxu0 0
      %573 = vmatprep.subr.bf16.mxu0 0
      %574 = vmatpush1.bf16.msra.mxu0 0
      %575 = vmatprep.subr.bf16.mxu0 0
      %576 = vmatpush1.bf16.msra.mxu0 0
      %577 = vmatprep.subr.bf16.mxu0 0
      %578 = vmatpush1.bf16.msra.mxu0 0
      %579 = vmatprep.subr.bf16.mxu0 0
      %580 = vmatpush1.bf16.msra.mxu0 0
      %581 = vmatprep.subr.bf16.mxu0 0
      %582 = vmatpush1.bf16.msra.mxu0 0
      %583 = vmatprep.subr.bf16.mxu0 0
      %584 = vmatpush1.bf16.msra.mxu0 0
      %585 = vmatprep.subr.bf16.mxu0 0
      %586 = vmatpush1.bf16.msra.mxu0 0
      %587 = vmatprep.subr.bf16.mxu0 0
      %588 = vmatpush1.bf16.msra.mxu0 0
      %589 = vmatprep.subr.bf16.mxu0 0
      %590 = vmatpush1.bf16.msra.mxu0 0
      %591 = vmatprep.subr.bf16.mxu0 0
      %592 = vmatpush1.bf16.msra.mxu0 0
      %593 = vmatprep.subr.bf16.mxu0 0
      %594 = vmatpush1.bf16.msra.mxu0 0
      %595 = vmatprep.subr.bf16.mxu0 0
      %596 = vmatpush1.bf16.msra.mxu0 0
      %597 = vmatprep.mubr.bf16.mxu0 0
      %598 = vmatmul.mubr.bf16.gmra.mrb[0].mxu0 %v563
      %v599 = vpop.f32.mrb[0].mxu0
      %v600 = vadd.f32 %v536, %v599
      %v601 = vpop.f32.mrb[0].mxu0
      %v602 = vpop.f32.mrb[0].mxu0
      %v603 = vadd.f32 %v536, %v602
      %v604 = vpop.f32.mrb[0].mxu0
      %605 = vdwg.mxu0
      %v606 = vld [vmem:[%s4] sm:$0x1]
      %v607 = vld [vmem:[%s5] sm:$0x1]
      %vm608 = vcmask 261120
      %v609 = vsel %vm608, %v600, 0.0
      %610 = vadd.xlane.f32.xlu0 %v609
      %v611 = vpop.xlane.xlu0 %610
      %v612 = vsel %vm608, %v603, 0.0
      %613 = vadd.xlane.f32.xlu0 %v612
      %v614 = vpop.xlane.xlu0 %613
      %v615 = vrcp.pop 32.0
      %v616 = vmul.f32 %v611, %v615
      %v617 = vmul.f32 %v614, %v615
      %v618 = vsub.f32 %v600, %v616
      %v619 = vsub.f32 %v603, %v617
      %v620 = vmul.f32 %v618, %v618
      %v621 = vmul.f32 %v619, %v619
      %v622 = vsel %vm608, %v620, 0.0
      %623 = vadd.xlane.f32.xlu0 %v622
      %v624 = vpop.xlane.xlu0 %623
      %v625 = vsel %vm608, %v621, 0.0
      %626 = vadd.xlane.f32.xlu0 %v625
      %v627 = vpop.xlane.xlu0 %626
      %v628 = vmul.f32 %v624, %v615
      %v629 = vmul.f32 %v627, %v615
      %v630 = vadd.f32 %v628, 1e-05
      %v631 = vadd.f32 %v629, 1e-05
      %v632 = vrsqrt.pop %v630
      %v633 = vrsqrt.pop %v631
      %v634 = vmul.f32 %v618, %v632
      %v635 = vmul.f32 %v619, %v633
      %v637 = vlaneseq
      %v638 = vshrl.u32 %v637, 7
      %v639 = vsub.s32 0, %v638
      %v640 = vrot.slane %v606, %v639
      %v642 = vmul.f32 %v634, %v640
      %v643 = vmul.f32 %v635, %v640
      %v645 = vlaneseq
      %v646 = vshrl.u32 %v645, 7
      %v647 = vsub.s32 0, %v646
      %v648 = vrot.slane %v607, %v647
      %v650 = vadd.f32 %v642, %v648
      %v651 = vadd.f32 %v643, %v648
      %v652 = vld [vmem:[%s490] sm:$0xff]
      %v653 = vld [vmem:[%s490 + $0x8] sm:$0xff]
      %654 = vst.msk [vmem:[%s500] sm:$0xff] %vm608, %v650
      %655 = vst.msk [vmem:[%s500 + $0x8] sm:$0xff] %vm608, %v651
      %v656 = vadd.f32 %v650, %v652
      %v657 = vadd.f32 %v651, %v653
      %v658 = vld [vmem:[%s6] sm:$0xf]
      %v659 = vld [vmem:[%s6 + $0x4] sm:$0xf]
      %v660 = vld [vmem:[%s6 + $0x8] sm:$0xf]
      %v661 = vld [vmem:[%s6 + $0xc] sm:$0xf]
      %v662 = vpack.c.bf16 %v657, %v656
      %v663 = vld [vmem:[%s7] sm:$0x1]
      %v665 = vlaneseq
      %v666 = vshrl.u32 %v665, 7
      %v667 = vsub.s32 0, %v666
      %v668 = vrot.slane %v663, %v667
      %v674 = vunpack.c.l.b16 %v658
      %v675 = vunpack.c.l.b16 %v659
      %v676 = vunpack.c.l.b16 %v660
      %v677 = vunpack.c.l.b16 %v661
      %v678 = vpack.c.b16 %v675, %v674
      %v679 = vpack.c.b16 %v677, %v676
      %v683 = vsel %vm608, %v662, 0
      %685 = vmatprep.subr.bf16.mxu0 0
      %686 = vmatpush1.bf16.msra.mxu0 %v678
      %687 = vmatprep.subr.bf16.mxu0 0
      %688 = vmatpush1.bf16.msra.mxu0 %v679
      %689 = vmatprep.subr.bf16.mxu0 0
      %690 = vmatpush1.bf16.msra.mxu0 0
      %691 = vmatprep.subr.bf16.mxu0 0
      %692 = vmatpush1.bf16.msra.mxu0 0
      %693 = vmatprep.subr.bf16.mxu0 0
      %694 = vmatpush1.bf16.msra.mxu0 0
      %695 = vmatprep.subr.bf16.mxu0 0
      %696 = vmatpush1.bf16.msra.mxu0 0
      %697 = vmatprep.subr.bf16.mxu0 0
      %698 = vmatpush1.bf16.msra.mxu0 0
      %699 = vmatprep.subr.bf16.mxu0 0
      %700 = vmatpush1.bf16.msra.mxu0 0
      %701 = vmatprep.subr.bf16.mxu0 0
      %702 = vmatpush1.bf16.msra.mxu0 0
      %703 = vmatprep.subr.bf16.mxu0 0
      %704 = vmatpush1.bf16.msra.mxu0 0
      %705 = vmatprep.subr.bf16.mxu0 0
      %706 = vmatpush1.bf16.msra.mxu0 0
      %707 = vmatprep.subr.bf16.mxu0 0
      %708 = vmatpush1.bf16.msra.mxu0 0
      %709 = vmatprep.subr.bf16.mxu0 0
      %710 = vmatpush1.bf16.msra.mxu0 0
      %711 = vmatprep.subr.bf16.mxu0 0
      %712 = vmatpush1.bf16.msra.mxu0 0
      %713 = vmatprep.subr.bf16.mxu0 0
      %714 = vmatpush1.bf16.msra.mxu0 0
      %715 = vmatprep.subr.bf16.mxu0 0
      %716 = vmatpush1.bf16.msra.mxu0 0
      %717 = vmatprep.mubr.bf16.mxu0 0
      %718 = vmatmul.mubr.bf16.gmra.mrb[0].mxu0 %v683
      %v719 = vpop.f32.mrb[0].mxu0
      %v720 = vadd.f32 %v668, %v719
      %v721 = vpop.f32.mrb[0].mxu0
      %v722 = vpop.f32.mrb[0].mxu0
      %v723 = vadd.f32 %v668, %v722
      %v724 = vpop.f32.mrb[0].mxu0
      %725 = vdwg.mxu0
      %v726 = vpack.c.bf16 %v723, %v720
      %v728 = vunpack.c.l.b16 %v726
      %v729 = vunpack.c.h.b16 %v726
      %v730 = vpack.c.b16 %v728, %v728
      %v731 = vpack.c.b16 %v729, %v729
      %vm734 = vcmask 257024
      %735 = vst.msk [vmem:[%s510] sm:$0xf] %vm734, %v730
      %736 = vst.msk [vmem:[%s510 + $0x4] sm:$0xf] %vm734, %v731
      %v737 = vld [vmem:[%s8] sm:$0xf]
      %v738 = vld [vmem:[%s8 + $0x4] sm:$0xf]
      %v739 = vld [vmem:[%s8 + $0x8] sm:$0xf]
      %v740 = vld [vmem:[%s8 + $0xc] sm:$0xf]
      %v741 = vpack.c.bf16 %v651, %v650
      %v742 = vld [vmem:[%s9] sm:$0x1]
      %v744 = vlaneseq
      %v745 = vshrl.u32 %v744, 7
      %v746 = vsub.s32 0, %v745
      %v747 = vrot.slane %v742, %v746
      %v753 = vunpack.c.l.b16 %v737
      %v754 = vunpack.c.l.b16 %v738
      %v755 = vunpack.c.l.b16 %v739
      %v756 = vunpack.c.l.b16 %v740
      %v757 = vpack.c.b16 %v754, %v753
      %v758 = vpack.c.b16 %v756, %v755
      %v762 = vsel %vm608, %v741, 0
      %764 = vmatprep.subr.bf16.mxu0 0
      %765 = vmatpush1.bf16.msra.mxu0 %v757
      %766 = vmatprep.subr.bf16.mxu0 0
      %767 = vmatpush1.bf16.msra.mxu0 %v758
      %768 = vmatprep.subr.bf16.mxu0 0
      %769 = vmatpush1.bf16.msra.mxu0 0
      %770 = vmatprep.subr.bf16.mxu0 0
      %771 = vmatpush1.bf16.msra.mxu0 0
      %772 = vmatprep.subr.bf16.mxu0 0
      %773 = vmatpush1.bf16.msra.mxu0 0
      %774 = vmatprep.subr.bf16.mxu0 0
      %775 = vmatpush1.bf16.msra.mxu0 0
      %776 = vmatprep.subr.bf16.mxu0 0
      %777 = vmatpush1.bf16.msra.mxu0 0
      %778 = vmatprep.subr.bf16.mxu0 0
      %779 = vmatpush1.bf16.msra.mxu0 0
      %780 = vmatprep.subr.bf16.mxu0 0
      %781 = vmatpush1.bf16.msra.mxu0 0
      %782 = vmatprep.subr.bf16.mxu0 0
      %783 = vmatpush1.bf16.msra.mxu0 0
      %784 = vmatprep.subr.bf16.mxu0 0
      %785 = vmatpush1.bf16.msra.mxu0 0
      %786 = vmatprep.subr.bf16.mxu0 0
      %787 = vmatpush1.bf16.msra.mxu0 0
      %788 = vmatprep.subr.bf16.mxu0 0
      %789 = vmatpush1.bf16.msra.mxu0 0
      %790 = vmatprep.subr.bf16.mxu0 0
      %791 = vmatpush1.bf16.msra.mxu0 0
      %792 = vmatprep.subr.bf16.mxu0 0
      %793 = vmatpush1.bf16.msra.mxu0 0
      %794 = vmatprep.subr.bf16.mxu0 0
      %795 = vmatpush1.bf16.msra.mxu0 0
      %796 = vmatprep.mubr.bf16.mxu0 0
      %797 = vmatmul.mubr.bf16.gmra.mrb[0].mxu0 %v762
      %v798 = vpop.f32.mrb[0].mxu0
      %v799 = vadd.f32 %v747, %v798
      %v800 = vpop.f32.mrb[0].mxu0
      %v801 = vpop.f32.mrb[0].mxu0
      %v802 = vadd.f32 %v747, %v801
      %v803 = vpop.f32.mrb[0].mxu0
      %804 = vdwg.mxu0
      %v805 = vpack.c.bf16 %v802, %v799
      %v807 = vunpack.c.l.b16 %v805
      %v808 = vunpack.c.h.b16 %v805
      %v809 = vpack.c.b16 %v807, %v807
      %v810 = vpack.c.b16 %v808, %v808
      %813 = vst.msk [vmem:[%s520] sm:$0xf] %vm734, %v809
      %814 = vst.msk [vmem:[%s520 + $0x4] sm:$0xf] %vm734, %v810
      %s815 = smul.u32 2, %s29
      %p816 = scmp.lt.s32.totalorder %s28, 1
      %s817 = scalar_select %p816, %s28, 1
      %p818 = scmp.lt.s32.totalorder %s815, 1
      %s819 = scalar_select %p818, %s815, 1
      %s820 = smul.addr %s817, 2
      %s821 = sadd.s32 %s819, %s820
      %s822 = smul.addr %s821, 8
      %s823 = scalar_lea.vmem %s10, %s822
      %s824 = smul.u32 2, %s29
      %p825 = scmp.lt.s32.totalorder %s28, 1
      %s826 = scalar_select %p825, %s28, 1
      %p827 = scmp.lt.s32.totalorder %s824, 1
      %s828 = scalar_select %p827, %s824, 1
      %s829 = smul.addr %s826, 2
      %s830 = sadd.s32 %s828, %s829
      %s831 = smul.addr %s830, 4
      %s832 = scalar_lea.vmem %s11, %s831
      %s833 = smul.u32 2, %s29
      %p834 = scmp.lt.s32.totalorder %s28, 1
      %s835 = scalar_select %p834, %s28, 1
      %p836 = scmp.lt.s32.totalorder %s833, 1
      %s837 = scalar_select %p836, %s833, 1
      %s838 = smul.addr %s835, 2
      %s839 = sadd.s32 %s837, %s838
      %s840 = smul.addr %s839, 4
      %s841 = scalar_lea.vmem %s12, %s840
      // Predicated region
      $region61: #{fwd.6} parent=59 // pred_check
        %p842 = pneg %p278
      $region62: #{fwd.6} parent=59 // pred_check_branch
        %844 = sbr.rel (%p842) target = $region64
      $region63: #{fwd.6} parent=59 // pred_region
        %s845 = smul.u32 2, %s29
      $region64: #{fwd.6} parent=59 // pred_fallthru
        _
      // Predicated region
      $region65: #{fwd.6} parent=59 // pred_check
        %p846 = pneg %p306
      $region66: #{fwd.6} parent=59 // pred_check_branch
        %848 = sbr.rel (%p846) target = $region68
      $region67: #{fwd.6} parent=59 // pred_region
        %s849 = smul.u32 2, %s29
      $region68: #{fwd.6} parent=59 // pred_fallthru
        _
      // Predicated region
      $region69: #{fwd.6} parent=59 // pred_check
        %p850 = pneg %p334
      $region70: #{fwd.6} parent=59 // pred_check_branch
        %852 = sbr.rel (%p850) target = $region72
      $region71: #{fwd.6} parent=59 // pred_region
        %s853 = smul.u32 2, %s29
      $region72: #{fwd.6} parent=59 // pred_fallthru
        _
    $region60: #{fwd.6} parent=5 // pred_fallthru
      _
    %p854 = scmp.le.s32.totalorder 2, %s19
    // Predicated region
    $region73: #{fwd.6} parent=5 // pred_check
      %p855 = pneg %p854
    $region74: #{fwd.6} parent=5 // pred_check_branch
      %857 = sbr.rel (%p855) target = $region76
    $region75: #{fwd.6} parent=5 // pred_region
      %s858 = ssub.s32 %s19, 2
      // Predicated region
      $region77: #{fwd.6} parent=75 // pred_check
        %p859 = pneg %p284
      $region78: #{fwd.6} parent=75 // pred_check_branch
        %861 = sbr.rel (%p859) target = $region80
      $region79: #{fwd.6} parent=75 // pred_region
        %s862 = smul.u32 2, %s31
        %p863 = scmp.lt.s32.totalorder %s30, 1
        %s864 = scalar_select %p863, %s30, 1
        %p865 = scmp.lt.s32.totalorder %s862, 1
        %s866 = scalar_select %p865, %s862, 1
        %s867 = smul.addr %s864, 2
        %s868 = sadd.s32 %s866, %s867
        %s869 = smul.addr %s868, 8
        %s870 = scalar_lea.vmem %s10, %s869
      $region80: #{fwd.6} parent=75 // pred_fallthru
        _
      // Predicated region
      $region81: #{fwd.6} parent=75 // pred_check
        %p871 = pneg %p312
      $region82: #{fwd.6} parent=75 // pred_check_branch
        %873 = sbr.rel (%p871) target = $region84
      $region83: #{fwd.6} parent=75 // pred_region
        %s874 = smul.u32 2, %s31
        %p875 = scmp.lt.s32.totalorder %s30, 1
        %s876 = scalar_select %p875, %s30, 1
        %p877 = scmp.lt.s32.totalorder %s874, 1
        %s878 = scalar_select %p877, %s874, 1
        %s879 = smul.addr %s876, 2
        %s880 = sadd.s32 %s878, %s879
        %s881 = smul.addr %s880, 4
        %s882 = scalar_lea.vmem %s11, %s881
      $region84: #{fwd.6} parent=75 // pred_fallthru
        _
      // Predicated region
      $region85: #{fwd.6} parent=75 // pred_check
        %p883 = pneg %p340
      $region86: #{fwd.6} parent=75 // pred_check_branch
        %885 = sbr.rel (%p883) target = $region88
      $region87: #{fwd.6} parent=75 // pred_region
        %s886 = smul.u32 2, %s31
        %p887 = scmp.lt.s32.totalorder %s30, 1
        %s888 = scalar_select %p887, %s30, 1
        %p889 = scmp.lt.s32.totalorder %s886, 1
        %s890 = scalar_select %p889, %s886, 1
        %s891 = smul.addr %s888, 2
        %s892 = sadd.s32 %s890, %s891
        %s893 = smul.addr %s892, 4
        %s894 = scalar_lea.vmem %s12, %s893
      $region88: #{fwd.6} parent=75 // pred_fallthru
        _
    $region76: #{fwd.6} parent=5 // pred_fallthru
      _
  $region6: #{fwd.6} parent=0 // loop_footer
    %s23 = sadd.s32 1, %s19
  $region7: #{fwd.6} parent=0 // loop_footer_branch
    %18 = sbr.rel target = $region3
  $region8: #{fwd.6} parent=0 // loop_exit
    _

// kernel: fwd.7
$region0: #{fwd.7}
  #allocation0 [shape = 'u32[]', space=smem, size = 0x4, offset = 0x4, fixed_abs, tag = 'smem constant byte address 0x4 - core index']
  #allocation1 [shape = 'u32[144,128]{1,0:T(1,128)}', space=vmem, size = 0x12000, scoped, tag = 'internal scratch']
  %s0 = inlined_call_operand.vmem [shape: bf16[2,16,64], index: 0, kind: input, shape index: {}]
  %s1 = inlined_call_operand.vmem [shape: bf16[64,32], index: 1, kind: input, shape index: {}]
  %s2 = inlined_call_operand.vmem [shape: f32[1,32], index: 2, kind: input, shape index: {}]
  %s3 = inlined_call_operand.vmem [shape: bf16[32,32], index: 3, kind: input, shape index: {}]
  %s4 = inlined_call_operand.vmem [shape: f32[1,32], index: 4, kind: input, shape index: {}]
  %s5 = inlined_call_operand.vmem [shape: bf16[32,32], index: 5, kind: input, shape index: {}]
  %s6 = inlined_call_operand.vmem [shape: f32[1,32], index: 6, kind: input, shape index: {}]
  %s7 = inlined_call_operand.vmem [shape: bf16[2,16,32], index: 7, kind: output, shape index: {0}]
  %s8 = inlined_call_operand.vmem [shape: bf16[2,16,32], index: 8, kind: output, shape index: {1}]
  %9 = xla_tuple %s7, %s8
  %s10 = sld [smem:[#allocation0]]
  $region69: #{fwd.7} parent=0
    _
  %s12 = ssub.s32 1, %s10
  %s13 = scalar_select 0, %s12, %s10
  loop: start=0, step=1, limit=4
  $region2: #{fwd.7} parent=0 // loop_pre_header
    _
  $region3: #{fwd.7} parent=0 // loop_header
    %s15 = sphi 0, %s19
    %p16 = scmp.ge.s32.totalorder %s15, 4
    %s25 = sphi 0, %s27
    %s28 = sphi 0, %s25
    %s29 = sphi 0, %s28
    %s45 = sphi 0, %s29
    %s49 = sphi 0, %s49
    %s51 = sphi 0, %s49
    %s52 = sphi 0, %s51
    %s66 = sphi 0, %s52
    %s70 = sphi 0, %s70
    %s72 = sphi 0, %s70
    %s73 = sphi 0, %s72
    %s87 = sphi 0, %s73
    %s91 = sphi 0, %s91
    %s93 = sphi 0, %s91
    %s94 = sphi 0, %s93
    %s108 = sphi 0, %s94
    %s112 = sphi 0, %s112
    %s114 = sphi 0, %s112
    %s115 = sphi 0, %s114
    %s129 = sphi 0, %s115
    %s133 = sphi 0, %s133
    %s135 = sphi 0, %s133
    %s136 = sphi 0, %s135
    %s150 = sphi 0, %s136
    %s154 = sphi 0, %s154
    %s156 = sphi 0, %s154
    %s157 = sphi 0, %s156
    %s171 = sphi 0, %s157
    %s177 = sphi 0, %s179
    %s180 = sphi 0, %s177
    %s181 = sphi 0, %s180
    %s197 = sphi 0, %s181
    %s203 = sphi 0, %s205
    %s206 = sphi 0, %s203
    %s207 = sphi 0, %s206
    %s223 = sphi 0, %s207
  $region4: #{fwd.7} parent=0 // loop_header_branch
    %18 = sbr.rel (%p16) target = $region8
  $region5: #{fwd.7} parent=0 // loop_body
    %s20 = ssub.s32 %s15, 1
    %s21 = ssub.s32 %s15, 2
    %s22 = sadd.s32 %s15, 1
    %s23 = ssub.s32 %s15, %s22
    %p24 = scmp.eq.s32.totalorder %s23, 0
    %s26 = sadd.s32 %s25, 1
    %s27 = scalar_select %p24, %s25, %s26
    %p30 = pneg %p24
    %p31 = scmp.eq.s32.totalorder %s15, 1
    %p32 = por %p30, %p31
    %p33 = scmp.ne.s32.totalorder %s25, %s28
    %p34 = scmp.eq.s32.totalorder %s15, 0
    %p35 = por %p33, %p34
    %p36 = scmp.ne.s32.totalorder %s25, %s28
    %p37 = scmp.eq.s32.totalorder %s20, 1
    %p38 = por %p36, %p37
    %p39 = scmp.ne.s32.totalorder %s28, %s29
    %p40 = scmp.eq.s32.totalorder %s20, 0
    %p41 = por %p39, %p40
    %p42 = scmp.ne.s32.totalorder %s28, %s29
    %p43 = scmp.eq.s32.totalorder %s21, 1
    %p44 = por %p42, %p43
    %p46 = scmp.ne.s32.totalorder %s29, %s45
    %p47 = scmp.eq.s32.totalorder %s21, 0
    %p48 = por %p46, %p47
    %s50 = sadd.s32 %s49, 1
    %p53 = scmp.eq.s32.totalorder %s15, 1
    %p54 = scmp.ne.s32.totalorder %s49, %s51
    %p55 = scmp.eq.s32.totalorder %s15, 0
    %p56 = por %p54, %p55
    %p57 = scmp.ne.s32.totalorder %s49, %s51
    %p58 = scmp.eq.s32.totalorder %s20, 1
    %p59 = por %p57, %p58
    %p60 = scmp.ne.s32.totalorder %s51, %s52
    %p61 = scmp.eq.s32.totalorder %s20, 0
    %p62 = por %p60, %p61
    %p63 = scmp.ne.s32.totalorder %s51, %s52
    %p64 = scmp.eq.s32.totalorder %s21, 1
    %p65 = por %p63, %p64
    %p67 = scmp.ne.s32.totalorder %s52, %s66
    %p68 = scmp.eq.s32.totalorder %s21, 0
    %p69 = por %p67, %p68
    %s71 = sadd.s32 %s70, 1
    %p74 = scmp.eq.s32.totalorder %s15, 1
    %p75 = scmp.ne.s32.totalorder %s70, %s72
    %p76 = scmp.eq.s32.totalorder %s15, 0
    %p77 = por %p75, %p76
    %p78 = scmp.ne.s32.totalorder %s70, %s72
    %p79 = scmp.eq.s32.totalorder %s20, 1
    %p80 = por %p78, %p79
    %p81 = scmp.ne.s32.totalorder %s72, %s73
    %p82 = scmp.eq.s32.totalorder %s20, 0
    %p83 = por %p81, %p82
    %p84 = scmp.ne.s32.totalorder %s72, %s73
    %p85 = scmp.eq.s32.totalorder %s21, 1
    %p86 = por %p84, %p85
    %p88 = scmp.ne.s32.totalorder %s73, %s87
    %p89 = scmp.eq.s32.totalorder %s21, 0
    %p90 = por %p88, %p89
    %s92 = sadd.s32 %s91, 1
    %p95 = scmp.eq.s32.totalorder %s15, 1
    %p96 = scmp.ne.s32.totalorder %s91, %s93
    %p97 = scmp.eq.s32.totalorder %s15, 0
    %p98 = por %p96, %p97
    %p99 = scmp.ne.s32.totalorder %s91, %s93
    %p100 = scmp.eq.s32.totalorder %s20, 1
    %p101 = por %p99, %p100
    %p102 = scmp.ne.s32.totalorder %s93, %s94
    %p103 = scmp.eq.s32.totalorder %s20, 0
    %p104 = por %p102, %p103
    %p105 = scmp.ne.s32.totalorder %s93, %s94
    %p106 = scmp.eq.s32.totalorder %s21, 1
    %p107 = por %p105, %p106
    %p109 = scmp.ne.s32.totalorder %s94, %s108
    %p110 = scmp.eq.s32.totalorder %s21, 0
    %p111 = por %p109, %p110
    %s113 = sadd.s32 %s112, 1
    %p116 = scmp.eq.s32.totalorder %s15, 1
    %p117 = scmp.ne.s32.totalorder %s112, %s114
    %p118 = scmp.eq.s32.totalorder %s15, 0
    %p119 = por %p117, %p118
    %p120 = scmp.ne.s32.totalorder %s112, %s114
    %p121 = scmp.eq.s32.totalorder %s20, 1
    %p122 = por %p120, %p121
    %p123 = scmp.ne.s32.totalorder %s114, %s115
    %p124 = scmp.eq.s32.totalorder %s20, 0
    %p125 = por %p123, %p124
    %p126 = scmp.ne.s32.totalorder %s114, %s115
    %p127 = scmp.eq.s32.totalorder %s21, 1
    %p128 = por %p126, %p127
    %p130 = scmp.ne.s32.totalorder %s115, %s129
    %p131 = scmp.eq.s32.totalorder %s21, 0
    %p132 = por %p130, %p131
    %s134 = sadd.s32 %s133, 1
    %p137 = scmp.eq.s32.totalorder %s15, 1
    %p138 = scmp.ne.s32.totalorder %s133, %s135
    %p139 = scmp.eq.s32.totalorder %s15, 0
    %p140 = por %p138, %p139
    %p141 = scmp.ne.s32.totalorder %s133, %s135
    %p142 = scmp.eq.s32.totalorder %s20, 1
    %p143 = por %p141, %p142
    %p144 = scmp.ne.s32.totalorder %s135, %s136
    %p145 = scmp.eq.s32.totalorder %s20, 0
    %p146 = por %p144, %p145
    %p147 = scmp.ne.s32.totalorder %s135, %s136
    %p148 = scmp.eq.s32.totalorder %s21, 1
    %p149 = por %p147, %p148
    %p151 = scmp.ne.s32.totalorder %s136, %s150
    %p152 = scmp.eq.s32.totalorder %s21, 0
    %p153 = por %p151, %p152
    %s155 = sadd.s32 %s154, 1
    %p158 = scmp.eq.s32.totalorder %s15, 1
    %p159 = scmp.ne.s32.totalorder %s154, %s156
    %p160 = scmp.eq.s32.totalorder %s15, 0
    %p161 = por %p159, %p160
    %p162 = scmp.ne.s32.totalorder %s154, %s156
    %p163 = scmp.eq.s32.totalorder %s20, 1
    %p164 = por %p162, %p163
    %p165 = scmp.ne.s32.totalorder %s156, %s157
    %p166 = scmp.eq.s32.totalorder %s20, 0
    %p167 = por %p165, %p166
    %p168 = scmp.ne.s32.totalorder %s156, %s157
    %p169 = scmp.eq.s32.totalorder %s21, 1
    %p170 = por %p168, %p169
    %p172 = scmp.ne.s32.totalorder %s157, %s171
    %p173 = scmp.eq.s32.totalorder %s21, 0
    %p174 = por %p172, %p173
    %s175 = ssub.s32 %s15, %s22
    %p176 = scmp.eq.s32.totalorder %s175, 0
    %s178 = sadd.s32 %s177, 1
    %s179 = scalar_select %p176, %s177, %s178
    %p182 = pneg %p176
    %p183 = scmp.eq.s32.totalorder %s15, 1
    %p184 = por %p182, %p183
    %p185 = scmp.ne.s32.totalorder %s177, %s180
    %p186 = scmp.eq.s32.totalorder %s15, 0
    %p187 = por %p185, %p186
    %p188 = scmp.ne.s32.totalorder %s177, %s180
    %p189 = scmp.eq.s32.totalorder %s20, 1
    %p190 = por %p188, %p189
    %p191 = scmp.ne.s32.totalorder %s180, %s181
    %p192 = scmp.eq.s32.totalorder %s20, 0
    %p193 = por %p191, %p192
    %p194 = scmp.ne.s32.totalorder %s180, %s181
    %p195 = scmp.eq.s32.totalorder %s21, 1
    %p196 = por %p194, %p195
    %p198 = scmp.ne.s32.totalorder %s181, %s197
    %p199 = scmp.eq.s32.totalorder %s21, 0
    %p200 = por %p198, %p199
    %s201 = ssub.s32 %s15, %s22
    %p202 = scmp.eq.s32.totalorder %s201, 0
    %s204 = sadd.s32 %s203, 1
    %s205 = scalar_select %p202, %s203, %s204
    %p208 = pneg %p202
    %p209 = scmp.eq.s32.totalorder %s15, 1
    %p210 = por %p208, %p209
    %p211 = scmp.ne.s32.totalorder %s203, %s206
    %p212 = scmp.eq.s32.totalorder %s15, 0
    %p213 = por %p211, %p212
    %p214 = scmp.ne.s32.totalorder %s203, %s206
    %p215 = scmp.eq.s32.totalorder %s20, 1
    %p216 = por %p214, %p215
    %p217 = scmp.ne.s32.totalorder %s206, %s207
    %p218 = scmp.eq.s32.totalorder %s20, 0
    %p219 = por %p217, %p218
    %p220 = scmp.ne.s32.totalorder %s206, %s207
    %p221 = scmp.eq.s32.totalorder %s21, 1
    %p222 = por %p220, %p221
    %p224 = scmp.ne.s32.totalorder %s207, %s223
    %p225 = scmp.eq.s32.totalorder %s21, 0
    %p226 = por %p224, %p225
    %p227 = scmp.le.s32.totalorder 1, %s15
    %p228 = scmp.lt.s32.totalorder %s15, 3
    %p229 = pnand %p227, %p228
    %p230 = pneg %p229
    // Predicated region
    $region9: #{fwd.7} parent=5 // pred_check
      _
    $region10: #{fwd.7} parent=5 // pred_check_branch
      %232 = sbr.rel (%p229) target = $region12
    $region11: #{fwd.7} parent=5 // pred_region
      %s233 = ssub.s32 %s15, 1
      // Predicated region
      $region13: #{fwd.7} parent=11 // pred_check
        %p234 = pneg %p62
      $region14: #{fwd.7} parent=11 // pred_check_branch
        %236 = sbr.rel (%p234) target = $region16
      $region15: #{fwd.7} parent=11 // pred_region
        _
      $region16: #{fwd.7} parent=11 // pred_fallthru
        _
      // Predicated region
      $region17: #{fwd.7} parent=11 // pred_check
        %p237 = pneg %p83
      $region18: #{fwd.7} parent=11 // pred_check_branch
        %239 = sbr.rel (%p237) target = $region20
      $region19: #{fwd.7} parent=11 // pred_region
        _
      $region20: #{fwd.7} parent=11 // pred_fallthru
        _
      // Predicated region
      $region21: #{fwd.7} parent=11 // pred_check
        %p240 = pneg %p104
      $region22: #{fwd.7} parent=11 // pred_check_branch
        %242 = sbr.rel (%p240) target = $region24
      $region23: #{fwd.7} parent=11 // pred_region
        _
      $region24: #{fwd.7} parent=11 // pred_fallthru
        _
      // Predicated region
      $region25: #{fwd.7} parent=11 // pred_check
        %p243 = pneg %p125
      $region26: #{fwd.7} parent=11 // pred_check_branch
        %245 = sbr.rel (%p243) target = $region28
      $region27: #{fwd.7} parent=11 // pred_region
        _
      $region28: #{fwd.7} parent=11 // pred_fallthru
        _
      // Predicated region
      $region29: #{fwd.7} parent=11 // pred_check
        %p246 = pneg %p146
      $region30: #{fwd.7} parent=11 // pred_check_branch
        %248 = sbr.rel (%p246) target = $region32
      $region31: #{fwd.7} parent=11 // pred_region
        _
      $region32: #{fwd.7} parent=11 // pred_fallthru
        _
      // Predicated region
      $region33: #{fwd.7} parent=11 // pred_check
        %p249 = pneg %p167
      $region34: #{fwd.7} parent=11 // pred_check_branch
        %251 = sbr.rel (%p249) target = $region36
      $region35: #{fwd.7} parent=11 // pred_region
        _
      $region36: #{fwd.7} parent=11 // pred_fallthru
        _
    $region12: #{fwd.7} parent=5 // pred_fallthru
      _
    %p252 = scmp.lt.s32.totalorder %s15, 2
    // Predicated region
    $region37: #{fwd.7} parent=5 // pred_check
      %p253 = pneg %p252
    $region38: #{fwd.7} parent=5 // pred_check_branch
      %255 = sbr.rel (%p253) target = $region40
    $region39: #{fwd.7} parent=5 // pred_region
      // Predicated region
      $region41: #{fwd.7} parent=39 // pred_check
        %p256 = pneg %p35
      $region42: #{fwd.7} parent=39 // pred_check_branch
        %258 = sbr.rel (%p256) target = $region44
      $region43: #{fwd.7} parent=39 // pred_region
        %p259 = scmp.lt.s32.totalorder %s15, 1
        %s260 = scalar_select %p259, %s15, 1
        %s261 = smul.addr %s260, 2
        %s262 = smul.addr %s261, 4
        %s263 = scalar_lea.vmem %s0, %s262
      $region44: #{fwd.7} parent=39 // pred_fallthru
        _
    $region40: #{fwd.7} parent=5 // pred_fallthru
      _
    %p264 = scmp.le.s32.totalorder 1, %s15
    %p265 = scmp.lt.s32.totalorder %s15, 3
    %p266 = pnand %p264, %p265
    %p267 = pneg %p266
    // Predicated region
    $region45: #{fwd.7} parent=5 // pred_check
      _
    $region46: #{fwd.7} parent=5 // pred_check_branch
      %269 = sbr.rel (%p266) target = $region48
    $region47: #{fwd.7} parent=5 // pred_region
      %s270 = ssub.s32 %s15, 1
      %p271 = scmp.lt.s32.totalorder %s20, 1
      %s272 = scalar_select %p271, %s20, 1
      %s273 = smul.addr %s272, 2
      %s274 = smul.addr %s273, 4
      %s275 = scalar_lea.vmem %s0, %s274
      %p276 = pneg %p41
      %p277 = pneg %p38
      %p278 = pneg %p62
      %p279 = pneg %p59
      %p280 = pneg %p83
      %p281 = pneg %p80
      %p282 = pneg %p104
      %p283 = pneg %p101
      %p284 = pneg %p125
      %p285 = pneg %p122
      %p286 = pneg %p146
      %p287 = pneg %p143
      %p288 = pneg %p167
      %p289 = pneg %p164
      %p290 = pneg %p193
      %p291 = pneg %p190
      %p292 = scmp.lt.s32.totalorder %s20, 1
      %s293 = scalar_select %p292, %s20, 1
      %s294 = smul.addr %s293, 2
      %s295 = smul.addr %s294, 4
      %s296 = scalar_lea.vmem %s7, %s295
      %p297 = pneg %p219
      %p298 = pneg %p216
      %p299 = scmp.lt.s32.totalorder %s20, 1
      %s300 = scalar_select %p299, %s20, 1
      %s301 = smul.addr %s300, 2
      %s302 = smul.addr %s301, 4
      %s303 = scalar_lea.vmem %s8, %s302
      %p304 = scmp.lt.s32.totalorder %s20, 1
      %s305 = scalar_select %p304, %s20, 1
      %s306 = smul.addr %s305, 2
      %s307 = smul.addr %s306, 4
      %s308 = scalar_lea.vmem %s0, %s307
      %p309 = scmp.lt.s32.totalorder %s20, 1
      %s310 = scalar_select %p309, %s20, 1
      %s311 = smul.addr %s310, 2
      %s312 = smul.addr %s311, 4
      %s313 = scalar_lea.vmem %s7, %s312
      %p314 = scmp.lt.s32.totalorder %s20, 1
      %s315 = scalar_select %p314, %s20, 1
      %s316 = smul.addr %s315, 2
      %s317 = smul.addr %s316, 4
      %s318 = scalar_lea.vmem %s8, %s317
      %v320 = vld [vmem:[%s308] sm:$0xf]
      %v321 = vld [vmem:[%s308 + $0x4] sm:$0xf]
      %v322 = vld [vmem:[%s1] sm:$0xf]
      %v323 = vld [vmem:[%s1 + $0x4] sm:$0xf]
      %v324 = vld [vmem:[%s1 + $0x8] sm:$0xf]
      %v325 = vld [vmem:[%s1 + $0xc] sm:$0xf]
      %v326 = vld [vmem:[%s1 + $0x10] sm:$0xf]
      %v327 = vld [vmem:[%s1 + $0x14] sm:$0xf]
      %v328 = vld [vmem:[%s1 + $0x18] sm:$0xf]
      %v329 = vld [vmem:[%s1 + $0x1c] sm:$0xf]
      %v330 = vld [vmem:[%s2] sm:$0x1]
      %v332 = vlaneseq
      %v333 = vshrl.u32 %v332, 7
      %v334 = vsub.s32 0, %v333
      %v335 = vrot.slane %v330, %v334
      %v339 = vunpack.c.l.b16 %v320
      %v340 = vunpack.c.l.b16 %v321
      %v341 = vpack.c.b16 %v340, %v339
      %v350 = vunpack.c.l.b16 %v322
      %v351 = vunpack.c.l.b16 %v323
      %v352 = vunpack.c.l.b16 %v324
      %v353 = vunpack.c.l.b16 %v325
      %v354 = vunpack.c.l.b16 %v326
      %v355 = vunpack.c.l.b16 %v327
      %v356 = vunpack.c.l.b16 %v328
      %v357 = vunpack.c.l.b16 %v329
      %v358 = vpack.c.b16 %v351, %v350
      %v359 = vpack.c.b16 %v353, %v352
      %v360 = vpack.c.b16 %v355, %v354
      %v361 = vpack.c.b16 %v357, %v356
      %vm366 = vcmask 523264
      %v368 = vsel %vm366, %v341, 0
      %370 = vmatprep.subr.bf16.mxu0 0
      %371 = vmatpush1.bf16.msra.mxu0 %v358
      %372 = vmatprep.subr.bf16.mxu0 0
      %373 = vmatpush1.bf16.msra.mxu0 %v359
      %374 = vmatprep.subr.bf16.mxu0 0
      %375 = vmatpush1.bf16.msra.mxu0 %v360
      %376 = vmatprep.subr.bf16.mxu0 0
      %377 = vmatpush1.bf16.msra.mxu0 %v361
      %378 = vmatprep.subr.bf16.mxu0 0
      %379 = vmatpush1.bf16.msra.mxu0 0
      %380 = vmatprep.subr.bf16.mxu0 0
      %381 = vmatpush1.bf16.msra.mxu0 0
      %382 = vmatprep.subr.bf16.mxu0 0
      %383 = vmatpush1.bf16.msra.mxu0 0
      %384 = vmatprep.subr.bf16.mxu0 0
      %385 = vmatpush1.bf16.msra.mxu0 0
      %386 = vmatprep.subr.bf16.mxu0 0
      %387 = vmatpush1.bf16.msra.mxu0 0
      %388 = vmatprep.subr.bf16.mxu0 0
      %389 = vmatpush1.bf16.msra.mxu0 0
      %390 = vmatprep.subr.bf16.mxu0 0
      %391 = vmatpush1.bf16.msra.mxu0 0
      %392 = vmatprep.subr.bf16.mxu0 0
      %393 = vmatpush1.bf16.msra.mxu0 0
      %394 = vmatprep.subr.bf16.mxu0 0
      %395 = vmatpush1.bf16.msra.mxu0 0
      %396 = vmatprep.subr.bf16.mxu0 0
      %397 = vmatpush1.bf16.msra.mxu0 0
      %398 = vmatprep.subr.bf16.mxu0 0
      %399 = vmatpush1.bf16.msra.mxu0 0
      %400 = vmatprep.subr.bf16.mxu0 0
      %401 = vmatpush1.bf16.msra.mxu0 0
      %402 = vmatprep.mubr.bf16.mxu0 0
      %403 = vmatmul.mubr.bf16.gmra.mrb[0].mxu0 %v368
      %v404 = vpop.f32.mrb[0].mxu0
      %v405 = vadd.f32 %v335, %v404
      %v406 = vpop.f32.mrb[0].mxu0
      %v407 = vpop.f32.mrb[0].mxu0
      %v408 = vadd.f32 %v335, %v407
      %v409 = vpop.f32.mrb[0].mxu0
      %410 = vdwg.mxu0
      %v411 = vld [vmem:[%s3] sm:$0xf]
      %v412 = vld [vmem:[%s3 + $0x4] sm:$0xf]
      %v413 = vld [vmem:[%s3 + $0x8] sm:$0xf]
      %v414 = vld [vmem:[%s3 + $0xc] sm:$0xf]
      %v415 = vpack.c.bf16 %v408, %v405
      %v416 = vld [vmem:[%s4] sm:$0x1]
      %v418 = vlaneseq
      %v419 = vshrl.u32 %v418, 7
      %v420 = vsub.s32 0, %v419
      %v421 = vrot.slane %v416, %v420
      %v427 = vunpack.c.l.b16 %v411
      %v428 = vunpack.c.l.b16 %v412
      %v429 = vunpack.c.l.b16 %v413
      %v430 = vunpack.c.l.b16 %v414
      %v431 = vpack.c.b16 %v428, %v427
      %v432 = vpack.c.b16 %v430, %v429
      %vm435 = vcmask 261120
      %v437 = vsel %vm435, %v415, 0
      %439 = vmatprep.subr.bf16.mxu0 0
      %440 = vmatpush1.bf16.msra.mxu0 %v431
      %441 = vmatprep.subr.bf16.mxu0 0
      %442 = vmatpush1.bf16.msra.mxu0 %v432
      %443 = vmatprep.subr.bf16.mxu0 0
      %444 = vmatpush1.bf16.msra.mxu0 0
      %445 = vmatprep.subr.bf16.mxu0 0
      %446 = vmatpush1.bf16.msra.mxu0 0
      %447 = vmatprep.subr.bf16.mxu0 0
      %448 = vmatpush1.bf16.msra.mxu0 0
      %449 = vmatprep.subr.bf16.mxu0 0
      %450 = vmatpush1.bf16.msra.mxu0 0
      %451 = vmatprep.subr.bf16.mxu0 0
      %452 = vmatpush1.bf16.msra.mxu0 0
      %453 = vmatprep.subr.bf16.mxu0 0
      %454 = vmatpush1.bf16.msra.mxu0 0
      %455 = vmatprep.subr.bf16.mxu0 0
      %456 = vmatpush1.bf16.msra.mxu0 0
      %457 = vmatprep.subr.bf16.mxu0 0
      %458 = vmatpush1.bf16.msra.mxu0 0
      %459 = vmatprep.subr.bf16.mxu0 0
      %460 = vmatpush1.bf16.msra.mxu0 0
      %461 = vmatprep.subr.bf16.mxu0 0
      %462 = vmatpush1.bf16.msra.mxu0 0
      %463 = vmatprep.subr.bf16.mxu0 0
      %464 = vmatpush1.bf16.msra.mxu0 0
      %465 = vmatprep.subr.bf16.mxu0 0
      %466 = vmatpush1.bf16.msra.mxu0 0
      %467 = vmatprep.subr.bf16.mxu0 0
      %468 = vmatpush1.bf16.msra.mxu0 0
      %469 = vmatprep.subr.bf16.mxu0 0
      %470 = vmatpush1.bf16.msra.mxu0 0
      %471 = vmatprep.mubr.bf16.mxu0 0
      %472 = vmatmul.mubr.bf16.gmra.mrb[0].mxu0 %v437
      %v473 = vpop.f32.mrb[0].mxu0
      %v474 = vadd.f32 %v421, %v473
      %v475 = vpop.f32.mrb[0].mxu0
      %v476 = vpop.f32.mrb[0].mxu0
      %v477 = vadd.f32 %v421, %v476
      %v478 = vpop.f32.mrb[0].mxu0
      %479 = vdwg.mxu0
      %v480 = vpack.c.bf16 %v477, %v474
      %v482 = vunpack.c.l.b16 %v480
      %v483 = vunpack.c.h.b16 %v480
      %v484 = vpack.c.b16 %v482, %v482
      %v485 = vpack.c.b16 %v483, %v483
      %vm488 = vcmask 257024
      %489 = vst.msk [vmem:[%s313] sm:$0xf] %vm488, %v484
      %490 = vst.msk [vmem:[%s313 + $0x4] sm:$0xf] %vm488, %v485
      %v491 = vld [vmem:[%s5] sm:$0xf]
      %v492 = vld [vmem:[%s5 + $0x4] sm:$0xf]
      %v493 = vld [vmem:[%s5 + $0x8] sm:$0xf]
      %v494 = vld [vmem:[%s5 + $0xc] sm:$0xf]
      %v495 = vld [vmem:[%s6] sm:$0x1]
      %v497 = vlaneseq
      %v498 = vshrl.u32 %v497, 7
      %v499 = vsub.s32 0, %v498
      %v500 = vrot.slane %v495, %v499
      %v506 = vunpack.c.l.b16 %v491
      %v507 = vunpack.c.l.b16 %v492
      %v508 = vunpack.c.l.b16 %v493
      %v509 = vunpack.c.l.b16 %v494
      %v510 = vpack.c.b16 %v507, %v506
      %v511 = vpack.c.b16 %v509, %v508
      %514 = vmatprep.subr.bf16.mxu0 0
      %515 = vmatpush1.bf16.msra.mxu0 %v510
      %516 = vmatprep.subr.bf16.mxu0 0
      %517 = vmatpush1.bf16.msra.mxu0 %v511
      %518 = vmatprep.subr.bf16.mxu0 0
      %519 = vmatpush1.bf16.msra.mxu0 0
      %520 = vmatprep.subr.bf16.mxu0 0
      %521 = vmatpush1.bf16.msra.mxu0 0
      %522 = vmatprep.subr.bf16.mxu0 0
      %523 = vmatpush1.bf16.msra.mxu0 0
      %524 = vmatprep.subr.bf16.mxu0 0
      %525 = vmatpush1.bf16.msra.mxu0 0
      %526 = vmatprep.subr.bf16.mxu0 0
      %527 = vmatpush1.bf16.msra.mxu0 0
      %528 = vmatprep.subr.bf16.mxu0 0
      %529 = vmatpush1.bf16.msra.mxu0 0
      %530 = vmatprep.subr.bf16.mxu0 0
      %531 = vmatpush1.bf16.msra.mxu0 0
      %532 = vmatprep.subr.bf16.mxu0 0
      %533 = vmatpush1.bf16.msra.mxu0 0
      %534 = vmatprep.subr.bf16.mxu0 0
      %535 = vmatpush1.bf16.msra.mxu0 0
      %536 = vmatprep.subr.bf16.mxu0 0
      %537 = vmatpush1.bf16.msra.mxu0 0
      %538 = vmatprep.subr.bf16.mxu0 0
      %539 = vmatpush1.bf16.msra.mxu0 0
      %540 = vmatprep.subr.bf16.mxu0 0
      %541 = vmatpush1.bf16.msra.mxu0 0
      %542 = vmatprep.subr.bf16.mxu0 0
      %543 = vmatpush1.bf16.msra.mxu0 0
      %544 = vmatprep.subr.bf16.mxu0 0
      %545 = vmatpush1.bf16.msra.mxu0 0
      %546 = vmatprep.mubr.bf16.mxu0 0
      %547 = vmatmul.mubr.bf16.gmra.mrb[0].mxu0 %v437
      %v548 = vpop.f32.mrb[0].mxu0
      %v549 = vadd.f32 %v500, %v548
      %v550 = vpop.f32.mrb[0].mxu0
      %v551 = vpop.f32.mrb[0].mxu0
      %v552 = vadd.f32 %v500, %v551
      %v553 = vpop.f32.mrb[0].mxu0
      %554 = vdwg.mxu0
      %v555 = vpack.c.bf16 %v552, %v549
      %v557 = vunpack.c.l.b16 %v555
      %v558 = vunpack.c.h.b16 %v555
      %v559 = vpack.c.b16 %v557, %v557
      %v560 = vpack.c.b16 %v558, %v558
      %563 = vst.msk [vmem:[%s318] sm:$0xf] %vm488, %v559
      %564 = vst.msk [vmem:[%s318 + $0x4] sm:$0xf] %vm488, %v560
      %p565 = scmp.lt.s32.totalorder %s20, 1
      %s566 = scalar_select %p565, %s20, 1
      %s567 = smul.addr %s566, 2
      %s568 = smul.addr %s567, 4
      %s569 = scalar_lea.vmem %s7, %s568
      %p570 = scmp.lt.s32.totalorder %s20, 1
      %s571 = scalar_select %p570, %s20, 1
      %s572 = smul.addr %s571, 2
      %s573 = smul.addr %s572, 4
      %s574 = scalar_lea.vmem %s8, %s573
      // Predicated region
      $region49: #{fwd.7} parent=47 // pred_check
        %p575 = pneg %p190
      $region50: #{fwd.7} parent=47 // pred_check_branch
        %577 = sbr.rel (%p575) target = $region52
      $region51: #{fwd.7} parent=47 // pred_region
        _
      $region52: #{fwd.7} parent=47 // pred_fallthru
        _
      // Predicated region
      $region53: #{fwd.7} parent=47 // pred_check
        %p578 = pneg %p216
      $region54: #{fwd.7} parent=47 // pred_check_branch
        %580 = sbr.rel (%p578) target = $region56
      $region55: #{fwd.7} parent=47 // pred_region
        _
      $region56: #{fwd.7} parent=47 // pred_fallthru
        _
    $region48: #{fwd.7} parent=5 // pred_fallthru
      _
    %p581 = scmp.le.s32.totalorder 2, %s15
    // Predicated region
    $region57: #{fwd.7} parent=5 // pred_check
      %p582 = pneg %p581
    $region58: #{fwd.7} parent=5 // pred_check_branch
      %584 = sbr.rel (%p582) target = $region60
    $region59: #{fwd.7} parent=5 // pred_region
      %s585 = ssub.s32 %s15, 2
      // Predicated region
      $region61: #{fwd.7} parent=59 // pred_check
        %p586 = pneg %p196
      $region62: #{fwd.7} parent=59 // pred_check_branch
        %588 = sbr.rel (%p586) target = $region64
      $region63: #{fwd.7} parent=59 // pred_region
        %p589 = scmp.lt.s32.totalorder %s21, 1
        %s590 = scalar_select %p589, %s21, 1
        %s591 = smul.addr %s590, 2
        %s592 = smul.addr %s591, 4
        %s593 = scalar_lea.vmem %s7, %s592
      $region64: #{fwd.7} parent=59 // pred_fallthru
        _
      // Predicated region
      $region65: #{fwd.7} parent=59 // pred_check
        %p594 = pneg %p222
      $region66: #{fwd.7} parent=59 // pred_check_branch
        %596 = sbr.rel (%p594) target = $region68
      $region67: #{fwd.7} parent=59 // pred_region
        %p597 = scmp.lt.s32.totalorder %s21, 1
        %s598 = scalar_select %p597, %s21, 1
        %s599 = smul.addr %s598, 2
        %s600 = smul.addr %s599, 4
        %s601 = scalar_lea.vmem %s8, %s600
      $region68: #{fwd.7} parent=59 // pred_fallthru
        _
    $region60: #{fwd.7} parent=5 // pred_fallthru
      _
  $region6: #{fwd.7} parent=0 // loop_footer
    %s19 = sadd.s32 1, %s15
  $region7: #{fwd.7} parent=0 // loop_footer_branch
    %14 = sbr.rel target = $region3
  $region8: #{fwd.7} parent=0 // loop_exit
    _

// kernel: fwd.11
$region0: #{fwd.11}
  #allocation0 [shape = 'u32[]', space=smem, size = 0x4, offset = 0x4, fixed_abs, tag = 'smem constant byte address 0x4 - core index']
  #allocation1 [shape = 'u32[144,128]{1,0:T(1,128)}', space=vmem, size = 0x12000, scoped, tag = 'internal scratch']
  %s0 = inlined_call_operand.vmem [shape: f32[2,4,64], index: 0, kind: input, shape index: {}]
  %s1 = inlined_call_operand.vmem [shape: f32[4,64], index: 1, kind: input, shape index: {}]
  %s2 = inlined_call_operand.vmem [shape: bf16[2,4,4,16], index: 2, kind: input, shape index: {}]
  %s3 = inlined_call_operand.vmem [shape: bf16[2,4,4,16], index: 3, kind: input, shape index: {}]
  %s4 = inlined_call_operand.vmem [shape: bf16[2,4,4,16], index: 4, kind: input, shape index: {}]
  %s5 = inlined_call_operand.vmem [shape: bf16[2,4,4,16], index: 5, kind: input, shape index: {}]
  %s6 = inlined_call_operand.vmem [shape: bf16[64,64], index: 6, kind: input, shape index: {}]
  %s7 = inlined_call_operand.vmem [shape: f32[1,64], index: 7, kind: input, shape index: {}]
  %s8 = inlined_call_operand.vmem [shape: bf16[4,16,64], index: 8, kind: input, shape index: {}]
  %s9 = inlined_call_operand.vmem [shape: f32[1,64], index: 9, kind: input, shape index: {}]
  %s10 = inlined_call_operand.vmem [shape: f32[1,64], index: 10, kind: input, shape index: {}]
  %s11 = inlined_call_operand.vmem [shape: f32[1,64], index: 11, kind: input, shape index: {}]
  %s12 = inlined_call_operand.vmem [shape: bf16[64,64], index: 12, kind: input, shape index: {}]
  %s13 = inlined_call_operand.vmem [shape: f32[1,64], index: 13, kind: input, shape index: {}]
  %s14 = inlined_call_operand.vmem [shape: bf16[4,16,64], index: 14, kind: input, shape index: {}]
  %s15 = inlined_call_operand.vmem [shape: f32[1,64], index: 15, kind: input, shape index: {}]
  %s16 = inlined_call_operand.vmem [shape: f32[1,64], index: 16, kind: input, shape index: {}]
  %s17 = inlined_call_operand.vmem [shape: f32[1,64], index: 17, kind: input, shape index: {}]
  %s18 = inlined_call_operand.vmem [shape: bf16[64,256], index: 18, kind: input, shape index: {}]
  %s19 = inlined_call_operand.vmem [shape: f32[1,256], index: 19, kind: input, shape index: {}]
  %s20 = inlined_call_operand.vmem [shape: bf16[256,64], index: 20, kind: input, shape index: {}]
  %s21 = inlined_call_operand.vmem [shape: f32[1,64], index: 21, kind: input, shape index: {}]
  %s22 = inlined_call_operand.vmem [shape: f32[1,64], index: 22, kind: input, shape index: {}]
  %s23 = inlined_call_operand.vmem [shape: f32[1,64], index: 23, kind: input, shape index: {}]
  %s24 = inlined_call_operand.hbm [shape: f32[2,4,64], index: 24, kind: output, shape index: {}]
  %s25 = sld [smem:[#allocation0]]
  $region129: #{fwd.11} parent=0
    _
  %s27 = ssub.s32 1, %s25
  %s28 = scalar_select 0, %s27, %s25
  $region1: #{fwd.11} parent=0
    #allocation2 [shape = 'u8[4096]{0}', space=vmem, size = 0x1000, scoped, tag = 'output window, operand 0']
    #allocation3 [shape = 's32[2]{0}', space=sflag, size = 0x8, scoped, tag = 'scoped memory for fwd.11']
    %29 = vsyncpa [#allocation3], 0
    %s30 = scalar_lea.sflag [#allocation3], 1
    %31 = vsyncpa %s30, 0
    loop: start=0, step=1, limit=4
    $region2: #{fwd.11} parent=1 // loop_pre_header
      _
    $region3: #{fwd.11} parent=1 // loop_header
      %s33 = sphi 0, %s37
      %p34 = scmp.ge.s32.totalorder %s33, 4
      %s40 = sphi 0, %s52
      %s41 = sphi 0, %s48
      %s42 = sphi 0, %s40
      %s43 = sphi 0, %s41
      %s44 = sphi 0, %s42
      %s45 = sphi 0, %s43
      %s57 = sphi 0, %s59
      %s60 = sphi 0, %s57
      %s61 = sphi 0, %s60
      %s77 = sphi 0, %s61
      %s83 = sphi 0, %s85
      %s86 = sphi 0, %s83
      %s87 = sphi 0, %s86
      %s103 = sphi 0, %s87
      %s109 = sphi 0, %s111
      %s112 = sphi 0, %s109
      %s113 = sphi 0, %s112
      %s129 = sphi 0, %s113
      %s135 = sphi 0, %s137
      %s138 = sphi 0, %s135
      %s139 = sphi 0, %s138
      %s155 = sphi 0, %s139
      %s161 = sphi 0, %s163
      %s164 = sphi 0, %s161
      %s165 = sphi 0, %s164
      %s181 = sphi 0, %s165
      %s187 = sphi 0, %s189
      %s190 = sphi 0, %s187
      %s191 = sphi 0, %s190
      %s207 = sphi 0, %s191
      %s211 = sphi 0, %s211
      %s213 = sphi 0, %s211
      %s214 = sphi 0, %s213
      %s228 = sphi 0, %s214
      %s232 = sphi 0, %s232
      %s234 = sphi 0, %s232
      %s235 = sphi 0, %s234
      %s249 = sphi 0, %s235
      %s253 = sphi 0, %s253
      %s255 = sphi 0, %s253
      %s256 = sphi 0, %s255
      %s270 = sphi 0, %s256
      %s274 = sphi 0, %s274
      %s276 = sphi 0, %s274
      %s277 = sphi 0, %s276
      %s291 = sphi 0, %s277
      %s295 = sphi 0, %s295
      %s297 = sphi 0, %s295
      %s298 = sphi 0, %s297
      %s312 = sphi 0, %s298
      %s316 = sphi 0, %s316
      %s318 = sphi 0, %s316
      %s319 = sphi 0, %s318
      %s333 = sphi 0, %s319
      %s337 = sphi 0, %s337
      %s339 = sphi 0, %s337
      %s340 = sphi 0, %s339
      %s354 = sphi 0, %s340
      %s358 = sphi 0, %s358
      %s360 = sphi 0, %s358
      %s361 = sphi 0, %s360
      %s375 = sphi 0, %s361
      %s379 = sphi 0, %s379
      %s381 = sphi 0, %s379
      %s382 = sphi 0, %s381
      %s396 = sphi 0, %s382
      %s400 = sphi 0, %s400
      %s402 = sphi 0, %s400
      %s403 = sphi 0, %s402
      %s417 = sphi 0, %s403
      %s421 = sphi 0, %s421
      %s423 = sphi 0, %s421
      %s424 = sphi 0, %s423
      %s438 = sphi 0, %s424
      %s442 = sphi 0, %s442
      %s444 = sphi 0, %s442
      %s445 = sphi 0, %s444
      %s459 = sphi 0, %s445
      %s463 = sphi 0, %s463
      %s465 = sphi 0, %s463
      %s466 = sphi 0, %s465
      %s480 = sphi 0, %s466
      %s484 = sphi 0, %s484
      %s486 = sphi 0, %s484
      %s487 = sphi 0, %s486
      %s501 = sphi 0, %s487
      %s505 = sphi 0, %s505
      %s507 = sphi 0, %s505
      %s508 = sphi 0, %s507
      %s522 = sphi 0, %s508
      %s526 = sphi 0, %s526
      %s528 = sphi 0, %s526
      %s529 = sphi 0, %s528
      %s543 = sphi 0, %s529
      %s547 = sphi 0, %s547
      %s549 = sphi 0, %s547
      %s550 = sphi 0, %s549
      %s564 = sphi 0, %s550
      %s568 = sphi 0, %s568
      %s570 = sphi 0, %s568
      %s571 = sphi 0, %s570
      %s585 = sphi 0, %s571
      %s593 = sphi 0, %s595
      %s596 = sphi 0, %s593
      %s597 = sphi 0, %s596
      %s613 = sphi 0, %s597
    $region4: #{fwd.11} parent=1 // loop_header_branch
      %36 = sbr.rel (%p34) target = $region8
    $region5: #{fwd.11} parent=1 // loop_body
      %s38 = ssub.s32 %s33, 1
      %s39 = ssub.s32 %s33, 2
      %s46 = sadd.s32 1, %s41
      %p47 = scmp.ge.s32.totalorder %s46, 1
      %s48 = scalar_select %p47, 0, %s46
      %s49 = sadd.s32 1, %s40
      %s50 = scalar_select %p47, %s49, %s40
      %p51 = scmp.ge.s32.totalorder %s50, 2
      %s52 = scalar_select %p51, 0, %s50
      %s53 = ssub.s32 %s40, %s52
      %s54 = ssub.s32 %s41, %s48
      %s55 = sor.u32 %s53, %s54
      %p56 = scmp.eq.s32.totalorder %s55, 0
      %s58 = sadd.s32 %s57, 1
      %s59 = scalar_select %p56, %s57, %s58
      %p62 = pneg %p56
      %p63 = scmp.eq.s32.totalorder %s33, 1
      %p64 = por %p62, %p63
      %p65 = scmp.ne.s32.totalorder %s57, %s60
      %p66 = scmp.eq.s32.totalorder %s33, 0
      %p67 = por %p65, %p66
      %p68 = scmp.ne.s32.totalorder %s57, %s60
      %p69 = scmp.eq.s32.totalorder %s38, 1
      %p70 = por %p68, %p69
      %p71 = scmp.ne.s32.totalorder %s60, %s61
      %p72 = scmp.eq.s32.totalorder %s38, 0
      %p73 = por %p71, %p72
      %p74 = scmp.ne.s32.totalorder %s60, %s61
      %p75 = scmp.eq.s32.totalorder %s39, 1
      %p76 = por %p74, %p75
      %p78 = scmp.ne.s32.totalorder %s61, %s77
      %p79 = scmp.eq.s32.totalorder %s39, 0
      %p80 = por %p78, %p79
      %s81 = ssub.s32 %s41, %s48
      %p82 = scmp.eq.s32.totalorder %s81, 0
      %s84 = sadd.s32 %s83, 1
      %s85 = scalar_select %p82, %s83, %s84
      %p88 = pneg %p82
      %p89 = scmp.eq.s32.totalorder %s33, 1
      %p90 = por %p88, %p89
      %p91 = scmp.ne.s32.totalorder %s83, %s86
      %p92 = scmp.eq.s32.totalorder %s33, 0
      %p93 = por %p91, %p92
      %p94 = scmp.ne.s32.totalorder %s83, %s86
      %p95 = scmp.eq.s32.totalorder %s38, 1
      %p96 = por %p94, %p95
      %p97 = scmp.ne.s32.totalorder %s86, %s87
      %p98 = scmp.eq.s32.totalorder %s38, 0
      %p99 = por %p97, %p98
      %p100 = scmp.ne.s32.totalorder %s86, %s87
      %p101 = scmp.eq.s32.totalorder %s39, 1
      %p102 = por %p100, %p101
      %p104 = scmp.ne.s32.totalorder %s87, %s103
      %p105 = scmp.eq.s32.totalorder %s39, 0
      %p106 = por %p104, %p105
      %s107 = ssub.s32 %s40, %s52
      %p108 = scmp.eq.s32.totalorder %s107, 0
      %s110 = sadd.s32 %s109, 1
      %s111 = scalar_select %p108, %s109, %s110
      %p114 = pneg %p108
      %p115 = scmp.eq.s32.totalorder %s33, 1
      %p116 = por %p114, %p115
      %p117 = scmp.ne.s32.totalorder %s109, %s112
      %p118 = scmp.eq.s32.totalorder %s33, 0
      %p119 = por %p117, %p118
      %p120 = scmp.ne.s32.totalorder %s109, %s112
      %p121 = scmp.eq.s32.totalorder %s38, 1
      %p122 = por %p120, %p121
      %p123 = scmp.ne.s32.totalorder %s112, %s113
      %p124 = scmp.eq.s32.totalorder %s38, 0
      %p125 = por %p123, %p124
      %p126 = scmp.ne.s32.totalorder %s112, %s113
      %p127 = scmp.eq.s32.totalorder %s39, 1
      %p128 = por %p126, %p127
      %p130 = scmp.ne.s32.totalorder %s113, %s129
      %p131 = scmp.eq.s32.totalorder %s39, 0
      %p132 = por %p130, %p131
      %s133 = ssub.s32 %s40, %s52
      %p134 = scmp.eq.s32.totalorder %s133, 0
      %s136 = sadd.s32 %s135, 1
      %s137 = scalar_select %p134, %s135, %s136
      %p140 = pneg %p134
      %p141 = scmp.eq.s32.totalorder %s33, 1
      %p142 = por %p140, %p141
      %p143 = scmp.ne.s32.totalorder %s135, %s138
      %p144 = scmp.eq.s32.totalorder %s33, 0
      %p145 = por %p143, %p144
      %p146 = scmp.ne.s32.totalorder %s135, %s138
      %p147 = scmp.eq.s32.totalorder %s38, 1
      %p148 = por %p146, %p147
      %p149 = scmp.ne.s32.totalorder %s138, %s139
      %p150 = scmp.eq.s32.totalorder %s38, 0
      %p151 = por %p149, %p150
      %p152 = scmp.ne.s32.totalorder %s138, %s139
      %p153 = scmp.eq.s32.totalorder %s39, 1
      %p154 = por %p152, %p153
      %p156 = scmp.ne.s32.totalorder %s139, %s155
      %p157 = scmp.eq.s32.totalorder %s39, 0
      %p158 = por %p156, %p157
      %s159 = ssub.s32 %s40, %s52
      %p160 = scmp.eq.s32.totalorder %s159, 0
      %s162 = sadd.s32 %s161, 1
      %s163 = scalar_select %p160, %s161, %s162
      %p166 = pneg %p160
      %p167 = scmp.eq.s32.totalorder %s33, 1
      %p168 = por %p166, %p167
      %p169 = scmp.ne.s32.totalorder %s161, %s164
      %p170 = scmp.eq.s32.totalorder %s33, 0
      %p171 = por %p169, %p170
      %p172 = scmp.ne.s32.totalorder %s161, %s164
      %p173 = scmp.eq.s32.totalorder %s38, 1
      %p174 = por %p172, %p173
      %p175 = scmp.ne.s32.totalorder %s164, %s165
      %p176 = scmp.eq.s32.totalorder %s38, 0
      %p177 = por %p175, %p176
      %p178 = scmp.ne.s32.totalorder %s164, %s165
      %p179 = scmp.eq.s32.totalorder %s39, 1
      %p180 = por %p178, %p179
      %p182 = scmp.ne.s32.totalorder %s165, %s181
      %p183 = scmp.eq.s32.totalorder %s39, 0
      %p184 = por %p182, %p183
      %s185 = ssub.s32 %s40, %s52
      %p186 = scmp.eq.s32.totalorder %s185, 0
      %s188 = sadd.s32 %s187, 1
      %s189 = scalar_select %p186, %s187, %s188
      %p192 = pneg %p186
      %p193 = scmp.eq.s32.totalorder %s33, 1
      %p194 = por %p192, %p193
      %p195 = scmp.ne.s32.totalorder %s187, %s190
      %p196 = scmp.eq.s32.totalorder %s33, 0
      %p197 = por %p195, %p196
      %p198 = scmp.ne.s32.totalorder %s187, %s190
      %p199 = scmp.eq.s32.totalorder %s38, 1
      %p200 = por %p198, %p199
      %p201 = scmp.ne.s32.totalorder %s190, %s191
      %p202 = scmp.eq.s32.totalorder %s38, 0
      %p203 = por %p201, %p202
      %p204 = scmp.ne.s32.totalorder %s190, %s191
      %p205 = scmp.eq.s32.totalorder %s39, 1
      %p206 = por %p204, %p205
      %p208 = scmp.ne.s32.totalorder %s191, %s207
      %p209 = scmp.eq.s32.totalorder %s39, 0
      %p210 = por %p208, %p209
      %s212 = sadd.s32 %s211, 1
      %p215 = scmp.eq.s32.totalorder %s33, 1
      %p216 = scmp.ne.s32.totalorder %s211, %s213
      %p217 = scmp.eq.s32.totalorder %s33, 0
      %p218 = por %p216, %p217
      %p219 = scmp.ne.s32.totalorder %s211, %s213
      %p220 = scmp.eq.s32.totalorder %s38, 1
      %p221 = por %p219, %p220
      %p222 = scmp.ne.s32.totalorder %s213, %s214
      %p223 = scmp.eq.s32.totalorder %s38, 0
      %p224 = por %p222, %p223
      %p225 = scmp.ne.s32.totalorder %s213, %s214
      %p226 = scmp.eq.s32.totalorder %s39, 1
      %p227 = por %p225, %p226
      %p229 = scmp.ne.s32.totalorder %s214, %s228
      %p230 = scmp.eq.s32.totalorder %s39, 0
      %p231 = por %p229, %p230
      %s233 = sadd.s32 %s232, 1
      %p236 = scmp.eq.s32.totalorder %s33, 1
      %p237 = scmp.ne.s32.totalorder %s232, %s234
      %p238 = scmp.eq.s32.totalorder %s33, 0
      %p239 = por %p237, %p238
      %p240 = scmp.ne.s32.totalorder %s232, %s234
      %p241 = scmp.eq.s32.totalorder %s38, 1
      %p242 = por %p240, %p241
      %p243 = scmp.ne.s32.totalorder %s234, %s235
      %p244 = scmp.eq.s32.totalorder %s38, 0
      %p245 = por %p243, %p244
      %p246 = scmp.ne.s32.totalorder %s234, %s235
      %p247 = scmp.eq.s32.totalorder %s39, 1
      %p248 = por %p246, %p247
      %p250 = scmp.ne.s32.totalorder %s235, %s249
      %p251 = scmp.eq.s32.totalorder %s39, 0
      %p252 = por %p250, %p251
      %s254 = sadd.s32 %s253, 1
      %p257 = scmp.eq.s32.totalorder %s33, 1
      %p258 = scmp.ne.s32.totalorder %s253, %s255
      %p259 = scmp.eq.s32.totalorder %s33, 0
      %p260 = por %p258, %p259
      %p261 = scmp.ne.s32.totalorder %s253, %s255
      %p262 = scmp.eq.s32.totalorder %s38, 1
      %p263 = por %p261, %p262
      %p264 = scmp.ne.s32.totalorder %s255, %s256
      %p265 = scmp.eq.s32.totalorder %s38, 0
      %p266 = por %p264, %p265
      %p267 = scmp.ne.s32.totalorder %s255, %s256
      %p268 = scmp.eq.s32.totalorder %s39, 1
      %p269 = por %p267, %p268
      %p271 = scmp.ne.s32.totalorder %s256, %s270
      %p272 = scmp.eq.s32.totalorder %s39, 0
      %p273 = por %p271, %p272
      %s275 = sadd.s32 %s274, 1
      %p278 = scmp.eq.s32.totalorder %s33, 1
      %p279 = scmp.ne.s32.totalorder %s274, %s276
      %p280 = scmp.eq.s32.totalorder %s33, 0
      %p281 = por %p279, %p280
      %p282 = scmp.ne.s32.totalorder %s274, %s276
      %p283 = scmp.eq.s32.totalorder %s38, 1
      %p284 = por %p282, %p283
      %p285 = scmp.ne.s32.totalorder %s276, %s277
      %p286 = scmp.eq.s32.totalorder %s38, 0
      %p287 = por %p285, %p286
      %p288 = scmp.ne.s32.totalorder %s276, %s277
      %p289 = scmp.eq.s32.totalorder %s39, 1
      %p290 = por %p288, %p289
      %p292 = scmp.ne.s32.totalorder %s277, %s291
      %p293 = scmp.eq.s32.totalorder %s39, 0
      %p294 = por %p292, %p293
      %s296 = sadd.s32 %s295, 1
      %p299 = scmp.eq.s32.totalorder %s33, 1
      %p300 = scmp.ne.s32.totalorder %s295, %s297
      %p301 = scmp.eq.s32.totalorder %s33, 0
      %p302 = por %p300, %p301
      %p303 = scmp.ne.s32.totalorder %s295, %s297
      %p304 = scmp.eq.s32.totalorder %s38, 1
      %p305 = por %p303, %p304
      %p306 = scmp.ne.s32.totalorder %s297, %s298
      %p307 = scmp.eq.s32.totalorder %s38, 0
      %p308 = por %p306, %p307
      %p309 = scmp.ne.s32.totalorder %s297, %s298
      %p310 = scmp.eq.s32.totalorder %s39, 1
      %p311 = por %p309, %p310
      %p313 = scmp.ne.s32.totalorder %s298, %s312
      %p314 = scmp.eq.s32.totalorder %s39, 0
      %p315 = por %p313, %p314
      %s317 = sadd.s32 %s316, 1
      %p320 = scmp.eq.s32.totalorder %s33, 1
      %p321 = scmp.ne.s32.totalorder %s316, %s318
      %p322 = scmp.eq.s32.totalorder %s33, 0
      %p323 = por %p321, %p322
      %p324 = scmp.ne.s32.totalorder %s316, %s318
      %p325 = scmp.eq.s32.totalorder %s38, 1
      %p326 = por %p324, %p325
      %p327 = scmp.ne.s32.totalorder %s318, %s319
      %p328 = scmp.eq.s32.totalorder %s38, 0
      %p329 = por %p327, %p328
      %p330 = scmp.ne.s32.totalorder %s318, %s319
      %p331 = scmp.eq.s32.totalorder %s39, 1
      %p332 = por %p330, %p331
      %p334 = scmp.ne.s32.totalorder %s319, %s333
      %p335 = scmp.eq.s32.totalorder %s39, 0
      %p336 = por %p334, %p335
      %s338 = sadd.s32 %s337, 1
      %p341 = scmp.eq.s32.totalorder %s33, 1
      %p342 = scmp.ne.s32.totalorder %s337, %s339
      %p343 = scmp.eq.s32.totalorder %s33, 0
      %p344 = por %p342, %p343
      %p345 = scmp.ne.s32.totalorder %s337, %s339
      %p346 = scmp.eq.s32.totalorder %s38, 1
      %p347 = por %p345, %p346
      %p348 = scmp.ne.s32.totalorder %s339, %s340
      %p349 = scmp.eq.s32.totalorder %s38, 0
      %p350 = por %p348, %p349
      %p351 = scmp.ne.s32.totalorder %s339, %s340
      %p352 = scmp.eq.s32.totalorder %s39, 1
      %p353 = por %p351, %p352
      %p355 = scmp.ne.s32.totalorder %s340, %s354
      %p356 = scmp.eq.s32.totalorder %s39, 0
      %p357 = por %p355, %p356
      %s359 = sadd.s32 %s358, 1
      %p362 = scmp.eq.s32.totalorder %s33, 1
      %p363 = scmp.ne.s32.totalorder %s358, %s360
      %p364 = scmp.eq.s32.totalorder %s33, 0
      %p365 = por %p363, %p364
      %p366 = scmp.ne.s32.totalorder %s358, %s360
      %p367 = scmp.eq.s32.totalorder %s38, 1
      %p368 = por %p366, %p367
      %p369 = scmp.ne.s32.totalorder %s360, %s361
      %p370 = scmp.eq.s32.totalorder %s38, 0
      %p371 = por %p369, %p370
      %p372 = scmp.ne.s32.totalorder %s360, %s361
      %p373 = scmp.eq.s32.totalorder %s39, 1
      %p374 = por %p372, %p373
      %p376 = scmp.ne.s32.totalorder %s361, %s375
      %p377 = scmp.eq.s32.totalorder %s39, 0
      %p378 = por %p376, %p377
      %s380 = sadd.s32 %s379, 1
      %p383 = scmp.eq.s32.totalorder %s33, 1
      %p384 = scmp.ne.s32.totalorder %s379, %s381
      %p385 = scmp.eq.s32.totalorder %s33, 0
      %p386 = por %p384, %p385
      %p387 = scmp.ne.s32.totalorder %s379, %s381
      %p388 = scmp.eq.s32.totalorder %s38, 1
      %p389 = por %p387, %p388
      %p390 = scmp.ne.s32.totalorder %s381, %s382
      %p391 = scmp.eq.s32.totalorder %s38, 0
      %p392 = por %p390, %p391
      %p393 = scmp.ne.s32.totalorder %s381, %s382
      %p394 = scmp.eq.s32.totalorder %s39, 1
      %p395 = por %p393, %p394
      %p397 = scmp.ne.s32.totalorder %s382, %s396
      %p398 = scmp.eq.s32.totalorder %s39, 0
      %p399 = por %p397, %p398
      %s401 = sadd.s32 %s400, 1
      %p404 = scmp.eq.s32.totalorder %s33, 1
      %p405 = scmp.ne.s32.totalorder %s400, %s402
      %p406 = scmp.eq.s32.totalorder %s33, 0
      %p407 = por %p405, %p406
      %p408 = scmp.ne.s32.totalorder %s400, %s402
      %p409 = scmp.eq.s32.totalorder %s38, 1
      %p410 = por %p408, %p409
      %p411 = scmp.ne.s32.totalorder %s402, %s403
      %p412 = scmp.eq.s32.totalorder %s38, 0
      %p413 = por %p411, %p412
      %p414 = scmp.ne.s32.totalorder %s402, %s403
      %p415 = scmp.eq.s32.totalorder %s39, 1
      %p416 = por %p414, %p415
      %p418 = scmp.ne.s32.totalorder %s403, %s417
      %p419 = scmp.eq.s32.totalorder %s39, 0
      %p420 = por %p418, %p419
      %s422 = sadd.s32 %s421, 1
      %p425 = scmp.eq.s32.totalorder %s33, 1
      %p426 = scmp.ne.s32.totalorder %s421, %s423
      %p427 = scmp.eq.s32.totalorder %s33, 0
      %p428 = por %p426, %p427
      %p429 = scmp.ne.s32.totalorder %s421, %s423
      %p430 = scmp.eq.s32.totalorder %s38, 1
      %p431 = por %p429, %p430
      %p432 = scmp.ne.s32.totalorder %s423, %s424
      %p433 = scmp.eq.s32.totalorder %s38, 0
      %p434 = por %p432, %p433
      %p435 = scmp.ne.s32.totalorder %s423, %s424
      %p436 = scmp.eq.s32.totalorder %s39, 1
      %p437 = por %p435, %p436
      %p439 = scmp.ne.s32.totalorder %s424, %s438
      %p440 = scmp.eq.s32.totalorder %s39, 0
      %p441 = por %p439, %p440
      %s443 = sadd.s32 %s442, 1
      %p446 = scmp.eq.s32.totalorder %s33, 1
      %p447 = scmp.ne.s32.totalorder %s442, %s444
      %p448 = scmp.eq.s32.totalorder %s33, 0
      %p449 = por %p447, %p448
      %p450 = scmp.ne.s32.totalorder %s442, %s444
      %p451 = scmp.eq.s32.totalorder %s38, 1
      %p452 = por %p450, %p451
      %p453 = scmp.ne.s32.totalorder %s444, %s445
      %p454 = scmp.eq.s32.totalorder %s38, 0
      %p455 = por %p453, %p454
      %p456 = scmp.ne.s32.totalorder %s444, %s445
      %p457 = scmp.eq.s32.totalorder %s39, 1
      %p458 = por %p456, %p457
      %p460 = scmp.ne.s32.totalorder %s445, %s459
      %p461 = scmp.eq.s32.totalorder %s39, 0
      %p462 = por %p460, %p461
      %s464 = sadd.s32 %s463, 1
      %p467 = scmp.eq.s32.totalorder %s33, 1
      %p468 = scmp.ne.s32.totalorder %s463, %s465
      %p469 = scmp.eq.s32.totalorder %s33, 0
      %p470 = por %p468, %p469
      %p471 = scmp.ne.s32.totalorder %s463, %s465
      %p472 = scmp.eq.s32.totalorder %s38, 1
      %p473 = por %p471, %p472
      %p474 = scmp.ne.s32.totalorder %s465, %s466
      %p475 = scmp.eq.s32.totalorder %s38, 0
      %p476 = por %p474, %p475
      %p477 = scmp.ne.s32.totalorder %s465, %s466
      %p478 = scmp.eq.s32.totalorder %s39, 1
      %p479 = por %p477, %p478
      %p481 = scmp.ne.s32.totalorder %s466, %s480
      %p482 = scmp.eq.s32.totalorder %s39, 0
      %p483 = por %p481, %p482
      %s485 = sadd.s32 %s484, 1
      %p488 = scmp.eq.s32.totalorder %s33, 1
      %p489 = scmp.ne.s32.totalorder %s484, %s486
      %p490 = scmp.eq.s32.totalorder %s33, 0
      %p491 = por %p489, %p490
      %p492 = scmp.ne.s32.totalorder %s484, %s486
      %p493 = scmp.eq.s32.totalorder %s38, 1
      %p494 = por %p492, %p493
      %p495 = scmp.ne.s32.totalorder %s486, %s487
      %p496 = scmp.eq.s32.totalorder %s38, 0
      %p497 = por %p495, %p496
      %p498 = scmp.ne.s32.totalorder %s486, %s487
      %p499 = scmp.eq.s32.totalorder %s39, 1
      %p500 = por %p498, %p499
      %p502 = scmp.ne.s32.totalorder %s487, %s501
      %p503 = scmp.eq.s32.totalorder %s39, 0
      %p504 = por %p502, %p503
      %s506 = sadd.s32 %s505, 1
      %p509 = scmp.eq.s32.totalorder %s33, 1
      %p510 = scmp.ne.s32.totalorder %s505, %s507
      %p511 = scmp.eq.s32.totalorder %s33, 0
      %p512 = por %p510, %p511
      %p513 = scmp.ne.s32.totalorder %s505, %s507
      %p514 = scmp.eq.s32.totalorder %s38, 1
      %p515 = por %p513, %p514
      %p516 = scmp.ne.s32.totalorder %s507, %s508
      %p517 = scmp.eq.s32.totalorder %s38, 0
      %p518 = por %p516, %p517
      %p519 = scmp.ne.s32.totalorder %s507, %s508
      %p520 = scmp.eq.s32.totalorder %s39, 1
      %p521 = por %p519, %p520
      %p523 = scmp.ne.s32.totalorder %s508, %s522
      %p524 = scmp.eq.s32.totalorder %s39, 0
      %p525 = por %p523, %p524
      %s527 = sadd.s32 %s526, 1
      %p530 = scmp.eq.s32.totalorder %s33, 1
      %p531 = scmp.ne.s32.totalorder %s526, %s528
      %p532 = scmp.eq.s32.totalorder %s33, 0
      %p533 = por %p531, %p532
      %p534 = scmp.ne.s32.totalorder %s526, %s528
      %p535 = scmp.eq.s32.totalorder %s38, 1
      %p536 = por %p534, %p535
      %p537 = scmp.ne.s32.totalorder %s528, %s529
      %p538 = scmp.eq.s32.totalorder %s38, 0
      %p539 = por %p537, %p538
      %p540 = scmp.ne.s32.totalorder %s528, %s529
      %p541 = scmp.eq.s32.totalorder %s39, 1
      %p542 = por %p540, %p541
      %p544 = scmp.ne.s32.totalorder %s529, %s543
      %p545 = scmp.eq.s32.totalorder %s39, 0
      %p546 = por %p544, %p545
      %s548 = sadd.s32 %s547, 1
      %p551 = scmp.eq.s32.totalorder %s33, 1
      %p552 = scmp.ne.s32.totalorder %s547, %s549
      %p553 = scmp.eq.s32.totalorder %s33, 0
      %p554 = por %p552, %p553
      %p555 = scmp.ne.s32.totalorder %s547, %s549
      %p556 = scmp.eq.s32.totalorder %s38, 1
      %p557 = por %p555, %p556
      %p558 = scmp.ne.s32.totalorder %s549, %s550
      %p559 = scmp.eq.s32.totalorder %s38, 0
      %p560 = por %p558, %p559
      %p561 = scmp.ne.s32.totalorder %s549, %s550
      %p562 = scmp.eq.s32.totalorder %s39, 1
      %p563 = por %p561, %p562
      %p565 = scmp.ne.s32.totalorder %s550, %s564
      %p566 = scmp.eq.s32.totalorder %s39, 0
      %p567 = por %p565, %p566
      %s569 = sadd.s32 %s568, 1
      %p572 = scmp.eq.s32.totalorder %s33, 1
      %p573 = scmp.ne.s32.totalorder %s568, %s570
      %p574 = scmp.eq.s32.totalorder %s33, 0
      %p575 = por %p573, %p574
      %p576 = scmp.ne.s32.totalorder %s568, %s570
      %p577 = scmp.eq.s32.totalorder %s38, 1
      %p578 = por %p576, %p577
      %p579 = scmp.ne.s32.totalorder %s570, %s571
      %p580 = scmp.eq.s32.totalorder %s38, 0
      %p581 = por %p579, %p580
      %p582 = scmp.ne.s32.totalorder %s570, %s571
      %p583 = scmp.eq.s32.totalorder %s39, 1
      %p584 = por %p582, %p583
      %p586 = scmp.ne.s32.totalorder %s571, %s585
      %p587 = scmp.eq.s32.totalorder %s39, 0
      %p588 = por %p586, %p587
      %s589 = ssub.s32 %s40, %s52
      %s590 = ssub.s32 %s41, %s48
      %s591 = sor.u32 %s589, %s590
      %p592 = scmp.eq.s32.totalorder %s591, 0
      %s594 = sadd.s32 %s593, 1
      %s595 = scalar_select %p592, %s593, %s594
      %p598 = pneg %p592
      %p599 = scmp.eq.s32.totalorder %s33, 1
      %p600 = por %p598, %p599
      %p601 = scmp.ne.s32.totalorder %s593, %s596
      %p602 = scmp.eq.s32.totalorder %s33, 0
      %p603 = por %p601, %p602
      %p604 = scmp.ne.s32.totalorder %s593, %s596
      %p605 = scmp.eq.s32.totalorder %s38, 1
      %p606 = por %p604, %p605
      %p607 = scmp.ne.s32.totalorder %s596, %s597
      %p608 = scmp.eq.s32.totalorder %s38, 0
      %p609 = por %p607, %p608
      %p610 = scmp.ne.s32.totalorder %s596, %s597
      %p611 = scmp.eq.s32.totalorder %s39, 1
      %p612 = por %p610, %p611
      %p614 = scmp.ne.s32.totalorder %s597, %s613
      %p615 = scmp.eq.s32.totalorder %s39, 0
      %p616 = por %p614, %p615
      %p617 = scmp.le.s32.totalorder 1, %s33
      %p618 = scmp.lt.s32.totalorder %s33, 3
      %p619 = pnand %p617, %p618
      %p620 = pneg %p619
      // Predicated region
      $region9: #{fwd.11} parent=5 // pred_check
        _
      $region10: #{fwd.11} parent=5 // pred_check_branch
        %622 = sbr.rel (%p619) target = $region12
      $region11: #{fwd.11} parent=5 // pred_region
        %s623 = ssub.s32 %s33, 1
        // Predicated region
        $region13: #{fwd.11} parent=11 // pred_check
          %p624 = pneg %p99
        $region14: #{fwd.11} parent=11 // pred_check_branch
          %626 = sbr.rel (%p624) target = $region16
        $region15: #{fwd.11} parent=11 // pred_region
          %p627 = scmp.lt.s32.totalorder %s43, 0
          %s628 = scalar_select %p627, %s43, 0
          %s629 = smul.addr %s628, 4
          %s630 = scalar_lea.vmem %s1, %s629
        $region16: #{fwd.11} parent=11 // pred_fallthru
          _
        // Predicated region
        $region17: #{fwd.11} parent=11 // pred_check
          %p631 = pneg %p224
        $region18: #{fwd.11} parent=11 // pred_check_branch
          %633 = sbr.rel (%p631) target = $region20
        $region19: #{fwd.11} parent=11 // pred_region
          _
        $region20: #{fwd.11} parent=11 // pred_fallthru
          _
        // Predicated region
        $region21: #{fwd.11} parent=11 // pred_check
          %p634 = pneg %p245
        $region22: #{fwd.11} parent=11 // pred_check_branch
          %636 = sbr.rel (%p634) target = $region24
        $region23: #{fwd.11} parent=11 // pred_region
          _
        $region24: #{fwd.11} parent=11 // pred_fallthru
          _
        // Predicated region
        $region25: #{fwd.11} parent=11 // pred_check
          %p637 = pneg %p266
        $region26: #{fwd.11} parent=11 // pred_check_branch
          %639 = sbr.rel (%p637) target = $region28
        $region27: #{fwd.11} parent=11 // pred_region
          _
        $region28: #{fwd.11} parent=11 // pred_fallthru
          _
        // Predicated region
        $region29: #{fwd.11} parent=11 // pred_check
          %p640 = pneg %p287
        $region30: #{fwd.11} parent=11 // pred_check_branch
          %642 = sbr.rel (%p640) target = $region32
        $region31: #{fwd.11} parent=11 // pred_region
          _
        $region32: #{fwd.11} parent=11 // pred_fallthru
          _
        // Predicated region
        $region33: #{fwd.11} parent=11 // pred_check
          %p643 = pneg %p308
        $region34: #{fwd.11} parent=11 // pred_check_branch
          %645 = sbr.rel (%p643) target = $region36
        $region35: #{fwd.11} parent=11 // pred_region
          _
        $region36: #{fwd.11} parent=11 // pred_fallthru
          _
        // Predicated region
        $region37: #{fwd.11} parent=11 // pred_check
          %p646 = pneg %p329
        $region38: #{fwd.11} parent=11 // pred_check_branch
          %648 = sbr.rel (%p646) target = $region40
        $region39: #{fwd.11} parent=11 // pred_region
          _
        $region40: #{fwd.11} parent=11 // pred_fallthru
          _
        // Predicated region
        $region41: #{fwd.11} parent=11 // pred_check
          %p649 = pneg %p350
        $region42: #{fwd.11} parent=11 // pred_check_branch
          %651 = sbr.rel (%p649) target = $region44
        $region43: #{fwd.11} parent=11 // pred_region
          _
        $region44: #{fwd.11} parent=11 // pred_fallthru
          _
        // Predicated region
        $region45: #{fwd.11} parent=11 // pred_check
          %p652 = pneg %p371
        $region46: #{fwd.11} parent=11 // pred_check_branch
          %654 = sbr.rel (%p652) target = $region48
        $region47: #{fwd.11} parent=11 // pred_region
          _
        $region48: #{fwd.11} parent=11 // pred_fallthru
          _
        // Predicated region
        $region49: #{fwd.11} parent=11 // pred_check
          %p655 = pneg %p392
        $region50: #{fwd.11} parent=11 // pred_check_branch
          %657 = sbr.rel (%p655) target = $region52
        $region51: #{fwd.11} parent=11 // pred_region
          _
        $region52: #{fwd.11} parent=11 // pred_fallthru
          _
        // Predicated region
        $region53: #{fwd.11} parent=11 // pred_check
          %p658 = pneg %p413
        $region54: #{fwd.11} parent=11 // pred_check_branch
          %660 = sbr.rel (%p658) target = $region56
        $region55: #{fwd.11} parent=11 // pred_region
          _
        $region56: #{fwd.11} parent=11 // pred_fallthru
          _
        // Predicated region
        $region57: #{fwd.11} parent=11 // pred_check
          %p661 = pneg %p434
        $region58: #{fwd.11} parent=11 // pred_check_branch
          %663 = sbr.rel (%p661) target = $region60
        $region59: #{fwd.11} parent=11 // pred_region
          _
        $region60: #{fwd.11} parent=11 // pred_fallthru
          _
        // Predicated region
        $region61: #{fwd.11} parent=11 // pred_check
          %p664 = pneg %p455
        $region62: #{fwd.11} parent=11 // pred_check_branch
          %666 = sbr.rel (%p664) target = $region64
        $region63: #{fwd.11} parent=11 // pred_region
          _
        $region64: #{fwd.11} parent=11 // pred_fallthru
          _
        // Predicated region
        $region65: #{fwd.11} parent=11 // pred_check
          %p667 = pneg %p476
        $region66: #{fwd.11} parent=11 // pred_check_branch
          %669 = sbr.rel (%p667) target = $region68
        $region67: #{fwd.11} parent=11 // pred_region
          _
        $region68: #{fwd.11} parent=11 // pred_fallthru
          _
        // Predicated region
        $region69: #{fwd.11} parent=11 // pred_check
          %p670 = pneg %p497
        $region70: #{fwd.11} parent=11 // pred_check_branch
          %672 = sbr.rel (%p670) target = $region72
        $region71: #{fwd.11} parent=11 // pred_region
          _
        $region72: #{fwd.11} parent=11 // pred_fallthru
          _
        // Predicated region
        $region73: #{fwd.11} parent=11 // pred_check
          %p673 = pneg %p518
        $region74: #{fwd.11} parent=11 // pred_check_branch
          %675 = sbr.rel (%p673) target = $region76
        $region75: #{fwd.11} parent=11 // pred_region
          _
        $region76: #{fwd.11} parent=11 // pred_fallthru
          _
        // Predicated region
        $region77: #{fwd.11} parent=11 // pred_check
          %p676 = pneg %p539
        $region78: #{fwd.11} parent=11 // pred_check_branch
          %678 = sbr.rel (%p676) target = $region80
        $region79: #{fwd.11} parent=11 // pred_region
          _
        $region80: #{fwd.11} parent=11 // pred_fallthru
          _
        // Predicated region
        $region81: #{fwd.11} parent=11 // pred_check
          %p679 = pneg %p560
        $region82: #{fwd.11} parent=11 // pred_check_branch
          %681 = sbr.rel (%p679) target = $region84
        $region83: #{fwd.11} parent=11 // pred_region
          _
        $region84: #{fwd.11} parent=11 // pred_fallthru
          _
        // Predicated region
        $region85: #{fwd.11} parent=11 // pred_check
          %p682 = pneg %p581
        $region86: #{fwd.11} parent=11 // pred_check_branch
          %684 = sbr.rel (%p682) target = $region88
        $region87: #{fwd.11} parent=11 // pred_region
          _
        $region88: #{fwd.11} parent=11 // pred_fallthru
          _
      $region12: #{fwd.11} parent=5 // pred_fallthru
        _
      %p685 = scmp.lt.s32.totalorder %s33, 2
      // Predicated region
      $region89: #{fwd.11} parent=5 // pred_check
        %p686 = pneg %p685
      $region90: #{fwd.11} parent=5 // pred_check_branch
        %688 = sbr.rel (%p686) target = $region92
      $region91: #{fwd.11} parent=5 // pred_region
        // Predicated region
        $region93: #{fwd.11} parent=91 // pred_check
          %p689 = pneg %p67
        $region94: #{fwd.11} parent=91 // pred_check_branch
          %691 = sbr.rel (%p689) target = $region96
        $region95: #{fwd.11} parent=91 // pred_region
          %p692 = scmp.lt.s32.totalorder %s40, 1
          %s693 = scalar_select %p692, %s40, 1
          %p694 = scmp.lt.s32.totalorder %s41, 0
          %s695 = scalar_select %p694, %s41, 0
          %s696 = sadd.s32 %s695, %s693
          %s697 = smul.addr %s696, 4
          %s698 = scalar_lea.vmem %s0, %s697
        $region96: #{fwd.11} parent=91 // pred_fallthru
          _
        // Predicated region
        $region97: #{fwd.11} parent=91 // pred_check
          %p699 = pneg %p119
        $region98: #{fwd.11} parent=91 // pred_check_branch
          %701 = sbr.rel (%p699) target = $region100
        $region99: #{fwd.11} parent=91 // pred_region
          %p702 = scmp.lt.s32.totalorder %s40, 1
          %s703 = scalar_select %p702, %s40, 1
          %s704 = smul.addr %s703, 4
          %s705 = smul.addr %s704, 2
          %s706 = scalar_lea.vmem %s2, %s705
        $region100: #{fwd.11} parent=91 // pred_fallthru
          _
        // Predicated region
        $region101: #{fwd.11} parent=91 // pred_check
          %p707 = pneg %p145
        $region102: #{fwd.11} parent=91 // pred_check_branch
          %709 = sbr.rel (%p707) target = $region104
        $region103: #{fwd.11} parent=91 // pred_region
          %p710 = scmp.lt.s32.totalorder %s40, 1
          %s711 = scalar_select %p710, %s40, 1
          %s712 = smul.addr %s711, 4
          %s713 = smul.addr %s712, 2
          %s714 = scalar_lea.vmem %s3, %s713
        $region104: #{fwd.11} parent=91 // pred_fallthru
          _
        // Predicated region
        $region105: #{fwd.11} parent=91 // pred_check
          %p715 = pneg %p171
        $region106: #{fwd.11} parent=91 // pred_check_branch
          %717 = sbr.rel (%p715) target = $region108
        $region107: #{fwd.11} parent=91 // pred_region
          %p718 = scmp.lt.s32.totalorder %s40, 1
          %s719 = scalar_select %p718, %s40, 1
          %s720 = smul.addr %s719, 4
          %s721 = smul.addr %s720, 2
          %s722 = scalar_lea.vmem %s4, %s721
        $region108: #{fwd.11} parent=91 // pred_fallthru
          _
        // Predicated region
        $region109: #{fwd.11} parent=91 // pred_check
          %p723 = pneg %p197
        $region110: #{fwd.11} parent=91 // pred_check_branch
          %725 = sbr.rel (%p723) target = $region112
        $region111: #{fwd.11} parent=91 // pred_region
          %p726 = scmp.lt.s32.totalorder %s40, 1
          %s727 = scalar_select %p726, %s40, 1
          %s728 = smul.addr %s727, 4
          %s729 = smul.addr %s728, 2
          %s730 = scalar_lea.vmem %s5, %s729
        $region112: #{fwd.11} parent=91 // pred_fallthru
          _
      $region92: #{fwd.11} parent=5 // pred_fallthru
        _
      %p731 = scmp.le.s32.totalorder 1, %s33
      %p732 = scmp.lt.s32.totalorder %s33, 3
      %p733 = pnand %p731, %p732
      %p734 = pneg %p733
      // Predicated region
      $region113: #{fwd.11} parent=5 // pred_check
        _
      $region114: #{fwd.11} parent=5 // pred_check_branch
        %736 = sbr.rel (%p733) target = $region116
      $region115: #{fwd.11} parent=5 // pred_region
        %s737 = ssub.s32 %s33, 1
        %p738 = scmp.lt.s32.totalorder %s42, 1
        %s739 = scalar_select %p738, %s42, 1
        %p740 = scmp.lt.s32.totalorder %s43, 0
        %s741 = scalar_select %p740, %s43, 0
        %s742 = sadd.s32 %s741, %s739
        %s743 = smul.addr %s742, 4
        %s744 = scalar_lea.vmem %s0, %s743
        %p745 = pneg %p73
        %p746 = pneg %p70
        %p747 = scmp.lt.s32.totalorder %s43, 0
        %s748 = scalar_select %p747, %s43, 0
        %s749 = smul.addr %s748, 4
        %s750 = scalar_lea.vmem %s1, %s749
        %p751 = pneg %p99
        %p752 = pneg %p96
        %p753 = scmp.lt.s32.totalorder %s42, 1
        %s754 = scalar_select %p753, %s42, 1
        %s755 = smul.addr %s754, 4
        %s756 = smul.addr %s755, 2
        %s757 = scalar_lea.vmem %s2, %s756
        %p758 = pneg %p125
        %p759 = pneg %p122
        %p760 = scmp.lt.s32.totalorder %s42, 1
        %s761 = scalar_select %p760, %s42, 1
        %s762 = smul.addr %s761, 4
        %s763 = smul.addr %s762, 2
        %s764 = scalar_lea.vmem %s3, %s763
        %p765 = pneg %p151
        %p766 = pneg %p148
        %p767 = scmp.lt.s32.totalorder %s42, 1
        %s768 = scalar_select %p767, %s42, 1
        %s769 = smul.addr %s768, 4
        %s770 = smul.addr %s769, 2
        %s771 = scalar_lea.vmem %s4, %s770
        %p772 = pneg %p177
        %p773 = pneg %p174
        %p774 = scmp.lt.s32.totalorder %s42, 1
        %s775 = scalar_select %p774, %s42, 1
        %s776 = smul.addr %s775, 4
        %s777 = smul.addr %s776, 2
        %s778 = scalar_lea.vmem %s5, %s777
        %p779 = pneg %p203
        %p780 = pneg %p200
        %p781 = pneg %p224
        %p782 = pneg %p221
        %p783 = pneg %p245
        %p784 = pneg %p242
        %p785 = pneg %p266
        %p786 = pneg %p263
        %p787 = pneg %p287
        %p788 = pneg %p284
        %p789 = pneg %p308
        %p790 = pneg %p305
        %p791 = pneg %p329
        %p792 = pneg %p326
        %p793 = pneg %p350
        %p794 = pneg %p347
        %p795 = pneg %p371
        %p796 = pneg %p368
        %p797 = pneg %p392
        %p798 = pneg %p389
        %p799 = pneg %p413
        %p800 = pneg %p410
        %p801 = pneg %p434
        %p802 = pneg %p431
        %p803 = pneg %p455
        %p804 = pneg %p452
        %p805 = pneg %p476
        %p806 = pneg %p473
        %p807 = pneg %p497
        %p808 = pneg %p494
        %p809 = pneg %p518
        %p810 = pneg %p515
        %p811 = pneg %p539
        %p812 = pneg %p536
        %p813 = pneg %p560
        %p814 = pneg %p557
        %p815 = pneg %p581
        %p816 = pneg %p578
        %p817 = pneg %p609
        %p818 = pneg %p606
        %s819 = sand.u32 %s596, 1
        %s820 = scalar_lea.sflag [#allocation3], %s819
        %s821 = sand.u32 %s596, 1
        %s822 = smul.addr %s821, 4
        %s823 = scalar_lea.vmem [#allocation2], %s822
        %p824 = scmp.lt.s32.totalorder %s42, 1
        %s825 = scalar_select %p824, %s42, 1
        %p826 = scmp.lt.s32.totalorder %s43, 0
        %s827 = scalar_select %p826, %s43, 0
        %s828 = sadd.s32 %s827, %s825
        %s829 = smul.addr %s828, 4
        %s830 = scalar_lea.vmem %s0, %s829
        %p831 = scmp.lt.s32.totalorder %s43, 0
        %s832 = scalar_select %p831, %s43, 0
        %s833 = smul.addr %s832, 4
        %s834 = scalar_lea.vmem %s1, %s833
        %p835 = scmp.lt.s32.totalorder %s42, 1
        %s836 = scalar_select %p835, %s42, 1
        %s837 = smul.addr %s836, 4
        %s838 = smul.addr %s837, 2
        %s839 = scalar_lea.vmem %s2, %s838
        %p840 = scmp.lt.s32.totalorder %s42, 1
        %s841 = scalar_select %p840, %s42, 1
        %s842 = smul.addr %s841, 4
        %s843 = smul.addr %s842, 2
        %s844 = scalar_lea.vmem %s3, %s843
        %p845 = scmp.lt.s32.totalorder %s42, 1
        %s846 = scalar_select %p845, %s42, 1
        %s847 = smul.addr %s846, 4
        %s848 = smul.addr %s847, 2
        %s849 = scalar_lea.vmem %s4, %s848
        %p850 = scmp.lt.s32.totalorder %s42, 1
        %s851 = scalar_select %p850, %s42, 1
        %s852 = smul.addr %s851, 4
        %s853 = smul.addr %s852, 2
        %s854 = scalar_lea.vmem %s5, %s853
        %v856 = vld [vmem:[%s830] sm:$0xf]
        %v857 = vld [vmem:[%s834] sm:$0xf]
        %v858 = vadd.f32 %v856, %v857
        %v859 = vld [vmem:[%s6] sm:$0xf]
        %v860 = vld [vmem:[%s6 + $0x4] sm:$0xf]
        %v861 = vld [vmem:[%s6 + $0x8] sm:$0xf]
        %v862 = vld [vmem:[%s6 + $0xc] sm:$0xf]
        %v863 = vld [vmem:[%s6 + $0x10] sm:$0xf]
        %v864 = vld [vmem:[%s6 + $0x14] sm:$0xf]
        %v865 = vld [vmem:[%s6 + $0x18] sm:$0xf]
        %v866 = vld [vmem:[%s6 + $0x1c] sm:$0xf]
        %v867 = vpack.c.bf16 %v858, %v858
        %v868 = vld [vmem:[%s7] sm:$0x1]
        %v870 = vlaneseq
        %v871 = vshrl.u32 %v870, 7
        %v872 = vsub.s32 0, %v871
        %v873 = vrot.slane %v868, %v872
        %v883 = vunpack.c.l.b16 %v859
        %v884 = vunpack.c.l.b16 %v860
        %v885 = vunpack.c.l.b16 %v861
        %v886 = vunpack.c.l.b16 %v862
        %v887 = vunpack.c.l.b16 %v863
        %v888 = vunpack.c.l.b16 %v864
        %v889 = vunpack.c.l.b16 %v865
        %v890 = vunpack.c.l.b16 %v866
        %v891 = vpack.c.b16 %v884, %v883
        %v892 = vpack.c.b16 %v886, %v885
        %v893 = vpack.c.b16 %v888, %v887
        %v894 = vpack.c.b16 %v890, %v889
        %vm899 = vcmask 523264
        %v901 = vsel %vm899, %v867, 0
        %903 = vmatprep.subr.bf16.mxu0 0
        %904 = vmatpush1.bf16.msra.mxu0 %v891
        %905 = vmatprep.subr.bf16.mxu0 0
        %906 = vmatpush1.bf16.msra.mxu0 %v892
        %907 = vmatprep.subr.bf16.mxu0 0
        %908 = vmatpush1.bf16.msra.mxu0 %v893
        %909 = vmatprep.subr.bf16.mxu0 0
        %910 = vmatpush1.bf16.msra.mxu0 %v894
        %911 = vmatprep.subr.bf16.mxu0 0
        %912 = vmatpush1.bf16.msra.mxu0 0
        %913 = vmatprep.subr.bf16.mxu0 0
        %914 = vmatpush1.bf16.msra.mxu0 0
        %915 = vmatprep.subr.bf16.mxu0 0
        %916 = vmatpush1.bf16.msra.mxu0 0
        %917 = vmatprep.subr.bf16.mxu0 0
        %918 = vmatpush1.bf16.msra.mxu0 0
        %919 = vmatprep.subr.bf16.mxu0 0
        %920 = vmatpush1.bf16.msra.mxu0 0
        %921 = vmatprep.subr.bf16.mxu0 0
        %922 = vmatpush1.bf16.msra.mxu0 0
        %923 = vmatprep.subr.bf16.mxu0 0
        %924 = vmatpush1.bf16.msra.mxu0 0
        %925 = vmatprep.subr.bf16.mxu0 0
        %926 = vmatpush1.bf16.msra.mxu0 0
        %927 = vmatprep.subr.bf16.mxu0 0
        %928 = vmatpush1.bf16.msra.mxu0 0
        %929 = vmatprep.subr.bf16.mxu0 0
        %930 = vmatpush1.bf16.msra.mxu0 0
        %931 = vmatprep.subr.bf16.mxu0 0
        %932 = vmatpush1.bf16.msra.mxu0 0
        %933 = vmatprep.subr.bf16.mxu0 0
        %934 = vmatpush1.bf16.msra.mxu0 0
        %935 = vmatprep.mubr.bf16.mxu0 0
        %936 = vmatmul.mubr.bf16.gmra.mrb[0].mxu0 %v901
        %v937 = vpop.f32.mrb[0].mxu0
        %v938 = vadd.f32 %v873, %v937
        %v939 = vpop.f32.mrb[0].mxu0
        %v940 = vpop.f32.mrb[0].mxu0
        %v941 = vpop.f32.mrb[0].mxu0
        %942 = vdwg.mxu0
        %v943 = vld [vmem:[%s839] sm:$0x3]
        %v944 = vld [vmem:[%s839 + $0x2] sm:$0x3]
        %v945 = vld [vmem:[%s839 + $0x4] sm:$0x3]
        %v946 = vld [vmem:[%s839 + $0x6] sm:$0x3]
        %v947 = vld [vmem:[%s844] sm:$0x3]
        %v948 = vld [vmem:[%s844 + $0x2] sm:$0x3]
        %v949 = vld [vmem:[%s844 + $0x4] sm:$0x3]
        %v950 = vld [vmem:[%s844 + $0x6] sm:$0x3]
        %v951 = vld [vmem:[%s8] sm:$0xf]
        %v952 = vld [vmem:[%s8 + $0x4] sm:$0xf]
        %v953 = vld [vmem:[%s8 + $0x8] sm:$0xf]
        %v954 = vld [vmem:[%s8 + $0xc] sm:$0xf]
        %v955 = vld [vmem:[%s8 + $0x10] sm:$0xf]
        %v956 = vld [vmem:[%s8 + $0x14] sm:$0xf]
        %v957 = vld [vmem:[%s8 + $0x18] sm:$0xf]
        %v958 = vld [vmem:[%s8 + $0x1c] sm:$0xf]
        %v959 = vld [vmem:[%s9] sm:$0x1]
        %961 = vrot.lane.b32.xlu0 %v938, 112
        %v962 = vpop.permute.xlu0 %961
        %964 = vrot.lane.b32.xlu0 %v938, 96
        %v965 = vpop.permute.xlu0 %964
        %967 = vrot.lane.b32.xlu0 %v938, 80
        %v968 = vpop.permute.xlu0 %967
        %v970 = vpack.c.bf16 %v938, %v938
        %v971 = vpack.c.bf16 %v962, %v962
        %v972 = vpack.c.bf16 %v965, %v965
        %v973 = vpack.c.bf16 %v968, %v968
        %vm974 = vcmask 130048
        %v976 = vsel %vm974, %v970, 0
        %v979 = vsel %vm974, %v943, 0
        %981 = vmatprep.subr.bf16.mxu0 0
        %982 = vmatpush1.bf16.xpose.msra.mxu0 %v979
        %983 = vmatprep.subr.bf16.mxu0 0
        %984 = vmatpush1.bf16.xpose.msra.mxu0 0
        %985 = vmatprep.subr.bf16.mxu0 0
        %986 = vmatpush1.bf16.xpose.msra.mxu0 0
        %987 = vmatprep.subr.bf16.mxu0 0
        %988 = vmatpush1.bf16.xpose.msra.mxu0 0
        %989 = vmatprep.subr.bf16.mxu0 0
        %990 = vmatpush1.bf16.xpose.msra.mxu0 0
        %991 = vmatprep.subr.bf16.mxu0 0
        %992 = vmatpush1.bf16.xpose.msra.mxu0 0
        %993 = vmatprep.subr.bf16.mxu0 0
        %994 = vmatpush1.bf16.xpose.msra.mxu0 0
        %995 = vmatprep.subr.bf16.mxu0 0
        %996 = vmatpush1.bf16.xpose.msra.mxu0 0
        %997 = vmatprep.subr.bf16.mxu0 0
        %998 = vmatpush1.bf16.xpose.msra.mxu0 0
        %999 = vmatprep.subr.bf16.mxu0 0
        %1000 = vmatpush1.bf16.xpose.msra.mxu0 0
        %1001 = vmatprep.subr.bf16.mxu0 0
        %1002 = vmatpush1.bf16.xpose.msra.mxu0 0
        %1003 = vmatprep.subr.bf16.mxu0 0
        %1004 = vmatpush1.bf16.xpose.msra.mxu0 0
        %1005 = vmatprep.subr.bf16.mxu0 0
        %1006 = vmatpush1.bf16.xpose.msra.mxu0 0
        %1007 = vmatprep.subr.bf16.mxu0 0
        %1008 = vmatpush1.bf16.xpose.msra.mxu0 0
        %1009 = vmatprep.subr.bf16.mxu0 0
        %1010 = vmatpush1.bf16.xpose.msra.mxu0 0
        %1011 = vmatprep.subr.bf16.mxu0 0
        %1012 = vmatpush1.bf16.xpose.msra.mxu0 0
        %1013 = vmatprep.mubr.bf16.mxu0 0
        %1014 = vmatmul.mubr.bf16.gmra.mrb[0].mxu0 %v976
        %v1015 = vpop.f32.mrb[0].mxu0
        %v1016 = vadd.f32 0.0, %v1015
        %v1017 = vpop.f32.mrb[0].mxu0
        %v1018 = vpop.f32.mrb[0].mxu0
        %v1019 = vpop.f32.mrb[0].mxu0
        %1020 = vdwg.mxu0
        %v1022 = vsel %vm974, %v971, 0
        %v1025 = vsel %vm974, %v944, 0
        %1027 = vmatprep.subr.bf16.mxu0 0
        %1028 = vmatpush1.bf16.xpose.msra.mxu0 %v1025
        %1029 = vmatprep.subr.bf16.mxu0 0
        %1030 = vmatpush1.bf16.xpose.msra.mxu0 0
        %1031 = vmatprep.subr.bf16.mxu0 0
        %1032 = vmatpush1.bf16.xpose.msra.mxu0 0
        %1033 = vmatprep.subr.bf16.mxu0 0
        %1034 = vmatpush1.bf16.xpose.msra.mxu0 0
        %1035 = vmatprep.subr.bf16.mxu0 0
        %1036 = vmatpush1.bf16.xpose.msra.mxu0 0
        %1037 = vmatprep.subr.bf16.mxu0 0
        %1038 = vmatpush1.bf16.xpose.msra.mxu0 0
        %1039 = vmatprep.subr.bf16.mxu0 0
        %1040 = vmatpush1.bf16.xpose.msra.mxu0 0
        %1041 = vmatprep.subr.bf16.mxu0 0
        %1042 = vmatpush1.bf16.xpose.msra.mxu0 0
        %1043 = vmatprep.subr.bf16.mxu0 0
        %1044 = vmatpush1.bf16.xpose.msra.mxu0 0
        %1045 = vmatprep.subr.bf16.mxu0 0
        %1046 = vmatpush1.bf16.xpose.msra.mxu0 0
        %1047 = vmatprep.subr.bf16.mxu0 0
        %1048 = vmatpush1.bf16.xpose.msra.mxu0 0
        %1049 = vmatprep.subr.bf16.mxu0 0
        %1050 = vmatpush1.bf16.xpose.msra.mxu0 0
        %1051 = vmatprep.subr.bf16.mxu0 0
        %1052 = vmatpush1.bf16.xpose.msra.mxu0 0
        %1053 = vmatprep.subr.bf16.mxu0 0
        %1054 = vmatpush1.bf16.xpose.msra.mxu0 0
        %1055 = vmatprep.subr.bf16.mxu0 0
        %1056 = vmatpush1.bf16.xpose.msra.mxu0 0
        %1057 = vmatprep.subr.bf16.mxu0 0
        %1058 = vmatpush1.bf16.xpose.msra.mxu0 0
        %1059 = vmatprep.mubr.bf16.mxu0 0
        %1060 = vmatmul.mubr.bf16.gmra.mrb[0].mxu0 %v1022
        %v1061 = vpop.f32.mrb[0].mxu0
        %v1062 = vadd.f32 0.0, %v1061
        %v1063 = vpop.f32.mrb[0].mxu0
        %v1064 = vpop.f32.mrb[0].mxu0
        %v1065 = vpop.f32.mrb[0].mxu0
        %1066 = vdwg.mxu0
        %v1068 = vsel %vm974, %v972, 0
        %v1071 = vsel %vm974, %v945, 0
        %1073 = vmatprep.subr.bf16.mxu0 0
        %1074 = vmatpush1.bf16.xpose.msra.mxu0 %v1071
        %1075 = vmatprep.subr.bf16.mxu0 0
        %1076 = vmatpush1.bf16.xpose.msra.mxu0 0
        %1077 = vmatprep.subr.bf16.mxu0 0
        %1078 = vmatpush1.bf16.xpose.msra.mxu0 0
        %1079 = vmatprep.subr.bf16.mxu0 0
        %1080 = vmatpush1.bf16.xpose.msra.mxu0 0
        %1081 = vmatprep.subr.bf16.mxu0 0
        %1082 = vmatpush1.bf16.xpose.msra.mxu0 0
        %1083 = vmatprep.subr.bf16.mxu0 0
        %1084 = vmatpush1.bf16.xpose.msra.mxu0 0
        %1085 = vmatprep.subr.bf16.mxu0 0
        %1086 = vmatpush1.bf16.xpose.msra.mxu0 0
        %1087 = vmatprep.subr.bf16.mxu0 0
        %1088 = vmatpush1.bf16.xpose.msra.mxu0 0
        %1089 = vmatprep.subr.bf16.mxu0 0
        %1090 = vmatpush1.bf16.xpose.msra.mxu0 0
        %1091 = vmatprep.subr.bf16.mxu0 0
        %1092 = vmatpush1.bf16.xpose.msra.mxu0 0
        %1093 = vmatprep.subr.bf16.mxu0 0
        %1094 = vmatpush1.bf16.xpose.msra.mxu0 0
        %1095 = vmatprep.subr.bf16.mxu0 0
        %1096 = vmatpush1.bf16.xpose.msra.mxu0 0
        %1097 = vmatprep.subr.bf16.mxu0 0
        %1098 = vmatpush1.bf16.xpose.msra.mxu0 0
        %1099 = vmatprep.subr.bf16.mxu0 0
        %1100 = vmatpush1.bf16.xpose.msra.mxu0 0
        %1101 = vmatprep.subr.bf16.mxu0 0
        %1102 = vmatpush1.bf16.xpose.msra.mxu0 0
        %1103 = vmatprep.subr.bf16.mxu0 0
        %1104 = vmatpush1.bf16.xpose.msra.mxu0 0
        %1105 = vmatprep.mubr.bf16.mxu0 0
        %1106 = vmatmul.mubr.bf16.gmra.mrb[0].mxu0 %v1068
        %v1107 = vpop.f32.mrb[0].mxu0
        %v1108 = vadd.f32 0.0, %v1107
        %v1109 = vpop.f32.mrb[0].mxu0
        %v1110 = vpop.f32.mrb[0].mxu0
        %v1111 = vpop.f32.mrb[0].mxu0
        %1112 = vdwg.mxu0
        %v1114 = vsel %vm974, %v973, 0
        %v1117 = vsel %vm974, %v946, 0
        %1119 = vmatprep.subr.bf16.mxu0 0
        %1120 = vmatpush1.bf16.xpose.msra.mxu0 %v1117
        %1121 = vmatprep.subr.bf16.mxu0 0
        %1122 = vmatpush1.bf16.xpose.msra.mxu0 0
        %1123 = vmatprep.subr.bf16.mxu0 0
        %1124 = vmatpush1.bf16.xpose.msra.mxu0 0
        %1125 = vmatprep.subr.bf16.mxu0 0
        %1126 = vmatpush1.bf16.xpose.msra.mxu0 0
        %1127 = vmatprep.subr.bf16.mxu0 0
        %1128 = vmatpush1.bf16.xpose.msra.mxu0 0
        %1129 = vmatprep.subr.bf16.mxu0 0
        %1130 = vmatpush1.bf16.xpose.msra.mxu0 0
        %1131 = vmatprep.subr.bf16.mxu0 0
        %1132 = vmatpush1.bf16.xpose.msra.mxu0 0
        %1133 = vmatprep.subr.bf16.mxu0 0
        %1134 = vmatpush1.bf16.xpose.msra.mxu0 0
        %1135 = vmatprep.subr.bf16.mxu0 0
        %1136 = vmatpush1.bf16.xpose.msra.mxu0 0
        %1137 = vmatprep.subr.bf16.mxu0 0
        %1138 = vmatpush1.bf16.xpose.msra.mxu0 0
        %1139 = vmatprep.subr.bf16.mxu0 0
        %1140 = vmatpush1.bf16.xpose.msra.mxu0 0
        %1141 = vmatprep.subr.bf16.mxu0 0
        %1142 = vmatpush1.bf16.xpose.msra.mxu0 0
        %1143 = vmatprep.subr.bf16.mxu0 0
        %1144 = vmatpush1.bf16.xpose.msra.mxu0 0
        %1145 = vmatprep.subr.bf16.mxu0 0
        %1146 = vmatpush1.bf16.xpose.msra.mxu0 0
        %1147 = vmatprep.subr.bf16.mxu0 0
        %1148 = vmatpush1.bf16.xpose.msra.mxu0 0
        %1149 = vmatprep.subr.bf16.mxu0 0
        %1150 = vmatpush1.bf16.xpose.msra.mxu0 0
        %1151 = vmatprep.mubr.bf16.mxu0 0
        %1152 = vmatmul.mubr.bf16.gmra.mrb[0].mxu0 %v1114
        %v1153 = vpop.f32.mrb[0].mxu0
        %v1154 = vadd.f32 0.0, %v1153
        %v1155 = vpop.f32.mrb[0].mxu0
        %v1156 = vpop.f32.mrb[0].mxu0
        %v1157 = vpop.f32.mrb[0].mxu0
        %1158 = vdwg.mxu0
        %vm1159 = vcmask 27648
        %v1160 = vsel %vm1159, %v1016, -inf
        %1161 = vmax.xlane.f32.xlu0 %v1160
        %v1162 = vpop.xlane.xlu0 %1161
        %v1163 = vsel %vm1159, %v1062, -inf
        %1164 = vmax.xlane.f32.xlu0 %v1163
        %v1165 = vpop.xlane.xlu0 %1164
        %v1166 = vsel %vm1159, %v1108, -inf
        %1167 = vmax.xlane.f32.xlu0 %v1166
        %v1168 = vpop.xlane.xlu0 %1167
        %v1169 = vsel %vm1159, %v1154, -inf
        %1170 = vmax.xlane.f32.xlu0 %v1169
        %v1171 = vpop.xlane.xlu0 %1170
        %v1172 = vsub.f32 %v1016, %v1162
        %v1173 = vsub.f32 %v1062, %v1165
        %v1174 = vsub.f32 %v1108, %v1168
        %v1175 = vsub.f32 %v1154, %v1171
        %v1176 = vmul.f32 %v1172, 1.442695
        %v1177 = vpow.pop %v1176
        %v1178 = vmul.f32 %v1173, 1.442695
        %v1179 = vpow.pop %v1178
        %v1180 = vmul.f32 %v1174, 1.442695
        %v1181 = vpow.pop %v1180
        %v1182 = vmul.f32 %v1175, 1.442695
        %v1183 = vpow.pop %v1182
        %v1184 = vsel %vm1159, %v1177, 0.0
        %1185 = vadd.xlane.f32.xlu0 %v1184
        %v1186 = vpop.xlane.xlu0 %1185
        %v1187 = vsel %vm1159, %v1179, 0.0
        %1188 = vadd.xlane.f32.xlu0 %v1187
        %v1189 = vpop.xlane.xlu0 %1188
        %v1190 = vsel %vm1159, %v1181, 0.0
        %1191 = vadd.xlane.f32.xlu0 %v1190
        %v1192 = vpop.xlane.xlu0 %1191
        %v1193 = vsel %vm1159, %v1183, 0.0
        %1194 = vadd.xlane.f32.xlu0 %v1193
        %v1195 = vpop.xlane.xlu0 %1194
        %v1196 = vrcp.pop %v1186
        %v1197 = vrcp.pop %v1189
        %v1198 = vrcp.pop %v1192
        %v1199 = vrcp.pop %v1195
        %v1200 = vmul.f32 %v1177, %v1196
        %v1201 = vmul.f32 %v1179, %v1197
        %v1202 = vmul.f32 %v1181, %v1198
        %v1203 = vmul.f32 %v1183, %v1199
        %v1204 = vpack.c.bf16 %v1200, %v1200
        %v1205 = vpack.c.bf16 %v1201, %v1201
        %v1206 = vpack.c.bf16 %v1202, %v1202
        %v1207 = vpack.c.bf16 %v1203, %v1203
        %vm1208 = vcmask 31744
        %v1210 = vsel %vm1208, %v1204, 0
        %vm1212 = vcmask 1041408
        %v1214 = vsel %vm1212, %v947, 0
        %1216 = vmatprep.subr.bf16.mxu0 0
        %1217 = vmatpush1.bf16.msra.mxu0 %v1214
        %1218 = vmatprep.subr.bf16.mxu0 0
        %1219 = vmatpush1.bf16.msra.mxu0 0
        %1220 = vmatprep.subr.bf16.mxu0 0
        %1221 = vmatpush1.bf16.msra.mxu0 0
        %1222 = vmatprep.subr.bf16.mxu0 0
        %1223 = vmatpush1.bf16.msra.mxu0 0
        %1224 = vmatprep.subr.bf16.mxu0 0
        %1225 = vmatpush1.bf16.msra.mxu0 0
        %1226 = vmatprep.subr.bf16.mxu0 0
        %1227 = vmatpush1.bf16.msra.mxu0 0
        %1228 = vmatprep.subr.bf16.mxu0 0
        %1229 = vmatpush1.bf16.msra.mxu0 0
        %1230 = vmatprep.subr.bf16.mxu0 0
        %1231 = vmatpush1.bf16.msra.mxu0 0
        %1232 = vmatprep.subr.bf16.mxu0 0
        %1233 = vmatpush1.bf16.msra.mxu0 0
        %1234 = vmatprep.subr.bf16.mxu0 0
        %1235 = vmatpush1.bf16.msra.mxu0 0
        %1236 = vmatprep.subr.bf16.mxu0 0
        %1237 = vmatpush1.bf16.msra.mxu0 0
        %1238 = vmatprep.subr.bf16.mxu0 0
        %1239 = vmatpush1.bf16.msra.mxu0 0
        %1240 = vmatprep.subr.bf16.mxu0 0
        %1241 = vmatpush1.bf16.msra.mxu0 0
        %1242 = vmatprep.subr.bf16.mxu0 0
        %1243 = vmatpush1.bf16.msra.mxu0 0
        %1244 = vmatprep.subr.bf16.mxu0 0
        %1245 = vmatpush1.bf16.msra.mxu0 0
        %1246 = vmatprep.subr.bf16.mxu0 0
        %1247 = vmatpush1.bf16.msra.mxu0 0
        %1248 = vmatprep.mubr.bf16.mxu0 0
        %1249 = vmatmul.mubr.bf16.gmra.mrb[0].mxu0 %v1210
        %v1250 = vpop.f32.mrb[0].mxu0
        %v1251 = vadd.f32 0.0, %v1250
        %v1252 = vpop.f32.mrb[0].mxu0
        %v1253 = vpop.f32.mrb[0].mxu0
        %v1254 = vpop.f32.mrb[0].mxu0
        %1255 = vdwg.mxu0
        %v1257 = vsel %vm1208, %v1205, 0
        %v1260 = vsel %vm1212, %v948, 0
        %1262 = vmatprep.subr.bf16.mxu0 0
        %1263 = vmatpush1.bf16.msra.mxu0 %v1260
        %1264 = vmatprep.subr.bf16.mxu0 0
        %1265 = vmatpush1.bf16.msra.mxu0 0
        %1266 = vmatprep.subr.bf16.mxu0 0
        %1267 = vmatpush1.bf16.msra.mxu0 0
        %1268 = vmatprep.subr.bf16.mxu0 0
        %1269 = vmatpush1.bf16.msra.mxu0 0
        %1270 = vmatprep.subr.bf16.mxu0 0
        %1271 = vmatpush1.bf16.msra.mxu0 0
        %1272 = vmatprep.subr.bf16.mxu0 0
        %1273 = vmatpush1.bf16.msra.mxu0 0
        %1274 = vmatprep.subr.bf16.mxu0 0
        %1275 = vmatpush1.bf16.msra.mxu0 0
        %1276 = vmatprep.subr.bf16.mxu0 0
        %1277 = vmatpush1.bf16.msra.mxu0 0
        %1278 = vmatprep.subr.bf16.mxu0 0
        %1279 = vmatpush1.bf16.msra.mxu0 0
        %1280 = vmatprep.subr.bf16.mxu0 0
        %1281 = vmatpush1.bf16.msra.mxu0 0
        %1282 = vmatprep.subr.bf16.mxu0 0
        %1283 = vmatpush1.bf16.msra.mxu0 0
        %1284 = vmatprep.subr.bf16.mxu0 0
        %1285 = vmatpush1.bf16.msra.mxu0 0
        %1286 = vmatprep.subr.bf16.mxu0 0
        %1287 = vmatpush1.bf16.msra.mxu0 0
        %1288 = vmatprep.subr.bf16.mxu0 0
        %1289 = vmatpush1.bf16.msra.mxu0 0
        %1290 = vmatprep.subr.bf16.mxu0 0
        %1291 = vmatpush1.bf16.msra.mxu0 0
        %1292 = vmatprep.subr.bf16.mxu0 0
        %1293 = vmatpush1.bf16.msra.mxu0 0
        %1294 = vmatprep.mubr.bf16.mxu0 0
        %1295 = vmatmul.mubr.bf16.gmra.mrb[0].mxu0 %v1257
        %v1296 = vpop.f32.mrb[0].mxu0
        %v1297 = vadd.f32 0.0, %v1296
        %v1298 = vpop.f32.mrb[0].mxu0
        %v1299 = vpop.f32.mrb[0].mxu0
        %v1300 = vpop.f32.mrb[0].mxu0
        %1301 = vdwg.mxu0
        %v1303 = vsel %vm1208, %v1206, 0
        %v1306 = vsel %vm1212, %v949, 0
        %1308 = vmatprep.subr.bf16.mxu0 0
        %1309 = vmatpush1.bf16.msra.mxu0 %v1306
        %1310 = vmatprep.subr.bf16.mxu0 0
        %1311 = vmatpush1.bf16.msra.mxu0 0
        %1312 = vmatprep.subr.bf16.mxu0 0
        %1313 = vmatpush1.bf16.msra.mxu0 0
        %1314 = vmatprep.subr.bf16.mxu0 0
        %1315 = vmatpush1.bf16.msra.mxu0 0
        %1316 = vmatprep.subr.bf16.mxu0 0
        %1317 = vmatpush1.bf16.msra.mxu0 0
        %1318 = vmatprep.subr.bf16.mxu0 0
        %1319 = vmatpush1.bf16.msra.mxu0 0
        %1320 = vmatprep.subr.bf16.mxu0 0
        %1321 = vmatpush1.bf16.msra.mxu0 0
        %1322 = vmatprep.subr.bf16.mxu0 0
        %1323 = vmatpush1.bf16.msra.mxu0 0
        %1324 = vmatprep.subr.bf16.mxu0 0
        %1325 = vmatpush1.bf16.msra.mxu0 0
        %1326 = vmatprep.subr.bf16.mxu0 0
        %1327 = vmatpush1.bf16.msra.mxu0 0
        %1328 = vmatprep.subr.bf16.mxu0 0
        %1329 = vmatpush1.bf16.msra.mxu0 0
        %1330 = vmatprep.subr.bf16.mxu0 0
        %1331 = vmatpush1.bf16.msra.mxu0 0
        %1332 = vmatprep.subr.bf16.mxu0 0
        %1333 = vmatpush1.bf16.msra.mxu0 0
        %1334 = vmatprep.subr.bf16.mxu0 0
        %1335 = vmatpush1.bf16.msra.mxu0 0
        %1336 = vmatprep.subr.bf16.mxu0 0
        %1337 = vmatpush1.bf16.msra.mxu0 0
        %1338 = vmatprep.subr.bf16.mxu0 0
        %1339 = vmatpush1.bf16.msra.mxu0 0
        %1340 = vmatprep.mubr.bf16.mxu0 0
        %1341 = vmatmul.mubr.bf16.gmra.mrb[0].mxu0 %v1303
        %v1342 = vpop.f32.mrb[0].mxu0
        %v1343 = vadd.f32 0.0, %v1342
        %v1344 = vpop.f32.mrb[0].mxu0
        %v1345 = vpop.f32.mrb[0].mxu0
        %v1346 = vpop.f32.mrb[0].mxu0
        %1347 = vdwg.mxu0
        %v1349 = vsel %vm1208, %v1207, 0
        %v1352 = vsel %vm1212, %v950, 0
        %1354 = vmatprep.subr.bf16.mxu0 0
        %1355 = vmatpush1.bf16.msra.mxu0 %v1352
        %1356 = vmatprep.subr.bf16.mxu0 0
        %1357 = vmatpush1.bf16.msra.mxu0 0
        %1358 = vmatprep.subr.bf16.mxu0 0
        %1359 = vmatpush1.bf16.msra.mxu0 0
        %1360 = vmatprep.subr.bf16.mxu0 0
        %1361 = vmatpush1.bf16.msra.mxu0 0
        %1362 = vmatprep.subr.bf16.mxu0 0
        %1363 = vmatpush1.bf16.msra.mxu0 0
        %1364 = vmatprep.subr.bf16.mxu0 0
        %1365 = vmatpush1.bf16.msra.mxu0 0
        %1366 = vmatprep.subr.bf16.mxu0 0
        %1367 = vmatpush1.bf16.msra.mxu0 0
        %1368 = vmatprep.subr.bf16.mxu0 0
        %1369 = vmatpush1.bf16.msra.mxu0 0
        %1370 = vmatprep.subr.bf16.mxu0 0
        %1371 = vmatpush1.bf16.msra.mxu0 0
        %1372 = vmatprep.subr.bf16.mxu0 0
        %1373 = vmatpush1.bf16.msra.mxu0 0
        %1374 = vmatprep.subr.bf16.mxu0 0
        %1375 = vmatpush1.bf16.msra.mxu0 0
        %1376 = vmatprep.subr.bf16.mxu0 0
        %1377 = vmatpush1.bf16.msra.mxu0 0
        %1378 = vmatprep.subr.bf16.mxu0 0
        %1379 = vmatpush1.bf16.msra.mxu0 0
        %1380 = vmatprep.subr.bf16.mxu0 0
        %1381 = vmatpush1.bf16.msra.mxu0 0
        %1382 = vmatprep.subr.bf16.mxu0 0
        %1383 = vmatpush1.bf16.msra.mxu0 0
        %1384 = vmatprep.subr.bf16.mxu0 0
        %1385 = vmatpush1.bf16.msra.mxu0 0
        %1386 = vmatprep.mubr.bf16.mxu0 0
        %1387 = vmatmul.mubr.bf16.gmra.mrb[0].mxu0 %v1349
        %v1388 = vpop.f32.mrb[0].mxu0
        %v1389 = vadd.f32 0.0, %v1388
        %v1390 = vpop.f32.mrb[0].mxu0
        %v1391 = vpop.f32.mrb[0].mxu0
        %v1392 = vpop.f32.mrb[0].mxu0
        %1393 = vdwg.mxu0
        %v1394 = vpack.c.bf16 %v1251, %v1251
        %v1395 = vpack.c.bf16 %v1297, %v1297
        %v1396 = vpack.c.bf16 %v1343, %v1343
        %v1397 = vpack.c.bf16 %v1389, %v1389
        %v1400 = vunpack.c.l.b16 %v951
        %v1401 = vunpack.c.l.b16 %v952
        %v1402 = vpack.c.b16 %v1401, %v1400
        %v1405 = vsel %vm974, %v1394, 0
        %1407 = vmatprep.subr.bf16.mxu0 0
        %1408 = vmatpush1.bf16.msra.mxu0 %v1402
        %1409 = vmatprep.subr.bf16.mxu0 0
        %1410 = vmatpush1.bf16.msra.mxu0 0
        %1411 = vmatprep.subr.bf16.mxu0 0
        %1412 = vmatpush1.bf16.msra.mxu0 0
        %1413 = vmatprep.subr.bf16.mxu0 0
        %1414 = vmatpush1.bf16.msra.mxu0 0
        %1415 = vmatprep.subr.bf16.mxu0 0
        %1416 = vmatpush1.bf16.msra.mxu0 0
        %1417 = vmatprep.subr.bf16.mxu0 0
        %1418 = vmatpush1.bf16.msra.mxu0 0
        %1419 = vmatprep.subr.bf16.mxu0 0
        %1420 = vmatpush1.bf16.msra.mxu0 0
        %1421 = vmatprep.subr.bf16.mxu0 0
        %1422 = vmatpush1.bf16.msra.mxu0 0
        %1423 = vmatprep.subr.bf16.mxu0 0
        %1424 = vmatpush1.bf16.msra.mxu0 0
        %1425 = vmatprep.subr.bf16.mxu0 0
        %1426 = vmatpush1.bf16.msra.mxu0 0
        %1427 = vmatprep.subr.bf16.mxu0 0
        %1428 = vmatpush1.bf16.msra.mxu0 0
        %1429 = vmatprep.subr.bf16.mxu0 0
        %1430 = vmatpush1.bf16.msra.mxu0 0
        %1431 = vmatprep.subr.bf16.mxu0 0
        %1432 = vmatpush1.bf16.msra.mxu0 0
        %1433 = vmatprep.subr.bf16.mxu0 0
        %1434 = vmatpush1.bf16.msra.mxu0 0
        %1435 = vmatprep.subr.bf16.mxu0 0
        %1436 = vmatpush1.bf16.msra.mxu0 0
        %1437 = vmatprep.subr.bf16.mxu0 0
        %1438 = vmatpush1.bf16.msra.mxu0 0
        %1439 = vmatprep.mubr.bf16.mxu0 0
        %1440 = vmatmul.mubr.bf16.gmra.mrb[0].mxu0 %v1405
        %v1441 = vpop.f32.mrb[0].mxu0
        %v1442 = vadd.f32 0.0, %v1441
        %v1443 = vpop.f32.mrb[0].mxu0
        %v1444 = vpop.f32.mrb[0].mxu0
        %v1445 = vpop.f32.mrb[0].mxu0
        %1446 = vdwg.mxu0
        %v1449 = vunpack.c.l.b16 %v953
        %v1450 = vunpack.c.l.b16 %v954
        %v1451 = vpack.c.b16 %v1450, %v1449
        %v1454 = vsel %vm974, %v1395, 0
        %1456 = vmatprep.subr.bf16.mxu0 0
        %1457 = vmatpush1.bf16.msra.mxu0 %v1451
        %1458 = vmatprep.subr.bf16.mxu0 0
        %1459 = vmatpush1.bf16.msra.mxu0 0
        %1460 = vmatprep.subr.bf16.mxu0 0
        %1461 = vmatpush1.bf16.msra.mxu0 0
        %1462 = vmatprep.subr.bf16.mxu0 0
        %1463 = vmatpush1.bf16.msra.mxu0 0
        %1464 = vmatprep.subr.bf16.mxu0 0
        %1465 = vmatpush1.bf16.msra.mxu0 0
        %1466 = vmatprep.subr.bf16.mxu0 0
        %1467 = vmatpush1.bf16.msra.mxu0 0
        %1468 = vmatprep.subr.bf16.mxu0 0
        %1469 = vmatpush1.bf16.msra.mxu0 0
        %1470 = vmatprep.subr.bf16.mxu0 0
        %1471 = vmatpush1.bf16.msra.mxu0 0
        %1472 = vmatprep.subr.bf16.mxu0 0
        %1473 = vmatpush1.bf16.msra.mxu0 0
        %1474 = vmatprep.subr.bf16.mxu0 0
        %1475 = vmatpush1.bf16.msra.mxu0 0
        %1476 = vmatprep.subr.bf16.mxu0 0
        %1477 = vmatpush1.bf16.msra.mxu0 0
        %1478 = vmatprep.subr.bf16.mxu0 0
        %1479 = vmatpush1.bf16.msra.mxu0 0
        %1480 = vmatprep.subr.bf16.mxu0 0
        %1481 = vmatpush1.bf16.msra.mxu0 0
        %1482 = vmatprep.subr.bf16.mxu0 0
        %1483 = vmatpush1.bf16.msra.mxu0 0
        %1484 = vmatprep.subr.bf16.mxu0 0
        %1485 = vmatpush1.bf16.msra.mxu0 0
        %1486 = vmatprep.subr.bf16.mxu0 0
        %1487 = vmatpush1.bf16.msra.mxu0 0
        %1488 = vmatprep.mubr.bf16.mxu0 0
        %1489 = vmatmul.mubr.bf16.gmra.mrb[0].mxu0 %v1454
        %v1490 = vpop.f32.mrb[0].mxu0
        %v1491 = vadd.f32 0.0, %v1490
        %v1492 = vpop.f32.mrb[0].mxu0
        %v1493 = vpop.f32.mrb[0].mxu0
        %v1494 = vpop.f32.mrb[0].mxu0
        %1495 = vdwg.mxu0
        %v1498 = vunpack.c.l.b16 %v955
        %v1499 = vunpack.c.l.b16 %v956
        %v1500 = vpack.c.b16 %v1499, %v1498
        %v1503 = vsel %vm974, %v1396, 0
        %1505 = vmatprep.subr.bf16.mxu0 0
        %1506 = vmatpush1.bf16.msra.mxu0 %v1500
        %1507 = vmatprep.subr.bf16.mxu0 0
        %1508 = vmatpush1.bf16.msra.mxu0 0
        %1509 = vmatprep.subr.bf16.mxu0 0
        %1510 = vmatpush1.bf16.msra.mxu0 0
        %1511 = vmatprep.subr.bf16.mxu0 0
        %1512 = vmatpush1.bf16.msra.mxu0 0
        %1513 = vmatprep.subr.bf16.mxu0 0
        %1514 = vmatpush1.bf16.msra.mxu0 0
        %1515 = vmatprep.subr.bf16.mxu0 0
        %1516 = vmatpush1.bf16.msra.mxu0 0
        %1517 = vmatprep.subr.bf16.mxu0 0
        %1518 = vmatpush1.bf16.msra.mxu0 0
        %1519 = vmatprep.subr.bf16.mxu0 0
        %1520 = vmatpush1.bf16.msra.mxu0 0
        %1521 = vmatprep.subr.bf16.mxu0 0
        %1522 = vmatpush1.bf16.msra.mxu0 0
        %1523 = vmatprep.subr.bf16.mxu0 0
        %1524 = vmatpush1.bf16.msra.mxu0 0
        %1525 = vmatprep.subr.bf16.mxu0 0
        %1526 = vmatpush1.bf16.msra.mxu0 0
        %1527 = vmatprep.subr.bf16.mxu0 0
        %1528 = vmatpush1.bf16.msra.mxu0 0
        %1529 = vmatprep.subr.bf16.mxu0 0
        %1530 = vmatpush1.bf16.msra.mxu0 0
        %1531 = vmatprep.subr.bf16.mxu0 0
        %1532 = vmatpush1.bf16.msra.mxu0 0
        %1533 = vmatprep.subr.bf16.mxu0 0
        %1534 = vmatpush1.bf16.msra.mxu0 0
        %1535 = vmatprep.subr.bf16.mxu0 0
        %1536 = vmatpush1.bf16.msra.mxu0 0
        %1537 = vmatprep.mubr.bf16.mxu0 0
        %1538 = vmatmul.mubr.bf16.gmra.mrb[0].mxu0 %v1503
        %v1539 = vpop.f32.mrb[0].mxu0
        %v1540 = vadd.f32 0.0, %v1539
        %v1541 = vpop.f32.mrb[0].mxu0
        %v1542 = vpop.f32.mrb[0].mxu0
        %v1543 = vpop.f32.mrb[0].mxu0
        %1544 = vdwg.mxu0
        %v1547 = vunpack.c.l.b16 %v957
        %v1548 = vunpack.c.l.b16 %v958
        %v1549 = vpack.c.b16 %v1548, %v1547
        %v1552 = vsel %vm974, %v1397, 0
        %1554 = vmatprep.subr.bf16.mxu0 0
        %1555 = vmatpush1.bf16.msra.mxu0 %v1549
        %1556 = vmatprep.subr.bf16.mxu0 0
        %1557 = vmatpush1.bf16.msra.mxu0 0
        %1558 = vmatprep.subr.bf16.mxu0 0
        %1559 = vmatpush1.bf16.msra.mxu0 0
        %1560 = vmatprep.subr.bf16.mxu0 0
        %1561 = vmatpush1.bf16.msra.mxu0 0
        %1562 = vmatprep.subr.bf16.mxu0 0
        %1563 = vmatpush1.bf16.msra.mxu0 0
        %1564 = vmatprep.subr.bf16.mxu0 0
        %1565 = vmatpush1.bf16.msra.mxu0 0
        %1566 = vmatprep.subr.bf16.mxu0 0
        %1567 = vmatpush1.bf16.msra.mxu0 0
        %1568 = vmatprep.subr.bf16.mxu0 0
        %1569 = vmatpush1.bf16.msra.mxu0 0
        %1570 = vmatprep.subr.bf16.mxu0 0
        %1571 = vmatpush1.bf16.msra.mxu0 0
        %1572 = vmatprep.subr.bf16.mxu0 0
        %1573 = vmatpush1.bf16.msra.mxu0 0
        %1574 = vmatprep.subr.bf16.mxu0 0
        %1575 = vmatpush1.bf16.msra.mxu0 0
        %1576 = vmatprep.subr.bf16.mxu0 0
        %1577 = vmatpush1.bf16.msra.mxu0 0
        %1578 = vmatprep.subr.bf16.mxu0 0
        %1579 = vmatpush1.bf16.msra.mxu0 0
        %1580 = vmatprep.subr.bf16.mxu0 0
        %1581 = vmatpush1.bf16.msra.mxu0 0
        %1582 = vmatprep.subr.bf16.mxu0 0
        %1583 = vmatpush1.bf16.msra.mxu0 0
        %1584 = vmatprep.subr.bf16.mxu0 0
        %1585 = vmatpush1.bf16.msra.mxu0 0
        %1586 = vmatprep.mubr.bf16.mxu0 0
        %1587 = vmatmul.mubr.bf16.gmra.mrb[0].mxu0 %v1552
        %v1588 = vpop.f32.mrb[0].mxu0
        %v1589 = vadd.f32 0.0, %v1588
        %v1590 = vpop.f32.mrb[0].mxu0
        %v1591 = vpop.f32.mrb[0].mxu0
        %v1592 = vpop.f32.mrb[0].mxu0
        %1593 = vdwg.mxu0
        %v1595 = vlaneseq
        %v1596 = vshrl.u32 %v1595, 7
        %v1597 = vsub.s32 0, %v1596
        %v1598 = vrot.slane %v959, %v1597
        %v1600 = vadd.f32 %v1598, %v1442
        %v1601 = vadd.f32 %v1600, %v1491
        %v1602 = vadd.f32 %v1601, %v1540
        %v1603 = vadd.f32 %v1602, %v1589
        %v1604 = vadd.f32 %v856, %v1603
        %v1605 = vld [vmem:[%s10] sm:$0x1]
        %v1606 = vld [vmem:[%s11] sm:$0x1]
        %vm1607 = vcmask 519168
        %v1608 = vsel %vm1607, %v1604, 0.0
        %1609 = vadd.xlane.f32.xlu0 %v1608
        %v1610 = vpop.xlane.xlu0 %1609
        %v1611 = vrcp.pop 64.0
        %v1612 = vmul.f32 %v1610, %v1611
        %v1613 = vsub.f32 %v1604, %v1612
        %v1614 = vmul.f32 %v1613, %v1613
        %v1615 = vsel %vm1607, %v1614, 0.0
        %1616 = vadd.xlane.f32.xlu0 %v1615
        %v1617 = vpop.xlane.xlu0 %1616
        %v1618 = vmul.f32 %v1617, %v1611
        %v1619 = vadd.f32 %v1618, 1e-05
        %v1620 = vrsqrt.pop %v1619
        %v1621 = vmul.f32 %v1613, %v1620
        %v1623 = vlaneseq
        %v1624 = vshrl.u32 %v1623, 7
        %v1625 = vsub.s32 0, %v1624
        %v1626 = vrot.slane %v1605, %v1625
        %v1628 = vmul.f32 %v1621, %v1626
        %v1630 = vlaneseq
        %v1631 = vshrl.u32 %v1630, 7
        %v1632 = vsub.s32 0, %v1631
        %v1633 = vrot.slane %v1606, %v1632
        %v1635 = vadd.f32 %v1628, %v1633
        %v1636 = vadd.f32 %v1635, %v857
        %v1637 = vld [vmem:[%s12] sm:$0xf]
        %v1638 = vld [vmem:[%s12 + $0x4] sm:$0xf]
        %v1639 = vld [vmem:[%s12 + $0x8] sm:$0xf]
        %v1640 = vld [vmem:[%s12 + $0xc] sm:$0xf]
        %v1641 = vld [vmem:[%s12 + $0x10] sm:$0xf]
        %v1642 = vld [vmem:[%s12 + $0x14] sm:$0xf]
        %v1643 = vld [vmem:[%s12 + $0x18] sm:$0xf]
        %v1644 = vld [vmem:[%s12 + $0x1c] sm:$0xf]
        %v1645 = vpack.c.bf16 %v1636, %v1636
        %v1646 = vld [vmem:[%s13] sm:$0x1]
        %v1648 = vlaneseq
        %v1649 = vshrl.u32 %v1648, 7
        %v1650 = vsub.s32 0, %v1649
        %v1651 = vrot.slane %v1646, %v1650
        %v1661 = vunpack.c.l.b16 %v1637
        %v1662 = vunpack.c.l.b16 %v1638
        %v1663 = vunpack.c.l.b16 %v1639
        %v1664 = vunpack.c.l.b16 %v1640
        %v1665 = vunpack.c.l.b16 %v1641
        %v1666 = vunpack.c.l.b16 %v1642
        %v1667 = vunpack.c.l.b16 %v1643
        %v1668 = vunpack.c.l.b16 %v1644
        %v1669 = vpack.c.b16 %v1662, %v1661
        %v1670 = vpack.c.b16 %v1664, %v1663
        %v1671 = vpack.c.b16 %v1666, %v1665
        %v1672 = vpack.c.b16 %v1668, %v1667
        %v1678 = vsel %vm899, %v1645, 0
        %1680 = vmatprep.subr.bf16.mxu0 0
        %1681 = vmatpush1.bf16.msra.mxu0 %v1669
        %1682 = vmatprep.subr.bf16.mxu0 0
        %1683 = vmatpush1.bf16.msra.mxu0 %v1670
        %1684 = vmatprep.subr.bf16.mxu0 0
        %1685 = vmatpush1.bf16.msra.mxu0 %v1671
        %1686 = vmatprep.subr.bf16.mxu0 0
        %1687 = vmatpush1.bf16.msra.mxu0 %v1672
        %1688 = vmatprep.subr.bf16.mxu0 0
        %1689 = vmatpush1.bf16.msra.mxu0 0
        %1690 = vmatprep.subr.bf16.mxu0 0
        %1691 = vmatpush1.bf16.msra.mxu0 0
        %1692 = vmatprep.subr.bf16.mxu0 0
        %1693 = vmatpush1.bf16.msra.mxu0 0
        %1694 = vmatprep.subr.bf16.mxu0 0
        %1695 = vmatpush1.bf16.msra.mxu0 0
        %1696 = vmatprep.subr.bf16.mxu0 0
        %1697 = vmatpush1.bf16.msra.mxu0 0
        %1698 = vmatprep.subr.bf16.mxu0 0
        %1699 = vmatpush1.bf16.msra.mxu0 0
        %1700 = vmatprep.subr.bf16.mxu0 0
        %1701 = vmatpush1.bf16.msra.mxu0 0
        %1702 = vmatprep.subr.bf16.mxu0 0
        %1703 = vmatpush1.bf16.msra.mxu0 0
        %1704 = vmatprep.subr.bf16.mxu0 0
        %1705 = vmatpush1.bf16.msra.mxu0 0
        %1706 = vmatprep.subr.bf16.mxu0 0
        %1707 = vmatpush1.bf16.msra.mxu0 0
        %1708 = vmatprep.subr.bf16.mxu0 0
        %1709 = vmatpush1.bf16.msra.mxu0 0
        %1710 = vmatprep.subr.bf16.mxu0 0
        %1711 = vmatpush1.bf16.msra.mxu0 0
        %1712 = vmatprep.mubr.bf16.mxu0 0
        %1713 = vmatmul.mubr.bf16.gmra.mrb[0].mxu0 %v1678
        %v1714 = vpop.f32.mrb[0].mxu0
        %v1715 = vadd.f32 %v1651, %v1714
        %v1716 = vpop.f32.mrb[0].mxu0
        %v1717 = vpop.f32.mrb[0].mxu0
        %v1718 = vpop.f32.mrb[0].mxu0
        %1719 = vdwg.mxu0
        %v1720 = vld [vmem:[%s849] sm:$0x3]
        %v1721 = vld [vmem:[%s849 + $0x2] sm:$0x3]
        %v1722 = vld [vmem:[%s849 + $0x4] sm:$0x3]
        %v1723 = vld [vmem:[%s849 + $0x6] sm:$0x3]
        %v1724 = vld [vmem:[%s854] sm:$0x3]
        %v1725 = vld [vmem:[%s854 + $0x2] sm:$0x3]
        %v1726 = vld [vmem:[%s854 + $0x4] sm:$0x3]
        %v1727 = vld [vmem:[%s854 + $0x6] sm:$0x3]
        %v1728 = vld [vmem:[%s14] sm:$0xf]
        %v1729 = vld [vmem:[%s14 + $0x4] sm:$0xf]
        %v1730 = vld [vmem:[%s14 + $0x8] sm:$0xf]
        %v1731 = vld [vmem:[%s14 + $0xc] sm:$0xf]
        %v1732 = vld [vmem:[%s14 + $0x10] sm:$0xf]
        %v1733 = vld [vmem:[%s14 + $0x14] sm:$0xf]
        %v1734 = vld [vmem:[%s14 + $0x18] sm:$0xf]
        %v1735 = vld [vmem:[%s14 + $0x1c] sm:$0xf]
        %v1736 = vld [vmem:[%s15] sm:$0x1]
        %1738 = vrot.lane.b32.xlu0 %v1715, 112
        %v1739 = vpop.permute.xlu0 %1738
        %1741 = vrot.lane.b32.xlu0 %v1715, 96
        %v1742 = vpop.permute.xlu0 %1741
        %1744 = vrot.lane.b32.xlu0 %v1715, 80
        %v1745 = vpop.permute.xlu0 %1744
        %v1747 = vpack.c.bf16 %v1715, %v1715
        %v1748 = vpack.c.bf16 %v1739, %v1739
        %v1749 = vpack.c.bf16 %v1742, %v1742
        %v1750 = vpack.c.bf16 %v1745, %v1745
        %v1752 = vsel %vm974, %v1747, 0
        %v1755 = vsel %vm974, %v1720, 0
        %1757 = vmatprep.subr.bf16.mxu0 0
        %1758 = vmatpush1.bf16.xpose.msra.mxu0 %v1755
        %1759 = vmatprep.subr.bf16.mxu0 0
        %1760 = vmatpush1.bf16.xpose.msra.mxu0 0
        %1761 = vmatprep.subr.bf16.mxu0 0
        %1762 = vmatpush1.bf16.xpose.msra.mxu0 0
        %1763 = vmatprep.subr.bf16.mxu0 0
        %1764 = vmatpush1.bf16.xpose.msra.mxu0 0
        %1765 = vmatprep.subr.bf16.mxu0 0
        %1766 = vmatpush1.bf16.xpose.msra.mxu0 0
        %1767 = vmatprep.subr.bf16.mxu0 0
        %1768 = vmatpush1.bf16.xpose.msra.mxu0 0
        %1769 = vmatprep.subr.bf16.mxu0 0
        %1770 = vmatpush1.bf16.xpose.msra.mxu0 0
        %1771 = vmatprep.subr.bf16.mxu0 0
        %1772 = vmatpush1.bf16.xpose.msra.mxu0 0
        %1773 = vmatprep.subr.bf16.mxu0 0
        %1774 = vmatpush1.bf16.xpose.msra.mxu0 0
        %1775 = vmatprep.subr.bf16.mxu0 0
        %1776 = vmatpush1.bf16.xpose.msra.mxu0 0
        %1777 = vmatprep.subr.bf16.mxu0 0
        %1778 = vmatpush1.bf16.xpose.msra.mxu0 0
        %1779 = vmatprep.subr.bf16.mxu0 0
        %1780 = vmatpush1.bf16.xpose.msra.mxu0 0
        %1781 = vmatprep.subr.bf16.mxu0 0
        %1782 = vmatpush1.bf16.xpose.msra.mxu0 0
        %1783 = vmatprep.subr.bf16.mxu0 0
        %1784 = vmatpush1.bf16.xpose.msra.mxu0 0
        %1785 = vmatprep.subr.bf16.mxu0 0
        %1786 = vmatpush1.bf16.xpose.msra.mxu0 0
        %1787 = vmatprep.subr.bf16.mxu0 0
        %1788 = vmatpush1.bf16.xpose.msra.mxu0 0
        %1789 = vmatprep.mubr.bf16.mxu0 0
        %1790 = vmatmul.mubr.bf16.gmra.mrb[0].mxu0 %v1752
        %v1791 = vpop.f32.mrb[0].mxu0
        %v1792 = vadd.f32 0.0, %v1791
        %v1793 = vpop.f32.mrb[0].mxu0
        %v1794 = vpop.f32.mrb[0].mxu0
        %v1795 = vpop.f32.mrb[0].mxu0
        %1796 = vdwg.mxu0
        %v1798 = vsel %vm974, %v1748, 0
        %v1801 = vsel %vm974, %v1721, 0
        %1803 = vmatprep.subr.bf16.mxu0 0
        %1804 = vmatpush1.bf16.xpose.msra.mxu0 %v1801
        %1805 = vmatprep.subr.bf16.mxu0 0
        %1806 = vmatpush1.bf16.xpose.msra.mxu0 0
        %1807 = vmatprep.subr.bf16.mxu0 0
        %1808 = vmatpush1.bf16.xpose.msra.mxu0 0
        %1809 = vmatprep.subr.bf16.mxu0 0
        %1810 = vmatpush1.bf16.xpose.msra.mxu0 0
        %1811 = vmatprep.subr.bf16.mxu0 0
        %1812 = vmatpush1.bf16.xpose.msra.mxu0 0
        %1813 = vmatprep.subr.bf16.mxu0 0
        %1814 = vmatpush1.bf16.xpose.msra.mxu0 0
        %1815 = vmatprep.subr.bf16.mxu0 0
        %1816 = vmatpush1.bf16.xpose.msra.mxu0 0
        %1817 = vmatprep.subr.bf16.mxu0 0
        %1818 = vmatpush1.bf16.xpose.msra.mxu0 0
        %1819 = vmatprep.subr.bf16.mxu0 0
        %1820 = vmatpush1.bf16.xpose.msra.mxu0 0
        %1821 = vmatprep.subr.bf16.mxu0 0
        %1822 = vmatpush1.bf16.xpose.msra.mxu0 0
        %1823 = vmatprep.subr.bf16.mxu0 0
        %1824 = vmatpush1.bf16.xpose.msra.mxu0 0
        %1825 = vmatprep.subr.bf16.mxu0 0
        %1826 = vmatpush1.bf16.xpose.msra.mxu0 0
        %1827 = vmatprep.subr.bf16.mxu0 0
        %1828 = vmatpush1.bf16.xpose.msra.mxu0 0
        %1829 = vmatprep.subr.bf16.mxu0 0
        %1830 = vmatpush1.bf16.xpose.msra.mxu0 0
        %1831 = vmatprep.subr.bf16.mxu0 0
        %1832 = vmatpush1.bf16.xpose.msra.mxu0 0
        %1833 = vmatprep.subr.bf16.mxu0 0
        %1834 = vmatpush1.bf16.xpose.msra.mxu0 0
        %1835 = vmatprep.mubr.bf16.mxu0 0
        %1836 = vmatmul.mubr.bf16.gmra.mrb[0].mxu0 %v1798
        %v1837 = vpop.f32.mrb[0].mxu0
        %v1838 = vadd.f32 0.0, %v1837
        %v1839 = vpop.f32.mrb[0].mxu0
        %v1840 = vpop.f32.mrb[0].mxu0
        %v1841 = vpop.f32.mrb[0].mxu0
        %1842 = vdwg.mxu0
        %v1844 = vsel %vm974, %v1749, 0
        %v1847 = vsel %vm974, %v1722, 0
        %1849 = vmatprep.subr.bf16.mxu0 0
        %1850 = vmatpush1.bf16.xpose.msra.mxu0 %v1847
        %1851 = vmatprep.subr.bf16.mxu0 0
        %1852 = vmatpush1.bf16.xpose.msra.mxu0 0
        %1853 = vmatprep.subr.bf16.mxu0 0
        %1854 = vmatpush1.bf16.xpose.msra.mxu0 0
        %1855 = vmatprep.subr.bf16.mxu0 0
        %1856 = vmatpush1.bf16.xpose.msra.mxu0 0
        %1857 = vmatprep.subr.bf16.mxu0 0
        %1858 = vmatpush1.bf16.xpose.msra.mxu0 0
        %1859 = vmatprep.subr.bf16.mxu0 0
        %1860 = vmatpush1.bf16.xpose.msra.mxu0 0
        %1861 = vmatprep.subr.bf16.mxu0 0
        %1862 = vmatpush1.bf16.xpose.msra.mxu0 0
        %1863 = vmatprep.subr.bf16.mxu0 0
        %1864 = vmatpush1.bf16.xpose.msra.mxu0 0
        %1865 = vmatprep.subr.bf16.mxu0 0
        %1866 = vmatpush1.bf16.xpose.msra.mxu0 0
        %1867 = vmatprep.subr.bf16.mxu0 0
        %1868 = vmatpush1.bf16.xpose.msra.mxu0 0
        %1869 = vmatprep.subr.bf16.mxu0 0
        %1870 = vmatpush1.bf16.xpose.msra.mxu0 0
        %1871 = vmatprep.subr.bf16.mxu0 0
        %1872 = vmatpush1.bf16.xpose.msra.mxu0 0
        %1873 = vmatprep.subr.bf16.mxu0 0
        %1874 = vmatpush1.bf16.xpose.msra.mxu0 0
        %1875 = vmatprep.subr.bf16.mxu0 0
        %1876 = vmatpush1.bf16.xpose.msra.mxu0 0
        %1877 = vmatprep.subr.bf16.mxu0 0
        %1878 = vmatpush1.bf16.xpose.msra.mxu0 0
        %1879 = vmatprep.subr.bf16.mxu0 0
        %1880 = vmatpush1.bf16.xpose.msra.mxu0 0
        %1881 = vmatprep.mubr.bf16.mxu0 0
        %1882 = vmatmul.mubr.bf16.gmra.mrb[0].mxu0 %v1844
        %v1883 = vpop.f32.mrb[0].mxu0
        %v1884 = vadd.f32 0.0, %v1883
        %v1885 = vpop.f32.mrb[0].mxu0
        %v1886 = vpop.f32.mrb[0].mxu0
        %v1887 = vpop.f32.mrb[0].mxu0
        %1888 = vdwg.mxu0
        %v1890 = vsel %vm974, %v1750, 0
        %v1893 = vsel %vm974, %v1723, 0
        %1895 = vmatprep.subr.bf16.mxu0 0
        %1896 = vmatpush1.bf16.xpose.msra.mxu0 %v1893
        %1897 = vmatprep.subr.bf16.mxu0 0
        %1898 = vmatpush1.bf16.xpose.msra.mxu0 0
        %1899 = vmatprep.subr.bf16.mxu0 0
        %1900 = vmatpush1.bf16.xpose.msra.mxu0 0
        %1901 = vmatprep.subr.bf16.mxu0 0
        %1902 = vmatpush1.bf16.xpose.msra.mxu0 0
        %1903 = vmatprep.subr.bf16.mxu0 0
        %1904 = vmatpush1.bf16.xpose.msra.mxu0 0
        %1905 = vmatprep.subr.bf16.mxu0 0
        %1906 = vmatpush1.bf16.xpose.msra.mxu0 0
        %1907 = vmatprep.subr.bf16.mxu0 0
        %1908 = vmatpush1.bf16.xpose.msra.mxu0 0
        %1909 = vmatprep.subr.bf16.mxu0 0
        %1910 = vmatpush1.bf16.xpose.msra.mxu0 0
        %1911 = vmatprep.subr.bf16.mxu0 0
        %1912 = vmatpush1.bf16.xpose.msra.mxu0 0
        %1913 = vmatprep.subr.bf16.mxu0 0
        %1914 = vmatpush1.bf16.xpose.msra.mxu0 0
        %1915 = vmatprep.subr.bf16.mxu0 0
        %1916 = vmatpush1.bf16.xpose.msra.mxu0 0
        %1917 = vmatprep.subr.bf16.mxu0 0
        %1918 = vmatpush1.bf16.xpose.msra.mxu0 0
        %1919 = vmatprep.subr.bf16.mxu0 0
        %1920 = vmatpush1.bf16.xpose.msra.mxu0 0
        %1921 = vmatprep.subr.bf16.mxu0 0
        %1922 = vmatpush1.bf16.xpose.msra.mxu0 0
        %1923 = vmatprep.subr.bf16.mxu0 0
        %1924 = vmatpush1.bf16.xpose.msra.mxu0 0
        %1925 = vmatprep.subr.bf16.mxu0 0
        %1926 = vmatpush1.bf16.xpose.msra.mxu0 0
        %1927 = vmatprep.mubr.bf16.mxu0 0
        %1928 = vmatmul.mubr.bf16.gmra.mrb[0].mxu0 %v1890
        %v1929 = vpop.f32.mrb[0].mxu0
        %v1930 = vadd.f32 0.0, %v1929
        %v1931 = vpop.f32.mrb[0].mxu0
        %v1932 = vpop.f32.mrb[0].mxu0
        %v1933 = vpop.f32.mrb[0].mxu0
        %1934 = vdwg.mxu0
        %v1935 = vsel %vm1159, %v1792, -inf
        %1936 = vmax.xlane.f32.xlu0 %v1935
        %v1937 = vpop.xlane.xlu0 %1936
        %v1938 = vsel %vm1159, %v1838, -inf
        %1939 = vmax.xlane.f32.xlu0 %v1938
        %v1940 = vpop.xlane.xlu0 %1939
        %v1941 = vsel %vm1159, %v1884, -inf
        %1942 = vmax.xlane.f32.xlu0 %v1941
        %v1943 = vpop.xlane.xlu0 %1942
        %v1944 = vsel %vm1159, %v1930, -inf
        %1945 = vmax.xlane.f32.xlu0 %v1944
        %v1946 = vpop.xlane.xlu0 %1945
        %v1947 = vsub.f32 %v1792, %v1937
        %v1948 = vsub.f32 %v1838, %v1940
        %v1949 = vsub.f32 %v1884, %v1943
        %v1950 = vsub.f32 %v1930, %v1946
        %v1951 = vmul.f32 %v1947, 1.442695
        %v1952 = vpow.pop %v1951
        %v1953 = vmul.f32 %v1948, 1.442695
        %v1954 = vpow.pop %v1953
        %v1955 = vmul.f32 %v1949, 1.442695
        %v1956 = vpow.pop %v1955
        %v1957 = vmul.f32 %v1950, 1.442695
        %v1958 = vpow.pop %v1957
        %v1959 = vsel %vm1159, %v1952, 0.0
        %1960 = vadd.xlane.f32.xlu0 %v1959
        %v1961 = vpop.xlane.xlu0 %1960
        %v1962 = vsel %vm1159, %v1954, 0.0
        %1963 = vadd.xlane.f32.xlu0 %v1962
        %v1964 = vpop.xlane.xlu0 %1963
        %v1965 = vsel %vm1159, %v1956, 0.0
        %1966 = vadd.xlane.f32.xlu0 %v1965
        %v1967 = vpop.xlane.xlu0 %1966
        %v1968 = vsel %vm1159, %v1958, 0.0
        %1969 = vadd.xlane.f32.xlu0 %v1968
        %v1970 = vpop.xlane.xlu0 %1969
        %v1971 = vrcp.pop %v1961
        %v1972 = vrcp.pop %v1964
        %v1973 = vrcp.pop %v1967
        %v1974 = vrcp.pop %v1970
        %v1975 = vmul.f32 %v1952, %v1971
        %v1976 = vmul.f32 %v1954, %v1972
        %v1977 = vmul.f32 %v1956, %v1973
        %v1978 = vmul.f32 %v1958, %v1974
        %v1979 = vpack.c.bf16 %v1975, %v1975
        %v1980 = vpack.c.bf16 %v1976, %v1976
        %v1981 = vpack.c.bf16 %v1977, %v1977
        %v1982 = vpack.c.bf16 %v1978, %v1978
        %v1984 = vsel %vm1208, %v1979, 0
        %v1987 = vsel %vm1212, %v1724, 0
        %1989 = vmatprep.subr.bf16.mxu0 0
        %1990 = vmatpush1.bf16.msra.mxu0 %v1987
        %1991 = vmatprep.subr.bf16.mxu0 0
        %1992 = vmatpush1.bf16.msra.mxu0 0
        %1993 = vmatprep.subr.bf16.mxu0 0
        %1994 = vmatpush1.bf16.msra.mxu0 0
        %1995 = vmatprep.subr.bf16.mxu0 0
        %1996 = vmatpush1.bf16.msra.mxu0 0
        %1997 = vmatprep.subr.bf16.mxu0 0
        %1998 = vmatpush1.bf16.msra.mxu0 0
        %1999 = vmatprep.subr.bf16.mxu0 0
        %2000 = vmatpush1.bf16.msra.mxu0 0
        %2001 = vmatprep.subr.bf16.mxu0 0
        %2002 = vmatpush1.bf16.msra.mxu0 0
        %2003 = vmatprep.subr.bf16.mxu0 0
        %2004 = vmatpush1.bf16.msra.mxu0 0
        %2005 = vmatprep.subr.bf16.mxu0 0
        %2006 = vmatpush1.bf16.msra.mxu0 0
        %2007 = vmatprep.subr.bf16.mxu0 0
        %2008 = vmatpush1.bf16.msra.mxu0 0
        %2009 = vmatprep.subr.bf16.mxu0 0
        %2010 = vmatpush1.bf16.msra.mxu0 0
        %2011 = vmatprep.subr.bf16.mxu0 0
        %2012 = vmatpush1.bf16.msra.mxu0 0
        %2013 = vmatprep.subr.bf16.mxu0 0
        %2014 = vmatpush1.bf16.msra.mxu0 0
        %2015 = vmatprep.subr.bf16.mxu0 0
        %2016 = vmatpush1.bf16.msra.mxu0 0
        %2017 = vmatprep.subr.bf16.mxu0 0
        %2018 = vmatpush1.bf16.msra.mxu0 0
        %2019 = vmatprep.subr.bf16.mxu0 0
        %2020 = vmatpush1.bf16.msra.mxu0 0
        %2021 = vmatprep.mubr.bf16.mxu0 0
        %2022 = vmatmul.mubr.bf16.gmra.mrb[0].mxu0 %v1984
        %v2023 = vpop.f32.mrb[0].mxu0
        %v2024 = vadd.f32 0.0, %v2023
        %v2025 = vpop.f32.mrb[0].mxu0
        %v2026 = vpop.f32.mrb[0].mxu0
        %v2027 = vpop.f32.mrb[0].mxu0
        %2028 = vdwg.mxu0
        %v2030 = vsel %vm1208, %v1980, 0
        %v2033 = vsel %vm1212, %v1725, 0
        %2035 = vmatprep.subr.bf16.mxu0 0
        %2036 = vmatpush1.bf16.msra.mxu0 %v2033
        %2037 = vmatprep.subr.bf16.mxu0 0
        %2038 = vmatpush1.bf16.msra.mxu0 0
        %2039 = vmatprep.subr.bf16.mxu0 0
        %2040 = vmatpush1.bf16.msra.mxu0 0
        %2041 = vmatprep.subr.bf16.mxu0 0
        %2042 = vmatpush1.bf16.msra.mxu0 0
        %2043 = vmatprep.subr.bf16.mxu0 0
        %2044 = vmatpush1.bf16.msra.mxu0 0
        %2045 = vmatprep.subr.bf16.mxu0 0
        %2046 = vmatpush1.bf16.msra.mxu0 0
        %2047 = vmatprep.subr.bf16.mxu0 0
        %2048 = vmatpush1.bf16.msra.mxu0 0
        %2049 = vmatprep.subr.bf16.mxu0 0
        %2050 = vmatpush1.bf16.msra.mxu0 0
        %2051 = vmatprep.subr.bf16.mxu0 0
        %2052 = vmatpush1.bf16.msra.mxu0 0
        %2053 = vmatprep.subr.bf16.mxu0 0
        %2054 = vmatpush1.bf16.msra.mxu0 0
        %2055 = vmatprep.subr.bf16.mxu0 0
        %2056 = vmatpush1.bf16.msra.mxu0 0
        %2057 = vmatprep.subr.bf16.mxu0 0
        %2058 = vmatpush1.bf16.msra.mxu0 0
        %2059 = vmatprep.subr.bf16.mxu0 0
        %2060 = vmatpush1.bf16.msra.mxu0 0
        %2061 = vmatprep.subr.bf16.mxu0 0
        %2062 = vmatpush1.bf16.msra.mxu0 0
        %2063 = vmatprep.subr.bf16.mxu0 0
        %2064 = vmatpush1.bf16.msra.mxu0 0
        %2065 = vmatprep.subr.bf16.mxu0 0
        %2066 = vmatpush1.bf16.msra.mxu0 0
        %2067 = vmatprep.mubr.bf16.mxu0 0
        %2068 = vmatmul.mubr.bf16.gmra.mrb[0].mxu0 %v2030
        %v2069 = vpop.f32.mrb[0].mxu0
        %v2070 = vadd.f32 0.0, %v2069
        %v2071 = vpop.f32.mrb[0].mxu0
        %v2072 = vpop.f32.mrb[0].mxu0
        %v2073 = vpop.f32.mrb[0].mxu0
        %2074 = vdwg.mxu0
        %v2076 = vsel %vm1208, %v1981, 0
        %v2079 = vsel %vm1212, %v1726, 0
        %2081 = vmatprep.subr.bf16.mxu0 0
        %2082 = vmatpush1.bf16.msra.mxu0 %v2079
        %2083 = vmatprep.subr.bf16.mxu0 0
        %2084 = vmatpush1.bf16.msra.mxu0 0
        %2085 = vmatprep.subr.bf16.mxu0 0
        %2086 = vmatpush1.bf16.msra.mxu0 0
        %2087 = vmatprep.subr.bf16.mxu0 0
        %2088 = vmatpush1.bf16.msra.mxu0 0
        %2089 = vmatprep.subr.bf16.mxu0 0
        %2090 = vmatpush1.bf16.msra.mxu0 0
        %2091 = vmatprep.subr.bf16.mxu0 0
        %2092 = vmatpush1.bf16.msra.mxu0 0
        %2093 = vmatprep.subr.bf16.mxu0 0
        %2094 = vmatpush1.bf16.msra.mxu0 0
        %2095 = vmatprep.subr.bf16.mxu0 0
        %2096 = vmatpush1.bf16.msra.mxu0 0
        %2097 = vmatprep.subr.bf16.mxu0 0
        %2098 = vmatpush1.bf16.msra.mxu0 0
        %2099 = vmatprep.subr.bf16.mxu0 0
        %2100 = vmatpush1.bf16.msra.mxu0 0
        %2101 = vmatprep.subr.bf16.mxu0 0
        %2102 = vmatpush1.bf16.msra.mxu0 0
        %2103 = vmatprep.subr.bf16.mxu0 0
        %2104 = vmatpush1.bf16.msra.mxu0 0
        %2105 = vmatprep.subr.bf16.mxu0 0
        %2106 = vmatpush1.bf16.msra.mxu0 0
        %2107 = vmatprep.subr.bf16.mxu0 0
        %2108 = vmatpush1.bf16.msra.mxu0 0
        %2109 = vmatprep.subr.bf16.mxu0 0
        %2110 = vmatpush1.bf16.msra.mxu0 0
        %2111 = vmatprep.subr.bf16.mxu0 0
        %2112 = vmatpush1.bf16.msra.mxu0 0
        %2113 = vmatprep.mubr.bf16.mxu0 0
        %2114 = vmatmul.mubr.bf16.gmra.mrb[0].mxu0 %v2076
        %v2115 = vpop.f32.mrb[0].mxu0
        %v2116 = vadd.f32 0.0, %v2115
        %v2117 = vpop.f32.mrb[0].mxu0
        %v2118 = vpop.f32.mrb[0].mxu0
        %v2119 = vpop.f32.mrb[0].mxu0
        %2120 = vdwg.mxu0
        %v2122 = vsel %vm1208, %v1982, 0
        %v2125 = vsel %vm1212, %v1727, 0
        %2127 = vmatprep.subr.bf16.mxu0 0
        %2128 = vmatpush1.bf16.msra.mxu0 %v2125
        %2129 = vmatprep.subr.bf16.mxu0 0
        %2130 = vmatpush1.bf16.msra.mxu0 0
        %2131 = vmatprep.subr.bf16.mxu0 0
        %2132 = vmatpush1.bf16.msra.mxu0 0
        %2133 = vmatprep.subr.bf16.mxu0 0
        %2134 = vmatpush1.bf16.msra.mxu0 0
        %2135 = vmatprep.subr.bf16.mxu0 0
        %2136 = vmatpush1.bf16.msra.mxu0 0
        %2137 = vmatprep.subr.bf16.mxu0 0
        %2138 = vmatpush1.bf16.msra.mxu0 0
        %2139 = vmatprep.subr.bf16.mxu0 0
        %2140 = vmatpush1.bf16.msra.mxu0 0
        %2141 = vmatprep.subr.bf16.mxu0 0
        %2142 = vmatpush1.bf16.msra.mxu0 0
        %2143 = vmatprep.subr.bf16.mxu0 0
        %2144 = vmatpush1.bf16.msra.mxu0 0
        %2145 = vmatprep.subr.bf16.mxu0 0
        %2146 = vmatpush1.bf16.msra.mxu0 0
        %2147 = vmatprep.subr.bf16.mxu0 0
        %2148 = vmatpush1.bf16.msra.mxu0 0
        %2149 = vmatprep.subr.bf16.mxu0 0
        %2150 = vmatpush1.bf16.msra.mxu0 0
        %2151 = vmatprep.subr.bf16.mxu0 0
        %2152 = vmatpush1.bf16.msra.mxu0 0
        %2153 = vmatprep.subr.bf16.mxu0 0
        %2154 = vmatpush1.bf16.msra.mxu0 0
        %2155 = vmatprep.subr.bf16.mxu0 0
        %2156 = vmatpush1.bf16.msra.mxu0 0
        %2157 = vmatprep.subr.bf16.mxu0 0
        %2158 = vmatpush1.bf16.msra.mxu0 0
        %2159 = vmatprep.mubr.bf16.mxu0 0
        %2160 = vmatmul.mubr.bf16.gmra.mrb[0].mxu0 %v2122
        %v2161 = vpop.f32.mrb[0].mxu0
        %v2162 = vadd.f32 0.0, %v2161
        %v2163 = vpop.f32.mrb[0].mxu0
        %v2164 = vpop.f32.mrb[0].mxu0
        %v2165 = vpop.f32.mrb[0].mxu0
        %2166 = vdwg.mxu0
        %v2167 = vpack.c.bf16 %v2024, %v2024
        %v2168 = vpack.c.bf16 %v2070, %v2070
        %v2169 = vpack.c.bf16 %v2116, %v2116
        %v2170 = vpack.c.bf16 %v2162, %v2162
        %v2173 = vunpack.c.l.b16 %v1728
        %v2174 = vunpack.c.l.b16 %v1729
        %v2175 = vpack.c.b16 %v2174, %v2173
        %v2178 = vsel %vm974, %v2167, 0
        %2180 = vmatprep.subr.bf16.mxu0 0
        %2181 = vmatpush1.bf16.msra.mxu0 %v2175
        %2182 = vmatprep.subr.bf16.mxu0 0
        %2183 = vmatpush1.bf16.msra.mxu0 0
        %2184 = vmatprep.subr.bf16.mxu0 0
        %2185 = vmatpush1.bf16.msra.mxu0 0
        %2186 = vmatprep.subr.bf16.mxu0 0
        %2187 = vmatpush1.bf16.msra.mxu0 0
        %2188 = vmatprep.subr.bf16.mxu0 0
        %2189 = vmatpush1.bf16.msra.mxu0 0
        %2190 = vmatprep.subr.bf16.mxu0 0
        %2191 = vmatpush1.bf16.msra.mxu0 0
        %2192 = vmatprep.subr.bf16.mxu0 0
        %2193 = vmatpush1.bf16.msra.mxu0 0
        %2194 = vmatprep.subr.bf16.mxu0 0
        %2195 = vmatpush1.bf16.msra.mxu0 0
        %2196 = vmatprep.subr.bf16.mxu0 0
        %2197 = vmatpush1.bf16.msra.mxu0 0
        %2198 = vmatprep.subr.bf16.mxu0 0
        %2199 = vmatpush1.bf16.msra.mxu0 0
        %2200 = vmatprep.subr.bf16.mxu0 0
        %2201 = vmatpush1.bf16.msra.mxu0 0
        %2202 = vmatprep.subr.bf16.mxu0 0
        %2203 = vmatpush1.bf16.msra.mxu0 0
        %2204 = vmatprep.subr.bf16.mxu0 0
        %2205 = vmatpush1.bf16.msra.mxu0 0
        %2206 = vmatprep.subr.bf16.mxu0 0
        %2207 = vmatpush1.bf16.msra.mxu0 0
        %2208 = vmatprep.subr.bf16.mxu0 0
        %2209 = vmatpush1.bf16.msra.mxu0 0
        %2210 = vmatprep.subr.bf16.mxu0 0
        %2211 = vmatpush1.bf16.msra.mxu0 0
        %2212 = vmatprep.mubr.bf16.mxu0 0
        %2213 = vmatmul.mubr.bf16.gmra.mrb[0].mxu0 %v2178
        %v2214 = vpop.f32.mrb[0].mxu0
        %v2215 = vadd.f32 0.0, %v2214
        %v2216 = vpop.f32.mrb[0].mxu0
        %v2217 = vpop.f32.mrb[0].mxu0
        %v2218 = vpop.f32.mrb[0].mxu0
        %2219 = vdwg.mxu0
        %v2222 = vunpack.c.l.b16 %v1730
        %v2223 = vunpack.c.l.b16 %v1731
        %v2224 = vpack.c.b16 %v2223, %v2222
        %v2227 = vsel %vm974, %v2168, 0
        %2229 = vmatprep.subr.bf16.mxu0 0
        %2230 = vmatpush1.bf16.msra.mxu0 %v2224
        %2231 = vmatprep.subr.bf16.mxu0 0
        %2232 = vmatpush1.bf16.msra.mxu0 0
        %2233 = vmatprep.subr.bf16.mxu0 0
        %2234 = vmatpush1.bf16.msra.mxu0 0
        %2235 = vmatprep.subr.bf16.mxu0 0
        %2236 = vmatpush1.bf16.msra.mxu0 0
        %2237 = vmatprep.subr.bf16.mxu0 0
        %2238 = vmatpush1.bf16.msra.mxu0 0
        %2239 = vmatprep.subr.bf16.mxu0 0
        %2240 = vmatpush1.bf16.msra.mxu0 0
        %2241 = vmatprep.subr.bf16.mxu0 0
        %2242 = vmatpush1.bf16.msra.mxu0 0
        %2243 = vmatprep.subr.bf16.mxu0 0
        %2244 = vmatpush1.bf16.msra.mxu0 0
        %2245 = vmatprep.subr.bf16.mxu0 0
        %2246 = vmatpush1.bf16.msra.mxu0 0
        %2247 = vmatprep.subr.bf16.mxu0 0
        %2248 = vmatpush1.bf16.msra.mxu0 0
        %2249 = vmatprep.subr.bf16.mxu0 0
        %2250 = vmatpush1.bf16.msra.mxu0 0
        %2251 = vmatprep.subr.bf16.mxu0 0
        %2252 = vmatpush1.bf16.msra.mxu0 0
        %2253 = vmatprep.subr.bf16.mxu0 0
        %2254 = vmatpush1.bf16.msra.mxu0 0
        %2255 = vmatprep.subr.bf16.mxu0 0
        %2256 = vmatpush1.bf16.msra.mxu0 0
        %2257 = vmatprep.subr.bf16.mxu0 0
        %2258 = vmatpush1.bf16.msra.mxu0 0
        %2259 = vmatprep.subr.bf16.mxu0 0
        %2260 = vmatpush1.bf16.msra.mxu0 0
        %2261 = vmatprep.mubr.bf16.mxu0 0
        %2262 = vmatmul.mubr.bf16.gmra.mrb[0].mxu0 %v2227
        %v2263 = vpop.f32.mrb[0].mxu0
        %v2264 = vadd.f32 0.0, %v2263
        %v2265 = vpop.f32.mrb[0].mxu0
        %v2266 = vpop.f32.mrb[0].mxu0
        %v2267 = vpop.f32.mrb[0].mxu0
        %2268 = vdwg.mxu0
        %v2271 = vunpack.c.l.b16 %v1732
        %v2272 = vunpack.c.l.b16 %v1733
        %v2273 = vpack.c.b16 %v2272, %v2271
        %v2276 = vsel %vm974, %v2169, 0
        %2278 = vmatprep.subr.bf16.mxu0 0
        %2279 = vmatpush1.bf16.msra.mxu0 %v2273
        %2280 = vmatprep.subr.bf16.mxu0 0
        %2281 = vmatpush1.bf16.msra.mxu0 0
        %2282 = vmatprep.subr.bf16.mxu0 0
        %2283 = vmatpush1.bf16.msra.mxu0 0
        %2284 = vmatprep.subr.bf16.mxu0 0
        %2285 = vmatpush1.bf16.msra.mxu0 0
        %2286 = vmatprep.subr.bf16.mxu0 0
        %2287 = vmatpush1.bf16.msra.mxu0 0
        %2288 = vmatprep.subr.bf16.mxu0 0
        %2289 = vmatpush1.bf16.msra.mxu0 0
        %2290 = vmatprep.subr.bf16.mxu0 0
        %2291 = vmatpush1.bf16.msra.mxu0 0
        %2292 = vmatprep.subr.bf16.mxu0 0
        %2293 = vmatpush1.bf16.msra.mxu0 0
        %2294 = vmatprep.subr.bf16.mxu0 0
        %2295 = vmatpush1.bf16.msra.mxu0 0
        %2296 = vmatprep.subr.bf16.mxu0 0
        %2297 = vmatpush1.bf16.msra.mxu0 0
        %2298 = vmatprep.subr.bf16.mxu0 0
        %2299 = vmatpush1.bf16.msra.mxu0 0
        %2300 = vmatprep.subr.bf16.mxu0 0
        %2301 = vmatpush1.bf16.msra.mxu0 0
        %2302 = vmatprep.subr.bf16.mxu0 0
        %2303 = vmatpush1.bf16.msra.mxu0 0
        %2304 = vmatprep.subr.bf16.mxu0 0
        %2305 = vmatpush1.bf16.msra.mxu0 0
        %2306 = vmatprep.subr.bf16.mxu0 0
        %2307 = vmatpush1.bf16.msra.mxu0 0
        %2308 = vmatprep.subr.bf16.mxu0 0
        %2309 = vmatpush1.bf16.msra.mxu0 0
        %2310 = vmatprep.mubr.bf16.mxu0 0
        %2311 = vmatmul.mubr.bf16.gmra.mrb[0].mxu0 %v2276
        %v2312 = vpop.f32.mrb[0].mxu0
        %v2313 = vadd.f32 0.0, %v2312
        %v2314 = vpop.f32.mrb[0].mxu0
        %v2315 = vpop.f32.mrb[0].mxu0
        %v2316 = vpop.f32.mrb[0].mxu0
        %2317 = vdwg.mxu0
        %v2320 = vunpack.c.l.b16 %v1734
        %v2321 = vunpack.c.l.b16 %v1735
        %v2322 = vpack.c.b16 %v2321, %v2320
        %v2325 = vsel %vm974, %v2170, 0
        %2327 = vmatprep.subr.bf16.mxu0 0
        %2328 = vmatpush1.bf16.msra.mxu0 %v2322
        %2329 = vmatprep.subr.bf16.mxu0 0
        %2330 = vmatpush1.bf16.msra.mxu0 0
        %2331 = vmatprep.subr.bf16.mxu0 0
        %2332 = vmatpush1.bf16.msra.mxu0 0
        %2333 = vmatprep.subr.bf16.mxu0 0
        %2334 = vmatpush1.bf16.msra.mxu0 0
        %2335 = vmatprep.subr.bf16.mxu0 0
        %2336 = vmatpush1.bf16.msra.mxu0 0
        %2337 = vmatprep.subr.bf16.mxu0 0
        %2338 = vmatpush1.bf16.msra.mxu0 0
        %2339 = vmatprep.subr.bf16.mxu0 0
        %2340 = vmatpush1.bf16.msra.mxu0 0
        %2341 = vmatprep.subr.bf16.mxu0 0
        %2342 = vmatpush1.bf16.msra.mxu0 0
        %2343 = vmatprep.subr.bf16.mxu0 0
        %2344 = vmatpush1.bf16.msra.mxu0 0
        %2345 = vmatprep.subr.bf16.mxu0 0
        %2346 = vmatpush1.bf16.msra.mxu0 0
        %2347 = vmatprep.subr.bf16.mxu0 0
        %2348 = vmatpush1.bf16.msra.mxu0 0
        %2349 = vmatprep.subr.bf16.mxu0 0
        %2350 = vmatpush1.bf16.msra.mxu0 0
        %2351 = vmatprep.subr.bf16.mxu0 0
        %2352 = vmatpush1.bf16.msra.mxu0 0
        %2353 = vmatprep.subr.bf16.mxu0 0
        %2354 = vmatpush1.bf16.msra.mxu0 0
        %2355 = vmatprep.subr.bf16.mxu0 0
        %2356 = vmatpush1.bf16.msra.mxu0 0
        %2357 = vmatprep.subr.bf16.mxu0 0
        %2358 = vmatpush1.bf16.msra.mxu0 0
        %2359 = vmatprep.mubr.bf16.mxu0 0
        %2360 = vmatmul.mubr.bf16.gmra.mrb[0].mxu0 %v2325
        %v2361 = vpop.f32.mrb[0].mxu0
        %v2362 = vadd.f32 0.0, %v2361
        %v2363 = vpop.f32.mrb[0].mxu0
        %v2364 = vpop.f32.mrb[0].mxu0
        %v2365 = vpop.f32.mrb[0].mxu0
        %2366 = vdwg.mxu0
        %v2368 = vlaneseq
        %v2369 = vshrl.u32 %v2368, 7
        %v2370 = vsub.s32 0, %v2369
        %v2371 = vrot.slane %v1736, %v2370
        %v2373 = vadd.f32 %v2371, %v2215
        %v2374 = vadd.f32 %v2373, %v2264
        %v2375 = vadd.f32 %v2374, %v2313
        %v2376 = vadd.f32 %v2375, %v2362
        %v2377 = vadd.f32 %v1635, %v2376
        %v2378 = vld [vmem:[%s16] sm:$0x1]
        %v2379 = vld [vmem:[%s17] sm:$0x1]
        %v2380 = vsel %vm1607, %v2377, 0.0
        %2381 = vadd.xlane.f32.xlu0 %v2380
        %v2382 = vpop.xlane.xlu0 %2381
        %v2383 = vmul.f32 %v2382, %v1611
        %v2384 = vsub.f32 %v2377, %v2383
        %v2385 = vmul.f32 %v2384, %v2384
        %v2386 = vsel %vm1607, %v2385, 0.0
        %2387 = vadd.xlane.f32.xlu0 %v2386
        %v2388 = vpop.xlane.xlu0 %2387
        %v2389 = vmul.f32 %v2388, %v1611
        %v2390 = vadd.f32 %v2389, 1e-05
        %v2391 = vrsqrt.pop %v2390
        %v2392 = vmul.f32 %v2384, %v2391
        %v2394 = vlaneseq
        %v2395 = vshrl.u32 %v2394, 7
        %v2396 = vsub.s32 0, %v2395
        %v2397 = vrot.slane %v2378, %v2396
        %v2399 = vmul.f32 %v2392, %v2397
        %v2401 = vlaneseq
        %v2402 = vshrl.u32 %v2401, 7
        %v2403 = vsub.s32 0, %v2402
        %v2404 = vrot.slane %v2379, %v2403
        %v2406 = vadd.f32 %v2399, %v2404
        %v2407 = vld [vmem:[%s18] sm:$0xff]
        %v2408 = vld [vmem:[%s18 + $0x8] sm:$0xff]
        %v2409 = vld [vmem:[%s18 + $0x10] sm:$0xff]
        %v2410 = vld [vmem:[%s18 + $0x18] sm:$0xff]
        %v2411 = vld [vmem:[%s18 + $0x20] sm:$0xff]
        %v2412 = vld [vmem:[%s18 + $0x28] sm:$0xff]
        %v2413 = vld [vmem:[%s18 + $0x30] sm:$0xff]
        %v2414 = vld [vmem:[%s18 + $0x38] sm:$0xff]
        %v2415 = vpack.c.bf16 %v2406, %v2406
        %v2416 = vld [vmem:[%s19] sm:$0x3]
        %v2418 = vlaneseq
        %v2419 = vshrl.u32 %v2418, 7
        %v2420 = vsub.s32 0, %v2419
        %v2421 = vrot.slane %v2416, %v2420
        %v2422 = vlaneseq
        %v2423 = vshrl.u32 %v2422, 7
        %v2424 = vsub.s32 1, %v2423
        %v2425 = vrot.slane %v2416, %v2424
        %v2436 = vunpack.c.l.b16 %v2407
        %v2437 = vunpack.c.h.b16 %v2407
        %v2438 = vunpack.c.l.b16 %v2408
        %v2439 = vunpack.c.h.b16 %v2408
        %v2440 = vunpack.c.l.b16 %v2409
        %v2441 = vunpack.c.h.b16 %v2409
        %v2442 = vunpack.c.l.b16 %v2410
        %v2443 = vunpack.c.h.b16 %v2410
        %v2444 = vunpack.c.l.b16 %v2411
        %v2445 = vunpack.c.h.b16 %v2411
        %v2446 = vunpack.c.l.b16 %v2412
        %v2447 = vunpack.c.h.b16 %v2412
        %v2448 = vunpack.c.l.b16 %v2413
        %v2449 = vunpack.c.h.b16 %v2413
        %v2450 = vunpack.c.l.b16 %v2414
        %v2451 = vunpack.c.h.b16 %v2414
        %v2452 = vpack.c.b16 %v2438, %v2436
        %v2453 = vpack.c.b16 %v2439, %v2437
        %v2454 = vpack.c.b16 %v2442, %v2440
        %v2455 = vpack.c.b16 %v2443, %v2441
        %v2456 = vpack.c.b16 %v2446, %v2444
        %v2457 = vpack.c.b16 %v2447, %v2445
        %v2458 = vpack.c.b16 %v2450, %v2448
        %v2459 = vpack.c.b16 %v2451, %v2449
        %v2469 = vsel %vm899, %v2415, 0
        %2471 = vmatprep.subr.bf16.mxu0 %v2453
        %2472 = vmatpush1.bf16.msra.mxu0 %v2452
        %2473 = vmatprep.subr.bf16.mxu0 %v2455
        %2474 = vmatpush1.bf16.msra.mxu0 %v2454
        %2475 = vmatprep.subr.bf16.mxu0 %v2457
        %2476 = vmatpush1.bf16.msra.mxu0 %v2456
        %2477 = vmatprep.subr.bf16.mxu0 %v2459
        %2478 = vmatpush1.bf16.msra.mxu0 %v2458
        %2479 = vmatprep.subr.bf16.mxu0 0
        %2480 = vmatpush1.bf16.msra.mxu0 0
        %2481 = vmatprep.subr.bf16.mxu0 0
        %2482 = vmatpush1.bf16.msra.mxu0 0
        %2483 = vmatprep.subr.bf16.mxu0 0
        %2484 = vmatpush1.bf16.msra.mxu0 0
        %2485 = vmatprep.subr.bf16.mxu0 0
        %2486 = vmatpush1.bf16.msra.mxu0 0
        %2487 = vmatprep.subr.bf16.mxu0 0
        %2488 = vmatpush1.bf16.msra.mxu0 0
        %2489 = vmatprep.subr.bf16.mxu0 0
        %2490 = vmatpush1.bf16.msra.mxu0 0
        %2491 = vmatprep.subr.bf16.mxu0 0
        %2492 = vmatpush1.bf16.msra.mxu0 0
        %2493 = vmatprep.subr.bf16.mxu0 0
        %2494 = vmatpush1.bf16.msra.mxu0 0
        %2495 = vmatprep.subr.bf16.mxu0 0
        %2496 = vmatpush1.bf16.msra.mxu0 0
        %2497 = vmatprep.subr.bf16.mxu0 0
        %2498 = vmatpush1.bf16.msra.mxu0 0
        %2499 = vmatprep.subr.bf16.mxu0 0
        %2500 = vmatpush1.bf16.msra.mxu0 0
        %2501 = vmatprep.subr.bf16.mxu0 0
        %2502 = vmatpush1.bf16.msra.mxu0 0
        %2503 = vmatprep.mubr.bf16.mxu0 0
        %2504 = vmatmul.mubr.bf16.gmra.mrb[0].mxu0 %v2469
        %v2505 = vpop.f32.mrb[0].mxu0
        %v2506 = vadd.f32 %v2421, %v2505
        %v2507 = vpop.f32.mrb[0].mxu0
        %v2508 = vadd.f32 %v2425, %v2507
        %v2509 = vpop.f32.mrb[0].mxu0
        %v2510 = vpop.f32.mrb[0].mxu0
        %2511 = vdwg.mxu0
        %v2512 = vmul.f32 %v2506, 0.5
        %v2513 = vmul.f32 %v2508, 0.5
        %v2514 = vmul.f32 %v2506, 0.044715
        %v2515 = vmul.f32 %v2508, 0.044715
        %v2516 = vmul.f32 %v2514, %v2506
        %v2517 = vmul.f32 %v2515, %v2508
        %v2518 = vmul.f32 %v2516, %v2506
        %v2519 = vmul.f32 %v2517, %v2508
        %v2520 = vadd.f32 %v2506, %v2518
        %v2521 = vadd.f32 %v2508, %v2519
        %v2522 = vmul.f32 %v2520, 0.7978846
        %v2523 = vmul.f32 %v2521, 0.7978846
        %v2524 = vtanh.pop %v2522
        %v2525 = vtanh.pop %v2523
        %v2526 = vadd.f32 %v2524, 1.0
        %v2527 = vadd.f32 %v2525, 1.0
        %v2528 = vmul.f32 %v2512, %v2526
        %v2529 = vmul.f32 %v2513, %v2527
        %v2530 = vld [vmem:[%s20] sm:$0xf]
        %v2531 = vld [vmem:[%s20 + $0x4] sm:$0xf]
        %v2532 = vld [vmem:[%s20 + $0x8] sm:$0xf]
        %v2533 = vld [vmem:[%s20 + $0xc] sm:$0xf]
        %v2534 = vld [vmem:[%s20 + $0x10] sm:$0xf]
        %v2535 = vld [vmem:[%s20 + $0x14] sm:$0xf]
        %v2536 = vld [vmem:[%s20 + $0x18] sm:$0xf]
        %v2537 = vld [vmem:[%s20 + $0x1c] sm:$0xf]
        %v2538 = vld [vmem:[%s20 + $0x20] sm:$0xf]
        %v2539 = vld [vmem:[%s20 + $0x24] sm:$0xf]
        %v2540 = vld [vmem:[%s20 + $0x28] sm:$0xf]
        %v2541 = vld [vmem:[%s20 + $0x2c] sm:$0xf]
        %v2542 = vld [vmem:[%s20 + $0x30] sm:$0xf]
        %v2543 = vld [vmem:[%s20 + $0x34] sm:$0xf]
        %v2544 = vld [vmem:[%s20 + $0x38] sm:$0xf]
        %v2545 = vld [vmem:[%s20 + $0x3c] sm:$0xf]
        %v2546 = vld [vmem:[%s20 + $0x40] sm:$0xf]
        %v2547 = vld [vmem:[%s20 + $0x44] sm:$0xf]
        %v2548 = vld [vmem:[%s20 + $0x48] sm:$0xf]
        %v2549 = vld [vmem:[%s20 + $0x4c] sm:$0xf]
        %v2550 = vld [vmem:[%s20 + $0x50] sm:$0xf]
        %v2551 = vld [vmem:[%s20 + $0x54] sm:$0xf]
        %v2552 = vld [vmem:[%s20 + $0x58] sm:$0xf]
        %v2553 = vld [vmem:[%s20 + $0x5c] sm:$0xf]
        %v2554 = vld [vmem:[%s20 + $0x60] sm:$0xf]
        %v2555 = vld [vmem:[%s20 + $0x64] sm:$0xf]
        %v2556 = vld [vmem:[%s20 + $0x68] sm:$0xf]
        %v2557 = vld [vmem:[%s20 + $0x6c] sm:$0xf]
        %v2558 = vld [vmem:[%s20 + $0x70] sm:$0xf]
        %v2559 = vld [vmem:[%s20 + $0x74] sm:$0xf]
        %v2560 = vld [vmem:[%s20 + $0x78] sm:$0xf]
        %v2561 = vld [vmem:[%s20 + $0x7c] sm:$0xf]
        %v2562 = vpack.c.bf16 %v2528, %v2528
        %v2563 = vpack.c.bf16 %v2529, %v2529
        %v2564 = vld [vmem:[%s21] sm:$0x1]
        %v2566 = vlaneseq
        %v2567 = vshrl.u32 %v2566, 7
        %v2568 = vsub.s32 0, %v2567
        %v2569 = vrot.slane %v2564, %v2568
        %v2603 = vunpack.c.l.b16 %v2530
        %v2604 = vunpack.c.l.b16 %v2531
        %v2605 = vunpack.c.l.b16 %v2532
        %v2606 = vunpack.c.l.b16 %v2533
        %v2607 = vunpack.c.l.b16 %v2534
        %v2608 = vunpack.c.l.b16 %v2535
        %v2609 = vunpack.c.l.b16 %v2536
        %v2610 = vunpack.c.l.b16 %v2537
        %v2611 = vunpack.c.l.b16 %v2538
        %v2612 = vunpack.c.l.b16 %v2539
        %v2613 = vunpack.c.l.b16 %v2540
        %v2614 = vunpack.c.l.b16 %v2541
        %v2615 = vunpack.c.l.b16 %v2542
        %v2616 = vunpack.c.l.b16 %v2543
        %v2617 = vunpack.c.l.b16 %v2544
        %v2618 = vunpack.c.l.b16 %v2545
        %v2619 = vunpack.c.l.b16 %v2546
        %v2620 = vunpack.c.l.b16 %v2547
        %v2621 = vunpack.c.l.b16 %v2548
        %v2622 = vunpack.c.l.b16 %v2549
        %v2623 = vunpack.c.l.b16 %v2550
        %v2624 = vunpack.c.l.b16 %v2551
        %v2625 = vunpack.c.l.b16 %v2552
        %v2626 = vunpack.c.l.b16 %v2553
        %v2627 = vunpack.c.l.b16 %v2554
        %v2628 = vunpack.c.l.b16 %v2555
        %v2629 = vunpack.c.l.b16 %v2556
        %v2630 = vunpack.c.l.b16 %v2557
        %v2631 = vunpack.c.l.b16 %v2558
        %v2632 = vunpack.c.l.b16 %v2559
        %v2633 = vunpack.c.l.b16 %v2560
        %v2634 = vunpack.c.l.b16 %v2561
        %v2635 = vpack.c.b16 %v2604, %v2603
        %v2636 = vpack.c.b16 %v2606, %v2605
        %v2637 = vpack.c.b16 %v2608, %v2607
        %v2638 = vpack.c.b16 %v2610, %v2609
        %v2639 = vpack.c.b16 %v2612, %v2611
        %v2640 = vpack.c.b16 %v2614, %v2613
        %v2641 = vpack.c.b16 %v2616, %v2615
        %v2642 = vpack.c.b16 %v2618, %v2617
        %v2643 = vpack.c.b16 %v2620, %v2619
        %v2644 = vpack.c.b16 %v2622, %v2621
        %v2645 = vpack.c.b16 %v2624, %v2623
        %v2646 = vpack.c.b16 %v2626, %v2625
        %v2647 = vpack.c.b16 %v2628, %v2627
        %v2648 = vpack.c.b16 %v2630, %v2629
        %v2649 = vpack.c.b16 %v2632, %v2631
        %v2650 = vpack.c.b16 %v2634, %v2633
        %2667 = vmatprep.subr.bf16.mxu0 0
        %2668 = vmatpush1.bf16.msra.mxu0 %v2635
        %2669 = vmatprep.subr.bf16.mxu0 0
        %2670 = vmatpush1.bf16.msra.mxu0 %v2636
        %2671 = vmatprep.subr.bf16.mxu0 0
        %2672 = vmatpush1.bf16.msra.mxu0 %v2637
        %2673 = vmatprep.subr.bf16.mxu0 0
        %2674 = vmatpush1.bf16.msra.mxu0 %v2638
        %2675 = vmatprep.subr.bf16.mxu0 0
        %2676 = vmatpush1.bf16.msra.mxu0 %v2639
        %2677 = vmatprep.subr.bf16.mxu0 0
        %2678 = vmatpush1.bf16.msra.mxu0 %v2640
        %2679 = vmatprep.subr.bf16.mxu0 0
        %2680 = vmatpush1.bf16.msra.mxu0 %v2641
        %2681 = vmatprep.subr.bf16.mxu0 0
        %2682 = vmatpush1.bf16.msra.mxu0 %v2642
        %2683 = vmatprep.subr.bf16.mxu0 0
        %2684 = vmatpush1.bf16.msra.mxu0 %v2643
        %2685 = vmatprep.subr.bf16.mxu0 0
        %2686 = vmatpush1.bf16.msra.mxu0 %v2644
        %2687 = vmatprep.subr.bf16.mxu0 0
        %2688 = vmatpush1.bf16.msra.mxu0 %v2645
        %2689 = vmatprep.subr.bf16.mxu0 0
        %2690 = vmatpush1.bf16.msra.mxu0 %v2646
        %2691 = vmatprep.subr.bf16.mxu0 0
        %2692 = vmatpush1.bf16.msra.mxu0 %v2647
        %2693 = vmatprep.subr.bf16.mxu0 0
        %2694 = vmatpush1.bf16.msra.mxu0 %v2648
        %2695 = vmatprep.subr.bf16.mxu0 0
        %2696 = vmatpush1.bf16.msra.mxu0 %v2649
        %2697 = vmatprep.subr.bf16.mxu0 0
        %2698 = vmatpush1.bf16.msra.mxu0 %v2650
        %2699 = vmatprep.mubr.bf16.mxu0 %v2563
        %2700 = vmatmul.mubr.bf16.gmra.mrb[0].mxu0 %v2562
        %v2701 = vpop.f32.mrb[0].mxu0
        %v2702 = vadd.f32 %v2569, %v2701
        %v2703 = vpop.f32.mrb[0].mxu0
        %v2704 = vpop.f32.mrb[0].mxu0
        %v2705 = vpop.f32.mrb[0].mxu0
        %2706 = vdwg.mxu0
        %v2707 = vadd.f32 %v2406, %v2702
        %v2708 = vld [vmem:[%s22] sm:$0x1]
        %v2709 = vld [vmem:[%s23] sm:$0x1]
        %v2710 = vsel %vm1607, %v2707, 0.0
        %2711 = vadd.xlane.f32.xlu0 %v2710
        %v2712 = vpop.xlane.xlu0 %2711
        %v2713 = vmul.f32 %v2712, %v1611
        %v2714 = vsub.f32 %v2707, %v2713
        %v2715 = vmul.f32 %v2714, %v2714
        %v2716 = vsel %vm1607, %v2715, 0.0
        %2717 = vadd.xlane.f32.xlu0 %v2716
        %v2718 = vpop.xlane.xlu0 %2717
        %v2719 = vmul.f32 %v2718, %v1611
        %v2720 = vadd.f32 %v2719, 1e-05
        %v2721 = vrsqrt.pop %v2720
        %v2722 = vmul.f32 %v2714, %v2721
        %v2724 = vlaneseq
        %v2725 = vshrl.u32 %v2724, 7
        %v2726 = vsub.s32 0, %v2725
        %v2727 = vrot.slane %v2708, %v2726
        %v2729 = vmul.f32 %v2722, %v2727
        %v2731 = vlaneseq
        %v2732 = vshrl.u32 %v2731, 7
        %v2733 = vsub.s32 0, %v2732
        %v2734 = vrot.slane %v2709, %v2733
        %v2736 = vadd.f32 %v2729, %v2734
        %2737 = vst.msk [vmem:[%s823] sm:$0xf] %vm1607, %v2736
        %s2738 = sand.u32 %s596, 1
        %s2739 = scalar_lea.sflag [#allocation3], %s2738
        %s2740 = sand.u32 %s596, 1
        %s2741 = smul.addr %s2740, 4
        %s2742 = scalar_lea.vmem [#allocation2], %s2741
        // Predicated region
        $region117: #{fwd.11} parent=115 // pred_check
          %p2743 = pneg %p606
        $region118: #{fwd.11} parent=115 // pred_check_branch
          %2745 = sbr.rel (%p2743) target = $region120
        $region119: #{fwd.11} parent=115 // pred_region
          %s2747 = ssub.s32 64, 64
          %2748 = vsyncadd %s2739, %s2747
          %s2749 = sadd.s32 %s43, %s42
          %s2750 = smul.addr %s2749, 64
          %s2751 = scalar_lea.hbm %s24, %s2750
          %s2753 = sshll.u32 %s2742, 4
          %s2754 = int_to_ptr.vmem [resolvable:$true] %s2753
          %2756 = dma.vmem_to_hbm [thread:$0]  %s2754, 64, %s2751, %s2739
        $region120: #{fwd.11} parent=115 // pred_fallthru
          _
      $region116: #{fwd.11} parent=5 // pred_fallthru
        _
      %p2757 = scmp.le.s32.totalorder 2, %s33
      // Predicated region
      $region121: #{fwd.11} parent=5 // pred_check
        %p2758 = pneg %p2757
      $region122: #{fwd.11} parent=5 // pred_check_branch
        %2760 = sbr.rel (%p2758) target = $region124
      $region123: #{fwd.11} parent=5 // pred_region
        %s2761 = ssub.s32 %s33, 2
        // Predicated region
        $region125: #{fwd.11} parent=123 // pred_check
          %p2762 = pneg %p612
        $region126: #{fwd.11} parent=123 // pred_check_branch
          %2764 = sbr.rel (%p2762) target = $region128
        $region127: #{fwd.11} parent=123 // pred_region
          %s2765 = sand.u32 %s597, 1
          %s2766 = scalar_lea.sflag [#allocation3], %s2765
          %s2767 = sand.u32 %s597, 1
          %s2768 = smul.addr %s2767, 4
          %s2769 = scalar_lea.vmem [#allocation2], %s2768
          %2770 = dma.done %s2766, 64
        $region128: #{fwd.11} parent=123 // pred_fallthru
          _
      $region124: #{fwd.11} parent=5 // pred_fallthru
        _
    $region6: #{fwd.11} parent=1 // loop_footer
      %s37 = sadd.s32 1, %s33
    $region7: #{fwd.11} parent=1 // loop_footer_branch
      %32 = sbr.rel target = $region3
    $region8: #{fwd.11} parent=1 // loop_exit
      _
    %2771 = vsyncpa [#allocation3], 1
    %s2772 = scalar_lea.sflag [#allocation3], 1
    %2773 = vsyncpa %s2772, 1

// kernel: fwd.8
$region0: #{fwd.8}
  #allocation0 [shape = 'u32[]', space=smem, size = 0x4, offset = 0x4, fixed_abs, tag = 'smem constant byte address 0x4 - core index']
  #allocation1 [shape = 'u32[144,128]{1,0:T(1,128)}', space=vmem, size = 0x12000, scoped, tag = 'internal scratch']
  %s0 = inlined_call_operand.vmem [shape: f32[2,16,32], index: 0, kind: input, shape index: {}]
  %s1 = inlined_call_operand.vmem [shape: f32[16,32], index: 1, kind: input, shape index: {}]
  %s2 = inlined_call_operand.vmem [shape: bf16[2,4,16,8], index: 2, kind: input, shape index: {}]
  %s3 = inlined_call_operand.vmem [shape: bf16[2,4,16,8], index: 3, kind: input, shape index: {}]
  %s4 = inlined_call_operand.vmem [shape: bf16[2,4,16,8], index: 4, kind: input, shape index: {}]
  %s5 = inlined_call_operand.vmem [shape: bf16[2,4,16,8], index: 5, kind: input, shape index: {}]
  %s6 = inlined_call_operand.vmem [shape: bf16[32,32], index: 6, kind: input, shape index: {}]
  %s7 = inlined_call_operand.vmem [shape: f32[1,32], index: 7, kind: input, shape index: {}]
  %s8 = inlined_call_operand.vmem [shape: bf16[4,8,32], index: 8, kind: input, shape index: {}]
  %s9 = inlined_call_operand.vmem [shape: f32[1,32], index: 9, kind: input, shape index: {}]
  %s10 = inlined_call_operand.vmem [shape: f32[1,32], index: 10, kind: input, shape index: {}]
  %s11 = inlined_call_operand.vmem [shape: f32[1,32], index: 11, kind: input, shape index: {}]
  %s12 = inlined_call_operand.vmem [shape: bf16[32,32], index: 12, kind: input, shape index: {}]
  %s13 = inlined_call_operand.vmem [shape: f32[1,32], index: 13, kind: input, shape index: {}]
  %s14 = inlined_call_operand.vmem [shape: bf16[4,8,32], index: 14, kind: input, shape index: {}]
  %s15 = inlined_call_operand.vmem [shape: f32[1,32], index: 15, kind: input, shape index: {}]
  %s16 = inlined_call_operand.vmem [shape: f32[1,32], index: 16, kind: input, shape index: {}]
  %s17 = inlined_call_operand.vmem [shape: f32[1,32], index: 17, kind: input, shape index: {}]
  %s18 = inlined_call_operand.vmem [shape: bf16[32,128], index: 18, kind: input, shape index: {}]
  %s19 = inlined_call_operand.vmem [shape: f32[1,128], index: 19, kind: input, shape index: {}]
  %s20 = inlined_call_operand.vmem [shape: bf16[128,32], index: 20, kind: input, shape index: {}]
  %s21 = inlined_call_operand.vmem [shape: f32[1,32], index: 21, kind: input, shape index: {}]
  %s22 = inlined_call_operand.vmem [shape: f32[1,32], index: 22, kind: input, shape index: {}]
  %s23 = inlined_call_operand.vmem [shape: f32[1,32], index: 23, kind: input, shape index: {}]
  %s24 = inlined_call_operand.hbm [shape: f32[2,16,32], index: 24, kind: output, shape index: {}]
  %s25 = sld [smem:[#allocation0]]
  $region129: #{fwd.8} parent=0
    _
  %s27 = ssub.s32 1, %s25
  %s28 = scalar_select 0, %s27, %s25
  $region1: #{fwd.8} parent=0
    #allocation2 [shape = 'u8[16384]{0}', space=vmem, size = 0x4000, scoped, tag = 'output window, operand 0']
    #allocation3 [shape = 's32[2]{0}', space=sflag, size = 0x8, scoped, tag = 'scoped memory for fwd.8']
    %29 = vsyncpa [#allocation3], 0
    %s30 = scalar_lea.sflag [#allocation3], 1
    %31 = vsyncpa %s30, 0
    loop: start=0, step=1, limit=4
    $region2: #{fwd.8} parent=1 // loop_pre_header
      _
    $region3: #{fwd.8} parent=1 // loop_header
      %s33 = sphi 0, %s37
      %p34 = scmp.ge.s32.totalorder %s33, 4
      %s40 = sphi 0, %s52
      %s41 = sphi 0, %s48
      %s42 = sphi 0, %s40
      %s43 = sphi 0, %s41
      %s44 = sphi 0, %s42
      %s45 = sphi 0, %s43
      %s57 = sphi 0, %s59
      %s60 = sphi 0, %s57
      %s61 = sphi 0, %s60
      %s77 = sphi 0, %s61
      %s83 = sphi 0, %s85
      %s86 = sphi 0, %s83
      %s87 = sphi 0, %s86
      %s103 = sphi 0, %s87
      %s109 = sphi 0, %s111
      %s112 = sphi 0, %s109
      %s113 = sphi 0, %s112
      %s129 = sphi 0, %s113
      %s135 = sphi 0, %s137
      %s138 = sphi 0, %s135
      %s139 = sphi 0, %s138
      %s155 = sphi 0, %s139
      %s161 = sphi 0, %s163
      %s164 = sphi 0, %s161
      %s165 = sphi 0, %s164
      %s181 = sphi 0, %s165
      %s187 = sphi 0, %s189
      %s190 = sphi 0, %s187
      %s191 = sphi 0, %s190
      %s207 = sphi 0, %s191
      %s211 = sphi 0, %s211
      %s213 = sphi 0, %s211
      %s214 = sphi 0, %s213
      %s228 = sphi 0, %s214
      %s232 = sphi 0, %s232
      %s234 = sphi 0, %s232
      %s235 = sphi 0, %s234
      %s249 = sphi 0, %s235
      %s253 = sphi 0, %s253
      %s255 = sphi 0, %s253
      %s256 = sphi 0, %s255
      %s270 = sphi 0, %s256
      %s274 = sphi 0, %s274
      %s276 = sphi 0, %s274
      %s277 = sphi 0, %s276
      %s291 = sphi 0, %s277
      %s295 = sphi 0, %s295
      %s297 = sphi 0, %s295
      %s298 = sphi 0, %s297
      %s312 = sphi 0, %s298
      %s316 = sphi 0, %s316
      %s318 = sphi 0, %s316
      %s319 = sphi 0, %s318
      %s333 = sphi 0, %s319
      %s337 = sphi 0, %s337
      %s339 = sphi 0, %s337
      %s340 = sphi 0, %s339
      %s354 = sphi 0, %s340
      %s358 = sphi 0, %s358
      %s360 = sphi 0, %s358
      %s361 = sphi 0, %s360
      %s375 = sphi 0, %s361
      %s379 = sphi 0, %s379
      %s381 = sphi 0, %s379
      %s382 = sphi 0, %s381
      %s396 = sphi 0, %s382
      %s400 = sphi 0, %s400
      %s402 = sphi 0, %s400
      %s403 = sphi 0, %s402
      %s417 = sphi 0, %s403
      %s421 = sphi 0, %s421
      %s423 = sphi 0, %s421
      %s424 = sphi 0, %s423
      %s438 = sphi 0, %s424
      %s442 = sphi 0, %s442
      %s444 = sphi 0, %s442
      %s445 = sphi 0, %s444
      %s459 = sphi 0, %s445
      %s463 = sphi 0, %s463
      %s465 = sphi 0, %s463
      %s466 = sphi 0, %s465
      %s480 = sphi 0, %s466
      %s484 = sphi 0, %s484
      %s486 = sphi 0, %s484
      %s487 = sphi 0, %s486
      %s501 = sphi 0, %s487
      %s505 = sphi 0, %s505
      %s507 = sphi 0, %s505
      %s508 = sphi 0, %s507
      %s522 = sphi 0, %s508
      %s526 = sphi 0, %s526
      %s528 = sphi 0, %s526
      %s529 = sphi 0, %s528
      %s543 = sphi 0, %s529
      %s547 = sphi 0, %s547
      %s549 = sphi 0, %s547
      %s550 = sphi 0, %s549
      %s564 = sphi 0, %s550
      %s568 = sphi 0, %s568
      %s570 = sphi 0, %s568
      %s571 = sphi 0, %s570
      %s585 = sphi 0, %s571
      %s593 = sphi 0, %s595
      %s596 = sphi 0, %s593
      %s597 = sphi 0, %s596
      %s613 = sphi 0, %s597
    $region4: #{fwd.8} parent=1 // loop_header_branch
      %36 = sbr.rel (%p34) target = $region8
    $region5: #{fwd.8} parent=1 // loop_body
      %s38 = ssub.s32 %s33, 1
      %s39 = ssub.s32 %s33, 2
      %s46 = sadd.s32 1, %s41
      %p47 = scmp.ge.s32.totalorder %s46, 1
      %s48 = scalar_select %p47, 0, %s46
      %s49 = sadd.s32 1, %s40
      %s50 = scalar_select %p47, %s49, %s40
      %p51 = scmp.ge.s32.totalorder %s50, 2
      %s52 = scalar_select %p51, 0, %s50
      %s53 = ssub.s32 %s40, %s52
      %s54 = ssub.s32 %s41, %s48
      %s55 = sor.u32 %s53, %s54
      %p56 = scmp.eq.s32.totalorder %s55, 0
      %s58 = sadd.s32 %s57, 1
      %s59 = scalar_select %p56, %s57, %s58
      %p62 = pneg %p56
      %p63 = scmp.eq.s32.totalorder %s33, 1
      %p64 = por %p62, %p63
      %p65 = scmp.ne.s32.totalorder %s57, %s60
      %p66 = scmp.eq.s32.totalorder %s33, 0
      %p67 = por %p65, %p66
      %p68 = scmp.ne.s32.totalorder %s57, %s60
      %p69 = scmp.eq.s32.totalorder %s38, 1
      %p70 = por %p68, %p69
      %p71 = scmp.ne.s32.totalorder %s60, %s61
      %p72 = scmp.eq.s32.totalorder %s38, 0
      %p73 = por %p71, %p72
      %p74 = scmp.ne.s32.totalorder %s60, %s61
      %p75 = scmp.eq.s32.totalorder %s39, 1
      %p76 = por %p74, %p75
      %p78 = scmp.ne.s32.totalorder %s61, %s77
      %p79 = scmp.eq.s32.totalorder %s39, 0
      %p80 = por %p78, %p79
      %s81 = ssub.s32 %s41, %s48
      %p82 = scmp.eq.s32.totalorder %s81, 0
      %s84 = sadd.s32 %s83, 1
      %s85 = scalar_select %p82, %s83, %s84
      %p88 = pneg %p82
      %p89 = scmp.eq.s32.totalorder %s33, 1
      %p90 = por %p88, %p89
      %p91 = scmp.ne.s32.totalorder %s83, %s86
      %p92 = scmp.eq.s32.totalorder %s33, 0
      %p93 = por %p91, %p92
      %p94 = scmp.ne.s32.totalorder %s83, %s86
      %p95 = scmp.eq.s32.totalorder %s38, 1
      %p96 = por %p94, %p95
      %p97 = scmp.ne.s32.totalorder %s86, %s87
      %p98 = scmp.eq.s32.totalorder %s38, 0
      %p99 = por %p97, %p98
      %p100 = scmp.ne.s32.totalorder %s86, %s87
      %p101 = scmp.eq.s32.totalorder %s39, 1
      %p102 = por %p100, %p101
      %p104 = scmp.ne.s32.totalorder %s87, %s103
      %p105 = scmp.eq.s32.totalorder %s39, 0
      %p106 = por %p104, %p105
      %s107 = ssub.s32 %s40, %s52
      %p108 = scmp.eq.s32.totalorder %s107, 0
      %s110 = sadd.s32 %s109, 1
      %s111 = scalar_select %p108, %s109, %s110
      %p114 = pneg %p108
      %p115 = scmp.eq.s32.totalorder %s33, 1
      %p116 = por %p114, %p115
      %p117 = scmp.ne.s32.totalorder %s109, %s112
      %p118 = scmp.eq.s32.totalorder %s33, 0
      %p119 = por %p117, %p118
      %p120 = scmp.ne.s32.totalorder %s109, %s112
      %p121 = scmp.eq.s32.totalorder %s38, 1
      %p122 = por %p120, %p121
      %p123 = scmp.ne.s32.totalorder %s112, %s113
      %p124 = scmp.eq.s32.totalorder %s38, 0
      %p125 = por %p123, %p124
      %p126 = scmp.ne.s32.totalorder %s112, %s113
      %p127 = scmp.eq.s32.totalorder %s39, 1
      %p128 = por %p126, %p127
      %p130 = scmp.ne.s32.totalorder %s113, %s129
      %p131 = scmp.eq.s32.totalorder %s39, 0
      %p132 = por %p130, %p131
      %s133 = ssub.s32 %s40, %s52
      %p134 = scmp.eq.s32.totalorder %s133, 0
      %s136 = sadd.s32 %s135, 1
      %s137 = scalar_select %p134, %s135, %s136
      %p140 = pneg %p134
      %p141 = scmp.eq.s32.totalorder %s33, 1
      %p142 = por %p140, %p141
      %p143 = scmp.ne.s32.totalorder %s135, %s138
      %p144 = scmp.eq.s32.totalorder %s33, 0
      %p145 = por %p143, %p144
      %p146 = scmp.ne.s32.totalorder %s135, %s138
      %p147 = scmp.eq.s32.totalorder %s38, 1
      %p148 = por %p146, %p147
      %p149 = scmp.ne.s32.totalorder %s138, %s139
      %p150 = scmp.eq.s32.totalorder %s38, 0
      %p151 = por %p149, %p150
      %p152 = scmp.ne.s32.totalorder %s138, %s139
      %p153 = scmp.eq.s32.totalorder %s39, 1
      %p154 = por %p152, %p153
      %p156 = scmp.ne.s32.totalorder %s139, %s155
      %p157 = scmp.eq.s32.totalorder %s39, 0
      %p158 = por %p156, %p157
      %s159 = ssub.s32 %s40, %s52
      %p160 = scmp.eq.s32.totalorder %s159, 0
      %s162 = sadd.s32 %s161, 1
      %s163 = scalar_select %p160, %s161, %s162
      %p166 = pneg %p160
      %p167 = scmp.eq.s32.totalorder %s33, 1
      %p168 = por %p166, %p167
      %p169 = scmp.ne.s32.totalorder %s161, %s164
      %p170 = scmp.eq.s32.totalorder %s33, 0
      %p171 = por %p169, %p170
      %p172 = scmp.ne.s32.totalorder %s161, %s164
      %p173 = scmp.eq.s32.totalorder %s38, 1
      %p174 = por %p172, %p173
      %p175 = scmp.ne.s32.totalorder %s164, %s165
      %p176 = scmp.eq.s32.totalorder %s38, 0
      %p177 = por %p175, %p176
      %p178 = scmp.ne.s32.totalorder %s164, %s165
      %p179 = scmp.eq.s32.totalorder %s39, 1
      %p180 = por %p178, %p179
      %p182 = scmp.ne.s32.totalorder %s165, %s181
      %p183 = scmp.eq.s32.totalorder %s39, 0
      %p184 = por %p182, %p183
      %s185 = ssub.s32 %s40, %s52
      %p186 = scmp.eq.s32.totalorder %s185, 0
      %s188 = sadd.s32 %s187, 1
      %s189 = scalar_select %p186, %s187, %s188
      %p192 = pneg %p186
      %p193 = scmp.eq.s32.totalorder %s33, 1
      %p194 = por %p192, %p193
      %p195 = scmp.ne.s32.totalorder %s187, %s190
      %p196 = scmp.eq.s32.totalorder %s33, 0
      %p197 = por %p195, %p196
      %p198 = scmp.ne.s32.totalorder %s187, %s190
      %p199 = scmp.eq.s32.totalorder %s38, 1
      %p200 = por %p198, %p199
      %p201 = scmp.ne.s32.totalorder %s190, %s191
      %p202 = scmp.eq.s32.totalorder %s38, 0
      %p203 = por %p201, %p202
      %p204 = scmp.ne.s32.totalorder %s190, %s191
      %p205 = scmp.eq.s32.totalorder %s39, 1
      %p206 = por %p204, %p205
      %p208 = scmp.ne.s32.totalorder %s191, %s207
      %p209 = scmp.eq.s32.totalorder %s39, 0
      %p210 = por %p208, %p209
      %s212 = sadd.s32 %s211, 1
      %p215 = scmp.eq.s32.totalorder %s33, 1
      %p216 = scmp.ne.s32.totalorder %s211, %s213
      %p217 = scmp.eq.s32.totalorder %s33, 0
      %p218 = por %p216, %p217
      %p219 = scmp.ne.s32.totalorder %s211, %s213
      %p220 = scmp.eq.s32.totalorder %s38, 1
      %p221 = por %p219, %p220
      %p222 = scmp.ne.s32.totalorder %s213, %s214
      %p223 = scmp.eq.s32.totalorder %s38, 0
      %p224 = por %p222, %p223
      %p225 = scmp.ne.s32.totalorder %s213, %s214
      %p226 = scmp.eq.s32.totalorder %s39, 1
      %p227 = por %p225, %p226
      %p229 = scmp.ne.s32.totalorder %s214, %s228
      %p230 = scmp.eq.s32.totalorder %s39, 0
      %p231 = por %p229, %p230
      %s233 = sadd.s32 %s232, 1
      %p236 = scmp.eq.s32.totalorder %s33, 1
      %p237 = scmp.ne.s32.totalorder %s232, %s234
      %p238 = scmp.eq.s32.totalorder %s33, 0
      %p239 = por %p237, %p238
      %p240 = scmp.ne.s32.totalorder %s232, %s234
      %p241 = scmp.eq.s32.totalorder %s38, 1
      %p242 = por %p240, %p241
      %p243 = scmp.ne.s32.totalorder %s234, %s235
      %p244 = scmp.eq.s32.totalorder %s38, 0
      %p245 = por %p243, %p244
      %p246 = scmp.ne.s32.totalorder %s234, %s235
      %p247 = scmp.eq.s32.totalorder %s39, 1
      %p248 = por %p246, %p247
      %p250 = scmp.ne.s32.totalorder %s235, %s249
      %p251 = scmp.eq.s32.totalorder %s39, 0
      %p252 = por %p250, %p251
      %s254 = sadd.s32 %s253, 1
      %p257 = scmp.eq.s32.totalorder %s33, 1
      %p258 = scmp.ne.s32.totalorder %s253, %s255
      %p259 = scmp.eq.s32.totalorder %s33, 0
      %p260 = por %p258, %p259
      %p261 = scmp.ne.s32.totalorder %s253, %s255
      %p262 = scmp.eq.s32.totalorder %s38, 1
      %p263 = por %p261, %p262
      %p264 = scmp.ne.s32.totalorder %s255, %s256
      %p265 = scmp.eq.s32.totalorder %s38, 0
      %p266 = por %p264, %p265
      %p267 = scmp.ne.s32.totalorder %s255, %s256
      %p268 = scmp.eq.s32.totalorder %s39, 1
      %p269 = por %p267, %p268
      %p271 = scmp.ne.s32.totalorder %s256, %s270
      %p272 = scmp.eq.s32.totalorder %s39, 0
      %p273 = por %p271, %p272
      %s275 = sadd.s32 %s274, 1
      %p278 = scmp.eq.s32.totalorder %s33, 1
      %p279 = scmp.ne.s32.totalorder %s274, %s276
      %p280 = scmp.eq.s32.totalorder %s33, 0
      %p281 = por %p279, %p280
      %p282 = scmp.ne.s32.totalorder %s274, %s276
      %p283 = scmp.eq.s32.totalorder %s38, 1
      %p284 = por %p282, %p283
      %p285 = scmp.ne.s32.totalorder %s276, %s277
      %p286 = scmp.eq.s32.totalorder %s38, 0
      %p287 = por %p285, %p286
      %p288 = scmp.ne.s32.totalorder %s276, %s277
      %p289 = scmp.eq.s32.totalorder %s39, 1
      %p290 = por %p288, %p289
      %p292 = scmp.ne.s32.totalorder %s277, %s291
      %p293 = scmp.eq.s32.totalorder %s39, 0
      %p294 = por %p292, %p293
      %s296 = sadd.s32 %s295, 1
      %p299 = scmp.eq.s32.totalorder %s33, 1
      %p300 = scmp.ne.s32.totalorder %s295, %s297
      %p301 = scmp.eq.s32.totalorder %s33, 0
      %p302 = por %p300, %p301
      %p303 = scmp.ne.s32.totalorder %s295, %s297
      %p304 = scmp.eq.s32.totalorder %s38, 1
      %p305 = por %p303, %p304
      %p306 = scmp.ne.s32.totalorder %s297, %s298
      %p307 = scmp.eq.s32.totalorder %s38, 0
      %p308 = por %p306, %p307
      %p309 = scmp.ne.s32.totalorder %s297, %s298
      %p310 = scmp.eq.s32.totalorder %s39, 1
      %p311 = por %p309, %p310
      %p313 = scmp.ne.s32.totalorder %s298, %s312
      %p314 = scmp.eq.s32.totalorder %s39, 0
      %p315 = por %p313, %p314
      %s317 = sadd.s32 %s316, 1
      %p320 = scmp.eq.s32.totalorder %s33, 1
      %p321 = scmp.ne.s32.totalorder %s316, %s318
      %p322 = scmp.eq.s32.totalorder %s33, 0
      %p323 = por %p321, %p322
      %p324 = scmp.ne.s32.totalorder %s316, %s318
      %p325 = scmp.eq.s32.totalorder %s38, 1
      %p326 = por %p324, %p325
      %p327 = scmp.ne.s32.totalorder %s318, %s319
      %p328 = scmp.eq.s32.totalorder %s38, 0
      %p329 = por %p327, %p328
      %p330 = scmp.ne.s32.totalorder %s318, %s319
      %p331 = scmp.eq.s32.totalorder %s39, 1
      %p332 = por %p330, %p331
      %p334 = scmp.ne.s32.totalorder %s319, %s333
      %p335 = scmp.eq.s32.totalorder %s39, 0
      %p336 = por %p334, %p335
      %s338 = sadd.s32 %s337, 1
      %p341 = scmp.eq.s32.totalorder %s33, 1
      %p342 = scmp.ne.s32.totalorder %s337, %s339
      %p343 = scmp.eq.s32.totalorder %s33, 0
      %p344 = por %p342, %p343
      %p345 = scmp.ne.s32.totalorder %s337, %s339
      %p346 = scmp.eq.s32.totalorder %s38, 1
      %p347 = por %p345, %p346
      %p348 = scmp.ne.s32.totalorder %s339, %s340
      %p349 = scmp.eq.s32.totalorder %s38, 0
      %p350 = por %p348, %p349
      %p351 = scmp.ne.s32.totalorder %s339, %s340
      %p352 = scmp.eq.s32.totalorder %s39, 1
      %p353 = por %p351, %p352
      %p355 = scmp.ne.s32.totalorder %s340, %s354
      %p356 = scmp.eq.s32.totalorder %s39, 0
      %p357 = por %p355, %p356
      %s359 = sadd.s32 %s358, 1
      %p362 = scmp.eq.s32.totalorder %s33, 1
      %p363 = scmp.ne.s32.totalorder %s358, %s360
      %p364 = scmp.eq.s32.totalorder %s33, 0
      %p365 = por %p363, %p364
      %p366 = scmp.ne.s32.totalorder %s358, %s360
      %p367 = scmp.eq.s32.totalorder %s38, 1
      %p368 = por %p366, %p367
      %p369 = scmp.ne.s32.totalorder %s360, %s361
      %p370 = scmp.eq.s32.totalorder %s38, 0
      %p371 = por %p369, %p370
      %p372 = scmp.ne.s32.totalorder %s360, %s361
      %p373 = scmp.eq.s32.totalorder %s39, 1
      %p374 = por %p372, %p373
      %p376 = scmp.ne.s32.totalorder %s361, %s375
      %p377 = scmp.eq.s32.totalorder %s39, 0
      %p378 = por %p376, %p377
      %s380 = sadd.s32 %s379, 1
      %p383 = scmp.eq.s32.totalorder %s33, 1
      %p384 = scmp.ne.s32.totalorder %s379, %s381
      %p385 = scmp.eq.s32.totalorder %s33, 0
      %p386 = por %p384, %p385
      %p387 = scmp.ne.s32.totalorder %s379, %s381
      %p388 = scmp.eq.s32.totalorder %s38, 1
      %p389 = por %p387, %p388
      %p390 = scmp.ne.s32.totalorder %s381, %s382
      %p391 = scmp.eq.s32.totalorder %s38, 0
      %p392 = por %p390, %p391
      %p393 = scmp.ne.s32.totalorder %s381, %s382
      %p394 = scmp.eq.s32.totalorder %s39, 1
      %p395 = por %p393, %p394
      %p397 = scmp.ne.s32.totalorder %s382, %s396
      %p398 = scmp.eq.s32.totalorder %s39, 0
      %p399 = por %p397, %p398
      %s401 = sadd.s32 %s400, 1
      %p404 = scmp.eq.s32.totalorder %s33, 1
      %p405 = scmp.ne.s32.totalorder %s400, %s402
      %p406 = scmp.eq.s32.totalorder %s33, 0
      %p407 = por %p405, %p406
      %p408 = scmp.ne.s32.totalorder %s400, %s402
      %p409 = scmp.eq.s32.totalorder %s38, 1
      %p410 = por %p408, %p409
      %p411 = scmp.ne.s32.totalorder %s402, %s403
      %p412 = scmp.eq.s32.totalorder %s38, 0
      %p413 = por %p411, %p412
      %p414 = scmp.ne.s32.totalorder %s402, %s403
      %p415 = scmp.eq.s32.totalorder %s39, 1
      %p416 = por %p414, %p415
      %p418 = scmp.ne.s32.totalorder %s403, %s417
      %p419 = scmp.eq.s32.totalorder %s39, 0
      %p420 = por %p418, %p419
      %s422 = sadd.s32 %s421, 1
      %p425 = scmp.eq.s32.totalorder %s33, 1
      %p426 = scmp.ne.s32.totalorder %s421, %s423
      %p427 = scmp.eq.s32.totalorder %s33, 0
      %p428 = por %p426, %p427
      %p429 = scmp.ne.s32.totalorder %s421, %s423
      %p430 = scmp.eq.s32.totalorder %s38, 1
      %p431 = por %p429, %p430
      %p432 = scmp.ne.s32.totalorder %s423, %s424
      %p433 = scmp.eq.s32.totalorder %s38, 0
      %p434 = por %p432, %p433
      %p435 = scmp.ne.s32.totalorder %s423, %s424
      %p436 = scmp.eq.s32.totalorder %s39, 1
      %p437 = por %p435, %p436
      %p439 = scmp.ne.s32.totalorder %s424, %s438
      %p440 = scmp.eq.s32.totalorder %s39, 0
      %p441 = por %p439, %p440
      %s443 = sadd.s32 %s442, 1
      %p446 = scmp.eq.s32.totalorder %s33, 1
      %p447 = scmp.ne.s32.totalorder %s442, %s444
      %p448 = scmp.eq.s32.totalorder %s33, 0
      %p449 = por %p447, %p448
      %p450 = scmp.ne.s32.totalorder %s442, %s444
      %p451 = scmp.eq.s32.totalorder %s38, 1
      %p452 = por %p450, %p451
      %p453 = scmp.ne.s32.totalorder %s444, %s445
      %p454 = scmp.eq.s32.totalorder %s38, 0
      %p455 = por %p453, %p454
      %p456 = scmp.ne.s32.totalorder %s444, %s445
      %p457 = scmp.eq.s32.totalorder %s39, 1
      %p458 = por %p456, %p457
      %p460 = scmp.ne.s32.totalorder %s445, %s459
      %p461 = scmp.eq.s32.totalorder %s39, 0
      %p462 = por %p460, %p461
      %s464 = sadd.s32 %s463, 1
      %p467 = scmp.eq.s32.totalorder %s33, 1
      %p468 = scmp.ne.s32.totalorder %s463, %s465
      %p469 = scmp.eq.s32.totalorder %s33, 0
      %p470 = por %p468, %p469
      %p471 = scmp.ne.s32.totalorder %s463, %s465
      %p472 = scmp.eq.s32.totalorder %s38, 1
      %p473 = por %p471, %p472
      %p474 = scmp.ne.s32.totalorder %s465, %s466
      %p475 = scmp.eq.s32.totalorder %s38, 0
      %p476 = por %p474, %p475
      %p477 = scmp.ne.s32.totalorder %s465, %s466
      %p478 = scmp.eq.s32.totalorder %s39, 1
      %p479 = por %p477, %p478
      %p481 = scmp.ne.s32.totalorder %s466, %s480
      %p482 = scmp.eq.s32.totalorder %s39, 0
      %p483 = por %p481, %p482
      %s485 = sadd.s32 %s484, 1
      %p488 = scmp.eq.s32.totalorder %s33, 1
      %p489 = scmp.ne.s32.totalorder %s484, %s486
      %p490 = scmp.eq.s32.totalorder %s33, 0
      %p491 = por %p489, %p490
      %p492 = scmp.ne.s32.totalorder %s484, %s486
      %p493 = scmp.eq.s32.totalorder %s38, 1
      %p494 = por %p492, %p493
      %p495 = scmp.ne.s32.totalorder %s486, %s487
      %p496 = scmp.eq.s32.totalorder %s38, 0
      %p497 = por %p495, %p496
      %p498 = scmp.ne.s32.totalorder %s486, %s487
      %p499 = scmp.eq.s32.totalorder %s39, 1
      %p500 = por %p498, %p499
      %p502 = scmp.ne.s32.totalorder %s487, %s501
      %p503 = scmp.eq.s32.totalorder %s39, 0
      %p504 = por %p502, %p503
      %s506 = sadd.s32 %s505, 1
      %p509 = scmp.eq.s32.totalorder %s33, 1
      %p510 = scmp.ne.s32.totalorder %s505, %s507
      %p511 = scmp.eq.s32.totalorder %s33, 0
      %p512 = por %p510, %p511
      %p513 = scmp.ne.s32.totalorder %s505, %s507
      %p514 = scmp.eq.s32.totalorder %s38, 1
      %p515 = por %p513, %p514
      %p516 = scmp.ne.s32.totalorder %s507, %s508
      %p517 = scmp.eq.s32.totalorder %s38, 0
      %p518 = por %p516, %p517
      %p519 = scmp.ne.s32.totalorder %s507, %s508
      %p520 = scmp.eq.s32.totalorder %s39, 1
      %p521 = por %p519, %p520
      %p523 = scmp.ne.s32.totalorder %s508, %s522
      %p524 = scmp.eq.s32.totalorder %s39, 0
      %p525 = por %p523, %p524
      %s527 = sadd.s32 %s526, 1
      %p530 = scmp.eq.s32.totalorder %s33, 1
      %p531 = scmp.ne.s32.totalorder %s526, %s528
      %p532 = scmp.eq.s32.totalorder %s33, 0
      %p533 = por %p531, %p532
      %p534 = scmp.ne.s32.totalorder %s526, %s528
      %p535 = scmp.eq.s32.totalorder %s38, 1
      %p536 = por %p534, %p535
      %p537 = scmp.ne.s32.totalorder %s528, %s529
      %p538 = scmp.eq.s32.totalorder %s38, 0
      %p539 = por %p537, %p538
      %p540 = scmp.ne.s32.totalorder %s528, %s529
      %p541 = scmp.eq.s32.totalorder %s39, 1
      %p542 = por %p540, %p541
      %p544 = scmp.ne.s32.totalorder %s529, %s543
      %p545 = scmp.eq.s32.totalorder %s39, 0
      %p546 = por %p544, %p545
      %s548 = sadd.s32 %s547, 1
      %p551 = scmp.eq.s32.totalorder %s33, 1
      %p552 = scmp.ne.s32.totalorder %s547, %s549
      %p553 = scmp.eq.s32.totalorder %s33, 0
      %p554 = por %p552, %p553
      %p555 = scmp.ne.s32.totalorder %s547, %s549
      %p556 = scmp.eq.s32.totalorder %s38, 1
      %p557 = por %p555, %p556
      %p558 = scmp.ne.s32.totalorder %s549, %s550
      %p559 = scmp.eq.s32.totalorder %s38, 0
      %p560 = por %p558, %p559
      %p561 = scmp.ne.s32.totalorder %s549, %s550
      %p562 = scmp.eq.s32.totalorder %s39, 1
      %p563 = por %p561, %p562
      %p565 = scmp.ne.s32.totalorder %s550, %s564
      %p566 = scmp.eq.s32.totalorder %s39, 0
      %p567 = por %p565, %p566
      %s569 = sadd.s32 %s568, 1
      %p572 = scmp.eq.s32.totalorder %s33, 1
      %p573 = scmp.ne.s32.totalorder %s568, %s570
      %p574 = scmp.eq.s32.totalorder %s33, 0
      %p575 = por %p573, %p574
      %p576 = scmp.ne.s32.totalorder %s568, %s570
      %p577 = scmp.eq.s32.totalorder %s38, 1
      %p578 = por %p576, %p577
      %p579 = scmp.ne.s32.totalorder %s570, %s571
      %p580 = scmp.eq.s32.totalorder %s38, 0
      %p581 = por %p579, %p580
      %p582 = scmp.ne.s32.totalorder %s570, %s571
      %p583 = scmp.eq.s32.totalorder %s39, 1
      %p584 = por %p582, %p583
      %p586 = scmp.ne.s32.totalorder %s571, %s585
      %p587 = scmp.eq.s32.totalorder %s39, 0
      %p588 = por %p586, %p587
      %s589 = ssub.s32 %s40, %s52
      %s590 = ssub.s32 %s41, %s48
      %s591 = sor.u32 %s589, %s590
      %p592 = scmp.eq.s32.totalorder %s591, 0
      %s594 = sadd.s32 %s593, 1
      %s595 = scalar_select %p592, %s593, %s594
      %p598 = pneg %p592
      %p599 = scmp.eq.s32.totalorder %s33, 1
      %p600 = por %p598, %p599
      %p601 = scmp.ne.s32.totalorder %s593, %s596
      %p602 = scmp.eq.s32.totalorder %s33, 0
      %p603 = por %p601, %p602
      %p604 = scmp.ne.s32.totalorder %s593, %s596
      %p605 = scmp.eq.s32.totalorder %s38, 1
      %p606 = por %p604, %p605
      %p607 = scmp.ne.s32.totalorder %s596, %s597
      %p608 = scmp.eq.s32.totalorder %s38, 0
      %p609 = por %p607, %p608
      %p610 = scmp.ne.s32.totalorder %s596, %s597
      %p611 = scmp.eq.s32.totalorder %s39, 1
      %p612 = por %p610, %p611
      %p614 = scmp.ne.s32.totalorder %s597, %s613
      %p615 = scmp.eq.s32.totalorder %s39, 0
      %p616 = por %p614, %p615
      %p617 = scmp.le.s32.totalorder 1, %s33
      %p618 = scmp.lt.s32.totalorder %s33, 3
      %p619 = pnand %p617, %p618
      %p620 = pneg %p619
      // Predicated region
      $region9: #{fwd.8} parent=5 // pred_check
        _
      $region10: #{fwd.8} parent=5 // pred_check_branch
        %622 = sbr.rel (%p619) target = $region12
      $region11: #{fwd.8} parent=5 // pred_region
        %s623 = ssub.s32 %s33, 1
        // Predicated region
        $region13: #{fwd.8} parent=11 // pred_check
          %p624 = pneg %p99
        $region14: #{fwd.8} parent=11 // pred_check_branch
          %626 = sbr.rel (%p624) target = $region16
        $region15: #{fwd.8} parent=11 // pred_region
          %s627 = smul.u32 2, %s43
          %p628 = scmp.lt.s32.totalorder %s627, 1
          %s629 = scalar_select %p628, %s627, 1
          %s630 = smul.addr %s629, 8
          %s631 = scalar_lea.vmem %s1, %s630
          %s632 = smul.u32 2, %s43
        $region16: #{fwd.8} parent=11 // pred_fallthru
          _
        // Predicated region
        $region17: #{fwd.8} parent=11 // pred_check
          %p633 = pneg %p224
        $region18: #{fwd.8} parent=11 // pred_check_branch
          %635 = sbr.rel (%p633) target = $region20
        $region19: #{fwd.8} parent=11 // pred_region
          _
        $region20: #{fwd.8} parent=11 // pred_fallthru
          _
        // Predicated region
        $region21: #{fwd.8} parent=11 // pred_check
          %p636 = pneg %p245
        $region22: #{fwd.8} parent=11 // pred_check_branch
          %638 = sbr.rel (%p636) target = $region24
        $region23: #{fwd.8} parent=11 // pred_region
          _
        $region24: #{fwd.8} parent=11 // pred_fallthru
          _
        // Predicated region
        $region25: #{fwd.8} parent=11 // pred_check
          %p639 = pneg %p266
        $region26: #{fwd.8} parent=11 // pred_check_branch
          %641 = sbr.rel (%p639) target = $region28
        $region27: #{fwd.8} parent=11 // pred_region
          _
        $region28: #{fwd.8} parent=11 // pred_fallthru
          _
        // Predicated region
        $region29: #{fwd.8} parent=11 // pred_check
          %p642 = pneg %p287
        $region30: #{fwd.8} parent=11 // pred_check_branch
          %644 = sbr.rel (%p642) target = $region32
        $region31: #{fwd.8} parent=11 // pred_region
          _
        $region32: #{fwd.8} parent=11 // pred_fallthru
          _
        // Predicated region
        $region33: #{fwd.8} parent=11 // pred_check
          %p645 = pneg %p308
        $region34: #{fwd.8} parent=11 // pred_check_branch
          %647 = sbr.rel (%p645) target = $region36
        $region35: #{fwd.8} parent=11 // pred_region
          _
        $region36: #{fwd.8} parent=11 // pred_fallthru
          _
        // Predicated region
        $region37: #{fwd.8} parent=11 // pred_check
          %p648 = pneg %p329
        $region38: #{fwd.8} parent=11 // pred_check_branch
          %650 = sbr.rel (%p648) target = $region40
        $region39: #{fwd.8} parent=11 // pred_region
          _
        $region40: #{fwd.8} parent=11 // pred_fallthru
          _
        // Predicated region
        $region41: #{fwd.8} parent=11 // pred_check
          %p651 = pneg %p350
        $region42: #{fwd.8} parent=11 // pred_check_branch
          %653 = sbr.rel (%p651) target = $region44
        $region43: #{fwd.8} parent=11 // pred_region
          _
        $region44: #{fwd.8} parent=11 // pred_fallthru
          _
        // Predicated region
        $region45: #{fwd.8} parent=11 // pred_check
          %p654 = pneg %p371
        $region46: #{fwd.8} parent=11 // pred_check_branch
          %656 = sbr.rel (%p654) target = $region48
        $region47: #{fwd.8} parent=11 // pred_region
          _
        $region48: #{fwd.8} parent=11 // pred_fallthru
          _
        // Predicated region
        $region49: #{fwd.8} parent=11 // pred_check
          %p657 = pneg %p392
        $region50: #{fwd.8} parent=11 // pred_check_branch
          %659 = sbr.rel (%p657) target = $region52
        $region51: #{fwd.8} parent=11 // pred_region
          _
        $region52: #{fwd.8} parent=11 // pred_fallthru
          _
        // Predicated region
        $region53: #{fwd.8} parent=11 // pred_check
          %p660 = pneg %p413
        $region54: #{fwd.8} parent=11 // pred_check_branch
          %662 = sbr.rel (%p660) target = $region56
        $region55: #{fwd.8} parent=11 // pred_region
          _
        $region56: #{fwd.8} parent=11 // pred_fallthru
          _
        // Predicated region
        $region57: #{fwd.8} parent=11 // pred_check
          %p663 = pneg %p434
        $region58: #{fwd.8} parent=11 // pred_check_branch
          %665 = sbr.rel (%p663) target = $region60
        $region59: #{fwd.8} parent=11 // pred_region
          _
        $region60: #{fwd.8} parent=11 // pred_fallthru
          _
        // Predicated region
        $region61: #{fwd.8} parent=11 // pred_check
          %p666 = pneg %p455
        $region62: #{fwd.8} parent=11 // pred_check_branch
          %668 = sbr.rel (%p666) target = $region64
        $region63: #{fwd.8} parent=11 // pred_region
          _
        $region64: #{fwd.8} parent=11 // pred_fallthru
          _
        // Predicated region
        $region65: #{fwd.8} parent=11 // pred_check
          %p669 = pneg %p476
        $region66: #{fwd.8} parent=11 // pred_check_branch
          %671 = sbr.rel (%p669) target = $region68
        $region67: #{fwd.8} parent=11 // pred_region
          _
        $region68: #{fwd.8} parent=11 // pred_fallthru
          _
        // Predicated region
        $region69: #{fwd.8} parent=11 // pred_check
          %p672 = pneg %p497
        $region70: #{fwd.8} parent=11 // pred_check_branch
          %674 = sbr.rel (%p672) target = $region72
        $region71: #{fwd.8} parent=11 // pred_region
          _
        $region72: #{fwd.8} parent=11 // pred_fallthru
          _
        // Predicated region
        $region73: #{fwd.8} parent=11 // pred_check
          %p675 = pneg %p518
        $region74: #{fwd.8} parent=11 // pred_check_branch
          %677 = sbr.rel (%p675) target = $region76
        $region75: #{fwd.8} parent=11 // pred_region
          _
        $region76: #{fwd.8} parent=11 // pred_fallthru
          _
        // Predicated region
        $region77: #{fwd.8} parent=11 // pred_check
          %p678 = pneg %p539
        $region78: #{fwd.8} parent=11 // pred_check_branch
          %680 = sbr.rel (%p678) target = $region80
        $region79: #{fwd.8} parent=11 // pred_region
          _
        $region80: #{fwd.8} parent=11 // pred_fallthru
          _
        // Predicated region
        $region81: #{fwd.8} parent=11 // pred_check
          %p681 = pneg %p560
        $region82: #{fwd.8} parent=11 // pred_check_branch
          %683 = sbr.rel (%p681) target = $region84
        $region83: #{fwd.8} parent=11 // pred_region
          _
        $region84: #{fwd.8} parent=11 // pred_fallthru
          _
        // Predicated region
        $region85: #{fwd.8} parent=11 // pred_check
          %p684 = pneg %p581
        $region86: #{fwd.8} parent=11 // pred_check_branch
          %686 = sbr.rel (%p684) target = $region88
        $region87: #{fwd.8} parent=11 // pred_region
          _
        $region88: #{fwd.8} parent=11 // pred_fallthru
          _
      $region12: #{fwd.8} parent=5 // pred_fallthru
        _
      %p687 = scmp.lt.s32.totalorder %s33, 2
      // Predicated region
      $region89: #{fwd.8} parent=5 // pred_check
        %p688 = pneg %p687
      $region90: #{fwd.8} parent=5 // pred_check_branch
        %690 = sbr.rel (%p688) target = $region92
      $region91: #{fwd.8} parent=5 // pred_region
        // Predicated region
        $region93: #{fwd.8} parent=91 // pred_check
          %p691 = pneg %p67
        $region94: #{fwd.8} parent=91 // pred_check_branch
          %693 = sbr.rel (%p691) target = $region96
        $region95: #{fwd.8} parent=91 // pred_region
          %s694 = smul.u32 2, %s41
          %p695 = scmp.lt.s32.totalorder %s40, 1
          %s696 = scalar_select %p695, %s40, 1
          %p697 = scmp.lt.s32.totalorder %s694, 1
          %s698 = scalar_select %p697, %s694, 1
          %s699 = smul.addr %s696, 2
          %s700 = sadd.s32 %s698, %s699
          %s701 = smul.addr %s700, 8
          %s702 = scalar_lea.vmem %s0, %s701
          %s703 = smul.u32 2, %s41
        $region96: #{fwd.8} parent=91 // pred_fallthru
          _
        // Predicated region
        $region97: #{fwd.8} parent=91 // pred_check
          %p704 = pneg %p119
        $region98: #{fwd.8} parent=91 // pred_check_branch
          %706 = sbr.rel (%p704) target = $region100
        $region99: #{fwd.8} parent=91 // pred_region
          %p707 = scmp.lt.s32.totalorder %s40, 1
          %s708 = scalar_select %p707, %s40, 1
          %s709 = smul.addr %s708, 8
          %s710 = smul.addr %s709, 4
          %s711 = scalar_lea.vmem %s2, %s710
        $region100: #{fwd.8} parent=91 // pred_fallthru
          _
        // Predicated region
        $region101: #{fwd.8} parent=91 // pred_check
          %p712 = pneg %p145
        $region102: #{fwd.8} parent=91 // pred_check_branch
          %714 = sbr.rel (%p712) target = $region104
        $region103: #{fwd.8} parent=91 // pred_region
          %p715 = scmp.lt.s32.totalorder %s40, 1
          %s716 = scalar_select %p715, %s40, 1
          %s717 = smul.addr %s716, 8
          %s718 = smul.addr %s717, 4
          %s719 = scalar_lea.vmem %s3, %s718
        $region104: #{fwd.8} parent=91 // pred_fallthru
          _
        // Predicated region
        $region105: #{fwd.8} parent=91 // pred_check
          %p720 = pneg %p171
        $region106: #{fwd.8} parent=91 // pred_check_branch
          %722 = sbr.rel (%p720) target = $region108
        $region107: #{fwd.8} parent=91 // pred_region
          %p723 = scmp.lt.s32.totalorder %s40, 1
          %s724 = scalar_select %p723, %s40, 1
          %s725 = smul.addr %s724, 8
          %s726 = smul.addr %s725, 4
          %s727 = scalar_lea.vmem %s4, %s726
        $region108: #{fwd.8} parent=91 // pred_fallthru
          _
        // Predicated region
        $region109: #{fwd.8} parent=91 // pred_check
          %p728 = pneg %p197
        $region110: #{fwd.8} parent=91 // pred_check_branch
          %730 = sbr.rel (%p728) target = $region112
        $region111: #{fwd.8} parent=91 // pred_region
          %p731 = scmp.lt.s32.totalorder %s40, 1
          %s732 = scalar_select %p731, %s40, 1
          %s733 = smul.addr %s732, 8
          %s734 = smul.addr %s733, 4
          %s735 = scalar_lea.vmem %s5, %s734
        $region112: #{fwd.8} parent=91 // pred_fallthru
          _
      $region92: #{fwd.8} parent=5 // pred_fallthru
        _
      %p736 = scmp.le.s32.totalorder 1, %s33
      %p737 = scmp.lt.s32.totalorder %s33, 3
      %p738 = pnand %p736, %p737
      %p739 = pneg %p738
      // Predicated region
      $region113: #{fwd.8} parent=5 // pred_check
        _
      $region114: #{fwd.8} parent=5 // pred_check_branch
        %741 = sbr.rel (%p738) target = $region116
      $region115: #{fwd.8} parent=5 // pred_region
        %s742 = ssub.s32 %s33, 1
        %s743 = smul.u32 2, %s43
        %p744 = scmp.lt.s32.totalorder %s42, 1
        %s745 = scalar_select %p744, %s42, 1
        %p746 = scmp.lt.s32.totalorder %s743, 1
        %s747 = scalar_select %p746, %s743, 1
        %s748 = smul.addr %s745, 2
        %s749 = sadd.s32 %s747, %s748
        %s750 = smul.addr %s749, 8
        %s751 = scalar_lea.vmem %s0, %s750
        %p752 = pneg %p73
        %p753 = pneg %p70
        %s754 = smul.u32 2, %s43
        %p755 = scmp.lt.s32.totalorder %s754, 1
        %s756 = scalar_select %p755, %s754, 1
        %s757 = smul.addr %s756, 8
        %s758 = scalar_lea.vmem %s1, %s757
        %p759 = pneg %p99
        %p760 = pneg %p96
        %p761 = scmp.lt.s32.totalorder %s42, 1
        %s762 = scalar_select %p761, %s42, 1
        %s763 = smul.addr %s762, 8
        %s764 = smul.addr %s763, 4
        %s765 = scalar_lea.vmem %s2, %s764
        %p766 = pneg %p125
        %p767 = pneg %p122
        %p768 = scmp.lt.s32.totalorder %s42, 1
        %s769 = scalar_select %p768, %s42, 1
        %s770 = smul.addr %s769, 8
        %s771 = smul.addr %s770, 4
        %s772 = scalar_lea.vmem %s3, %s771
        %p773 = pneg %p151
        %p774 = pneg %p148
        %p775 = scmp.lt.s32.totalorder %s42, 1
        %s776 = scalar_select %p775, %s42, 1
        %s777 = smul.addr %s776, 8
        %s778 = smul.addr %s777, 4
        %s779 = scalar_lea.vmem %s4, %s778
        %p780 = pneg %p177
        %p781 = pneg %p174
        %p782 = scmp.lt.s32.totalorder %s42, 1
        %s783 = scalar_select %p782, %s42, 1
        %s784 = smul.addr %s783, 8
        %s785 = smul.addr %s784, 4
        %s786 = scalar_lea.vmem %s5, %s785
        %p787 = pneg %p203
        %p788 = pneg %p200
        %p789 = pneg %p224
        %p790 = pneg %p221
        %p791 = pneg %p245
        %p792 = pneg %p242
        %p793 = pneg %p266
        %p794 = pneg %p263
        %p795 = pneg %p287
        %p796 = pneg %p284
        %p797 = pneg %p308
        %p798 = pneg %p305
        %p799 = pneg %p329
        %p800 = pneg %p326
        %p801 = pneg %p350
        %p802 = pneg %p347
        %p803 = pneg %p371
        %p804 = pneg %p368
        %p805 = pneg %p392
        %p806 = pneg %p389
        %p807 = pneg %p413
        %p808 = pneg %p410
        %p809 = pneg %p434
        %p810 = pneg %p431
        %p811 = pneg %p455
        %p812 = pneg %p452
        %p813 = pneg %p476
        %p814 = pneg %p473
        %p815 = pneg %p497
        %p816 = pneg %p494
        %p817 = pneg %p518
        %p818 = pneg %p515
        %p819 = pneg %p539
        %p820 = pneg %p536
        %p821 = pneg %p560
        %p822 = pneg %p557
        %p823 = pneg %p581
        %p824 = pneg %p578
        %p825 = pneg %p609
        %p826 = pneg %p606
        %s827 = sand.u32 %s596, 1
        %s828 = scalar_lea.sflag [#allocation3], %s827
        %s829 = sand.u32 %s596, 1
        %s830 = smul.addr %s829, 16
        %s831 = scalar_lea.vmem [#allocation2], %s830
        %s832 = smul.u32 2, %s43
        %p833 = scmp.lt.s32.totalorder %s42, 1
        %s834 = scalar_select %p833, %s42, 1
        %p835 = scmp.lt.s32.totalorder %s832, 1
        %s836 = scalar_select %p835, %s832, 1
        %s837 = smul.addr %s834, 2
        %s838 = sadd.s32 %s836, %s837
        %s839 = smul.addr %s838, 8
        %s840 = scalar_lea.vmem %s0, %s839
        %s841 = smul.u32 2, %s43
        %s842 = smul.u32 2, %s43
        %p843 = scmp.lt.s32.totalorder %s842, 1
        %s844 = scalar_select %p843, %s842, 1
        %s845 = smul.addr %s844, 8
        %s846 = scalar_lea.vmem %s1, %s845
        %s847 = smul.u32 2, %s43
        %p848 = scmp.lt.s32.totalorder %s42, 1
        %s849 = scalar_select %p848, %s42, 1
        %s850 = smul.addr %s849, 8
        %s851 = smul.addr %s850, 4
        %s852 = scalar_lea.vmem %s2, %s851
        %p853 = scmp.lt.s32.totalorder %s42, 1
        %s854 = scalar_select %p853, %s42, 1
        %s855 = smul.addr %s854, 8
        %s856 = smul.addr %s855, 4
        %s857 = scalar_lea.vmem %s3, %s856
        %p858 = scmp.lt.s32.totalorder %s42, 1
        %s859 = scalar_select %p858, %s42, 1
        %s860 = smul.addr %s859, 8
        %s861 = smul.addr %s860, 4
        %s862 = scalar_lea.vmem %s4, %s861
        %p863 = scmp.lt.s32.totalorder %s42, 1
        %s864 = scalar_select %p863, %s42, 1
        %s865 = smul.addr %s864, 8
        %s866 = smul.addr %s865, 4
        %s867 = scalar_lea.vmem %s5, %s866
        %s868 = smul.u32 2, %s43
        %v870 = vld [vmem:[%s840] sm:$0xff]
        %v871 = vld [vmem:[%s840 + $0x8] sm:$0xff]
        %v872 = vld [vmem:[%s846] sm:$0xff]
        %v873 = vld [vmem:[%s846 + $0x8] sm:$0xff]
        %v874 = vadd.f32 %v870, %v872
        %v875 = vadd.f32 %v871, %v873
        %v876 = vld [vmem:[%s6] sm:$0xf]
        %v877 = vld [vmem:[%s6 + $0x4] sm:$0xf]
        %v878 = vld [vmem:[%s6 + $0x8] sm:$0xf]
        %v879 = vld [vmem:[%s6 + $0xc] sm:$0xf]
        %v880 = vpack.c.bf16 %v875, %v874
        %v881 = vld [vmem:[%s7] sm:$0x1]
        %v883 = vlaneseq
        %v884 = vshrl.u32 %v883, 7
        %v885 = vsub.s32 0, %v884
        %v886 = vrot.slane %v881, %v885
        %v892 = vunpack.c.l.b16 %v876
        %v893 = vunpack.c.l.b16 %v877
        %v894 = vunpack.c.l.b16 %v878
        %v895 = vunpack.c.l.b16 %v879
        %v896 = vpack.c.b16 %v893, %v892
        %v897 = vpack.c.b16 %v895, %v894
        %vm900 = vcmask 261120
        %v902 = vsel %vm900, %v880, 0
        %904 = vmatprep.subr.bf16.mxu0 0
        %905 = vmatpush1.bf16.msra.mxu0 %v896
        %906 = vmatprep.subr.bf16.mxu0 0
        %907 = vmatpush1.bf16.msra.mxu0 %v897
        %908 = vmatprep.subr.bf16.mxu0 0
        %909 = vmatpush1.bf16.msra.mxu0 0
        %910 = vmatprep.subr.bf16.mxu0 0
        %911 = vmatpush1.bf16.msra.mxu0 0
        %912 = vmatprep.subr.bf16.mxu0 0
        %913 = vmatpush1.bf16.msra.mxu0 0
        %914 = vmatprep.subr.bf16.mxu0 0
        %915 = vmatpush1.bf16.msra.mxu0 0
        %916 = vmatprep.subr.bf16.mxu0 0
        %917 = vmatpush1.bf16.msra.mxu0 0
        %918 = vmatprep.subr.bf16.mxu0 0
        %919 = vmatpush1.bf16.msra.mxu0 0
        %920 = vmatprep.subr.bf16.mxu0 0
        %921 = vmatpush1.bf16.msra.mxu0 0
        %922 = vmatprep.subr.bf16.mxu0 0
        %923 = vmatpush1.bf16.msra.mxu0 0
        %924 = vmatprep.subr.bf16.mxu0 0
        %925 = vmatpush1.bf16.msra.mxu0 0
        %926 = vmatprep.subr.bf16.mxu0 0
        %927 = vmatpush1.bf16.msra.mxu0 0
        %928 = vmatprep.subr.bf16.mxu0 0
        %929 = vmatpush1.bf16.msra.mxu0 0
        %930 = vmatprep.subr.bf16.mxu0 0
        %931 = vmatpush1.bf16.msra.mxu0 0
        %932 = vmatprep.subr.bf16.mxu0 0
        %933 = vmatpush1.bf16.msra.mxu0 0
        %934 = vmatprep.subr.bf16.mxu0 0
        %935 = vmatpush1.bf16.msra.mxu0 0
        %936 = vmatprep.mubr.bf16.mxu0 0
        %937 = vmatmul.mubr.bf16.gmra.mrb[0].mxu0 %v902
        %v938 = vpop.f32.mrb[0].mxu0
        %v939 = vadd.f32 %v886, %v938
        %v940 = vpop.f32.mrb[0].mxu0
        %v941 = vpop.f32.mrb[0].mxu0
        %v942 = vadd.f32 %v886, %v941
        %v943 = vpop.f32.mrb[0].mxu0
        %944 = vdwg.mxu0
        %v945 = vld [vmem:[%s852] sm:$0xf]
        %v946 = vld [vmem:[%s852 + $0x4] sm:$0xf]
        %v947 = vld [vmem:[%s852 + $0x8] sm:$0xf]
        %v948 = vld [vmem:[%s852 + $0xc] sm:$0xf]
        %v949 = vld [vmem:[%s852 + $0x10] sm:$0xf]
        %v950 = vld [vmem:[%s852 + $0x14] sm:$0xf]
        %v951 = vld [vmem:[%s852 + $0x18] sm:$0xf]
        %v952 = vld [vmem:[%s852 + $0x1c] sm:$0xf]
        %v953 = vld [vmem:[%s857] sm:$0xf]
        %v954 = vld [vmem:[%s857 + $0x4] sm:$0xf]
        %v955 = vld [vmem:[%s857 + $0x8] sm:$0xf]
        %v956 = vld [vmem:[%s857 + $0xc] sm:$0xf]
        %v957 = vld [vmem:[%s857 + $0x10] sm:$0xf]
        %v958 = vld [vmem:[%s857 + $0x14] sm:$0xf]
        %v959 = vld [vmem:[%s857 + $0x18] sm:$0xf]
        %v960 = vld [vmem:[%s857 + $0x1c] sm:$0xf]
        %v961 = vld [vmem:[%s8] sm:$0xf]
        %v962 = vld [vmem:[%s8 + $0x4] sm:$0xf]
        %v963 = vld [vmem:[%s8 + $0x8] sm:$0xf]
        %v964 = vld [vmem:[%s8 + $0xc] sm:$0xf]
        %v965 = vld [vmem:[%s9] sm:$0x1]
        %968 = vrot.lane.b32.xlu0 %v939, 120
        %v969 = vpop.permute.xlu0 %968
        %970 = vrot.lane.b32.xlu0 %v942, 120
        %v971 = vpop.permute.xlu0 %970
        %974 = vrot.lane.b32.xlu0 %v939, 112
        %v975 = vpop.permute.xlu0 %974
        %976 = vrot.lane.b32.xlu0 %v942, 112
        %v977 = vpop.permute.xlu0 %976
        %980 = vrot.lane.b32.xlu0 %v939, 104
        %v981 = vpop.permute.xlu0 %980
        %982 = vrot.lane.b32.xlu0 %v942, 104
        %v983 = vpop.permute.xlu0 %982
        %v986 = vpack.c.bf16 %v942, %v939
        %v987 = vpack.c.bf16 %v971, %v969
        %v988 = vpack.c.bf16 %v977, %v975
        %v989 = vpack.c.bf16 %v983, %v981
        %v992 = vunpack.c.l.b16 %v945
        %v993 = vunpack.c.l.b16 %v946
        %v994 = vpack.c.b16 %v993, %v992
        %vm995 = vcmask 64512
        %v997 = vsel %vm995, %v986, 0
        %v1000 = vsel %vm995, %v994, 0
        %1002 = vmatprep.subr.bf16.mxu0 0
        %1003 = vmatpush1.bf16.xpose.msra.mxu0 %v1000
        %1004 = vmatprep.subr.bf16.mxu0 0
        %1005 = vmatpush1.bf16.xpose.msra.mxu0 0
        %1006 = vmatprep.subr.bf16.mxu0 0
        %1007 = vmatpush1.bf16.xpose.msra.mxu0 0
        %1008 = vmatprep.subr.bf16.mxu0 0
        %1009 = vmatpush1.bf16.xpose.msra.mxu0 0
        %1010 = vmatprep.subr.bf16.mxu0 0
        %1011 = vmatpush1.bf16.xpose.msra.mxu0 0
        %1012 = vmatprep.subr.bf16.mxu0 0
        %1013 = vmatpush1.bf16.xpose.msra.mxu0 0
        %1014 = vmatprep.subr.bf16.mxu0 0
        %1015 = vmatpush1.bf16.xpose.msra.mxu0 0
        %1016 = vmatprep.subr.bf16.mxu0 0
        %1017 = vmatpush1.bf16.xpose.msra.mxu0 0
        %1018 = vmatprep.subr.bf16.mxu0 0
        %1019 = vmatpush1.bf16.xpose.msra.mxu0 0
        %1020 = vmatprep.subr.bf16.mxu0 0
        %1021 = vmatpush1.bf16.xpose.msra.mxu0 0
        %1022 = vmatprep.subr.bf16.mxu0 0
        %1023 = vmatpush1.bf16.xpose.msra.mxu0 0
        %1024 = vmatprep.subr.bf16.mxu0 0
        %1025 = vmatpush1.bf16.xpose.msra.mxu0 0
        %1026 = vmatprep.subr.bf16.mxu0 0
        %1027 = vmatpush1.bf16.xpose.msra.mxu0 0
        %1028 = vmatprep.subr.bf16.mxu0 0
        %1029 = vmatpush1.bf16.xpose.msra.mxu0 0
        %1030 = vmatprep.subr.bf16.mxu0 0
        %1031 = vmatpush1.bf16.xpose.msra.mxu0 0
        %1032 = vmatprep.subr.bf16.mxu0 0
        %1033 = vmatpush1.bf16.xpose.msra.mxu0 0
        %1034 = vmatprep.mubr.bf16.mxu0 0
        %1035 = vmatmul.mubr.bf16.gmra.mrb[0].mxu0 %v997
        %v1036 = vpop.f32.mrb[0].mxu0
        %v1037 = vadd.f32 0.0, %v1036
        %v1038 = vpop.f32.mrb[0].mxu0
        %v1039 = vpop.f32.mrb[0].mxu0
        %v1040 = vadd.f32 0.0, %v1039
        %v1041 = vpop.f32.mrb[0].mxu0
        %1042 = vdwg.mxu0
        %v1045 = vunpack.c.l.b16 %v947
        %v1046 = vunpack.c.l.b16 %v948
        %v1047 = vpack.c.b16 %v1046, %v1045
        %v1049 = vsel %vm995, %v987, 0
        %v1052 = vsel %vm995, %v1047, 0
        %1054 = vmatprep.subr.bf16.mxu0 0
        %1055 = vmatpush1.bf16.xpose.msra.mxu0 %v1052
        %1056 = vmatprep.subr.bf16.mxu0 0
        %1057 = vmatpush1.bf16.xpose.msra.mxu0 0
        %1058 = vmatprep.subr.bf16.mxu0 0
        %1059 = vmatpush1.bf16.xpose.msra.mxu0 0
        %1060 = vmatprep.subr.bf16.mxu0 0
        %1061 = vmatpush1.bf16.xpose.msra.mxu0 0
        %1062 = vmatprep.subr.bf16.mxu0 0
        %1063 = vmatpush1.bf16.xpose.msra.mxu0 0
        %1064 = vmatprep.subr.bf16.mxu0 0
        %1065 = vmatpush1.bf16.xpose.msra.mxu0 0
        %1066 = vmatprep.subr.bf16.mxu0 0
        %1067 = vmatpush1.bf16.xpose.msra.mxu0 0
        %1068 = vmatprep.subr.bf16.mxu0 0
        %1069 = vmatpush1.bf16.xpose.msra.mxu0 0
        %1070 = vmatprep.subr.bf16.mxu0 0
        %1071 = vmatpush1.bf16.xpose.msra.mxu0 0
        %1072 = vmatprep.subr.bf16.mxu0 0
        %1073 = vmatpush1.bf16.xpose.msra.mxu0 0
        %1074 = vmatprep.subr.bf16.mxu0 0
        %1075 = vmatpush1.bf16.xpose.msra.mxu0 0
        %1076 = vmatprep.subr.bf16.mxu0 0
        %1077 = vmatpush1.bf16.xpose.msra.mxu0 0
        %1078 = vmatprep.subr.bf16.mxu0 0
        %1079 = vmatpush1.bf16.xpose.msra.mxu0 0
        %1080 = vmatprep.subr.bf16.mxu0 0
        %1081 = vmatpush1.bf16.xpose.msra.mxu0 0
        %1082 = vmatprep.subr.bf16.mxu0 0
        %1083 = vmatpush1.bf16.xpose.msra.mxu0 0
        %1084 = vmatprep.subr.bf16.mxu0 0
        %1085 = vmatpush1.bf16.xpose.msra.mxu0 0
        %1086 = vmatprep.mubr.bf16.mxu0 0
        %1087 = vmatmul.mubr.bf16.gmra.mrb[0].mxu0 %v1049
        %v1088 = vpop.f32.mrb[0].mxu0
        %v1089 = vadd.f32 0.0, %v1088
        %v1090 = vpop.f32.mrb[0].mxu0
        %v1091 = vpop.f32.mrb[0].mxu0
        %v1092 = vadd.f32 0.0, %v1091
        %v1093 = vpop.f32.mrb[0].mxu0
        %1094 = vdwg.mxu0
        %v1097 = vunpack.c.l.b16 %v949
        %v1098 = vunpack.c.l.b16 %v950
        %v1099 = vpack.c.b16 %v1098, %v1097
        %v1101 = vsel %vm995, %v988, 0
        %v1104 = vsel %vm995, %v1099, 0
        %1106 = vmatprep.subr.bf16.mxu0 0
        %1107 = vmatpush1.bf16.xpose.msra.mxu0 %v1104
        %1108 = vmatprep.subr.bf16.mxu0 0
        %1109 = vmatpush1.bf16.xpose.msra.mxu0 0
        %1110 = vmatprep.subr.bf16.mxu0 0
        %1111 = vmatpush1.bf16.xpose.msra.mxu0 0
        %1112 = vmatprep.subr.bf16.mxu0 0
        %1113 = vmatpush1.bf16.xpose.msra.mxu0 0
        %1114 = vmatprep.subr.bf16.mxu0 0
        %1115 = vmatpush1.bf16.xpose.msra.mxu0 0
        %1116 = vmatprep.subr.bf16.mxu0 0
        %1117 = vmatpush1.bf16.xpose.msra.mxu0 0
        %1118 = vmatprep.subr.bf16.mxu0 0
        %1119 = vmatpush1.bf16.xpose.msra.mxu0 0
        %1120 = vmatprep.subr.bf16.mxu0 0
        %1121 = vmatpush1.bf16.xpose.msra.mxu0 0
        %1122 = vmatprep.subr.bf16.mxu0 0
        %1123 = vmatpush1.bf16.xpose.msra.mxu0 0
        %1124 = vmatprep.subr.bf16.mxu0 0
        %1125 = vmatpush1.bf16.xpose.msra.mxu0 0
        %1126 = vmatprep.subr.bf16.mxu0 0
        %1127 = vmatpush1.bf16.xpose.msra.mxu0 0
        %1128 = vmatprep.subr.bf16.mxu0 0
        %1129 = vmatpush1.bf16.xpose.msra.mxu0 0
        %1130 = vmatprep.subr.bf16.mxu0 0
        %1131 = vmatpush1.bf16.xpose.msra.mxu0 0
        %1132 = vmatprep.subr.bf16.mxu0 0
        %1133 = vmatpush1.bf16.xpose.msra.mxu0 0
        %1134 = vmatprep.subr.bf16.mxu0 0
        %1135 = vmatpush1.bf16.xpose.msra.mxu0 0
        %1136 = vmatprep.subr.bf16.mxu0 0
        %1137 = vmatpush1.bf16.xpose.msra.mxu0 0
        %1138 = vmatprep.mubr.bf16.mxu0 0
        %1139 = vmatmul.mubr.bf16.gmra.mrb[0].mxu0 %v1101
        %v1140 = vpop.f32.mrb[0].mxu0
        %v1141 = vadd.f32 0.0, %v1140
        %v1142 = vpop.f32.mrb[0].mxu0
        %v1143 = vpop.f32.mrb[0].mxu0
        %v1144 = vadd.f32 0.0, %v1143
        %v1145 = vpop.f32.mrb[0].mxu0
        %1146 = vdwg.mxu0
        %v1149 = vunpack.c.l.b16 %v951
        %v1150 = vunpack.c.l.b16 %v952
        %v1151 = vpack.c.b16 %v1150, %v1149
        %v1153 = vsel %vm995, %v989, 0
        %v1156 = vsel %vm995, %v1151, 0
        %1158 = vmatprep.subr.bf16.mxu0 0
        %1159 = vmatpush1.bf16.xpose.msra.mxu0 %v1156
        %1160 = vmatprep.subr.bf16.mxu0 0
        %1161 = vmatpush1.bf16.xpose.msra.mxu0 0
        %1162 = vmatprep.subr.bf16.mxu0 0
        %1163 = vmatpush1.bf16.xpose.msra.mxu0 0
        %1164 = vmatprep.subr.bf16.mxu0 0
        %1165 = vmatpush1.bf16.xpose.msra.mxu0 0
        %1166 = vmatprep.subr.bf16.mxu0 0
        %1167 = vmatpush1.bf16.xpose.msra.mxu0 0
        %1168 = vmatprep.subr.bf16.mxu0 0
        %1169 = vmatpush1.bf16.xpose.msra.mxu0 0
        %1170 = vmatprep.subr.bf16.mxu0 0
        %1171 = vmatpush1.bf16.xpose.msra.mxu0 0
        %1172 = vmatprep.subr.bf16.mxu0 0
        %1173 = vmatpush1.bf16.xpose.msra.mxu0 0
        %1174 = vmatprep.subr.bf16.mxu0 0
        %1175 = vmatpush1.bf16.xpose.msra.mxu0 0
        %1176 = vmatprep.subr.bf16.mxu0 0
        %1177 = vmatpush1.bf16.xpose.msra.mxu0 0
        %1178 = vmatprep.subr.bf16.mxu0 0
        %1179 = vmatpush1.bf16.xpose.msra.mxu0 0
        %1180 = vmatprep.subr.bf16.mxu0 0
        %1181 = vmatpush1.bf16.xpose.msra.mxu0 0
        %1182 = vmatprep.subr.bf16.mxu0 0
        %1183 = vmatpush1.bf16.xpose.msra.mxu0 0
        %1184 = vmatprep.subr.bf16.mxu0 0
        %1185 = vmatpush1.bf16.xpose.msra.mxu0 0
        %1186 = vmatprep.subr.bf16.mxu0 0
        %1187 = vmatpush1.bf16.xpose.msra.mxu0 0
        %1188 = vmatprep.subr.bf16.mxu0 0
        %1189 = vmatpush1.bf16.xpose.msra.mxu0 0
        %1190 = vmatprep.mubr.bf16.mxu0 0
        %1191 = vmatmul.mubr.bf16.gmra.mrb[0].mxu0 %v1153
        %v1192 = vpop.f32.mrb[0].mxu0
        %v1193 = vadd.f32 0.0, %v1192
        %v1194 = vpop.f32.mrb[0].mxu0
        %v1195 = vpop.f32.mrb[0].mxu0
        %v1196 = vadd.f32 0.0, %v1195
        %v1197 = vpop.f32.mrb[0].mxu0
        %1198 = vdwg.mxu0
        %vm1199 = vcmask 130048
        %v1200 = vsel %vm1199, %v1037, -inf
        %1201 = vmax.xlane.f32.xlu0 %v1200
        %v1202 = vpop.xlane.xlu0 %1201
        %v1203 = vsel %vm1199, %v1040, -inf
        %1204 = vmax.xlane.f32.xlu0 %v1203
        %v1205 = vpop.xlane.xlu0 %1204
        %v1206 = vsel %vm1199, %v1089, -inf
        %1207 = vmax.xlane.f32.xlu0 %v1206
        %v1208 = vpop.xlane.xlu0 %1207
        %v1209 = vsel %vm1199, %v1092, -inf
        %1210 = vmax.xlane.f32.xlu0 %v1209
        %v1211 = vpop.xlane.xlu0 %1210
        %v1212 = vsel %vm1199, %v1141, -inf
        %1213 = vmax.xlane.f32.xlu0 %v1212
        %v1214 = vpop.xlane.xlu0 %1213
        %v1215 = vsel %vm1199, %v1144, -inf
        %1216 = vmax.xlane.f32.xlu0 %v1215
        %v1217 = vpop.xlane.xlu0 %1216
        %v1218 = vsel %vm1199, %v1193, -inf
        %1219 = vmax.xlane.f32.xlu0 %v1218
        %v1220 = vpop.xlane.xlu0 %1219
        %v1221 = vsel %vm1199, %v1196, -inf
        %1222 = vmax.xlane.f32.xlu0 %v1221
        %v1223 = vpop.xlane.xlu0 %1222
        %v1224 = vsub.f32 %v1037, %v1202
        %v1225 = vsub.f32 %v1040, %v1205
        %v1226 = vsub.f32 %v1089, %v1208
        %v1227 = vsub.f32 %v1092, %v1211
        %v1228 = vsub.f32 %v1141, %v1214
        %v1229 = vsub.f32 %v1144, %v1217
        %v1230 = vsub.f32 %v1193, %v1220
        %v1231 = vsub.f32 %v1196, %v1223
        %v1232 = vmul.f32 %v1224, 1.442695
        %v1233 = vpow.pop %v1232
        %v1234 = vmul.f32 %v1225, 1.442695
        %v1235 = vpow.pop %v1234
        %v1236 = vmul.f32 %v1226, 1.442695
        %v1237 = vpow.pop %v1236
        %v1238 = vmul.f32 %v1227, 1.442695
        %v1239 = vpow.pop %v1238
        %v1240 = vmul.f32 %v1228, 1.442695
        %v1241 = vpow.pop %v1240
        %v1242 = vmul.f32 %v1229, 1.442695
        %v1243 = vpow.pop %v1242
        %v1244 = vmul.f32 %v1230, 1.442695
        %v1245 = vpow.pop %v1244
        %v1246 = vmul.f32 %v1231, 1.442695
        %v1247 = vpow.pop %v1246
        %v1248 = vsel %vm1199, %v1233, 0.0
        %1249 = vadd.xlane.f32.xlu0 %v1248
        %v1250 = vpop.xlane.xlu0 %1249
        %v1251 = vsel %vm1199, %v1235, 0.0
        %1252 = vadd.xlane.f32.xlu0 %v1251
        %v1253 = vpop.xlane.xlu0 %1252
        %v1254 = vsel %vm1199, %v1237, 0.0
        %1255 = vadd.xlane.f32.xlu0 %v1254
        %v1256 = vpop.xlane.xlu0 %1255
        %v1257 = vsel %vm1199, %v1239, 0.0
        %1258 = vadd.xlane.f32.xlu0 %v1257
        %v1259 = vpop.xlane.xlu0 %1258
        %v1260 = vsel %vm1199, %v1241, 0.0
        %1261 = vadd.xlane.f32.xlu0 %v1260
        %v1262 = vpop.xlane.xlu0 %1261
        %v1263 = vsel %vm1199, %v1243, 0.0
        %1264 = vadd.xlane.f32.xlu0 %v1263
        %v1265 = vpop.xlane.xlu0 %1264
        %v1266 = vsel %vm1199, %v1245, 0.0
        %1267 = vadd.xlane.f32.xlu0 %v1266
        %v1268 = vpop.xlane.xlu0 %1267
        %v1269 = vsel %vm1199, %v1247, 0.0
        %1270 = vadd.xlane.f32.xlu0 %v1269
        %v1271 = vpop.xlane.xlu0 %1270
        %v1272 = vrcp.pop %v1250
        %v1273 = vrcp.pop %v1253
        %v1274 = vrcp.pop %v1256
        %v1275 = vrcp.pop %v1259
        %v1276 = vrcp.pop %v1262
        %v1277 = vrcp.pop %v1265
        %v1278 = vrcp.pop %v1268
        %v1279 = vrcp.pop %v1271
        %v1280 = vmul.f32 %v1233, %v1272
        %v1281 = vmul.f32 %v1235, %v1273
        %v1282 = vmul.f32 %v1237, %v1274
        %v1283 = vmul.f32 %v1239, %v1275
        %v1284 = vmul.f32 %v1241, %v1276
        %v1285 = vmul.f32 %v1243, %v1277
        %v1286 = vmul.f32 %v1245, %v1278
        %v1287 = vmul.f32 %v1247, %v1279
        %v1288 = vpack.c.bf16 %v1281, %v1280
        %v1289 = vpack.c.bf16 %v1283, %v1282
        %v1290 = vpack.c.bf16 %v1285, %v1284
        %v1291 = vpack.c.bf16 %v1287, %v1286
        %v1294 = vunpack.c.l.b16 %v953
        %v1295 = vunpack.c.l.b16 %v954
        %v1296 = vpack.c.b16 %v1295, %v1294
        %v1299 = vsel %vm1199, %v1288, 0
        %1301 = vmatprep.subr.bf16.mxu0 0
        %1302 = vmatpush1.bf16.msra.mxu0 %v1296
        %1303 = vmatprep.subr.bf16.mxu0 0
        %1304 = vmatpush1.bf16.msra.mxu0 0
        %1305 = vmatprep.subr.bf16.mxu0 0
        %1306 = vmatpush1.bf16.msra.mxu0 0
        %1307 = vmatprep.subr.bf16.mxu0 0
        %1308 = vmatpush1.bf16.msra.mxu0 0
        %1309 = vmatprep.subr.bf16.mxu0 0
        %1310 = vmatpush1.bf16.msra.mxu0 0
        %1311 = vmatprep.subr.bf16.mxu0 0
        %1312 = vmatpush1.bf16.msra.mxu0 0
        %1313 = vmatprep.subr.bf16.mxu0 0
        %1314 = vmatpush1.bf16.msra.mxu0 0
        %1315 = vmatprep.subr.bf16.mxu0 0
        %1316 = vmatpush1.bf16.msra.mxu0 0
        %1317 = vmatprep.subr.bf16.mxu0 0
        %1318 = vmatpush1.bf16.msra.mxu0 0
        %1319 = vmatprep.subr.bf16.mxu0 0
        %1320 = vmatpush1.bf16.msra.mxu0 0
        %1321 = vmatprep.subr.bf16.mxu0 0
        %1322 = vmatpush1.bf16.msra.mxu0 0
        %1323 = vmatprep.subr.bf16.mxu0 0
        %1324 = vmatpush1.bf16.msra.mxu0 0
        %1325 = vmatprep.subr.bf16.mxu0 0
        %1326 = vmatpush1.bf16.msra.mxu0 0
        %1327 = vmatprep.subr.bf16.mxu0 0
        %1328 = vmatpush1.bf16.msra.mxu0 0
        %1329 = vmatprep.subr.bf16.mxu0 0
        %1330 = vmatpush1.bf16.msra.mxu0 0
        %1331 = vmatprep.subr.bf16.mxu0 0
        %1332 = vmatpush1.bf16.msra.mxu0 0
        %1333 = vmatprep.mubr.bf16.mxu0 0
        %1334 = vmatmul.mubr.bf16.gmra.mrb[0].mxu0 %v1299
        %v1335 = vpop.f32.mrb[0].mxu0
        %v1336 = vadd.f32 0.0, %v1335
        %v1337 = vpop.f32.mrb[0].mxu0
        %v1338 = vpop.f32.mrb[0].mxu0
        %v1339 = vadd.f32 0.0, %v1338
        %v1340 = vpop.f32.mrb[0].mxu0
        %1341 = vdwg.mxu0
        %v1344 = vunpack.c.l.b16 %v955
        %v1345 = vunpack.c.l.b16 %v956
        %v1346 = vpack.c.b16 %v1345, %v1344
        %v1349 = vsel %vm1199, %v1289, 0
        %1351 = vmatprep.subr.bf16.mxu0 0
        %1352 = vmatpush1.bf16.msra.mxu0 %v1346
        %1353 = vmatprep.subr.bf16.mxu0 0
        %1354 = vmatpush1.bf16.msra.mxu0 0
        %1355 = vmatprep.subr.bf16.mxu0 0
        %1356 = vmatpush1.bf16.msra.mxu0 0
        %1357 = vmatprep.subr.bf16.mxu0 0
        %1358 = vmatpush1.bf16.msra.mxu0 0
        %1359 = vmatprep.subr.bf16.mxu0 0
        %1360 = vmatpush1.bf16.msra.mxu0 0
        %1361 = vmatprep.subr.bf16.mxu0 0
        %1362 = vmatpush1.bf16.msra.mxu0 0
        %1363 = vmatprep.subr.bf16.mxu0 0
        %1364 = vmatpush1.bf16.msra.mxu0 0
        %1365 = vmatprep.subr.bf16.mxu0 0
        %1366 = vmatpush1.bf16.msra.mxu0 0
        %1367 = vmatprep.subr.bf16.mxu0 0
        %1368 = vmatpush1.bf16.msra.mxu0 0
        %1369 = vmatprep.subr.bf16.mxu0 0
        %1370 = vmatpush1.bf16.msra.mxu0 0
        %1371 = vmatprep.subr.bf16.mxu0 0
        %1372 = vmatpush1.bf16.msra.mxu0 0
        %1373 = vmatprep.subr.bf16.mxu0 0
        %1374 = vmatpush1.bf16.msra.mxu0 0
        %1375 = vmatprep.subr.bf16.mxu0 0
        %1376 = vmatpush1.bf16.msra.mxu0 0
        %1377 = vmatprep.subr.bf16.mxu0 0
        %1378 = vmatpush1.bf16.msra.mxu0 0
        %1379 = vmatprep.subr.bf16.mxu0 0
        %1380 = vmatpush1.bf16.msra.mxu0 0
        %1381 = vmatprep.subr.bf16.mxu0 0
        %1382 = vmatpush1.bf16.msra.mxu0 0
        %1383 = vmatprep.mubr.bf16.mxu0 0
        %1384 = vmatmul.mubr.bf16.gmra.mrb[0].mxu0 %v1349
        %v1385 = vpop.f32.mrb[0].mxu0
        %v1386 = vadd.f32 0.0, %v1385
        %v1387 = vpop.f32.mrb[0].mxu0
        %v1388 = vpop.f32.mrb[0].mxu0
        %v1389 = vadd.f32 0.0, %v1388
        %v1390 = vpop.f32.mrb[0].mxu0
        %1391 = vdwg.mxu0
        %v1394 = vunpack.c.l.b16 %v957
        %v1395 = vunpack.c.l.b16 %v958
        %v1396 = vpack.c.b16 %v1395, %v1394
        %v1399 = vsel %vm1199, %v1290, 0
        %1401 = vmatprep.subr.bf16.mxu0 0
        %1402 = vmatpush1.bf16.msra.mxu0 %v1396
        %1403 = vmatprep.subr.bf16.mxu0 0
        %1404 = vmatpush1.bf16.msra.mxu0 0
        %1405 = vmatprep.subr.bf16.mxu0 0
        %1406 = vmatpush1.bf16.msra.mxu0 0
        %1407 = vmatprep.subr.bf16.mxu0 0
        %1408 = vmatpush1.bf16.msra.mxu0 0
        %1409 = vmatprep.subr.bf16.mxu0 0
        %1410 = vmatpush1.bf16.msra.mxu0 0
        %1411 = vmatprep.subr.bf16.mxu0 0
        %1412 = vmatpush1.bf16.msra.mxu0 0
        %1413 = vmatprep.subr.bf16.mxu0 0
        %1414 = vmatpush1.bf16.msra.mxu0 0
        %1415 = vmatprep.subr.bf16.mxu0 0
        %1416 = vmatpush1.bf16.msra.mxu0 0
        %1417 = vmatprep.subr.bf16.mxu0 0
        %1418 = vmatpush1.bf16.msra.mxu0 0
        %1419 = vmatprep.subr.bf16.mxu0 0
        %1420 = vmatpush1.bf16.msra.mxu0 0
        %1421 = vmatprep.subr.bf16.mxu0 0
        %1422 = vmatpush1.bf16.msra.mxu0 0
        %1423 = vmatprep.subr.bf16.mxu0 0
        %1424 = vmatpush1.bf16.msra.mxu0 0
        %1425 = vmatprep.subr.bf16.mxu0 0
        %1426 = vmatpush1.bf16.msra.mxu0 0
        %1427 = vmatprep.subr.bf16.mxu0 0
        %1428 = vmatpush1.bf16.msra.mxu0 0
        %1429 = vmatprep.subr.bf16.mxu0 0
        %1430 = vmatpush1.bf16.msra.mxu0 0
        %1431 = vmatprep.subr.bf16.mxu0 0
        %1432 = vmatpush1.bf16.msra.mxu0 0
        %1433 = vmatprep.mubr.bf16.mxu0 0
        %1434 = vmatmul.mubr.bf16.gmra.mrb[0].mxu0 %v1399
        %v1435 = vpop.f32.mrb[0].mxu0
        %v1436 = vadd.f32 0.0, %v1435
        %v1437 = vpop.f32.mrb[0].mxu0
        %v1438 = vpop.f32.mrb[0].mxu0
        %v1439 = vadd.f32 0.0, %v1438
        %v1440 = vpop.f32.mrb[0].mxu0
        %1441 = vdwg.mxu0
        %v1444 = vunpack.c.l.b16 %v959
        %v1445 = vunpack.c.l.b16 %v960
        %v1446 = vpack.c.b16 %v1445, %v1444
        %v1449 = vsel %vm1199, %v1291, 0
        %1451 = vmatprep.subr.bf16.mxu0 0
        %1452 = vmatpush1.bf16.msra.mxu0 %v1446
        %1453 = vmatprep.subr.bf16.mxu0 0
        %1454 = vmatpush1.bf16.msra.mxu0 0
        %1455 = vmatprep.subr.bf16.mxu0 0
        %1456 = vmatpush1.bf16.msra.mxu0 0
        %1457 = vmatprep.subr.bf16.mxu0 0
        %1458 = vmatpush1.bf16.msra.mxu0 0
        %1459 = vmatprep.subr.bf16.mxu0 0
        %1460 = vmatpush1.bf16.msra.mxu0 0
        %1461 = vmatprep.subr.bf16.mxu0 0
        %1462 = vmatpush1.bf16.msra.mxu0 0
        %1463 = vmatprep.subr.bf16.mxu0 0
        %1464 = vmatpush1.bf16.msra.mxu0 0
        %1465 = vmatprep.subr.bf16.mxu0 0
        %1466 = vmatpush1.bf16.msra.mxu0 0
        %1467 = vmatprep.subr.bf16.mxu0 0
        %1468 = vmatpush1.bf16.msra.mxu0 0
        %1469 = vmatprep.subr.bf16.mxu0 0
        %1470 = vmatpush1.bf16.msra.mxu0 0
        %1471 = vmatprep.subr.bf16.mxu0 0
        %1472 = vmatpush1.bf16.msra.mxu0 0
        %1473 = vmatprep.subr.bf16.mxu0 0
        %1474 = vmatpush1.bf16.msra.mxu0 0
        %1475 = vmatprep.subr.bf16.mxu0 0
        %1476 = vmatpush1.bf16.msra.mxu0 0
        %1477 = vmatprep.subr.bf16.mxu0 0
        %1478 = vmatpush1.bf16.msra.mxu0 0
        %1479 = vmatprep.subr.bf16.mxu0 0
        %1480 = vmatpush1.bf16.msra.mxu0 0
        %1481 = vmatprep.subr.bf16.mxu0 0
        %1482 = vmatpush1.bf16.msra.mxu0 0
        %1483 = vmatprep.mubr.bf16.mxu0 0
        %1484 = vmatmul.mubr.bf16.gmra.mrb[0].mxu0 %v1449
        %v1485 = vpop.f32.mrb[0].mxu0
        %v1486 = vadd.f32 0.0, %v1485
        %v1487 = vpop.f32.mrb[0].mxu0
        %v1488 = vpop.f32.mrb[0].mxu0
        %v1489 = vadd.f32 0.0, %v1488
        %v1490 = vpop.f32.mrb[0].mxu0
        %1491 = vdwg.mxu0
        %v1492 = vpack.c.bf16 %v1339, %v1336
        %v1493 = vpack.c.bf16 %v1389, %v1386
        %v1494 = vpack.c.bf16 %v1439, %v1436
        %v1495 = vpack.c.bf16 %v1489, %v1486
        %v1497 = vsel %vm995, %v1492, 0
        %vm1499 = vcmask 1043456
        %v1501 = vsel %vm1499, %v961, 0
        %1503 = vmatprep.subr.bf16.mxu0 0
        %1504 = vmatpush1.bf16.msra.mxu0 %v1501
        %1505 = vmatprep.subr.bf16.mxu0 0
        %1506 = vmatpush1.bf16.msra.mxu0 0
        %1507 = vmatprep.subr.bf16.mxu0 0
        %1508 = vmatpush1.bf16.msra.mxu0 0
        %1509 = vmatprep.subr.bf16.mxu0 0
        %1510 = vmatpush1.bf16.msra.mxu0 0
        %1511 = vmatprep.subr.bf16.mxu0 0
        %1512 = vmatpush1.bf16.msra.mxu0 0
        %1513 = vmatprep.subr.bf16.mxu0 0
        %1514 = vmatpush1.bf16.msra.mxu0 0
        %1515 = vmatprep.subr.bf16.mxu0 0
        %1516 = vmatpush1.bf16.msra.mxu0 0
        %1517 = vmatprep.subr.bf16.mxu0 0
        %1518 = vmatpush1.bf16.msra.mxu0 0
        %1519 = vmatprep.subr.bf16.mxu0 0
        %1520 = vmatpush1.bf16.msra.mxu0 0
        %1521 = vmatprep.subr.bf16.mxu0 0
        %1522 = vmatpush1.bf16.msra.mxu0 0
        %1523 = vmatprep.subr.bf16.mxu0 0
        %1524 = vmatpush1.bf16.msra.mxu0 0
        %1525 = vmatprep.subr.bf16.mxu0 0
        %1526 = vmatpush1.bf16.msra.mxu0 0
        %1527 = vmatprep.subr.bf16.mxu0 0
        %1528 = vmatpush1.bf16.msra.mxu0 0
        %1529 = vmatprep.subr.bf16.mxu0 0
        %1530 = vmatpush1.bf16.msra.mxu0 0
        %1531 = vmatprep.subr.bf16.mxu0 0
        %1532 = vmatpush1.bf16.msra.mxu0 0
        %1533 = vmatprep.subr.bf16.mxu0 0
        %1534 = vmatpush1.bf16.msra.mxu0 0
        %1535 = vmatprep.mubr.bf16.mxu0 0
        %1536 = vmatmul.mubr.bf16.gmra.mrb[0].mxu0 %v1497
        %v1537 = vpop.f32.mrb[0].mxu0
        %v1538 = vadd.f32 0.0, %v1537
        %v1539 = vpop.f32.mrb[0].mxu0
        %v1540 = vpop.f32.mrb[0].mxu0
        %v1541 = vadd.f32 0.0, %v1540
        %v1542 = vpop.f32.mrb[0].mxu0
        %1543 = vdwg.mxu0
        %v1545 = vsel %vm995, %v1493, 0
        %v1548 = vsel %vm1499, %v962, 0
        %1550 = vmatprep.subr.bf16.mxu0 0
        %1551 = vmatpush1.bf16.msra.mxu0 %v1548
        %1552 = vmatprep.subr.bf16.mxu0 0
        %1553 = vmatpush1.bf16.msra.mxu0 0
        %1554 = vmatprep.subr.bf16.mxu0 0
        %1555 = vmatpush1.bf16.msra.mxu0 0
        %1556 = vmatprep.subr.bf16.mxu0 0
        %1557 = vmatpush1.bf16.msra.mxu0 0
        %1558 = vmatprep.subr.bf16.mxu0 0
        %1559 = vmatpush1.bf16.msra.mxu0 0
        %1560 = vmatprep.subr.bf16.mxu0 0
        %1561 = vmatpush1.bf16.msra.mxu0 0
        %1562 = vmatprep.subr.bf16.mxu0 0
        %1563 = vmatpush1.bf16.msra.mxu0 0
        %1564 = vmatprep.subr.bf16.mxu0 0
        %1565 = vmatpush1.bf16.msra.mxu0 0
        %1566 = vmatprep.subr.bf16.mxu0 0
        %1567 = vmatpush1.bf16.msra.mxu0 0
        %1568 = vmatprep.subr.bf16.mxu0 0
        %1569 = vmatpush1.bf16.msra.mxu0 0
        %1570 = vmatprep.subr.bf16.mxu0 0
        %1571 = vmatpush1.bf16.msra.mxu0 0
        %1572 = vmatprep.subr.bf16.mxu0 0
        %1573 = vmatpush1.bf16.msra.mxu0 0
        %1574 = vmatprep.subr.bf16.mxu0 0
        %1575 = vmatpush1.bf16.msra.mxu0 0
        %1576 = vmatprep.subr.bf16.mxu0 0
        %1577 = vmatpush1.bf16.msra.mxu0 0
        %1578 = vmatprep.subr.bf16.mxu0 0
        %1579 = vmatpush1.bf16.msra.mxu0 0
        %1580 = vmatprep.subr.bf16.mxu0 0
        %1581 = vmatpush1.bf16.msra.mxu0 0
        %1582 = vmatprep.mubr.bf16.mxu0 0
        %1583 = vmatmul.mubr.bf16.gmra.mrb[0].mxu0 %v1545
        %v1584 = vpop.f32.mrb[0].mxu0
        %v1585 = vadd.f32 0.0, %v1584
        %v1586 = vpop.f32.mrb[0].mxu0
        %v1587 = vpop.f32.mrb[0].mxu0
        %v1588 = vadd.f32 0.0, %v1587
        %v1589 = vpop.f32.mrb[0].mxu0
        %1590 = vdwg.mxu0
        %v1592 = vsel %vm995, %v1494, 0
        %v1595 = vsel %vm1499, %v963, 0
        %1597 = vmatprep.subr.bf16.mxu0 0
        %1598 = vmatpush1.bf16.msra.mxu0 %v1595
        %1599 = vmatprep.subr.bf16.mxu0 0
        %1600 = vmatpush1.bf16.msra.mxu0 0
        %1601 = vmatprep.subr.bf16.mxu0 0
        %1602 = vmatpush1.bf16.msra.mxu0 0
        %1603 = vmatprep.subr.bf16.mxu0 0
        %1604 = vmatpush1.bf16.msra.mxu0 0
        %1605 = vmatprep.subr.bf16.mxu0 0
        %1606 = vmatpush1.bf16.msra.mxu0 0
        %1607 = vmatprep.subr.bf16.mxu0 0
        %1608 = vmatpush1.bf16.msra.mxu0 0
        %1609 = vmatprep.subr.bf16.mxu0 0
        %1610 = vmatpush1.bf16.msra.mxu0 0
        %1611 = vmatprep.subr.bf16.mxu0 0
        %1612 = vmatpush1.bf16.msra.mxu0 0
        %1613 = vmatprep.subr.bf16.mxu0 0
        %1614 = vmatpush1.bf16.msra.mxu0 0
        %1615 = vmatprep.subr.bf16.mxu0 0
        %1616 = vmatpush1.bf16.msra.mxu0 0
        %1617 = vmatprep.subr.bf16.mxu0 0
        %1618 = vmatpush1.bf16.msra.mxu0 0
        %1619 = vmatprep.subr.bf16.mxu0 0
        %1620 = vmatpush1.bf16.msra.mxu0 0
        %1621 = vmatprep.subr.bf16.mxu0 0
        %1622 = vmatpush1.bf16.msra.mxu0 0
        %1623 = vmatprep.subr.bf16.mxu0 0
        %1624 = vmatpush1.bf16.msra.mxu0 0
        %1625 = vmatprep.subr.bf16.mxu0 0
        %1626 = vmatpush1.bf16.msra.mxu0 0
        %1627 = vmatprep.subr.bf16.mxu0 0
        %1628 = vmatpush1.bf16.msra.mxu0 0
        %1629 = vmatprep.mubr.bf16.mxu0 0
        %1630 = vmatmul.mubr.bf16.gmra.mrb[0].mxu0 %v1592
        %v1631 = vpop.f32.mrb[0].mxu0
        %v1632 = vadd.f32 0.0, %v1631
        %v1633 = vpop.f32.mrb[0].mxu0
        %v1634 = vpop.f32.mrb[0].mxu0
        %v1635 = vadd.f32 0.0, %v1634
        %v1636 = vpop.f32.mrb[0].mxu0
        %1637 = vdwg.mxu0
        %v1639 = vsel %vm995, %v1495, 0
        %v1642 = vsel %vm1499, %v964, 0
        %1644 = vmatprep.subr.bf16.mxu0 0
        %1645 = vmatpush1.bf16.msra.mxu0 %v1642
        %1646 = vmatprep.subr.bf16.mxu0 0
        %1647 = vmatpush1.bf16.msra.mxu0 0
        %1648 = vmatprep.subr.bf16.mxu0 0
        %1649 = vmatpush1.bf16.msra.mxu0 0
        %1650 = vmatprep.subr.bf16.mxu0 0
        %1651 = vmatpush1.bf16.msra.mxu0 0
        %1652 = vmatprep.subr.bf16.mxu0 0
        %1653 = vmatpush1.bf16.msra.mxu0 0
        %1654 = vmatprep.subr.bf16.mxu0 0
        %1655 = vmatpush1.bf16.msra.mxu0 0
        %1656 = vmatprep.subr.bf16.mxu0 0
        %1657 = vmatpush1.bf16.msra.mxu0 0
        %1658 = vmatprep.subr.bf16.mxu0 0
        %1659 = vmatpush1.bf16.msra.mxu0 0
        %1660 = vmatprep.subr.bf16.mxu0 0
        %1661 = vmatpush1.bf16.msra.mxu0 0
        %1662 = vmatprep.subr.bf16.mxu0 0
        %1663 = vmatpush1.bf16.msra.mxu0 0
        %1664 = vmatprep.subr.bf16.mxu0 0
        %1665 = vmatpush1.bf16.msra.mxu0 0
        %1666 = vmatprep.subr.bf16.mxu0 0
        %1667 = vmatpush1.bf16.msra.mxu0 0
        %1668 = vmatprep.subr.bf16.mxu0 0
        %1669 = vmatpush1.bf16.msra.mxu0 0
        %1670 = vmatprep.subr.bf16.mxu0 0
        %1671 = vmatpush1.bf16.msra.mxu0 0
        %1672 = vmatprep.subr.bf16.mxu0 0
        %1673 = vmatpush1.bf16.msra.mxu0 0
        %1674 = vmatprep.subr.bf16.mxu0 0
        %1675 = vmatpush1.bf16.msra.mxu0 0
        %1676 = vmatprep.mubr.bf16.mxu0 0
        %1677 = vmatmul.mubr.bf16.gmra.mrb[0].mxu0 %v1639
        %v1678 = vpop.f32.mrb[0].mxu0
        %v1679 = vadd.f32 0.0, %v1678
        %v1680 = vpop.f32.mrb[0].mxu0
        %v1681 = vpop.f32.mrb[0].mxu0
        %v1682 = vadd.f32 0.0, %v1681
        %v1683 = vpop.f32.mrb[0].mxu0
        %1684 = vdwg.mxu0
        %v1686 = vlaneseq
        %v1687 = vshrl.u32 %v1686, 7
        %v1688 = vsub.s32 0, %v1687
        %v1689 = vrot.slane %v965, %v1688
        %v1691 = vadd.f32 %v1689, %v1538
        %v1692 = vadd.f32 %v1689, %v1541
        %v1693 = vadd.f32 %v1691, %v1585
        %v1694 = vadd.f32 %v1692, %v1588
        %v1695 = vadd.f32 %v1693, %v1632
        %v1696 = vadd.f32 %v1694, %v1635
        %v1697 = vadd.f32 %v1695, %v1679
        %v1698 = vadd.f32 %v1696, %v1682
        %v1699 = vadd.f32 %v870, %v1697
        %v1700 = vadd.f32 %v871, %v1698
        %v1701 = vld [vmem:[%s10] sm:$0x1]
        %v1702 = vld [vmem:[%s11] sm:$0x1]
        %v1703 = vsel %vm900, %v1699, 0.0
        %1704 = vadd.xlane.f32.xlu0 %v1703
        %v1705 = vpop.xlane.xlu0 %1704
        %v1706 = vsel %vm900, %v1700, 0.0
        %1707 = vadd.xlane.f32.xlu0 %v1706
        %v1708 = vpop.xlane.xlu0 %1707
        %v1709 = vrcp.pop 32.0
        %v1710 = vmul.f32 %v1705, %v1709
        %v1711 = vmul.f32 %v1708, %v1709
        %v1712 = vsub.f32 %v1699, %v1710
        %v1713 = vsub.f32 %v1700, %v1711
        %v1714 = vmul.f32 %v1712, %v1712
        %v1715 = vmul.f32 %v1713, %v1713
        %v1716 = vsel %vm900, %v1714, 0.0
        %1717 = vadd.xlane.f32.xlu0 %v1716
        %v1718 = vpop.xlane.xlu0 %1717
        %v1719 = vsel %vm900, %v1715, 0.0
        %1720 = vadd.xlane.f32.xlu0 %v1719
        %v1721 = vpop.xlane.xlu0 %1720
        %v1722 = vmul.f32 %v1718, %v1709
        %v1723 = vmul.f32 %v1721, %v1709
        %v1724 = vadd.f32 %v1722, 1e-05
        %v1725 = vadd.f32 %v1723, 1e-05
        %v1726 = vrsqrt.pop %v1724
        %v1727 = vrsqrt.pop %v1725
        %v1728 = vmul.f32 %v1712, %v1726
        %v1729 = vmul.f32 %v1713, %v1727
        %v1731 = vlaneseq
        %v1732 = vshrl.u32 %v1731, 7
        %v1733 = vsub.s32 0, %v1732
        %v1734 = vrot.slane %v1701, %v1733
        %v1736 = vmul.f32 %v1728, %v1734
        %v1737 = vmul.f32 %v1729, %v1734
        %v1739 = vlaneseq
        %v1740 = vshrl.u32 %v1739, 7
        %v1741 = vsub.s32 0, %v1740
        %v1742 = vrot.slane %v1702, %v1741
        %v1744 = vadd.f32 %v1736, %v1742
        %v1745 = vadd.f32 %v1737, %v1742
        %v1746 = vadd.f32 %v1744, %v872
        %v1747 = vadd.f32 %v1745, %v873
        %v1748 = vld [vmem:[%s12] sm:$0xf]
        %v1749 = vld [vmem:[%s12 + $0x4] sm:$0xf]
        %v1750 = vld [vmem:[%s12 + $0x8] sm:$0xf]
        %v1751 = vld [vmem:[%s12 + $0xc] sm:$0xf]
        %v1752 = vpack.c.bf16 %v1747, %v1746
        %v1753 = vld [vmem:[%s13] sm:$0x1]
        %v1755 = vlaneseq
        %v1756 = vshrl.u32 %v1755, 7
        %v1757 = vsub.s32 0, %v1756
        %v1758 = vrot.slane %v1753, %v1757
        %v1764 = vunpack.c.l.b16 %v1748
        %v1765 = vunpack.c.l.b16 %v1749
        %v1766 = vunpack.c.l.b16 %v1750
        %v1767 = vunpack.c.l.b16 %v1751
        %v1768 = vpack.c.b16 %v1765, %v1764
        %v1769 = vpack.c.b16 %v1767, %v1766
        %v1773 = vsel %vm900, %v1752, 0
        %1775 = vmatprep.subr.bf16.mxu0 0
        %1776 = vmatpush1.bf16.msra.mxu0 %v1768
        %1777 = vmatprep.subr.bf16.mxu0 0
        %1778 = vmatpush1.bf16.msra.mxu0 %v1769
        %1779 = vmatprep.subr.bf16.mxu0 0
        %1780 = vmatpush1.bf16.msra.mxu0 0
        %1781 = vmatprep.subr.bf16.mxu0 0
        %1782 = vmatpush1.bf16.msra.mxu0 0
        %1783 = vmatprep.subr.bf16.mxu0 0
        %1784 = vmatpush1.bf16.msra.mxu0 0
        %1785 = vmatprep.subr.bf16.mxu0 0
        %1786 = vmatpush1.bf16.msra.mxu0 0
        %1787 = vmatprep.subr.bf16.mxu0 0
        %1788 = vmatpush1.bf16.msra.mxu0 0
        %1789 = vmatprep.subr.bf16.mxu0 0
        %1790 = vmatpush1.bf16.msra.mxu0 0
        %1791 = vmatprep.subr.bf16.mxu0 0
        %1792 = vmatpush1.bf16.msra.mxu0 0
        %1793 = vmatprep.subr.bf16.mxu0 0
        %1794 = vmatpush1.bf16.msra.mxu0 0
        %1795 = vmatprep.subr.bf16.mxu0 0
        %1796 = vmatpush1.bf16.msra.mxu0 0
        %1797 = vmatprep.subr.bf16.mxu0 0
        %1798 = vmatpush1.bf16.msra.mxu0 0
        %1799 = vmatprep.subr.bf16.mxu0 0
        %1800 = vmatpush1.bf16.msra.mxu0 0
        %1801 = vmatprep.subr.bf16.mxu0 0
        %1802 = vmatpush1.bf16.msra.mxu0 0
        %1803 = vmatprep.subr.bf16.mxu0 0
        %1804 = vmatpush1.bf16.msra.mxu0 0
        %1805 = vmatprep.subr.bf16.mxu0 0
        %1806 = vmatpush1.bf16.msra.mxu0 0
        %1807 = vmatprep.mubr.bf16.mxu0 0
        %1808 = vmatmul.mubr.bf16.gmra.mrb[0].mxu0 %v1773
        %v1809 = vpop.f32.mrb[0].mxu0
        %v1810 = vadd.f32 %v1758, %v1809
        %v1811 = vpop.f32.mrb[0].mxu0
        %v1812 = vpop.f32.mrb[0].mxu0
        %v1813 = vadd.f32 %v1758, %v1812
        %v1814 = vpop.f32.mrb[0].mxu0
        %1815 = vdwg.mxu0
        %v1816 = vld [vmem:[%s862] sm:$0xf]
        %v1817 = vld [vmem:[%s862 + $0x4] sm:$0xf]
        %v1818 = vld [vmem:[%s862 + $0x8] sm:$0xf]
        %v1819 = vld [vmem:[%s862 + $0xc] sm:$0xf]
        %v1820 = vld [vmem:[%s862 + $0x10] sm:$0xf]
        %v1821 = vld [vmem:[%s862 + $0x14] sm:$0xf]
        %v1822 = vld [vmem:[%s862 + $0x18] sm:$0xf]
        %v1823 = vld [vmem:[%s862 + $0x1c] sm:$0xf]
        %v1824 = vld [vmem:[%s867] sm:$0xf]
        %v1825 = vld [vmem:[%s867 + $0x4] sm:$0xf]
        %v1826 = vld [vmem:[%s867 + $0x8] sm:$0xf]
        %v1827 = vld [vmem:[%s867 + $0xc] sm:$0xf]
        %v1828 = vld [vmem:[%s867 + $0x10] sm:$0xf]
        %v1829 = vld [vmem:[%s867 + $0x14] sm:$0xf]
        %v1830 = vld [vmem:[%s867 + $0x18] sm:$0xf]
        %v1831 = vld [vmem:[%s867 + $0x1c] sm:$0xf]
        %v1832 = vld [vmem:[%s14] sm:$0xf]
        %v1833 = vld [vmem:[%s14 + $0x4] sm:$0xf]
        %v1834 = vld [vmem:[%s14 + $0x8] sm:$0xf]
        %v1835 = vld [vmem:[%s14 + $0xc] sm:$0xf]
        %v1836 = vld [vmem:[%s15] sm:$0x1]
        %1839 = vrot.lane.b32.xlu0 %v1810, 120
        %v1840 = vpop.permute.xlu0 %1839
        %1841 = vrot.lane.b32.xlu0 %v1813, 120
        %v1842 = vpop.permute.xlu0 %1841
        %1845 = vrot.lane.b32.xlu0 %v1810, 112
        %v1846 = vpop.permute.xlu0 %1845
        %1847 = vrot.lane.b32.xlu0 %v1813, 112
        %v1848 = vpop.permute.xlu0 %1847
        %1851 = vrot.lane.b32.xlu0 %v1810, 104
        %v1852 = vpop.permute.xlu0 %1851
        %1853 = vrot.lane.b32.xlu0 %v1813, 104
        %v1854 = vpop.permute.xlu0 %1853
        %v1857 = vpack.c.bf16 %v1813, %v1810
        %v1858 = vpack.c.bf16 %v1842, %v1840
        %v1859 = vpack.c.bf16 %v1848, %v1846
        %v1860 = vpack.c.bf16 %v1854, %v1852
        %v1863 = vunpack.c.l.b16 %v1816
        %v1864 = vunpack.c.l.b16 %v1817
        %v1865 = vpack.c.b16 %v1864, %v1863
        %v1867 = vsel %vm995, %v1857, 0
        %v1870 = vsel %vm995, %v1865, 0
        %1872 = vmatprep.subr.bf16.mxu0 0
        %1873 = vmatpush1.bf16.xpose.msra.mxu0 %v1870
        %1874 = vmatprep.subr.bf16.mxu0 0
        %1875 = vmatpush1.bf16.xpose.msra.mxu0 0
        %1876 = vmatprep.subr.bf16.mxu0 0
        %1877 = vmatpush1.bf16.xpose.msra.mxu0 0
        %1878 = vmatprep.subr.bf16.mxu0 0
        %1879 = vmatpush1.bf16.xpose.msra.mxu0 0
        %1880 = vmatprep.subr.bf16.mxu0 0
        %1881 = vmatpush1.bf16.xpose.msra.mxu0 0
        %1882 = vmatprep.subr.bf16.mxu0 0
        %1883 = vmatpush1.bf16.xpose.msra.mxu0 0
        %1884 = vmatprep.subr.bf16.mxu0 0
        %1885 = vmatpush1.bf16.xpose.msra.mxu0 0
        %1886 = vmatprep.subr.bf16.mxu0 0
        %1887 = vmatpush1.bf16.xpose.msra.mxu0 0
        %1888 = vmatprep.subr.bf16.mxu0 0
        %1889 = vmatpush1.bf16.xpose.msra.mxu0 0
        %1890 = vmatprep.subr.bf16.mxu0 0
        %1891 = vmatpush1.bf16.xpose.msra.mxu0 0
        %1892 = vmatprep.subr.bf16.mxu0 0
        %1893 = vmatpush1.bf16.xpose.msra.mxu0 0
        %1894 = vmatprep.subr.bf16.mxu0 0
        %1895 = vmatpush1.bf16.xpose.msra.mxu0 0
        %1896 = vmatprep.subr.bf16.mxu0 0
        %1897 = vmatpush1.bf16.xpose.msra.mxu0 0
        %1898 = vmatprep.subr.bf16.mxu0 0
        %1899 = vmatpush1.bf16.xpose.msra.mxu0 0
        %1900 = vmatprep.subr.bf16.mxu0 0
        %1901 = vmatpush1.bf16.xpose.msra.mxu0 0
        %1902 = vmatprep.subr.bf16.mxu0 0
        %1903 = vmatpush1.bf16.xpose.msra.mxu0 0
        %1904 = vmatprep.mubr.bf16.mxu0 0
        %1905 = vmatmul.mubr.bf16.gmra.mrb[0].mxu0 %v1867
        %v1906 = vpop.f32.mrb[0].mxu0
        %v1907 = vadd.f32 0.0, %v1906
        %v1908 = vpop.f32.mrb[0].mxu0
        %v1909 = vpop.f32.mrb[0].mxu0
        %v1910 = vadd.f32 0.0, %v1909
        %v1911 = vpop.f32.mrb[0].mxu0
        %1912 = vdwg.mxu0
        %v1915 = vunpack.c.l.b16 %v1818
        %v1916 = vunpack.c.l.b16 %v1819
        %v1917 = vpack.c.b16 %v1916, %v1915
        %v1919 = vsel %vm995, %v1858, 0
        %v1922 = vsel %vm995, %v1917, 0
        %1924 = vmatprep.subr.bf16.mxu0 0
        %1925 = vmatpush1.bf16.xpose.msra.mxu0 %v1922
        %1926 = vmatprep.subr.bf16.mxu0 0
        %1927 = vmatpush1.bf16.xpose.msra.mxu0 0
        %1928 = vmatprep.subr.bf16.mxu0 0
        %1929 = vmatpush1.bf16.xpose.msra.mxu0 0
        %1930 = vmatprep.subr.bf16.mxu0 0
        %1931 = vmatpush1.bf16.xpose.msra.mxu0 0
        %1932 = vmatprep.subr.bf16.mxu0 0
        %1933 = vmatpush1.bf16.xpose.msra.mxu0 0
        %1934 = vmatprep.subr.bf16.mxu0 0
        %1935 = vmatpush1.bf16.xpose.msra.mxu0 0
        %1936 = vmatprep.subr.bf16.mxu0 0
        %1937 = vmatpush1.bf16.xpose.msra.mxu0 0
        %1938 = vmatprep.subr.bf16.mxu0 0
        %1939 = vmatpush1.bf16.xpose.msra.mxu0 0
        %1940 = vmatprep.subr.bf16.mxu0 0
        %1941 = vmatpush1.bf16.xpose.msra.mxu0 0
        %1942 = vmatprep.subr.bf16.mxu0 0
        %1943 = vmatpush1.bf16.xpose.msra.mxu0 0
        %1944 = vmatprep.subr.bf16.mxu0 0
        %1945 = vmatpush1.bf16.xpose.msra.mxu0 0
        %1946 = vmatprep.subr.bf16.mxu0 0
        %1947 = vmatpush1.bf16.xpose.msra.mxu0 0
        %1948 = vmatprep.subr.bf16.mxu0 0
        %1949 = vmatpush1.bf16.xpose.msra.mxu0 0
        %1950 = vmatprep.subr.bf16.mxu0 0
        %1951 = vmatpush1.bf16.xpose.msra.mxu0 0
        %1952 = vmatprep.subr.bf16.mxu0 0
        %1953 = vmatpush1.bf16.xpose.msra.mxu0 0
        %1954 = vmatprep.subr.bf16.mxu0 0
        %1955 = vmatpush1.bf16.xpose.msra.mxu0 0
        %1956 = vmatprep.mubr.bf16.mxu0 0
        %1957 = vmatmul.mubr.bf16.gmra.mrb[0].mxu0 %v1919
        %v1958 = vpop.f32.mrb[0].mxu0
        %v1959 = vadd.f32 0.0, %v1958
        %v1960 = vpop.f32.mrb[0].mxu0
        %v1961 = vpop.f32.mrb[0].mxu0
        %v1962 = vadd.f32 0.0, %v1961
        %v1963 = vpop.f32.mrb[0].mxu0
        %1964 = vdwg.mxu0
        %v1967 = vunpack.c.l.b16 %v1820
        %v1968 = vunpack.c.l.b16 %v1821
        %v1969 = vpack.c.b16 %v1968, %v1967
        %v1971 = vsel %vm995, %v1859, 0
        %v1974 = vsel %vm995, %v1969, 0
        %1976 = vmatprep.subr.bf16.mxu0 0
        %1977 = vmatpush1.bf16.xpose.msra.mxu0 %v1974
        %1978 = vmatprep.subr.bf16.mxu0 0
        %1979 = vmatpush1.bf16.xpose.msra.mxu0 0
        %1980 = vmatprep.subr.bf16.mxu0 0
        %1981 = vmatpush1.bf16.xpose.msra.mxu0 0
        %1982 = vmatprep.subr.bf16.mxu0 0
        %1983 = vmatpush1.bf16.xpose.msra.mxu0 0
        %1984 = vmatprep.subr.bf16.mxu0 0
        %1985 = vmatpush1.bf16.xpose.msra.mxu0 0
        %1986 = vmatprep.subr.bf16.mxu0 0
        %1987 = vmatpush1.bf16.xpose.msra.mxu0 0
        %1988 = vmatprep.subr.bf16.mxu0 0
        %1989 = vmatpush1.bf16.xpose.msra.mxu0 0
        %1990 = vmatprep.subr.bf16.mxu0 0
        %1991 = vmatpush1.bf16.xpose.msra.mxu0 0
        %1992 = vmatprep.subr.bf16.mxu0 0
        %1993 = vmatpush1.bf16.xpose.msra.mxu0 0
        %1994 = vmatprep.subr.bf16.mxu0 0
        %1995 = vmatpush1.bf16.xpose.msra.mxu0 0
        %1996 = vmatprep.subr.bf16.mxu0 0
        %1997 = vmatpush1.bf16.xpose.msra.mxu0 0
        %1998 = vmatprep.subr.bf16.mxu0 0
        %1999 = vmatpush1.bf16.xpose.msra.mxu0 0
        %2000 = vmatprep.subr.bf16.mxu0 0
        %2001 = vmatpush1.bf16.xpose.msra.mxu0 0
        %2002 = vmatprep.subr.bf16.mxu0 0
        %2003 = vmatpush1.bf16.xpose.msra.mxu0 0
        %2004 = vmatprep.subr.bf16.mxu0 0
        %2005 = vmatpush1.bf16.xpose.msra.mxu0 0
        %2006 = vmatprep.subr.bf16.mxu0 0
        %2007 = vmatpush1.bf16.xpose.msra.mxu0 0
        %2008 = vmatprep.mubr.bf16.mxu0 0
        %2009 = vmatmul.mubr.bf16.gmra.mrb[0].mxu0 %v1971
        %v2010 = vpop.f32.mrb[0].mxu0
        %v2011 = vadd.f32 0.0, %v2010
        %v2012 = vpop.f32.mrb[0].mxu0
        %v2013 = vpop.f32.mrb[0].mxu0
        %v2014 = vadd.f32 0.0, %v2013
        %v2015 = vpop.f32.mrb[0].mxu0
        %2016 = vdwg.mxu0
        %v2019 = vunpack.c.l.b16 %v1822
        %v2020 = vunpack.c.l.b16 %v1823
        %v2021 = vpack.c.b16 %v2020, %v2019
        %v2023 = vsel %vm995, %v1860, 0
        %v2026 = vsel %vm995, %v2021, 0
        %2028 = vmatprep.subr.bf16.mxu0 0
        %2029 = vmatpush1.bf16.xpose.msra.mxu0 %v2026
        %2030 = vmatprep.subr.bf16.mxu0 0
        %2031 = vmatpush1.bf16.xpose.msra.mxu0 0
        %2032 = vmatprep.subr.bf16.mxu0 0
        %2033 = vmatpush1.bf16.xpose.msra.mxu0 0
        %2034 = vmatprep.subr.bf16.mxu0 0
        %2035 = vmatpush1.bf16.xpose.msra.mxu0 0
        %2036 = vmatprep.subr.bf16.mxu0 0
        %2037 = vmatpush1.bf16.xpose.msra.mxu0 0
        %2038 = vmatprep.subr.bf16.mxu0 0
        %2039 = vmatpush1.bf16.xpose.msra.mxu0 0
        %2040 = vmatprep.subr.bf16.mxu0 0
        %2041 = vmatpush1.bf16.xpose.msra.mxu0 0
        %2042 = vmatprep.subr.bf16.mxu0 0
        %2043 = vmatpush1.bf16.xpose.msra.mxu0 0
        %2044 = vmatprep.subr.bf16.mxu0 0
        %2045 = vmatpush1.bf16.xpose.msra.mxu0 0
        %2046 = vmatprep.subr.bf16.mxu0 0
        %2047 = vmatpush1.bf16.xpose.msra.mxu0 0
        %2048 = vmatprep.subr.bf16.mxu0 0
        %2049 = vmatpush1.bf16.xpose.msra.mxu0 0
        %2050 = vmatprep.subr.bf16.mxu0 0
        %2051 = vmatpush1.bf16.xpose.msra.mxu0 0
        %2052 = vmatprep.subr.bf16.mxu0 0
        %2053 = vmatpush1.bf16.xpose.msra.mxu0 0
        %2054 = vmatprep.subr.bf16.mxu0 0
        %2055 = vmatpush1.bf16.xpose.msra.mxu0 0
        %2056 = vmatprep.subr.bf16.mxu0 0
        %2057 = vmatpush1.bf16.xpose.msra.mxu0 0
        %2058 = vmatprep.subr.bf16.mxu0 0
        %2059 = vmatpush1.bf16.xpose.msra.mxu0 0
        %2060 = vmatprep.mubr.bf16.mxu0 0
        %2061 = vmatmul.mubr.bf16.gmra.mrb[0].mxu0 %v2023
        %v2062 = vpop.f32.mrb[0].mxu0
        %v2063 = vadd.f32 0.0, %v2062
        %v2064 = vpop.f32.mrb[0].mxu0
        %v2065 = vpop.f32.mrb[0].mxu0
        %v2066 = vadd.f32 0.0, %v2065
        %v2067 = vpop.f32.mrb[0].mxu0
        %2068 = vdwg.mxu0
        %v2069 = vsel %vm1199, %v1907, -inf
        %2070 = vmax.xlane.f32.xlu0 %v2069
        %v2071 = vpop.xlane.xlu0 %2070
        %v2072 = vsel %vm1199, %v1910, -inf
        %2073 = vmax.xlane.f32.xlu0 %v2072
        %v2074 = vpop.xlane.xlu0 %2073
        %v2075 = vsel %vm1199, %v1959, -inf
        %2076 = vmax.xlane.f32.xlu0 %v2075
        %v2077 = vpop.xlane.xlu0 %2076
        %v2078 = vsel %vm1199, %v1962, -inf
        %2079 = vmax.xlane.f32.xlu0 %v2078
        %v2080 = vpop.xlane.xlu0 %2079
        %v2081 = vsel %vm1199, %v2011, -inf
        %2082 = vmax.xlane.f32.xlu0 %v2081
        %v2083 = vpop.xlane.xlu0 %2082
        %v2084 = vsel %vm1199, %v2014, -inf
        %2085 = vmax.xlane.f32.xlu0 %v2084
        %v2086 = vpop.xlane.xlu0 %2085
        %v2087 = vsel %vm1199, %v2063, -inf
        %2088 = vmax.xlane.f32.xlu0 %v2087
        %v2089 = vpop.xlane.xlu0 %2088
        %v2090 = vsel %vm1199, %v2066, -inf
        %2091 = vmax.xlane.f32.xlu0 %v2090
        %v2092 = vpop.xlane.xlu0 %2091
        %v2093 = vsub.f32 %v1907, %v2071
        %v2094 = vsub.f32 %v1910, %v2074
        %v2095 = vsub.f32 %v1959, %v2077
        %v2096 = vsub.f32 %v1962, %v2080
        %v2097 = vsub.f32 %v2011, %v2083
        %v2098 = vsub.f32 %v2014, %v2086
        %v2099 = vsub.f32 %v2063, %v2089
        %v2100 = vsub.f32 %v2066, %v2092
        %v2101 = vmul.f32 %v2093, 1.442695
        %v2102 = vpow.pop %v2101
        %v2103 = vmul.f32 %v2094, 1.442695
        %v2104 = vpow.pop %v2103
        %v2105 = vmul.f32 %v2095, 1.442695
        %v2106 = vpow.pop %v2105
        %v2107 = vmul.f32 %v2096, 1.442695
        %v2108 = vpow.pop %v2107
        %v2109 = vmul.f32 %v2097, 1.442695
        %v2110 = vpow.pop %v2109
        %v2111 = vmul.f32 %v2098, 1.442695
        %v2112 = vpow.pop %v2111
        %v2113 = vmul.f32 %v2099, 1.442695
        %v2114 = vpow.pop %v2113
        %v2115 = vmul.f32 %v2100, 1.442695
        %v2116 = vpow.pop %v2115
        %v2117 = vsel %vm1199, %v2102, 0.0
        %2118 = vadd.xlane.f32.xlu0 %v2117
        %v2119 = vpop.xlane.xlu0 %2118
        %v2120 = vsel %vm1199, %v2104, 0.0
        %2121 = vadd.xlane.f32.xlu0 %v2120
        %v2122 = vpop.xlane.xlu0 %2121
        %v2123 = vsel %vm1199, %v2106, 0.0
        %2124 = vadd.xlane.f32.xlu0 %v2123
        %v2125 = vpop.xlane.xlu0 %2124
        %v2126 = vsel %vm1199, %v2108, 0.0
        %2127 = vadd.xlane.f32.xlu0 %v2126
        %v2128 = vpop.xlane.xlu0 %2127
        %v2129 = vsel %vm1199, %v2110, 0.0
        %2130 = vadd.xlane.f32.xlu0 %v2129
        %v2131 = vpop.xlane.xlu0 %2130
        %v2132 = vsel %vm1199, %v2112, 0.0
        %2133 = vadd.xlane.f32.xlu0 %v2132
        %v2134 = vpop.xlane.xlu0 %2133
        %v2135 = vsel %vm1199, %v2114, 0.0
        %2136 = vadd.xlane.f32.xlu0 %v2135
        %v2137 = vpop.xlane.xlu0 %2136
        %v2138 = vsel %vm1199, %v2116, 0.0
        %2139 = vadd.xlane.f32.xlu0 %v2138
        %v2140 = vpop.xlane.xlu0 %2139
        %v2141 = vrcp.pop %v2119
        %v2142 = vrcp.pop %v2122
        %v2143 = vrcp.pop %v2125
        %v2144 = vrcp.pop %v2128
        %v2145 = vrcp.pop %v2131
        %v2146 = vrcp.pop %v2134
        %v2147 = vrcp.pop %v2137
        %v2148 = vrcp.pop %v2140
        %v2149 = vmul.f32 %v2102, %v2141
        %v2150 = vmul.f32 %v2104, %v2142
        %v2151 = vmul.f32 %v2106, %v2143
        %v2152 = vmul.f32 %v2108, %v2144
        %v2153 = vmul.f32 %v2110, %v2145
        %v2154 = vmul.f32 %v2112, %v2146
        %v2155 = vmul.f32 %v2114, %v2147
        %v2156 = vmul.f32 %v2116, %v2148
        %v2157 = vpack.c.bf16 %v2150, %v2149
        %v2158 = vpack.c.bf16 %v2152, %v2151
        %v2159 = vpack.c.bf16 %v2154, %v2153
        %v2160 = vpack.c.bf16 %v2156, %v2155
        %v2163 = vunpack.c.l.b16 %v1824
        %v2164 = vunpack.c.l.b16 %v1825
        %v2165 = vpack.c.b16 %v2164, %v2163
        %v2168 = vsel %vm1199, %v2157, 0
        %2170 = vmatprep.subr.bf16.mxu0 0
        %2171 = vmatpush1.bf16.msra.mxu0 %v2165
        %2172 = vmatprep.subr.bf16.mxu0 0
        %2173 = vmatpush1.bf16.msra.mxu0 0
        %2174 = vmatprep.subr.bf16.mxu0 0
        %2175 = vmatpush1.bf16.msra.mxu0 0
        %2176 = vmatprep.subr.bf16.mxu0 0
        %2177 = vmatpush1.bf16.msra.mxu0 0
        %2178 = vmatprep.subr.bf16.mxu0 0
        %2179 = vmatpush1.bf16.msra.mxu0 0
        %2180 = vmatprep.subr.bf16.mxu0 0
        %2181 = vmatpush1.bf16.msra.mxu0 0
        %2182 = vmatprep.subr.bf16.mxu0 0
        %2183 = vmatpush1.bf16.msra.mxu0 0
        %2184 = vmatprep.subr.bf16.mxu0 0
        %2185 = vmatpush1.bf16.msra.mxu0 0
        %2186 = vmatprep.subr.bf16.mxu0 0
        %2187 = vmatpush1.bf16.msra.mxu0 0
        %2188 = vmatprep.subr.bf16.mxu0 0
        %2189 = vmatpush1.bf16.msra.mxu0 0
        %2190 = vmatprep.subr.bf16.mxu0 0
        %2191 = vmatpush1.bf16.msra.mxu0 0
        %2192 = vmatprep.subr.bf16.mxu0 0
        %2193 = vmatpush1.bf16.msra.mxu0 0
        %2194 = vmatprep.subr.bf16.mxu0 0
        %2195 = vmatpush1.bf16.msra.mxu0 0
        %2196 = vmatprep.subr.bf16.mxu0 0
        %2197 = vmatpush1.bf16.msra.mxu0 0
        %2198 = vmatprep.subr.bf16.mxu0 0
        %2199 = vmatpush1.bf16.msra.mxu0 0
        %2200 = vmatprep.subr.bf16.mxu0 0
        %2201 = vmatpush1.bf16.msra.mxu0 0
        %2202 = vmatprep.mubr.bf16.mxu0 0
        %2203 = vmatmul.mubr.bf16.gmra.mrb[0].mxu0 %v2168
        %v2204 = vpop.f32.mrb[0].mxu0
        %v2205 = vadd.f32 0.0, %v2204
        %v2206 = vpop.f32.mrb[0].mxu0
        %v2207 = vpop.f32.mrb[0].mxu0
        %v2208 = vadd.f32 0.0, %v2207
        %v2209 = vpop.f32.mrb[0].mxu0
        %2210 = vdwg.mxu0
        %v2213 = vunpack.c.l.b16 %v1826
        %v2214 = vunpack.c.l.b16 %v1827
        %v2215 = vpack.c.b16 %v2214, %v2213
        %v2218 = vsel %vm1199, %v2158, 0
        %2220 = vmatprep.subr.bf16.mxu0 0
        %2221 = vmatpush1.bf16.msra.mxu0 %v2215
        %2222 = vmatprep.subr.bf16.mxu0 0
        %2223 = vmatpush1.bf16.msra.mxu0 0
        %2224 = vmatprep.subr.bf16.mxu0 0
        %2225 = vmatpush1.bf16.msra.mxu0 0
        %2226 = vmatprep.subr.bf16.mxu0 0
        %2227 = vmatpush1.bf16.msra.mxu0 0
        %2228 = vmatprep.subr.bf16.mxu0 0
        %2229 = vmatpush1.bf16.msra.mxu0 0
        %2230 = vmatprep.subr.bf16.mxu0 0
        %2231 = vmatpush1.bf16.msra.mxu0 0
        %2232 = vmatprep.subr.bf16.mxu0 0
        %2233 = vmatpush1.bf16.msra.mxu0 0
        %2234 = vmatprep.subr.bf16.mxu0 0
        %2235 = vmatpush1.bf16.msra.mxu0 0
        %2236 = vmatprep.subr.bf16.mxu0 0
        %2237 = vmatpush1.bf16.msra.mxu0 0
        %2238 = vmatprep.subr.bf16.mxu0 0
        %2239 = vmatpush1.bf16.msra.mxu0 0
        %2240 = vmatprep.subr.bf16.mxu0 0
        %2241 = vmatpush1.bf16.msra.mxu0 0
        %2242 = vmatprep.subr.bf16.mxu0 0
        %2243 = vmatpush1.bf16.msra.mxu0 0
        %2244 = vmatprep.subr.bf16.mxu0 0
        %2245 = vmatpush1.bf16.msra.mxu0 0
        %2246 = vmatprep.subr.bf16.mxu0 0
        %2247 = vmatpush1.bf16.msra.mxu0 0
        %2248 = vmatprep.subr.bf16.mxu0 0
        %2249 = vmatpush1.bf16.msra.mxu0 0
        %2250 = vmatprep.subr.bf16.mxu0 0
        %2251 = vmatpush1.bf16.msra.mxu0 0
        %2252 = vmatprep.mubr.bf16.mxu0 0
        %2253 = vmatmul.mubr.bf16.gmra.mrb[0].mxu0 %v2218
        %v2254 = vpop.f32.mrb[0].mxu0
        %v2255 = vadd.f32 0.0, %v2254
        %v2256 = vpop.f32.mrb[0].mxu0
        %v2257 = vpop.f32.mrb[0].mxu0
        %v2258 = vadd.f32 0.0, %v2257
        %v2259 = vpop.f32.mrb[0].mxu0
        %2260 = vdwg.mxu0
        %v2263 = vunpack.c.l.b16 %v1828
        %v2264 = vunpack.c.l.b16 %v1829
        %v2265 = vpack.c.b16 %v2264, %v2263
        %v2268 = vsel %vm1199, %v2159, 0
        %2270 = vmatprep.subr.bf16.mxu0 0
        %2271 = vmatpush1.bf16.msra.mxu0 %v2265
        %2272 = vmatprep.subr.bf16.mxu0 0
        %2273 = vmatpush1.bf16.msra.mxu0 0
        %2274 = vmatprep.subr.bf16.mxu0 0
        %2275 = vmatpush1.bf16.msra.mxu0 0
        %2276 = vmatprep.subr.bf16.mxu0 0
        %2277 = vmatpush1.bf16.msra.mxu0 0
        %2278 = vmatprep.subr.bf16.mxu0 0
        %2279 = vmatpush1.bf16.msra.mxu0 0
        %2280 = vmatprep.subr.bf16.mxu0 0
        %2281 = vmatpush1.bf16.msra.mxu0 0
        %2282 = vmatprep.subr.bf16.mxu0 0
        %2283 = vmatpush1.bf16.msra.mxu0 0
        %2284 = vmatprep.subr.bf16.mxu0 0
        %2285 = vmatpush1.bf16.msra.mxu0 0
        %2286 = vmatprep.subr.bf16.mxu0 0
        %2287 = vmatpush1.bf16.msra.mxu0 0
        %2288 = vmatprep.subr.bf16.mxu0 0
        %2289 = vmatpush1.bf16.msra.mxu0 0
        %2290 = vmatprep.subr.bf16.mxu0 0
        %2291 = vmatpush1.bf16.msra.mxu0 0
        %2292 = vmatprep.subr.bf16.mxu0 0
        %2293 = vmatpush1.bf16.msra.mxu0 0
        %2294 = vmatprep.subr.bf16.mxu0 0
        %2295 = vmatpush1.bf16.msra.mxu0 0
        %2296 = vmatprep.subr.bf16.mxu0 0
        %2297 = vmatpush1.bf16.msra.mxu0 0
        %2298 = vmatprep.subr.bf16.mxu0 0
        %2299 = vmatpush1.bf16.msra.mxu0 0
        %2300 = vmatprep.subr.bf16.mxu0 0
        %2301 = vmatpush1.bf16.msra.mxu0 0
        %2302 = vmatprep.mubr.bf16.mxu0 0
        %2303 = vmatmul.mubr.bf16.gmra.mrb[0].mxu0 %v2268
        %v2304 = vpop.f32.mrb[0].mxu0
        %v2305 = vadd.f32 0.0, %v2304
        %v2306 = vpop.f32.mrb[0].mxu0
        %v2307 = vpop.f32.mrb[0].mxu0
        %v2308 = vadd.f32 0.0, %v2307
        %v2309 = vpop.f32.mrb[0].mxu0
        %2310 = vdwg.mxu0
        %v2313 = vunpack.c.l.b16 %v1830
        %v2314 = vunpack.c.l.b16 %v1831
        %v2315 = vpack.c.b16 %v2314, %v2313
        %v2318 = vsel %vm1199, %v2160, 0
        %2320 = vmatprep.subr.bf16.mxu0 0
        %2321 = vmatpush1.bf16.msra.mxu0 %v2315
        %2322 = vmatprep.subr.bf16.mxu0 0
        %2323 = vmatpush1.bf16.msra.mxu0 0
        %2324 = vmatprep.subr.bf16.mxu0 0
        %2325 = vmatpush1.bf16.msra.mxu0 0
        %2326 = vmatprep.subr.bf16.mxu0 0
        %2327 = vmatpush1.bf16.msra.mxu0 0
        %2328 = vmatprep.subr.bf16.mxu0 0
        %2329 = vmatpush1.bf16.msra.mxu0 0
        %2330 = vmatprep.subr.bf16.mxu0 0
        %2331 = vmatpush1.bf16.msra.mxu0 0
        %2332 = vmatprep.subr.bf16.mxu0 0
        %2333 = vmatpush1.bf16.msra.mxu0 0
        %2334 = vmatprep.subr.bf16.mxu0 0
        %2335 = vmatpush1.bf16.msra.mxu0 0
        %2336 = vmatprep.subr.bf16.mxu0 0
        %2337 = vmatpush1.bf16.msra.mxu0 0
        %2338 = vmatprep.subr.bf16.mxu0 0
        %2339 = vmatpush1.bf16.msra.mxu0 0
        %2340 = vmatprep.subr.bf16.mxu0 0
        %2341 = vmatpush1.bf16.msra.mxu0 0
        %2342 = vmatprep.subr.bf16.mxu0 0
        %2343 = vmatpush1.bf16.msra.mxu0 0
        %2344 = vmatprep.subr.bf16.mxu0 0
        %2345 = vmatpush1.bf16.msra.mxu0 0
        %2346 = vmatprep.subr.bf16.mxu0 0
        %2347 = vmatpush1.bf16.msra.mxu0 0
        %2348 = vmatprep.subr.bf16.mxu0 0
        %2349 = vmatpush1.bf16.msra.mxu0 0
        %2350 = vmatprep.subr.bf16.mxu0 0
        %2351 = vmatpush1.bf16.msra.mxu0 0
        %2352 = vmatprep.mubr.bf16.mxu0 0
        %2353 = vmatmul.mubr.bf16.gmra.mrb[0].mxu0 %v2318
        %v2354 = vpop.f32.mrb[0].mxu0
        %v2355 = vadd.f32 0.0, %v2354
        %v2356 = vpop.f32.mrb[0].mxu0
        %v2357 = vpop.f32.mrb[0].mxu0
        %v2358 = vadd.f32 0.0, %v2357
        %v2359 = vpop.f32.mrb[0].mxu0
        %2360 = vdwg.mxu0
        %v2361 = vpack.c.bf16 %v2208, %v2205
        %v2362 = vpack.c.bf16 %v2258, %v2255
        %v2363 = vpack.c.bf16 %v2308, %v2305
        %v2364 = vpack.c.bf16 %v2358, %v2355
        %v2366 = vsel %vm995, %v2361, 0
        %v2369 = vsel %vm1499, %v1832, 0
        %2371 = vmatprep.subr.bf16.mxu0 0
        %2372 = vmatpush1.bf16.msra.mxu0 %v2369
        %2373 = vmatprep.subr.bf16.mxu0 0
        %2374 = vmatpush1.bf16.msra.mxu0 0
        %2375 = vmatprep.subr.bf16.mxu0 0
        %2376 = vmatpush1.bf16.msra.mxu0 0
        %2377 = vmatprep.subr.bf16.mxu0 0
        %2378 = vmatpush1.bf16.msra.mxu0 0
        %2379 = vmatprep.subr.bf16.mxu0 0
        %2380 = vmatpush1.bf16.msra.mxu0 0
        %2381 = vmatprep.subr.bf16.mxu0 0
        %2382 = vmatpush1.bf16.msra.mxu0 0
        %2383 = vmatprep.subr.bf16.mxu0 0
        %2384 = vmatpush1.bf16.msra.mxu0 0
        %2385 = vmatprep.subr.bf16.mxu0 0
        %2386 = vmatpush1.bf16.msra.mxu0 0
        %2387 = vmatprep.subr.bf16.mxu0 0
        %2388 = vmatpush1.bf16.msra.mxu0 0
        %2389 = vmatprep.subr.bf16.mxu0 0
        %2390 = vmatpush1.bf16.msra.mxu0 0
        %2391 = vmatprep.subr.bf16.mxu0 0
        %2392 = vmatpush1.bf16.msra.mxu0 0
        %2393 = vmatprep.subr.bf16.mxu0 0
        %2394 = vmatpush1.bf16.msra.mxu0 0
        %2395 = vmatprep.subr.bf16.mxu0 0
        %2396 = vmatpush1.bf16.msra.mxu0 0
        %2397 = vmatprep.subr.bf16.mxu0 0
        %2398 = vmatpush1.bf16.msra.mxu0 0
        %2399 = vmatprep.subr.bf16.mxu0 0
        %2400 = vmatpush1.bf16.msra.mxu0 0
        %2401 = vmatprep.subr.bf16.mxu0 0
        %2402 = vmatpush1.bf16.msra.mxu0 0
        %2403 = vmatprep.mubr.bf16.mxu0 0
        %2404 = vmatmul.mubr.bf16.gmra.mrb[0].mxu0 %v2366
        %v2405 = vpop.f32.mrb[0].mxu0
        %v2406 = vadd.f32 0.0, %v2405
        %v2407 = vpop.f32.mrb[0].mxu0
        %v2408 = vpop.f32.mrb[0].mxu0
        %v2409 = vadd.f32 0.0, %v2408
        %v2410 = vpop.f32.mrb[0].mxu0
        %2411 = vdwg.mxu0
        %v2413 = vsel %vm995, %v2362, 0
        %v2416 = vsel %vm1499, %v1833, 0
        %2418 = vmatprep.subr.bf16.mxu0 0
        %2419 = vmatpush1.bf16.msra.mxu0 %v2416
        %2420 = vmatprep.subr.bf16.mxu0 0
        %2421 = vmatpush1.bf16.msra.mxu0 0
        %2422 = vmatprep.subr.bf16.mxu0 0
        %2423 = vmatpush1.bf16.msra.mxu0 0
        %2424 = vmatprep.subr.bf16.mxu0 0
        %2425 = vmatpush1.bf16.msra.mxu0 0
        %2426 = vmatprep.subr.bf16.mxu0 0
        %2427 = vmatpush1.bf16.msra.mxu0 0
        %2428 = vmatprep.subr.bf16.mxu0 0
        %2429 = vmatpush1.bf16.msra.mxu0 0
        %2430 = vmatprep.subr.bf16.mxu0 0
        %2431 = vmatpush1.bf16.msra.mxu0 0
        %2432 = vmatprep.subr.bf16.mxu0 0
        %2433 = vmatpush1.bf16.msra.mxu0 0
        %2434 = vmatprep.subr.bf16.mxu0 0
        %2435 = vmatpush1.bf16.msra.mxu0 0
        %2436 = vmatprep.subr.bf16.mxu0 0
        %2437 = vmatpush1.bf16.msra.mxu0 0
        %2438 = vmatprep.subr.bf16.mxu0 0
        %2439 = vmatpush1.bf16.msra.mxu0 0
        %2440 = vmatprep.subr.bf16.mxu0 0
        %2441 = vmatpush1.bf16.msra.mxu0 0
        %2442 = vmatprep.subr.bf16.mxu0 0
        %2443 = vmatpush1.bf16.msra.mxu0 0
        %2444 = vmatprep.subr.bf16.mxu0 0
        %2445 = vmatpush1.bf16.msra.mxu0 0
        %2446 = vmatprep.subr.bf16.mxu0 0
        %2447 = vmatpush1.bf16.msra.mxu0 0
        %2448 = vmatprep.subr.bf16.mxu0 0
        %2449 = vmatpush1.bf16.msra.mxu0 0
        %2450 = vmatprep.mubr.bf16.mxu0 0
        %2451 = vmatmul.mubr.bf16.gmra.mrb[0].mxu0 %v2413
        %v2452 = vpop.f32.mrb[0].mxu0
        %v2453 = vadd.f32 0.0, %v2452
        %v2454 = vpop.f32.mrb[0].mxu0
        %v2455 = vpop.f32.mrb[0].mxu0
        %v2456 = vadd.f32 0.0, %v2455
        %v2457 = vpop.f32.mrb[0].mxu0
        %2458 = vdwg.mxu0
        %v2460 = vsel %vm995, %v2363, 0
        %v2463 = vsel %vm1499, %v1834, 0
        %2465 = vmatprep.subr.bf16.mxu0 0
        %2466 = vmatpush1.bf16.msra.mxu0 %v2463
        %2467 = vmatprep.subr.bf16.mxu0 0
        %2468 = vmatpush1.bf16.msra.mxu0 0
        %2469 = vmatprep.subr.bf16.mxu0 0
        %2470 = vmatpush1.bf16.msra.mxu0 0
        %2471 = vmatprep.subr.bf16.mxu0 0
        %2472 = vmatpush1.bf16.msra.mxu0 0
        %2473 = vmatprep.subr.bf16.mxu0 0
        %2474 = vmatpush1.bf16.msra.mxu0 0
        %2475 = vmatprep.subr.bf16.mxu0 0
        %2476 = vmatpush1.bf16.msra.mxu0 0
        %2477 = vmatprep.subr.bf16.mxu0 0
        %2478 = vmatpush1.bf16.msra.mxu0 0
        %2479 = vmatprep.subr.bf16.mxu0 0
        %2480 = vmatpush1.bf16.msra.mxu0 0
        %2481 = vmatprep.subr.bf16.mxu0 0
        %2482 = vmatpush1.bf16.msra.mxu0 0
        %2483 = vmatprep.subr.bf16.mxu0 0
        %2484 = vmatpush1.bf16.msra.mxu0 0
        %2485 = vmatprep.subr.bf16.mxu0 0
        %2486 = vmatpush1.bf16.msra.mxu0 0
        %2487 = vmatprep.subr.bf16.mxu0 0
        %2488 = vmatpush1.bf16.msra.mxu0 0
        %2489 = vmatprep.subr.bf16.mxu0 0
        %2490 = vmatpush1.bf16.msra.mxu0 0
        %2491 = vmatprep.subr.bf16.mxu0 0
        %2492 = vmatpush1.bf16.msra.mxu0 0
        %2493 = vmatprep.subr.bf16.mxu0 0
        %2494 = vmatpush1.bf16.msra.mxu0 0
        %2495 = vmatprep.subr.bf16.mxu0 0
        %2496 = vmatpush1.bf16.msra.mxu0 0
        %2497 = vmatprep.mubr.bf16.mxu0 0
        %2498 = vmatmul.mubr.bf16.gmra.mrb[0].mxu0 %v2460
        %v2499 = vpop.f32.mrb[0].mxu0
        %v2500 = vadd.f32 0.0, %v2499
        %v2501 = vpop.f32.mrb[0].mxu0
        %v2502 = vpop.f32.mrb[0].mxu0
        %v2503 = vadd.f32 0.0, %v2502
        %v2504 = vpop.f32.mrb[0].mxu0
        %2505 = vdwg.mxu0
        %v2507 = vsel %vm995, %v2364, 0
        %v2510 = vsel %vm1499, %v1835, 0
        %2512 = vmatprep.subr.bf16.mxu0 0
        %2513 = vmatpush1.bf16.msra.mxu0 %v2510
        %2514 = vmatprep.subr.bf16.mxu0 0
        %2515 = vmatpush1.bf16.msra.mxu0 0
        %2516 = vmatprep.subr.bf16.mxu0 0
        %2517 = vmatpush1.bf16.msra.mxu0 0
        %2518 = vmatprep.subr.bf16.mxu0 0
        %2519 = vmatpush1.bf16.msra.mxu0 0
        %2520 = vmatprep.subr.bf16.mxu0 0
        %2521 = vmatpush1.bf16.msra.mxu0 0
        %2522 = vmatprep.subr.bf16.mxu0 0
        %2523 = vmatpush1.bf16.msra.mxu0 0
        %2524 = vmatprep.subr.bf16.mxu0 0
        %2525 = vmatpush1.bf16.msra.mxu0 0
        %2526 = vmatprep.subr.bf16.mxu0 0
        %2527 = vmatpush1.bf16.msra.mxu0 0
        %2528 = vmatprep.subr.bf16.mxu0 0
        %2529 = vmatpush1.bf16.msra.mxu0 0
        %2530 = vmatprep.subr.bf16.mxu0 0
        %2531 = vmatpush1.bf16.msra.mxu0 0
        %2532 = vmatprep.subr.bf16.mxu0 0
        %2533 = vmatpush1.bf16.msra.mxu0 0
        %2534 = vmatprep.subr.bf16.mxu0 0
        %2535 = vmatpush1.bf16.msra.mxu0 0
        %2536 = vmatprep.subr.bf16.mxu0 0
        %2537 = vmatpush1.bf16.msra.mxu0 0
        %2538 = vmatprep.subr.bf16.mxu0 0
        %2539 = vmatpush1.bf16.msra.mxu0 0
        %2540 = vmatprep.subr.bf16.mxu0 0
        %2541 = vmatpush1.bf16.msra.mxu0 0
        %2542 = vmatprep.subr.bf16.mxu0 0
        %2543 = vmatpush1.bf16.msra.mxu0 0
        %2544 = vmatprep.mubr.bf16.mxu0 0
        %2545 = vmatmul.mubr.bf16.gmra.mrb[0].mxu0 %v2507
        %v2546 = vpop.f32.mrb[0].mxu0
        %v2547 = vadd.f32 0.0, %v2546
        %v2548 = vpop.f32.mrb[0].mxu0
        %v2549 = vpop.f32.mrb[0].mxu0
        %v2550 = vadd.f32 0.0, %v2549
        %v2551 = vpop.f32.mrb[0].mxu0
        %2552 = vdwg.mxu0
        %v2554 = vlaneseq
        %v2555 = vshrl.u32 %v2554, 7
        %v2556 = vsub.s32 0, %v2555
        %v2557 = vrot.slane %v1836, %v2556
        %v2559 = vadd.f32 %v2557, %v2406
        %v2560 = vadd.f32 %v2557, %v2409
        %v2561 = vadd.f32 %v2559, %v2453
        %v2562 = vadd.f32 %v2560, %v2456
        %v2563 = vadd.f32 %v2561, %v2500
        %v2564 = vadd.f32 %v2562, %v2503
        %v2565 = vadd.f32 %v2563, %v2547
        %v2566 = vadd.f32 %v2564, %v2550
        %v2567 = vadd.f32 %v1744, %v2565
        %v2568 = vadd.f32 %v1745, %v2566
        %v2569 = vld [vmem:[%s16] sm:$0x1]
        %v2570 = vld [vmem:[%s17] sm:$0x1]
        %v2571 = vsel %vm900, %v2567, 0.0
        %2572 = vadd.xlane.f32.xlu0 %v2571
        %v2573 = vpop.xlane.xlu0 %2572
        %v2574 = vsel %vm900, %v2568, 0.0
        %2575 = vadd.xlane.f32.xlu0 %v2574
        %v2576 = vpop.xlane.xlu0 %2575
        %v2577 = vmul.f32 %v2573, %v1709
        %v2578 = vmul.f32 %v2576, %v1709
        %v2579 = vsub.f32 %v2567, %v2577
        %v2580 = vsub.f32 %v2568, %v2578
        %v2581 = vmul.f32 %v2579, %v2579
        %v2582 = vmul.f32 %v2580, %v2580
        %v2583 = vsel %vm900, %v2581, 0.0
        %2584 = vadd.xlane.f32.xlu0 %v2583
        %v2585 = vpop.xlane.xlu0 %2584
        %v2586 = vsel %vm900, %v2582, 0.0
        %2587 = vadd.xlane.f32.xlu0 %v2586
        %v2588 = vpop.xlane.xlu0 %2587
        %v2589 = vmul.f32 %v2585, %v1709
        %v2590 = vmul.f32 %v2588, %v1709
        %v2591 = vadd.f32 %v2589, 1e-05
        %v2592 = vadd.f32 %v2590, 1e-05
        %v2593 = vrsqrt.pop %v2591
        %v2594 = vrsqrt.pop %v2592
        %v2595 = vmul.f32 %v2579, %v2593
        %v2596 = vmul.f32 %v2580, %v2594
        %v2598 = vlaneseq
        %v2599 = vshrl.u32 %v2598, 7
        %v2600 = vsub.s32 0, %v2599
        %v2601 = vrot.slane %v2569, %v2600
        %v2603 = vmul.f32 %v2595, %v2601
        %v2604 = vmul.f32 %v2596, %v2601
        %v2606 = vlaneseq
        %v2607 = vshrl.u32 %v2606, 7
        %v2608 = vsub.s32 0, %v2607
        %v2609 = vrot.slane %v2570, %v2608
        %v2611 = vadd.f32 %v2603, %v2609
        %v2612 = vadd.f32 %v2604, %v2609
        %v2613 = vld [vmem:[%s18] sm:$0xf]
        %v2614 = vld [vmem:[%s18 + $0x4] sm:$0xf]
        %v2615 = vld [vmem:[%s18 + $0x8] sm:$0xf]
        %v2616 = vld [vmem:[%s18 + $0xc] sm:$0xf]
        %v2617 = vpack.c.bf16 %v2612, %v2611
        %v2618 = vld [vmem:[%s19] sm:$0x1]
        %v2620 = vlaneseq
        %v2621 = vshrl.u32 %v2620, 7
        %v2622 = vsub.s32 0, %v2621
        %v2623 = vrot.slane %v2618, %v2622
        %v2629 = vunpack.c.l.b16 %v2613
        %v2630 = vunpack.c.l.b16 %v2614
        %v2631 = vunpack.c.l.b16 %v2615
        %v2632 = vunpack.c.l.b16 %v2616
        %v2633 = vpack.c.b16 %v2630, %v2629
        %v2634 = vpack.c.b16 %v2632, %v2631
        %v2638 = vsel %vm900, %v2617, 0
        %2640 = vmatprep.subr.bf16.mxu0 0
        %2641 = vmatpush1.bf16.msra.mxu0 %v2633
        %2642 = vmatprep.subr.bf16.mxu0 0
        %2643 = vmatpush1.bf16.msra.mxu0 %v2634
        %2644 = vmatprep.subr.bf16.mxu0 0
        %2645 = vmatpush1.bf16.msra.mxu0 0
        %2646 = vmatprep.subr.bf16.mxu0 0
        %2647 = vmatpush1.bf16.msra.mxu0 0
        %2648 = vmatprep.subr.bf16.mxu0 0
        %2649 = vmatpush1.bf16.msra.mxu0 0
        %2650 = vmatprep.subr.bf16.mxu0 0
        %2651 = vmatpush1.bf16.msra.mxu0 0
        %2652 = vmatprep.subr.bf16.mxu0 0
        %2653 = vmatpush1.bf16.msra.mxu0 0
        %2654 = vmatprep.subr.bf16.mxu0 0
        %2655 = vmatpush1.bf16.msra.mxu0 0
        %2656 = vmatprep.subr.bf16.mxu0 0
        %2657 = vmatpush1.bf16.msra.mxu0 0
        %2658 = vmatprep.subr.bf16.mxu0 0
        %2659 = vmatpush1.bf16.msra.mxu0 0
        %2660 = vmatprep.subr.bf16.mxu0 0
        %2661 = vmatpush1.bf16.msra.mxu0 0
        %2662 = vmatprep.subr.bf16.mxu0 0
        %2663 = vmatpush1.bf16.msra.mxu0 0
        %2664 = vmatprep.subr.bf16.mxu0 0
        %2665 = vmatpush1.bf16.msra.mxu0 0
        %2666 = vmatprep.subr.bf16.mxu0 0
        %2667 = vmatpush1.bf16.msra.mxu0 0
        %2668 = vmatprep.subr.bf16.mxu0 0
        %2669 = vmatpush1.bf16.msra.mxu0 0
        %2670 = vmatprep.subr.bf16.mxu0 0
        %2671 = vmatpush1.bf16.msra.mxu0 0
        %2672 = vmatprep.mubr.bf16.mxu0 0
        %2673 = vmatmul.mubr.bf16.gmra.mrb[0].mxu0 %v2638
        %v2674 = vpop.f32.mrb[0].mxu0
        %v2675 = vadd.f32 %v2623, %v2674
        %v2676 = vpop.f32.mrb[0].mxu0
        %v2677 = vpop.f32.mrb[0].mxu0
        %v2678 = vadd.f32 %v2623, %v2677
        %v2679 = vpop.f32.mrb[0].mxu0
        %2680 = vdwg.mxu0
        %v2681 = vmul.f32 %v2675, 0.5
        %v2682 = vmul.f32 %v2678, 0.5
        %v2683 = vmul.f32 %v2675, 0.044715
        %v2684 = vmul.f32 %v2678, 0.044715
        %v2685 = vmul.f32 %v2683, %v2675
        %v2686 = vmul.f32 %v2684, %v2678
        %v2687 = vmul.f32 %v2685, %v2675
        %v2688 = vmul.f32 %v2686, %v2678
        %v2689 = vadd.f32 %v2675, %v2687
        %v2690 = vadd.f32 %v2678, %v2688
        %v2691 = vmul.f32 %v2689, 0.7978846
        %v2692 = vmul.f32 %v2690, 0.7978846
        %v2693 = vtanh.pop %v2691
        %v2694 = vtanh.pop %v2692
        %v2695 = vadd.f32 %v2693, 1.0
        %v2696 = vadd.f32 %v2694, 1.0
        %v2697 = vmul.f32 %v2681, %v2695
        %v2698 = vmul.f32 %v2682, %v2696
        %v2699 = vld [vmem:[%s20] sm:$0xf]
        %v2700 = vld [vmem:[%s20 + $0x4] sm:$0xf]
        %v2701 = vld [vmem:[%s20 + $0x8] sm:$0xf]
        %v2702 = vld [vmem:[%s20 + $0xc] sm:$0xf]
        %v2703 = vld [vmem:[%s20 + $0x10] sm:$0xf]
        %v2704 = vld [vmem:[%s20 + $0x14] sm:$0xf]
        %v2705 = vld [vmem:[%s20 + $0x18] sm:$0xf]
        %v2706 = vld [vmem:[%s20 + $0x1c] sm:$0xf]
        %v2707 = vld [vmem:[%s20 + $0x20] sm:$0xf]
        %v2708 = vld [vmem:[%s20 + $0x24] sm:$0xf]
        %v2709 = vld [vmem:[%s20 + $0x28] sm:$0xf]
        %v2710 = vld [vmem:[%s20 + $0x2c] sm:$0xf]
        %v2711 = vld [vmem:[%s20 + $0x30] sm:$0xf]
        %v2712 = vld [vmem:[%s20 + $0x34] sm:$0xf]
        %v2713 = vld [vmem:[%s20 + $0x38] sm:$0xf]
        %v2714 = vld [vmem:[%s20 + $0x3c] sm:$0xf]
        %v2715 = vpack.c.bf16 %v2698, %v2697
        %v2716 = vld [vmem:[%s21] sm:$0x1]
        %v2718 = vlaneseq
        %v2719 = vshrl.u32 %v2718, 7
        %v2720 = vsub.s32 0, %v2719
        %v2721 = vrot.slane %v2716, %v2720
        %v2739 = vunpack.c.l.b16 %v2699
        %v2740 = vunpack.c.l.b16 %v2700
        %v2741 = vunpack.c.l.b16 %v2701
        %v2742 = vunpack.c.l.b16 %v2702
        %v2743 = vunpack.c.l.b16 %v2703
        %v2744 = vunpack.c.l.b16 %v2704
        %v2745 = vunpack.c.l.b16 %v2705
        %v2746 = vunpack.c.l.b16 %v2706
        %v2747 = vunpack.c.l.b16 %v2707
        %v2748 = vunpack.c.l.b16 %v2708
        %v2749 = vunpack.c.l.b16 %v2709
        %v2750 = vunpack.c.l.b16 %v2710
        %v2751 = vunpack.c.l.b16 %v2711
        %v2752 = vunpack.c.l.b16 %v2712
        %v2753 = vunpack.c.l.b16 %v2713
        %v2754 = vunpack.c.l.b16 %v2714
        %v2755 = vpack.c.b16 %v2740, %v2739
        %v2756 = vpack.c.b16 %v2742, %v2741
        %v2757 = vpack.c.b16 %v2744, %v2743
        %v2758 = vpack.c.b16 %v2746, %v2745
        %v2759 = vpack.c.b16 %v2748, %v2747
        %v2760 = vpack.c.b16 %v2750, %v2749
        %v2761 = vpack.c.b16 %v2752, %v2751
        %v2762 = vpack.c.b16 %v2754, %v2753
        %2771 = vmatprep.subr.bf16.mxu0 0
        %2772 = vmatpush1.bf16.msra.mxu0 %v2755
        %2773 = vmatprep.subr.bf16.mxu0 0
        %2774 = vmatpush1.bf16.msra.mxu0 %v2756
        %2775 = vmatprep.subr.bf16.mxu0 0
        %2776 = vmatpush1.bf16.msra.mxu0 %v2757
        %2777 = vmatprep.subr.bf16.mxu0 0
        %2778 = vmatpush1.bf16.msra.mxu0 %v2758
        %2779 = vmatprep.subr.bf16.mxu0 0
        %2780 = vmatpush1.bf16.msra.mxu0 %v2759
        %2781 = vmatprep.subr.bf16.mxu0 0
        %2782 = vmatpush1.bf16.msra.mxu0 %v2760
        %2783 = vmatprep.subr.bf16.mxu0 0
        %2784 = vmatpush1.bf16.msra.mxu0 %v2761
        %2785 = vmatprep.subr.bf16.mxu0 0
        %2786 = vmatpush1.bf16.msra.mxu0 %v2762
        %2787 = vmatprep.subr.bf16.mxu0 0
        %2788 = vmatpush1.bf16.msra.mxu0 0
        %2789 = vmatprep.subr.bf16.mxu0 0
        %2790 = vmatpush1.bf16.msra.mxu0 0
        %2791 = vmatprep.subr.bf16.mxu0 0
        %2792 = vmatpush1.bf16.msra.mxu0 0
        %2793 = vmatprep.subr.bf16.mxu0 0
        %2794 = vmatpush1.bf16.msra.mxu0 0
        %2795 = vmatprep.subr.bf16.mxu0 0
        %2796 = vmatpush1.bf16.msra.mxu0 0
        %2797 = vmatprep.subr.bf16.mxu0 0
        %2798 = vmatpush1.bf16.msra.mxu0 0
        %2799 = vmatprep.subr.bf16.mxu0 0
        %2800 = vmatpush1.bf16.msra.mxu0 0
        %2801 = vmatprep.subr.bf16.mxu0 0
        %2802 = vmatpush1.bf16.msra.mxu0 0
        %2803 = vmatprep.mubr.bf16.mxu0 0
        %2804 = vmatmul.mubr.bf16.gmra.mrb[0].mxu0 %v2715
        %v2805 = vpop.f32.mrb[0].mxu0
        %v2806 = vadd.f32 %v2721, %v2805
        %v2807 = vpop.f32.mrb[0].mxu0
        %v2808 = vpop.f32.mrb[0].mxu0
        %v2809 = vadd.f32 %v2721, %v2808
        %v2810 = vpop.f32.mrb[0].mxu0
        %2811 = vdwg.mxu0
        %v2812 = vadd.f32 %v2611, %v2806
        %v2813 = vadd.f32 %v2612, %v2809
        %v2814 = vld [vmem:[%s22] sm:$0x1]
        %v2815 = vld [vmem:[%s23] sm:$0x1]
        %v2816 = vsel %vm900, %v2812, 0.0
        %2817 = vadd.xlane.f32.xlu0 %v2816
        %v2818 = vpop.xlane.xlu0 %2817
        %v2819 = vsel %vm900, %v2813, 0.0
        %2820 = vadd.xlane.f32.xlu0 %v2819
        %v2821 = vpop.xlane.xlu0 %2820
        %v2822 = vmul.f32 %v2818, %v1709
        %v2823 = vmul.f32 %v2821, %v1709
        %v2824 = vsub.f32 %v2812, %v2822
        %v2825 = vsub.f32 %v2813, %v2823
        %v2826 = vmul.f32 %v2824, %v2824
        %v2827 = vmul.f32 %v2825, %v2825
        %v2828 = vsel %vm900, %v2826, 0.0
        %2829 = vadd.xlane.f32.xlu0 %v2828
        %v2830 = vpop.xlane.xlu0 %2829
        %v2831 = vsel %vm900, %v2827, 0.0
        %2832 = vadd.xlane.f32.xlu0 %v2831
        %v2833 = vpop.xlane.xlu0 %2832
        %v2834 = vmul.f32 %v2830, %v1709
        %v2835 = vmul.f32 %v2833, %v1709
        %v2836 = vadd.f32 %v2834, 1e-05
        %v2837 = vadd.f32 %v2835, 1e-05
        %v2838 = vrsqrt.pop %v2836
        %v2839 = vrsqrt.pop %v2837
        %v2840 = vmul.f32 %v2824, %v2838
        %v2841 = vmul.f32 %v2825, %v2839
        %v2843 = vlaneseq
        %v2844 = vshrl.u32 %v2843, 7
        %v2845 = vsub.s32 0, %v2844
        %v2846 = vrot.slane %v2814, %v2845
        %v2848 = vmul.f32 %v2840, %v2846
        %v2849 = vmul.f32 %v2841, %v2846
        %v2851 = vlaneseq
        %v2852 = vshrl.u32 %v2851, 7
        %v2853 = vsub.s32 0, %v2852
        %v2854 = vrot.slane %v2815, %v2853
        %v2856 = vadd.f32 %v2848, %v2854
        %v2857 = vadd.f32 %v2849, %v2854
        %2858 = vst.msk [vmem:[%s831] sm:$0xff] %vm900, %v2856
        %2859 = vst.msk [vmem:[%s831 + $0x8] sm:$0xff] %vm900, %v2857
        %s2860 = sand.u32 %s596, 1
        %s2861 = scalar_lea.sflag [#allocation3], %s2860
        %s2862 = sand.u32 %s596, 1
        %s2863 = smul.addr %s2862, 16
        %s2864 = scalar_lea.vmem [#allocation2], %s2863
        // Predicated region
        $region117: #{fwd.8} parent=115 // pred_check
          %p2865 = pneg %p606
        $region118: #{fwd.8} parent=115 // pred_check_branch
          %2867 = sbr.rel (%p2865) target = $region120
        $region119: #{fwd.8} parent=115 // pred_region
          %s2868 = smul.u32 2, %s43
          %s2870 = ssub.s32 256, 256
          %2871 = vsyncadd %s2861, %s2870
          %s2872 = smul.addr %s42, 2
          %s2873 = sadd.s32 %s2868, %s2872
          %s2874 = smul.addr %s2873, 128
          %s2875 = scalar_lea.hbm %s24, %s2874
          %s2876 = sshll.u32 %s2864, 4
          %s2877 = int_to_ptr.vmem [resolvable:$true] %s2876
          %2882 = dma.vmem_to_hbm [thread:$0]  %s2877, 256, %s2875, %s2861, 128, 128, 8
        $region120: #{fwd.8} parent=115 // pred_fallthru
          _
      $region116: #{fwd.8} parent=5 // pred_fallthru
        _
      %p2883 = scmp.le.s32.totalorder 2, %s33
      // Predicated region
      $region121: #{fwd.8} parent=5 // pred_check
        %p2884 = pneg %p2883
      $region122: #{fwd.8} parent=5 // pred_check_branch
        %2886 = sbr.rel (%p2884) target = $region124
      $region123: #{fwd.8} parent=5 // pred_region
        %s2887 = ssub.s32 %s33, 2
        // Predicated region
        $region125: #{fwd.8} parent=123 // pred_check
          %p2888 = pneg %p612
        $region126: #{fwd.8} parent=123 // pred_check_branch
          %2890 = sbr.rel (%p2888) target = $region128
        $region127: #{fwd.8} parent=123 // pred_region
          %s2891 = sand.u32 %s597, 1
          %s2892 = scalar_lea.sflag [#allocation3], %s2891
          %s2893 = sand.u32 %s597, 1
          %s2894 = smul.addr %s2893, 16
          %s2895 = scalar_lea.vmem [#allocation2], %s2894
          %2896 = dma.done %s2892, 256
        $region128: #{fwd.8} parent=123 // pred_fallthru
          _
      $region124: #{fwd.8} parent=5 // pred_fallthru
        _
    $region6: #{fwd.8} parent=1 // loop_footer
      %s37 = sadd.s32 1, %s33
    $region7: #{fwd.8} parent=1 // loop_footer_branch
      %32 = sbr.rel target = $region3
    $region8: #{fwd.8} parent=1 // loop_exit
      _
    %2897 = vsyncpa [#allocation3], 1
    %s2898 = scalar_lea.sflag [#allocation3], 1
    %2899 = vsyncpa %s2898, 1

</llo_original>
